<compile_context>
chip_gen: v6e
topology: v6e:2x2x1
jax: 0.10.0
libtpu: 0.0.40
codegen_flags: <defaults>
</compile_context>

<pallas_src>
import functools
import math

import jax
import jax.numpy as jnp
from jax.experimental import pallas as pl
from jax.experimental.pallas import tpu as pltpu


def _attn_kernel(x_ref, wqkv_ref, bqkv_ref, wp_ref, bp_ref, o_ref,
                 *, n_head, compute_dtype, approx_recip):
    bb, T, C = x_ref.shape
    hd = C // n_head
    scale = 1.0 / math.sqrt(hd)

    def mm(a, b):
        # MXU matmul, f32 accumulation; operands narrowed to compute_dtype (bf16 default).
        return jnp.dot(a.astype(compute_dtype), b.astype(compute_dtype),
                       preferred_element_type=jnp.float32)

    # (bb, T, C) -> (bb*T, C): leading-dim merge only (T % 8 == 0), no relayout.
    x2d = x_ref[...].reshape(bb * T, C)

    # Fused QKV projection: one (bb*T, C) x (C, 3C) GEMM.  Weights were pre-transposed
    # and concatenated in the wrapper (PyTorch y = x @ W.T + b  ->  x @ Wt + b).
    qkv = mm(x2d, wqkv_ref[...]) + bqkv_ref[...]            # (bb*T, 3C) f32

    # Cast to the MXU operand dtype ONCE, full-width (not per 16-lane head slice).
    q = qkv[:, :C].astype(compute_dtype)
    k = qkv[:, C:2 * C].astype(compute_dtype)
    v = qkv[:, 2 * C:].astype(compute_dtype)

    # Per (batch-in-block, head) attention.  bb and n_head are static Python ints, so
    # these loops unroll at trace time; per-head results stay in registers and are
    # assembled into one lane-dense (bb*T, C) slab (no VMEM scratch, no masked stores).
    row_blocks = []
    for b in range(bb):
        r0, r1 = b * T, (b + 1) * T
        head_outs = []
        for h in range(n_head):
            c0, c1 = h * hd, (h + 1) * hd
            q_h = q[r0:r1, c0:c1]
            k_h = k[r0:r1, c0:c1]
            v_h = v[r0:r1, c0:c1]

            # scores = q_h @ k_h^T, expressed as a contraction on the head dim so the
            # MXU consumes the "transposed" operand natively (no .T materialized).
            s = jax.lax.dot_general(
                q_h, k_h, dimension_numbers=(((1,), (1,)), ((), ())),
                preferred_element_type=jnp.float32) * scale          # (T, T) f32

            # softmax in f32 (matches F.softmax; no causal mask in the reference forward).
            s = s - jnp.max(s, axis=-1, keepdims=True)
            p = jnp.exp(s)
            inv = pl.reciprocal(jnp.sum(p, axis=-1, keepdims=True), approx=approx_recip)
            p = (p * inv).astype(compute_dtype)

            head_outs.append(jnp.dot(p, v_h, preferred_element_type=jnp.float32))
        row_blocks.append(jnp.concatenate(head_outs, axis=1))        # (T, C) f32
    y2d = jnp.concatenate(row_blocks, axis=0)                        # (bb*T, C) f32

    # Output projection: one lane-dense (bb*T, C) x (C, C) GEMM.
    out2d = mm(y2d, wp_ref[...]) + bp_ref[...]
    o_ref[...] = out2d.reshape(bb, T, C).astype(o_ref.dtype)


def causal_self_attention(x, params, n_head, *, block_b=None, use_bf16=True,
                          approx_recip=True):
    """x: (B, T, C) float32.  params: PyTorch-shaped wq,bq,wk,bk,wv,bv,wp,bp."""
    B, T, C = x.shape
    assert C % n_head == 0
    if block_b is None:
        # Keep a >=2-step, even-length grid so the "parallel" batch axis can shard
        # across v7x's two TensorCores, while maximizing the per-step GEMM M = block_b*T.
        # On single-TC v5e/v6e, callers may pass block_b=B (grid of 1) instead.
        block_b = B // 2 if (B % 2 == 0 and B >= 2) else B
    assert B % block_b == 0, "block_b must divide B"

    w_dtype = jnp.bfloat16 if use_bf16 else jnp.float32
    compute_dtype = jnp.bfloat16 if use_bf16 else jnp.float32

    # Pre-transpose ONCE (PyTorch W is (out, in); kernel consumes Wt = (in, out)) and
    # fuse the three QKV projections into a single (C, 3C) weight / (1, 3C) bias.
    w_qkv_t = jnp.concatenate(
        [params["wq"].T, params["wk"].T, params["wv"].T], axis=1).astype(w_dtype)
    b_qkv = jnp.concatenate(
        [params["bq"], params["bk"], params["bv"]]).reshape(1, 3 * C).astype(jnp.float32)
    w_p_t = params["wp"].T.astype(w_dtype)
    b_p = params["bp"].reshape(1, C).astype(jnp.float32)

    x_spec = pl.BlockSpec((block_b, T, C), lambda i: (i, 0, 0))
    # Constant-index-map blocks: fetched once and revisited across the grid.
    # TODO(synk): at production C (v7x, 64 MiB VMEM) single-buffer these with
    # pipeline_mode=pl.Buffered(1) and/or tile the 3C axis.
    wqkv_spec = pl.BlockSpec((C, 3 * C), lambda i: (0, 0))
    bqkv_spec = pl.BlockSpec((1, 3 * C), lambda i: (0, 0))
    wp_spec = pl.BlockSpec((C, C), lambda i: (0, 0))
    bp_spec = pl.BlockSpec((1, C), lambda i: (0, 0))

    kernel = functools.partial(
        _attn_kernel, n_head=n_head, compute_dtype=compute_dtype,
        approx_recip=approx_recip)

    return pl.pallas_call(
        kernel,
        out_shape=jax.ShapeDtypeStruct((B, T, C), x.dtype),
        grid_spec=pltpu.PrefetchScalarGridSpec(
            num_scalar_prefetch=0,
            grid=(B // block_b,),
            in_specs=[x_spec, wqkv_spec, bqkv_spec, wp_spec, bp_spec],
            out_specs=x_spec,
        ),
        compiler_params=pltpu.CompilerParams(
            dimension_semantics=("parallel",),
            vmem_limit_bytes=48 * 1024 * 1024,
        ),
    )(x, w_qkv_t, b_qkv, w_p_t, b_p)


def reference(x, params, n_head):
    """Pure-JAX reference mirroring the PyTorch forward (explicit_atten=None, p=0)."""
    B, T, C = x.shape
    hd = C // n_head

    def lin(inp, w, b):
        return inp @ w.T + b

    q = lin(x, params["wq"], params["bq"]).reshape(B, T, n_head, hd).transpose(0, 2, 1, 3)
    k = lin(x, params["wk"], params["bk"]).reshape(B, T, n_head, hd).transpose(0, 2, 1, 3)
    v = lin(x, params["wv"], params["bv"]).reshape(B, T, n_head, hd).transpose(0, 2, 1, 3)

    att = jnp.einsum("bhtd,bhsd->bhts", q, k) * (1.0 / math.sqrt(hd))
    att = jax.nn.softmax(att, axis=-1)
    y = jnp.einsum("bhts,bhsd->bhtd", att, v)
    y = y.transpose(0, 2, 1, 3).reshape(B, T, C)
    return lin(y, params["wp"], params["bp"])


def init_params(key, dim):
    """Deterministic synthetic parameters, PyTorch Linear shapes: W (out, in), b (out,)."""
    ks = jax.random.split(key, 8)
    s = 1.0 / math.sqrt(dim)
    return {
        "wq": jax.random.uniform(ks[0], (dim, dim), jnp.float32, -s, s),
        "bq": jax.random.uniform(ks[1], (dim,), jnp.float32, -s, s),
        "wk": jax.random.uniform(ks[2], (dim, dim), jnp.float32, -s, s),
        "bk": jax.random.uniform(ks[3], (dim,), jnp.float32, -s, s),
        "wv": jax.random.uniform(ks[4], (dim, dim), jnp.float32, -s, s),
        "bv": jax.random.uniform(ks[5], (dim,), jnp.float32, -s, s),
        "wp": jax.random.uniform(ks[6], (dim, dim), jnp.float32, -s, s),
        "bp": jax.random.uniform(ks[7], (dim,), jnp.float32, -s, s),
    }


if __name__ == "__main__":
    # TPU-friendly small shapes: C a multiple of 128 (lane-dense blocks), T a multiple
    # of 8 (sublane alignment), head_num=8 matches the module default.  With the default
    # block_b = B//2 = 4, each grid step runs GEMMs with M = block_b*T = 128 (fills MXU
    # rows) and the 2-step "parallel" grid maps one step per TensorCore on v7x.
    B, T, C, H = 8, 32, 128, 8   # batch=8, seq=32, dim=128, head_num=8 (head_dim=16)

    key = jax.random.PRNGKey(0)
    kx, kp = jax.random.split(key)
    x = jax.random.normal(kx, (B, T, C), dtype=jnp.float32)
    params = init_params(kp, C)

    ref = reference(x, params, H)

    # Default (production) path: bf16 MXU operands, f32 accumulation, approx reciprocal.
    out = jax.block_until_ready(causal_self_attention(x, params, H))
    assert out.shape == (B, T, C)
    assert jnp.allclose(out, ref, atol=5e-2, rtol=5e-2), "bf16 kernel mismatch vs reference"

    # Strict f32 path (exact reciprocal) to validate semantics precisely.
    out_f32 = jax.block_until_ready(
        causal_self_attention(x, params, H, use_bf16=False, approx_recip=False))
    assert jnp.allclose(out_f32, ref, atol=1e-4, rtol=1e-4), "f32 kernel mismatch vs reference"

    print("KERNEL_OK")
</pallas_src>

<mosaic_0001>
module attributes {stable_mosaic.version = 11 : i64} {
  func.func @_attn_kernel(%arg0: i32, %arg1: memref<4x32x128xf32, #tpu.memory_space<vmem>>, %arg2: memref<128x384xbf16, #tpu.memory_space<vmem>>, %arg3: memref<1x384xf32, #tpu.memory_space<vmem>>, %arg4: memref<128x128xbf16, #tpu.memory_space<vmem>>, %arg5: memref<1x128xf32, #tpu.memory_space<vmem>>, %arg6: memref<4x32x128xf32, #tpu.memory_space<vmem>>) attributes {dimension_semantics = [#tpu.dimension_semantics<parallel>], iteration_bounds = array<i64: 2>, scalar_prefetch = 0 : i64, scratch_operands = 0 : i64, tpu.core_type = #tpu.core_type<tc>, window_params = [{transform_indices = @transform_0, window_bounds = array<i64: 4, 32, 128>}, {pipeline_mode = #tpu.pipeline_mode<synchronous>, transform_indices = @transform_1, window_bounds = array<i64: 128, 384>}, {pipeline_mode = #tpu.pipeline_mode<synchronous>, transform_indices = @transform_2, window_bounds = array<i64: 1, 384>}, {pipeline_mode = #tpu.pipeline_mode<synchronous>, transform_indices = @transform_3, window_bounds = array<i64: 128, 128>}, {pipeline_mode = #tpu.pipeline_mode<synchronous>, transform_indices = @transform_4, window_bounds = array<i64: 1, 128>}, {transform_indices = @transform_5, window_bounds = array<i64: 4, 32, 128>}]} {
    %c0 = arith.constant 0 : index
    %c0_0 = arith.constant 0 : index
    %c0_1 = arith.constant 0 : index
    %0 = vector.load %arg1[%c0, %c0_0, %c0_1] : memref<4x32x128xf32, #tpu.memory_space<vmem>>, vector<4x32x128xf32>
    %1 = vector.shape_cast %0 : vector<4x32x128xf32> to vector<128x128xf32>
    %c0_2 = arith.constant 0 : index
    %c0_3 = arith.constant 0 : index
    %2 = vector.load %arg2[%c0_2, %c0_3] : memref<128x384xbf16, #tpu.memory_space<vmem>>, vector<128x384xbf16>
    %3 = arith.truncf %1 : vector<128x128xf32> to vector<128x128xbf16>
    %cst = arith.constant dense<0.000000e+00> : vector<128x384xf32>
    %4 = tpu.matmul %3, %2, %cst {dimension_numbers = #tpu.dot_dimension_numbers<[1], [0], [0], [1], [0, 0, 1, 1], [], []>} : vector<128x128xbf16>, vector<128x384xbf16>, vector<128x384xf32> -> vector<128x384xf32>
    %c0_4 = arith.constant 0 : index
    %c0_5 = arith.constant 0 : index
    %5 = vector.load %arg3[%c0_4, %c0_5] : memref<1x384xf32, #tpu.memory_space<vmem>>, vector<1x384xf32>
    %6 = vector.broadcast %5 : vector<1x384xf32> to vector<128x384xf32>
    %7 = arith.addf %4, %6 : vector<128x384xf32>
    %8 = vector.extract_strided_slice %7 {offsets = [0, 0], sizes = [128, 128], strides = [1, 1]} : vector<128x384xf32> to vector<128x128xf32>
    %9 = arith.truncf %8 : vector<128x128xf32> to vector<128x128xbf16>
    %10 = vector.extract_strided_slice %7 {offsets = [0, 128], sizes = [128, 128], strides = [1, 1]} : vector<128x384xf32> to vector<128x128xf32>
    %11 = arith.truncf %10 : vector<128x128xf32> to vector<128x128xbf16>
    %12 = vector.extract_strided_slice %7 {offsets = [0, 256], sizes = [128, 128], strides = [1, 1]} : vector<128x384xf32> to vector<128x128xf32>
    %13 = arith.truncf %12 : vector<128x128xf32> to vector<128x128xbf16>
    %14 = vector.extract_strided_slice %9 {offsets = [0, 0], sizes = [32, 16], strides = [1, 1]} : vector<128x128xbf16> to vector<32x16xbf16>
    %15 = vector.extract_strided_slice %11 {offsets = [0, 0], sizes = [32, 16], strides = [1, 1]} : vector<128x128xbf16> to vector<32x16xbf16>
    %16 = vector.extract_strided_slice %13 {offsets = [0, 0], sizes = [32, 16], strides = [1, 1]} : vector<128x128xbf16> to vector<32x16xbf16>
    %cst_6 = arith.constant dense<0.000000e+00> : vector<32x32xf32>
    %17 = tpu.matmul %14, %15, %cst_6 {dimension_numbers = #tpu.dot_dimension_numbers<[1], [1], [0], [0], [0, 0, 1, 0], [], []>} : vector<32x16xbf16>, vector<32x16xbf16>, vector<32x32xf32> -> vector<32x32xf32>
    %cst_7 = arith.constant 2.500000e-01 : f32
    %18 = vector.broadcast %cst_7 : f32 to vector<32x32xf32>
    %19 = arith.mulf %17, %18 : vector<32x32xf32>
    %cst_8 = arith.constant dense<0xFF800000> : vector<32xf32>
    %20 = vector.multi_reduction <maximumf>, %19, %cst_8 [1] : vector<32x32xf32> to vector<32xf32>
    %21 = vector.shape_cast %20 : vector<32xf32> to vector<32x1xf32>
    %22 = vector.broadcast %21 : vector<32x1xf32> to vector<32x32xf32>
    %23 = arith.subf %19, %22 : vector<32x32xf32>
    %24 = math.exp %23 : vector<32x32xf32>
    %cst_9 = arith.constant dense<0.000000e+00> : vector<32xf32>
    %25 = vector.multi_reduction <add>, %24, %cst_9 [1] : vector<32x32xf32> to vector<32xf32>
    %26 = vector.shape_cast %25 : vector<32xf32> to vector<32x1xf32>
    %27 = tpu.reciprocal %26 {approx = true} : vector<32x1xf32> -> vector<32x1xf32>
    %28 = vector.broadcast %27 : vector<32x1xf32> to vector<32x32xf32>
    %29 = arith.mulf %24, %28 : vector<32x32xf32>
    %30 = arith.truncf %29 : vector<32x32xf32> to vector<32x32xbf16>
    %cst_10 = arith.constant dense<0.000000e+00> : vector<32x16xf32>
    %31 = tpu.matmul %30, %16, %cst_10 {dimension_numbers = #tpu.dot_dimension_numbers<[1], [0], [0], [1], [0, 0, 1, 1], [], []>} : vector<32x32xbf16>, vector<32x16xbf16>, vector<32x16xf32> -> vector<32x16xf32>
    %32 = vector.extract_strided_slice %9 {offsets = [0, 16], sizes = [32, 16], strides = [1, 1]} : vector<128x128xbf16> to vector<32x16xbf16>
    %33 = vector.extract_strided_slice %11 {offsets = [0, 16], sizes = [32, 16], strides = [1, 1]} : vector<128x128xbf16> to vector<32x16xbf16>
    %34 = vector.extract_strided_slice %13 {offsets = [0, 16], sizes = [32, 16], strides = [1, 1]} : vector<128x128xbf16> to vector<32x16xbf16>
    %cst_11 = arith.constant dense<0.000000e+00> : vector<32x32xf32>
    %35 = tpu.matmul %32, %33, %cst_11 {dimension_numbers = #tpu.dot_dimension_numbers<[1], [1], [0], [0], [0, 0, 1, 0], [], []>} : vector<32x16xbf16>, vector<32x16xbf16>, vector<32x32xf32> -> vector<32x32xf32>
    %cst_12 = arith.constant 2.500000e-01 : f32
    %36 = vector.broadcast %cst_12 : f32 to vector<32x32xf32>
    %37 = arith.mulf %35, %36 : vector<32x32xf32>
    %cst_13 = arith.constant dense<0xFF800000> : vector<32xf32>
    %38 = vector.multi_reduction <maximumf>, %37, %cst_13 [1] : vector<32x32xf32> to vector<32xf32>
    %39 = vector.shape_cast %38 : vector<32xf32> to vector<32x1xf32>
    %40 = vector.broadcast %39 : vector<32x1xf32> to vector<32x32xf32>
    %41 = arith.subf %37, %40 : vector<32x32xf32>
    %42 = math.exp %41 : vector<32x32xf32>
    %cst_14 = arith.constant dense<0.000000e+00> : vector<32xf32>
    %43 = vector.multi_reduction <add>, %42, %cst_14 [1] : vector<32x32xf32> to vector<32xf32>
    %44 = vector.shape_cast %43 : vector<32xf32> to vector<32x1xf32>
    %45 = tpu.reciprocal %44 {approx = true} : vector<32x1xf32> -> vector<32x1xf32>
    %46 = vector.broadcast %45 : vector<32x1xf32> to vector<32x32xf32>
    %47 = arith.mulf %42, %46 : vector<32x32xf32>
    %48 = arith.truncf %47 : vector<32x32xf32> to vector<32x32xbf16>
    %cst_15 = arith.constant dense<0.000000e+00> : vector<32x16xf32>
    %49 = tpu.matmul %48, %34, %cst_15 {dimension_numbers = #tpu.dot_dimension_numbers<[1], [0], [0], [1], [0, 0, 1, 1], [], []>} : vector<32x32xbf16>, vector<32x16xbf16>, vector<32x16xf32> -> vector<32x16xf32>
    %50 = vector.extract_strided_slice %9 {offsets = [0, 32], sizes = [32, 16], strides = [1, 1]} : vector<128x128xbf16> to vector<32x16xbf16>
    %51 = vector.extract_strided_slice %11 {offsets = [0, 32], sizes = [32, 16], strides = [1, 1]} : vector<128x128xbf16> to vector<32x16xbf16>
    %52 = vector.extract_strided_slice %13 {offsets = [0, 32], sizes = [32, 16], strides = [1, 1]} : vector<128x128xbf16> to vector<32x16xbf16>
    %cst_16 = arith.constant dense<0.000000e+00> : vector<32x32xf32>
    %53 = tpu.matmul %50, %51, %cst_16 {dimension_numbers = #tpu.dot_dimension_numbers<[1], [1], [0], [0], [0, 0, 1, 0], [], []>} : vector<32x16xbf16>, vector<32x16xbf16>, vector<32x32xf32> -> vector<32x32xf32>
    %cst_17 = arith.constant 2.500000e-01 : f32
    %54 = vector.broadcast %cst_17 : f32 to vector<32x32xf32>
    %55 = arith.mulf %53, %54 : vector<32x32xf32>
    %cst_18 = arith.constant dense<0xFF800000> : vector<32xf32>
    %56 = vector.multi_reduction <maximumf>, %55, %cst_18 [1] : vector<32x32xf32> to vector<32xf32>
    %57 = vector.shape_cast %56 : vector<32xf32> to vector<32x1xf32>
    %58 = vector.broadcast %57 : vector<32x1xf32> to vector<32x32xf32>
    %59 = arith.subf %55, %58 : vector<32x32xf32>
    %60 = math.exp %59 : vector<32x32xf32>
    %cst_19 = arith.constant dense<0.000000e+00> : vector<32xf32>
    %61 = vector.multi_reduction <add>, %60, %cst_19 [1] : vector<32x32xf32> to vector<32xf32>
    %62 = vector.shape_cast %61 : vector<32xf32> to vector<32x1xf32>
    %63 = tpu.reciprocal %62 {approx = true} : vector<32x1xf32> -> vector<32x1xf32>
    %64 = vector.broadcast %63 : vector<32x1xf32> to vector<32x32xf32>
    %65 = arith.mulf %60, %64 : vector<32x32xf32>
    %66 = arith.truncf %65 : vector<32x32xf32> to vector<32x32xbf16>
    %cst_20 = arith.constant dense<0.000000e+00> : vector<32x16xf32>
    %67 = tpu.matmul %66, %52, %cst_20 {dimension_numbers = #tpu.dot_dimension_numbers<[1], [0], [0], [1], [0, 0, 1, 1], [], []>} : vector<32x32xbf16>, vector<32x16xbf16>, vector<32x16xf32> -> vector<32x16xf32>
    %68 = vector.extract_strided_slice %9 {offsets = [0, 48], sizes = [32, 16], strides = [1, 1]} : vector<128x128xbf16> to vector<32x16xbf16>
    %69 = vector.extract_strided_slice %11 {offsets = [0, 48], sizes = [32, 16], strides = [1, 1]} : vector<128x128xbf16> to vector<32x16xbf16>
    %70 = vector.extract_strided_slice %13 {offsets = [0, 48], sizes = [32, 16], strides = [1, 1]} : vector<128x128xbf16> to vector<32x16xbf16>
    %cst_21 = arith.constant dense<0.000000e+00> : vector<32x32xf32>
    %71 = tpu.matmul %68, %69, %cst_21 {dimension_numbers = #tpu.dot_dimension_numbers<[1], [1], [0], [0], [0, 0, 1, 0], [], []>} : vector<32x16xbf16>, vector<32x16xbf16>, vector<32x32xf32> -> vector<32x32xf32>
    %cst_22 = arith.constant 2.500000e-01 : f32
    %72 = vector.broadcast %cst_22 : f32 to vector<32x32xf32>
    %73 = arith.mulf %71, %72 : vector<32x32xf32>
    %cst_23 = arith.constant dense<0xFF800000> : vector<32xf32>
    %74 = vector.multi_reduction <maximumf>, %73, %cst_23 [1] : vector<32x32xf32> to vector<32xf32>
    %75 = vector.shape_cast %74 : vector<32xf32> to vector<32x1xf32>
    %76 = vector.broadcast %75 : vector<32x1xf32> to vector<32x32xf32>
    %77 = arith.subf %73, %76 : vector<32x32xf32>
    %78 = math.exp %77 : vector<32x32xf32>
    %cst_24 = arith.constant dense<0.000000e+00> : vector<32xf32>
    %79 = vector.multi_reduction <add>, %78, %cst_24 [1] : vector<32x32xf32> to vector<32xf32>
    %80 = vector.shape_cast %79 : vector<32xf32> to vector<32x1xf32>
    %81 = tpu.reciprocal %80 {approx = true} : vector<32x1xf32> -> vector<32x1xf32>
    %82 = vector.broadcast %81 : vector<32x1xf32> to vector<32x32xf32>
    %83 = arith.mulf %78, %82 : vector<32x32xf32>
    %84 = arith.truncf %83 : vector<32x32xf32> to vector<32x32xbf16>
    %cst_25 = arith.constant dense<0.000000e+00> : vector<32x16xf32>
    %85 = tpu.matmul %84, %70, %cst_25 {dimension_numbers = #tpu.dot_dimension_numbers<[1], [0], [0], [1], [0, 0, 1, 1], [], []>} : vector<32x32xbf16>, vector<32x16xbf16>, vector<32x16xf32> -> vector<32x16xf32>
    %86 = vector.extract_strided_slice %9 {offsets = [0, 64], sizes = [32, 16], strides = [1, 1]} : vector<128x128xbf16> to vector<32x16xbf16>
    %87 = vector.extract_strided_slice %11 {offsets = [0, 64], sizes = [32, 16], strides = [1, 1]} : vector<128x128xbf16> to vector<32x16xbf16>
    %88 = vector.extract_strided_slice %13 {offsets = [0, 64], sizes = [32, 16], strides = [1, 1]} : vector<128x128xbf16> to vector<32x16xbf16>
    %cst_26 = arith.constant dense<0.000000e+00> : vector<32x32xf32>
    %89 = tpu.matmul %86, %87, %cst_26 {dimension_numbers = #tpu.dot_dimension_numbers<[1], [1], [0], [0], [0, 0, 1, 0], [], []>} : vector<32x16xbf16>, vector<32x16xbf16>, vector<32x32xf32> -> vector<32x32xf32>
    %cst_27 = arith.constant 2.500000e-01 : f32
    %90 = vector.broadcast %cst_27 : f32 to vector<32x32xf32>
    %91 = arith.mulf %89, %90 : vector<32x32xf32>
    %cst_28 = arith.constant dense<0xFF800000> : vector<32xf32>
    %92 = vector.multi_reduction <maximumf>, %91, %cst_28 [1] : vector<32x32xf32> to vector<32xf32>
    %93 = vector.shape_cast %92 : vector<32xf32> to vector<32x1xf32>
    %94 = vector.broadcast %93 : vector<32x1xf32> to vector<32x32xf32>
    %95 = arith.subf %91, %94 : vector<32x32xf32>
    %96 = math.exp %95 : vector<32x32xf32>
    %cst_29 = arith.constant dense<0.000000e+00> : vector<32xf32>
    %97 = vector.multi_reduction <add>, %96, %cst_29 [1] : vector<32x32xf32> to vector<32xf32>
    %98 = vector.shape_cast %97 : vector<32xf32> to vector<32x1xf32>
    %99 = tpu.reciprocal %98 {approx = true} : vector<32x1xf32> -> vector<32x1xf32>
    %100 = vector.broadcast %99 : vector<32x1xf32> to vector<32x32xf32>
    %101 = arith.mulf %96, %100 : vector<32x32xf32>
    %102 = arith.truncf %101 : vector<32x32xf32> to vector<32x32xbf16>
    %cst_30 = arith.constant dense<0.000000e+00> : vector<32x16xf32>
    %103 = tpu.matmul %102, %88, %cst_30 {dimension_numbers = #tpu.dot_dimension_numbers<[1], [0], [0], [1], [0, 0, 1, 1], [], []>} : vector<32x32xbf16>, vector<32x16xbf16>, vector<32x16xf32> -> vector<32x16xf32>
    %104 = vector.extract_strided_slice %9 {offsets = [0, 80], sizes = [32, 16], strides = [1, 1]} : vector<128x128xbf16> to vector<32x16xbf16>
    %105 = vector.extract_strided_slice %11 {offsets = [0, 80], sizes = [32, 16], strides = [1, 1]} : vector<128x128xbf16> to vector<32x16xbf16>
    %106 = vector.extract_strided_slice %13 {offsets = [0, 80], sizes = [32, 16], strides = [1, 1]} : vector<128x128xbf16> to vector<32x16xbf16>
    %cst_31 = arith.constant dense<0.000000e+00> : vector<32x32xf32>
    %107 = tpu.matmul %104, %105, %cst_31 {dimension_numbers = #tpu.dot_dimension_numbers<[1], [1], [0], [0], [0, 0, 1, 0], [], []>} : vector<32x16xbf16>, vector<32x16xbf16>, vector<32x32xf32> -> vector<32x32xf32>
    %cst_32 = arith.constant 2.500000e-01 : f32
    %108 = vector.broadcast %cst_32 : f32 to vector<32x32xf32>
    %109 = arith.mulf %107, %108 : vector<32x32xf32>
    %cst_33 = arith.constant dense<0xFF800000> : vector<32xf32>
    %110 = vector.multi_reduction <maximumf>, %109, %cst_33 [1] : vector<32x32xf32> to vector<32xf32>
    %111 = vector.shape_cast %110 : vector<32xf32> to vector<32x1xf32>
    %112 = vector.broadcast %111 : vector<32x1xf32> to vector<32x32xf32>
    %113 = arith.subf %109, %112 : vector<32x32xf32>
    %114 = math.exp %113 : vector<32x32xf32>
    %cst_34 = arith.constant dense<0.000000e+00> : vector<32xf32>
    %115 = vector.multi_reduction <add>, %114, %cst_34 [1] : vector<32x32xf32> to vector<32xf32>
    %116 = vector.shape_cast %115 : vector<32xf32> to vector<32x1xf32>
    %117 = tpu.reciprocal %116 {approx = true} : vector<32x1xf32> -> vector<32x1xf32>
    %118 = vector.broadcast %117 : vector<32x1xf32> to vector<32x32xf32>
    %119 = arith.mulf %114, %118 : vector<32x32xf32>
    %120 = arith.truncf %119 : vector<32x32xf32> to vector<32x32xbf16>
    %cst_35 = arith.constant dense<0.000000e+00> : vector<32x16xf32>
    %121 = tpu.matmul %120, %106, %cst_35 {dimension_numbers = #tpu.dot_dimension_numbers<[1], [0], [0], [1], [0, 0, 1, 1], [], []>} : vector<32x32xbf16>, vector<32x16xbf16>, vector<32x16xf32> -> vector<32x16xf32>
    %122 = vector.extract_strided_slice %9 {offsets = [0, 96], sizes = [32, 16], strides = [1, 1]} : vector<128x128xbf16> to vector<32x16xbf16>
    %123 = vector.extract_strided_slice %11 {offsets = [0, 96], sizes = [32, 16], strides = [1, 1]} : vector<128x128xbf16> to vector<32x16xbf16>
    %124 = vector.extract_strided_slice %13 {offsets = [0, 96], sizes = [32, 16], strides = [1, 1]} : vector<128x128xbf16> to vector<32x16xbf16>
    %cst_36 = arith.constant dense<0.000000e+00> : vector<32x32xf32>
    %125 = tpu.matmul %122, %123, %cst_36 {dimension_numbers = #tpu.dot_dimension_numbers<[1], [1], [0], [0], [0, 0, 1, 0], [], []>} : vector<32x16xbf16>, vector<32x16xbf16>, vector<32x32xf32> -> vector<32x32xf32>
    %cst_37 = arith.constant 2.500000e-01 : f32
    %126 = vector.broadcast %cst_37 : f32 to vector<32x32xf32>
    %127 = arith.mulf %125, %126 : vector<32x32xf32>
    %cst_38 = arith.constant dense<0xFF800000> : vector<32xf32>
    %128 = vector.multi_reduction <maximumf>, %127, %cst_38 [1] : vector<32x32xf32> to vector<32xf32>
    %129 = vector.shape_cast %128 : vector<32xf32> to vector<32x1xf32>
    %130 = vector.broadcast %129 : vector<32x1xf32> to vector<32x32xf32>
    %131 = arith.subf %127, %130 : vector<32x32xf32>
    %132 = math.exp %131 : vector<32x32xf32>
    %cst_39 = arith.constant dense<0.000000e+00> : vector<32xf32>
    %133 = vector.multi_reduction <add>, %132, %cst_39 [1] : vector<32x32xf32> to vector<32xf32>
    %134 = vector.shape_cast %133 : vector<32xf32> to vector<32x1xf32>
    %135 = tpu.reciprocal %134 {approx = true} : vector<32x1xf32> -> vector<32x1xf32>
    %136 = vector.broadcast %135 : vector<32x1xf32> to vector<32x32xf32>
    %137 = arith.mulf %132, %136 : vector<32x32xf32>
    %138 = arith.truncf %137 : vector<32x32xf32> to vector<32x32xbf16>
    %cst_40 = arith.constant dense<0.000000e+00> : vector<32x16xf32>
    %139 = tpu.matmul %138, %124, %cst_40 {dimension_numbers = #tpu.dot_dimension_numbers<[1], [0], [0], [1], [0, 0, 1, 1], [], []>} : vector<32x32xbf16>, vector<32x16xbf16>, vector<32x16xf32> -> vector<32x16xf32>
    %140 = vector.extract_strided_slice %9 {offsets = [0, 112], sizes = [32, 16], strides = [1, 1]} : vector<128x128xbf16> to vector<32x16xbf16>
    %141 = vector.extract_strided_slice %11 {offsets = [0, 112], sizes = [32, 16], strides = [1, 1]} : vector<128x128xbf16> to vector<32x16xbf16>
    %142 = vector.extract_strided_slice %13 {offsets = [0, 112], sizes = [32, 16], strides = [1, 1]} : vector<128x128xbf16> to vector<32x16xbf16>
    %cst_41 = arith.constant dense<0.000000e+00> : vector<32x32xf32>
    %143 = tpu.matmul %140, %141, %cst_41 {dimension_numbers = #tpu.dot_dimension_numbers<[1], [1], [0], [0], [0, 0, 1, 0], [], []>} : vector<32x16xbf16>, vector<32x16xbf16>, vector<32x32xf32> -> vector<32x32xf32>
    %cst_42 = arith.constant 2.500000e-01 : f32
    %144 = vector.broadcast %cst_42 : f32 to vector<32x32xf32>
    %145 = arith.mulf %143, %144 : vector<32x32xf32>
    %cst_43 = arith.constant dense<0xFF800000> : vector<32xf32>
    %146 = vector.multi_reduction <maximumf>, %145, %cst_43 [1] : vector<32x32xf32> to vector<32xf32>
    %147 = vector.shape_cast %146 : vector<32xf32> to vector<32x1xf32>
    %148 = vector.broadcast %147 : vector<32x1xf32> to vector<32x32xf32>
    %149 = arith.subf %145, %148 : vector<32x32xf32>
    %150 = math.exp %149 : vector<32x32xf32>
    %cst_44 = arith.constant dense<0.000000e+00> : vector<32xf32>
    %151 = vector.multi_reduction <add>, %150, %cst_44 [1] : vector<32x32xf32> to vector<32xf32>
    %152 = vector.shape_cast %151 : vector<32xf32> to vector<32x1xf32>
    %153 = tpu.reciprocal %152 {approx = true} : vector<32x1xf32> -> vector<32x1xf32>
    %154 = vector.broadcast %153 : vector<32x1xf32> to vector<32x32xf32>
    %155 = arith.mulf %150, %154 : vector<32x32xf32>
    %156 = arith.truncf %155 : vector<32x32xf32> to vector<32x32xbf16>
    %cst_45 = arith.constant dense<0.000000e+00> : vector<32x16xf32>
    %157 = tpu.matmul %156, %142, %cst_45 {dimension_numbers = #tpu.dot_dimension_numbers<[1], [0], [0], [1], [0, 0, 1, 1], [], []>} : vector<32x32xbf16>, vector<32x16xbf16>, vector<32x16xf32> -> vector<32x16xf32>
    %158 = tpu.concatenate %31, %49, %67, %85, %103, %121, %139, %157 in 1 : vector<32x16xf32>, vector<32x16xf32>, vector<32x16xf32>, vector<32x16xf32>, vector<32x16xf32>, vector<32x16xf32>, vector<32x16xf32>, vector<32x16xf32> -> vector<32x128xf32>
    %159 = vector.extract_strided_slice %9 {offsets = [32, 0], sizes = [32, 16], strides = [1, 1]} : vector<128x128xbf16> to vector<32x16xbf16>
    %160 = vector.extract_strided_slice %11 {offsets = [32, 0], sizes = [32, 16], strides = [1, 1]} : vector<128x128xbf16> to vector<32x16xbf16>
    %161 = vector.extract_strided_slice %13 {offsets = [32, 0], sizes = [32, 16], strides = [1, 1]} : vector<128x128xbf16> to vector<32x16xbf16>
    %cst_46 = arith.constant dense<0.000000e+00> : vector<32x32xf32>
    %162 = tpu.matmul %159, %160, %cst_46 {dimension_numbers = #tpu.dot_dimension_numbers<[1], [1], [0], [0], [0, 0, 1, 0], [], []>} : vector<32x16xbf16>, vector<32x16xbf16>, vector<32x32xf32> -> vector<32x32xf32>
    %cst_47 = arith.constant 2.500000e-01 : f32
    %163 = vector.broadcast %cst_47 : f32 to vector<32x32xf32>
    %164 = arith.mulf %162, %163 : vector<32x32xf32>
    %cst_48 = arith.constant dense<0xFF800000> : vector<32xf32>
    %165 = vector.multi_reduction <maximumf>, %164, %cst_48 [1] : vector<32x32xf32> to vector<32xf32>
    %166 = vector.shape_cast %165 : vector<32xf32> to vector<32x1xf32>
    %167 = vector.broadcast %166 : vector<32x1xf32> to vector<32x32xf32>
    %168 = arith.subf %164, %167 : vector<32x32xf32>
    %169 = math.exp %168 : vector<32x32xf32>
    %cst_49 = arith.constant dense<0.000000e+00> : vector<32xf32>
    %170 = vector.multi_reduction <add>, %169, %cst_49 [1] : vector<32x32xf32> to vector<32xf32>
    %171 = vector.shape_cast %170 : vector<32xf32> to vector<32x1xf32>
    %172 = tpu.reciprocal %171 {approx = true} : vector<32x1xf32> -> vector<32x1xf32>
    %173 = vector.broadcast %172 : vector<32x1xf32> to vector<32x32xf32>
    %174 = arith.mulf %169, %173 : vector<32x32xf32>
    %175 = arith.truncf %174 : vector<32x32xf32> to vector<32x32xbf16>
    %cst_50 = arith.constant dense<0.000000e+00> : vector<32x16xf32>
    %176 = tpu.matmul %175, %161, %cst_50 {dimension_numbers = #tpu.dot_dimension_numbers<[1], [0], [0], [1], [0, 0, 1, 1], [], []>} : vector<32x32xbf16>, vector<32x16xbf16>, vector<32x16xf32> -> vector<32x16xf32>
    %177 = vector.extract_strided_slice %9 {offsets = [32, 16], sizes = [32, 16], strides = [1, 1]} : vector<128x128xbf16> to vector<32x16xbf16>
    %178 = vector.extract_strided_slice %11 {offsets = [32, 16], sizes = [32, 16], strides = [1, 1]} : vector<128x128xbf16> to vector<32x16xbf16>
    %179 = vector.extract_strided_slice %13 {offsets = [32, 16], sizes = [32, 16], strides = [1, 1]} : vector<128x128xbf16> to vector<32x16xbf16>
    %cst_51 = arith.constant dense<0.000000e+00> : vector<32x32xf32>
    %180 = tpu.matmul %177, %178, %cst_51 {dimension_numbers = #tpu.dot_dimension_numbers<[1], [1], [0], [0], [0, 0, 1, 0], [], []>} : vector<32x16xbf16>, vector<32x16xbf16>, vector<32x32xf32> -> vector<32x32xf32>
    %cst_52 = arith.constant 2.500000e-01 : f32
    %181 = vector.broadcast %cst_52 : f32 to vector<32x32xf32>
    %182 = arith.mulf %180, %181 : vector<32x32xf32>
    %cst_53 = arith.constant dense<0xFF800000> : vector<32xf32>
    %183 = vector.multi_reduction <maximumf>, %182, %cst_53 [1] : vector<32x32xf32> to vector<32xf32>
    %184 = vector.shape_cast %183 : vector<32xf32> to vector<32x1xf32>
    %185 = vector.broadcast %184 : vector<32x1xf32> to vector<32x32xf32>
    %186 = arith.subf %182, %185 : vector<32x32xf32>
    %187 = math.exp %186 : vector<32x32xf32>
    %cst_54 = arith.constant dense<0.000000e+00> : vector<32xf32>
    %188 = vector.multi_reduction <add>, %187, %cst_54 [1] : vector<32x32xf32> to vector<32xf32>
    %189 = vector.shape_cast %188 : vector<32xf32> to vector<32x1xf32>
    %190 = tpu.reciprocal %189 {approx = true} : vector<32x1xf32> -> vector<32x1xf32>
    %191 = vector.broadcast %190 : vector<32x1xf32> to vector<32x32xf32>
    %192 = arith.mulf %187, %191 : vector<32x32xf32>
    %193 = arith.truncf %192 : vector<32x32xf32> to vector<32x32xbf16>
    %cst_55 = arith.constant dense<0.000000e+00> : vector<32x16xf32>
    %194 = tpu.matmul %193, %179, %cst_55 {dimension_numbers = #tpu.dot_dimension_numbers<[1], [0], [0], [1], [0, 0, 1, 1], [], []>} : vector<32x32xbf16>, vector<32x16xbf16>, vector<32x16xf32> -> vector<32x16xf32>
    %195 = vector.extract_strided_slice %9 {offsets = [32, 32], sizes = [32, 16], strides = [1, 1]} : vector<128x128xbf16> to vector<32x16xbf16>
    %196 = vector.extract_strided_slice %11 {offsets = [32, 32], sizes = [32, 16], strides = [1, 1]} : vector<128x128xbf16> to vector<32x16xbf16>
    %197 = vector.extract_strided_slice %13 {offsets = [32, 32], sizes = [32, 16], strides = [1, 1]} : vector<128x128xbf16> to vector<32x16xbf16>
    %cst_56 = arith.constant dense<0.000000e+00> : vector<32x32xf32>
    %198 = tpu.matmul %195, %196, %cst_56 {dimension_numbers = #tpu.dot_dimension_numbers<[1], [1], [0], [0], [0, 0, 1, 0], [], []>} : vector<32x16xbf16>, vector<32x16xbf16>, vector<32x32xf32> -> vector<32x32xf32>
    %cst_57 = arith.constant 2.500000e-01 : f32
    %199 = vector.broadcast %cst_57 : f32 to vector<32x32xf32>
    %200 = arith.mulf %198, %199 : vector<32x32xf32>
    %cst_58 = arith.constant dense<0xFF800000> : vector<32xf32>
    %201 = vector.multi_reduction <maximumf>, %200, %cst_58 [1] : vector<32x32xf32> to vector<32xf32>
    %202 = vector.shape_cast %201 : vector<32xf32> to vector<32x1xf32>
    %203 = vector.broadcast %202 : vector<32x1xf32> to vector<32x32xf32>
    %204 = arith.subf %200, %203 : vector<32x32xf32>
    %205 = math.exp %204 : vector<32x32xf32>
    %cst_59 = arith.constant dense<0.000000e+00> : vector<32xf32>
    %206 = vector.multi_reduction <add>, %205, %cst_59 [1] : vector<32x32xf32> to vector<32xf32>
    %207 = vector.shape_cast %206 : vector<32xf32> to vector<32x1xf32>
    %208 = tpu.reciprocal %207 {approx = true} : vector<32x1xf32> -> vector<32x1xf32>
    %209 = vector.broadcast %208 : vector<32x1xf32> to vector<32x32xf32>
    %210 = arith.mulf %205, %209 : vector<32x32xf32>
    %211 = arith.truncf %210 : vector<32x32xf32> to vector<32x32xbf16>
    %cst_60 = arith.constant dense<0.000000e+00> : vector<32x16xf32>
    %212 = tpu.matmul %211, %197, %cst_60 {dimension_numbers = #tpu.dot_dimension_numbers<[1], [0], [0], [1], [0, 0, 1, 1], [], []>} : vector<32x32xbf16>, vector<32x16xbf16>, vector<32x16xf32> -> vector<32x16xf32>
    %213 = vector.extract_strided_slice %9 {offsets = [32, 48], sizes = [32, 16], strides = [1, 1]} : vector<128x128xbf16> to vector<32x16xbf16>
    %214 = vector.extract_strided_slice %11 {offsets = [32, 48], sizes = [32, 16], strides = [1, 1]} : vector<128x128xbf16> to vector<32x16xbf16>
    %215 = vector.extract_strided_slice %13 {offsets = [32, 48], sizes = [32, 16], strides = [1, 1]} : vector<128x128xbf16> to vector<32x16xbf16>
    %cst_61 = arith.constant dense<0.000000e+00> : vector<32x32xf32>
    %216 = tpu.matmul %213, %214, %cst_61 {dimension_numbers = #tpu.dot_dimension_numbers<[1], [1], [0], [0], [0, 0, 1, 0], [], []>} : vector<32x16xbf16>, vector<32x16xbf16>, vector<32x32xf32> -> vector<32x32xf32>
    %cst_62 = arith.constant 2.500000e-01 : f32
    %217 = vector.broadcast %cst_62 : f32 to vector<32x32xf32>
    %218 = arith.mulf %216, %217 : vector<32x32xf32>
    %cst_63 = arith.constant dense<0xFF800000> : vector<32xf32>
    %219 = vector.multi_reduction <maximumf>, %218, %cst_63 [1] : vector<32x32xf32> to vector<32xf32>
    %220 = vector.shape_cast %219 : vector<32xf32> to vector<32x1xf32>
    %221 = vector.broadcast %220 : vector<32x1xf32> to vector<32x32xf32>
    %222 = arith.subf %218, %221 : vector<32x32xf32>
    %223 = math.exp %222 : vector<32x32xf32>
    %cst_64 = arith.constant dense<0.000000e+00> : vector<32xf32>
    %224 = vector.multi_reduction <add>, %223, %cst_64 [1] : vector<32x32xf32> to vector<32xf32>
    %225 = vector.shape_cast %224 : vector<32xf32> to vector<32x1xf32>
    %226 = tpu.reciprocal %225 {approx = true} : vector<32x1xf32> -> vector<32x1xf32>
    %227 = vector.broadcast %226 : vector<32x1xf32> to vector<32x32xf32>
    %228 = arith.mulf %223, %227 : vector<32x32xf32>
    %229 = arith.truncf %228 : vector<32x32xf32> to vector<32x32xbf16>
    %cst_65 = arith.constant dense<0.000000e+00> : vector<32x16xf32>
    %230 = tpu.matmul %229, %215, %cst_65 {dimension_numbers = #tpu.dot_dimension_numbers<[1], [0], [0], [1], [0, 0, 1, 1], [], []>} : vector<32x32xbf16>, vector<32x16xbf16>, vector<32x16xf32> -> vector<32x16xf32>
    %231 = vector.extract_strided_slice %9 {offsets = [32, 64], sizes = [32, 16], strides = [1, 1]} : vector<128x128xbf16> to vector<32x16xbf16>
    %232 = vector.extract_strided_slice %11 {offsets = [32, 64], sizes = [32, 16], strides = [1, 1]} : vector<128x128xbf16> to vector<32x16xbf16>
    %233 = vector.extract_strided_slice %13 {offsets = [32, 64], sizes = [32, 16], strides = [1, 1]} : vector<128x128xbf16> to vector<32x16xbf16>
    %cst_66 = arith.constant dense<0.000000e+00> : vector<32x32xf32>
    %234 = tpu.matmul %231, %232, %cst_66 {dimension_numbers = #tpu.dot_dimension_numbers<[1], [1], [0], [0], [0, 0, 1, 0], [], []>} : vector<32x16xbf16>, vector<32x16xbf16>, vector<32x32xf32> -> vector<32x32xf32>
    %cst_67 = arith.constant 2.500000e-01 : f32
    %235 = vector.broadcast %cst_67 : f32 to vector<32x32xf32>
    %236 = arith.mulf %234, %235 : vector<32x32xf32>
    %cst_68 = arith.constant dense<0xFF800000> : vector<32xf32>
    %237 = vector.multi_reduction <maximumf>, %236, %cst_68 [1] : vector<32x32xf32> to vector<32xf32>
    %238 = vector.shape_cast %237 : vector<32xf32> to vector<32x1xf32>
    %239 = vector.broadcast %238 : vector<32x1xf32> to vector<32x32xf32>
    %240 = arith.subf %236, %239 : vector<32x32xf32>
    %241 = math.exp %240 : vector<32x32xf32>
    %cst_69 = arith.constant dense<0.000000e+00> : vector<32xf32>
    %242 = vector.multi_reduction <add>, %241, %cst_69 [1] : vector<32x32xf32> to vector<32xf32>
    %243 = vector.shape_cast %242 : vector<32xf32> to vector<32x1xf32>
    %244 = tpu.reciprocal %243 {approx = true} : vector<32x1xf32> -> vector<32x1xf32>
    %245 = vector.broadcast %244 : vector<32x1xf32> to vector<32x32xf32>
    %246 = arith.mulf %241, %245 : vector<32x32xf32>
    %247 = arith.truncf %246 : vector<32x32xf32> to vector<32x32xbf16>
    %cst_70 = arith.constant dense<0.000000e+00> : vector<32x16xf32>
    %248 = tpu.matmul %247, %233, %cst_70 {dimension_numbers = #tpu.dot_dimension_numbers<[1], [0], [0], [1], [0, 0, 1, 1], [], []>} : vector<32x32xbf16>, vector<32x16xbf16>, vector<32x16xf32> -> vector<32x16xf32>
    %249 = vector.extract_strided_slice %9 {offsets = [32, 80], sizes = [32, 16], strides = [1, 1]} : vector<128x128xbf16> to vector<32x16xbf16>
    %250 = vector.extract_strided_slice %11 {offsets = [32, 80], sizes = [32, 16], strides = [1, 1]} : vector<128x128xbf16> to vector<32x16xbf16>
    %251 = vector.extract_strided_slice %13 {offsets = [32, 80], sizes = [32, 16], strides = [1, 1]} : vector<128x128xbf16> to vector<32x16xbf16>
    %cst_71 = arith.constant dense<0.000000e+00> : vector<32x32xf32>
    %252 = tpu.matmul %249, %250, %cst_71 {dimension_numbers = #tpu.dot_dimension_numbers<[1], [1], [0], [0], [0, 0, 1, 0], [], []>} : vector<32x16xbf16>, vector<32x16xbf16>, vector<32x32xf32> -> vector<32x32xf32>
    %cst_72 = arith.constant 2.500000e-01 : f32
    %253 = vector.broadcast %cst_72 : f32 to vector<32x32xf32>
    %254 = arith.mulf %252, %253 : vector<32x32xf32>
    %cst_73 = arith.constant dense<0xFF800000> : vector<32xf32>
    %255 = vector.multi_reduction <maximumf>, %254, %cst_73 [1] : vector<32x32xf32> to vector<32xf32>
    %256 = vector.shape_cast %255 : vector<32xf32> to vector<32x1xf32>
    %257 = vector.broadcast %256 : vector<32x1xf32> to vector<32x32xf32>
    %258 = arith.subf %254, %257 : vector<32x32xf32>
    %259 = math.exp %258 : vector<32x32xf32>
    %cst_74 = arith.constant dense<0.000000e+00> : vector<32xf32>
    %260 = vector.multi_reduction <add>, %259, %cst_74 [1] : vector<32x32xf32> to vector<32xf32>
    %261 = vector.shape_cast %260 : vector<32xf32> to vector<32x1xf32>
    %262 = tpu.reciprocal %261 {approx = true} : vector<32x1xf32> -> vector<32x1xf32>
    %263 = vector.broadcast %262 : vector<32x1xf32> to vector<32x32xf32>
    %264 = arith.mulf %259, %263 : vector<32x32xf32>
    %265 = arith.truncf %264 : vector<32x32xf32> to vector<32x32xbf16>
    %cst_75 = arith.constant dense<0.000000e+00> : vector<32x16xf32>
    %266 = tpu.matmul %265, %251, %cst_75 {dimension_numbers = #tpu.dot_dimension_numbers<[1], [0], [0], [1], [0, 0, 1, 1], [], []>} : vector<32x32xbf16>, vector<32x16xbf16>, vector<32x16xf32> -> vector<32x16xf32>
    %267 = vector.extract_strided_slice %9 {offsets = [32, 96], sizes = [32, 16], strides = [1, 1]} : vector<128x128xbf16> to vector<32x16xbf16>
    %268 = vector.extract_strided_slice %11 {offsets = [32, 96], sizes = [32, 16], strides = [1, 1]} : vector<128x128xbf16> to vector<32x16xbf16>
    %269 = vector.extract_strided_slice %13 {offsets = [32, 96], sizes = [32, 16], strides = [1, 1]} : vector<128x128xbf16> to vector<32x16xbf16>
    %cst_76 = arith.constant dense<0.000000e+00> : vector<32x32xf32>
    %270 = tpu.matmul %267, %268, %cst_76 {dimension_numbers = #tpu.dot_dimension_numbers<[1], [1], [0], [0], [0, 0, 1, 0], [], []>} : vector<32x16xbf16>, vector<32x16xbf16>, vector<32x32xf32> -> vector<32x32xf32>
    %cst_77 = arith.constant 2.500000e-01 : f32
    %271 = vector.broadcast %cst_77 : f32 to vector<32x32xf32>
    %272 = arith.mulf %270, %271 : vector<32x32xf32>
    %cst_78 = arith.constant dense<0xFF800000> : vector<32xf32>
    %273 = vector.multi_reduction <maximumf>, %272, %cst_78 [1] : vector<32x32xf32> to vector<32xf32>
    %274 = vector.shape_cast %273 : vector<32xf32> to vector<32x1xf32>
    %275 = vector.broadcast %274 : vector<32x1xf32> to vector<32x32xf32>
    %276 = arith.subf %272, %275 : vector<32x32xf32>
    %277 = math.exp %276 : vector<32x32xf32>
    %cst_79 = arith.constant dense<0.000000e+00> : vector<32xf32>
    %278 = vector.multi_reduction <add>, %277, %cst_79 [1] : vector<32x32xf32> to vector<32xf32>
    %279 = vector.shape_cast %278 : vector<32xf32> to vector<32x1xf32>
    %280 = tpu.reciprocal %279 {approx = true} : vector<32x1xf32> -> vector<32x1xf32>
    %281 = vector.broadcast %280 : vector<32x1xf32> to vector<32x32xf32>
    %282 = arith.mulf %277, %281 : vector<32x32xf32>
    %283 = arith.truncf %282 : vector<32x32xf32> to vector<32x32xbf16>
    %cst_80 = arith.constant dense<0.000000e+00> : vector<32x16xf32>
    %284 = tpu.matmul %283, %269, %cst_80 {dimension_numbers = #tpu.dot_dimension_numbers<[1], [0], [0], [1], [0, 0, 1, 1], [], []>} : vector<32x32xbf16>, vector<32x16xbf16>, vector<32x16xf32> -> vector<32x16xf32>
    %285 = vector.extract_strided_slice %9 {offsets = [32, 112], sizes = [32, 16], strides = [1, 1]} : vector<128x128xbf16> to vector<32x16xbf16>
    %286 = vector.extract_strided_slice %11 {offsets = [32, 112], sizes = [32, 16], strides = [1, 1]} : vector<128x128xbf16> to vector<32x16xbf16>
    %287 = vector.extract_strided_slice %13 {offsets = [32, 112], sizes = [32, 16], strides = [1, 1]} : vector<128x128xbf16> to vector<32x16xbf16>
    %cst_81 = arith.constant dense<0.000000e+00> : vector<32x32xf32>
    %288 = tpu.matmul %285, %286, %cst_81 {dimension_numbers = #tpu.dot_dimension_numbers<[1], [1], [0], [0], [0, 0, 1, 0], [], []>} : vector<32x16xbf16>, vector<32x16xbf16>, vector<32x32xf32> -> vector<32x32xf32>
    %cst_82 = arith.constant 2.500000e-01 : f32
    %289 = vector.broadcast %cst_82 : f32 to vector<32x32xf32>
    %290 = arith.mulf %288, %289 : vector<32x32xf32>
    %cst_83 = arith.constant dense<0xFF800000> : vector<32xf32>
    %291 = vector.multi_reduction <maximumf>, %290, %cst_83 [1] : vector<32x32xf32> to vector<32xf32>
    %292 = vector.shape_cast %291 : vector<32xf32> to vector<32x1xf32>
    %293 = vector.broadcast %292 : vector<32x1xf32> to vector<32x32xf32>
    %294 = arith.subf %290, %293 : vector<32x32xf32>
    %295 = math.exp %294 : vector<32x32xf32>
    %cst_84 = arith.constant dense<0.000000e+00> : vector<32xf32>
    %296 = vector.multi_reduction <add>, %295, %cst_84 [1] : vector<32x32xf32> to vector<32xf32>
    %297 = vector.shape_cast %296 : vector<32xf32> to vector<32x1xf32>
    %298 = tpu.reciprocal %297 {approx = true} : vector<32x1xf32> -> vector<32x1xf32>
    %299 = vector.broadcast %298 : vector<32x1xf32> to vector<32x32xf32>
    %300 = arith.mulf %295, %299 : vector<32x32xf32>
    %301 = arith.truncf %300 : vector<32x32xf32> to vector<32x32xbf16>
    %cst_85 = arith.constant dense<0.000000e+00> : vector<32x16xf32>
    %302 = tpu.matmul %301, %287, %cst_85 {dimension_numbers = #tpu.dot_dimension_numbers<[1], [0], [0], [1], [0, 0, 1, 1], [], []>} : vector<32x32xbf16>, vector<32x16xbf16>, vector<32x16xf32> -> vector<32x16xf32>
    %303 = tpu.concatenate %176, %194, %212, %230, %248, %266, %284, %302 in 1 : vector<32x16xf32>, vector<32x16xf32>, vector<32x16xf32>, vector<32x16xf32>, vector<32x16xf32>, vector<32x16xf32>, vector<32x16xf32>, vector<32x16xf32> -> vector<32x128xf32>
    %304 = vector.extract_strided_slice %9 {offsets = [64, 0], sizes = [32, 16], strides = [1, 1]} : vector<128x128xbf16> to vector<32x16xbf16>
    %305 = vector.extract_strided_slice %11 {offsets = [64, 0], sizes = [32, 16], strides = [1, 1]} : vector<128x128xbf16> to vector<32x16xbf16>
    %306 = vector.extract_strided_slice %13 {offsets = [64, 0], sizes = [32, 16], strides = [1, 1]} : vector<128x128xbf16> to vector<32x16xbf16>
    %cst_86 = arith.constant dense<0.000000e+00> : vector<32x32xf32>
    %307 = tpu.matmul %304, %305, %cst_86 {dimension_numbers = #tpu.dot_dimension_numbers<[1], [1], [0], [0], [0, 0, 1, 0], [], []>} : vector<32x16xbf16>, vector<32x16xbf16>, vector<32x32xf32> -> vector<32x32xf32>
    %cst_87 = arith.constant 2.500000e-01 : f32
    %308 = vector.broadcast %cst_87 : f32 to vector<32x32xf32>
    %309 = arith.mulf %307, %308 : vector<32x32xf32>
    %cst_88 = arith.constant dense<0xFF800000> : vector<32xf32>
    %310 = vector.multi_reduction <maximumf>, %309, %cst_88 [1] : vector<32x32xf32> to vector<32xf32>
    %311 = vector.shape_cast %310 : vector<32xf32> to vector<32x1xf32>
    %312 = vector.broadcast %311 : vector<32x1xf32> to vector<32x32xf32>
    %313 = arith.subf %309, %312 : vector<32x32xf32>
    %314 = math.exp %313 : vector<32x32xf32>
    %cst_89 = arith.constant dense<0.000000e+00> : vector<32xf32>
    %315 = vector.multi_reduction <add>, %314, %cst_89 [1] : vector<32x32xf32> to vector<32xf32>
    %316 = vector.shape_cast %315 : vector<32xf32> to vector<32x1xf32>
    %317 = tpu.reciprocal %316 {approx = true} : vector<32x1xf32> -> vector<32x1xf32>
    %318 = vector.broadcast %317 : vector<32x1xf32> to vector<32x32xf32>
    %319 = arith.mulf %314, %318 : vector<32x32xf32>
    %320 = arith.truncf %319 : vector<32x32xf32> to vector<32x32xbf16>
    %cst_90 = arith.constant dense<0.000000e+00> : vector<32x16xf32>
    %321 = tpu.matmul %320, %306, %cst_90 {dimension_numbers = #tpu.dot_dimension_numbers<[1], [0], [0], [1], [0, 0, 1, 1], [], []>} : vector<32x32xbf16>, vector<32x16xbf16>, vector<32x16xf32> -> vector<32x16xf32>
    %322 = vector.extract_strided_slice %9 {offsets = [64, 16], sizes = [32, 16], strides = [1, 1]} : vector<128x128xbf16> to vector<32x16xbf16>
    %323 = vector.extract_strided_slice %11 {offsets = [64, 16], sizes = [32, 16], strides = [1, 1]} : vector<128x128xbf16> to vector<32x16xbf16>
    %324 = vector.extract_strided_slice %13 {offsets = [64, 16], sizes = [32, 16], strides = [1, 1]} : vector<128x128xbf16> to vector<32x16xbf16>
    %cst_91 = arith.constant dense<0.000000e+00> : vector<32x32xf32>
    %325 = tpu.matmul %322, %323, %cst_91 {dimension_numbers = #tpu.dot_dimension_numbers<[1], [1], [0], [0], [0, 0, 1, 0], [], []>} : vector<32x16xbf16>, vector<32x16xbf16>, vector<32x32xf32> -> vector<32x32xf32>
    %cst_92 = arith.constant 2.500000e-01 : f32
    %326 = vector.broadcast %cst_92 : f32 to vector<32x32xf32>
    %327 = arith.mulf %325, %326 : vector<32x32xf32>
    %cst_93 = arith.constant dense<0xFF800000> : vector<32xf32>
    %328 = vector.multi_reduction <maximumf>, %327, %cst_93 [1] : vector<32x32xf32> to vector<32xf32>
    %329 = vector.shape_cast %328 : vector<32xf32> to vector<32x1xf32>
    %330 = vector.broadcast %329 : vector<32x1xf32> to vector<32x32xf32>
    %331 = arith.subf %327, %330 : vector<32x32xf32>
    %332 = math.exp %331 : vector<32x32xf32>
    %cst_94 = arith.constant dense<0.000000e+00> : vector<32xf32>
    %333 = vector.multi_reduction <add>, %332, %cst_94 [1] : vector<32x32xf32> to vector<32xf32>
    %334 = vector.shape_cast %333 : vector<32xf32> to vector<32x1xf32>
    %335 = tpu.reciprocal %334 {approx = true} : vector<32x1xf32> -> vector<32x1xf32>
    %336 = vector.broadcast %335 : vector<32x1xf32> to vector<32x32xf32>
    %337 = arith.mulf %332, %336 : vector<32x32xf32>
    %338 = arith.truncf %337 : vector<32x32xf32> to vector<32x32xbf16>
    %cst_95 = arith.constant dense<0.000000e+00> : vector<32x16xf32>
    %339 = tpu.matmul %338, %324, %cst_95 {dimension_numbers = #tpu.dot_dimension_numbers<[1], [0], [0], [1], [0, 0, 1, 1], [], []>} : vector<32x32xbf16>, vector<32x16xbf16>, vector<32x16xf32> -> vector<32x16xf32>
    %340 = vector.extract_strided_slice %9 {offsets = [64, 32], sizes = [32, 16], strides = [1, 1]} : vector<128x128xbf16> to vector<32x16xbf16>
    %341 = vector.extract_strided_slice %11 {offsets = [64, 32], sizes = [32, 16], strides = [1, 1]} : vector<128x128xbf16> to vector<32x16xbf16>
    %342 = vector.extract_strided_slice %13 {offsets = [64, 32], sizes = [32, 16], strides = [1, 1]} : vector<128x128xbf16> to vector<32x16xbf16>
    %cst_96 = arith.constant dense<0.000000e+00> : vector<32x32xf32>
    %343 = tpu.matmul %340, %341, %cst_96 {dimension_numbers = #tpu.dot_dimension_numbers<[1], [1], [0], [0], [0, 0, 1, 0], [], []>} : vector<32x16xbf16>, vector<32x16xbf16>, vector<32x32xf32> -> vector<32x32xf32>
    %cst_97 = arith.constant 2.500000e-01 : f32
    %344 = vector.broadcast %cst_97 : f32 to vector<32x32xf32>
    %345 = arith.mulf %343, %344 : vector<32x32xf32>
    %cst_98 = arith.constant dense<0xFF800000> : vector<32xf32>
    %346 = vector.multi_reduction <maximumf>, %345, %cst_98 [1] : vector<32x32xf32> to vector<32xf32>
    %347 = vector.shape_cast %346 : vector<32xf32> to vector<32x1xf32>
    %348 = vector.broadcast %347 : vector<32x1xf32> to vector<32x32xf32>
    %349 = arith.subf %345, %348 : vector<32x32xf32>
    %350 = math.exp %349 : vector<32x32xf32>
    %cst_99 = arith.constant dense<0.000000e+00> : vector<32xf32>
    %351 = vector.multi_reduction <add>, %350, %cst_99 [1] : vector<32x32xf32> to vector<32xf32>
    %352 = vector.shape_cast %351 : vector<32xf32> to vector<32x1xf32>
    %353 = tpu.reciprocal %352 {approx = true} : vector<32x1xf32> -> vector<32x1xf32>
    %354 = vector.broadcast %353 : vector<32x1xf32> to vector<32x32xf32>
    %355 = arith.mulf %350, %354 : vector<32x32xf32>
    %356 = arith.truncf %355 : vector<32x32xf32> to vector<32x32xbf16>
    %cst_100 = arith.constant dense<0.000000e+00> : vector<32x16xf32>
    %357 = tpu.matmul %356, %342, %cst_100 {dimension_numbers = #tpu.dot_dimension_numbers<[1], [0], [0], [1], [0, 0, 1, 1], [], []>} : vector<32x32xbf16>, vector<32x16xbf16>, vector<32x16xf32> -> vector<32x16xf32>
    %358 = vector.extract_strided_slice %9 {offsets = [64, 48], sizes = [32, 16], strides = [1, 1]} : vector<128x128xbf16> to vector<32x16xbf16>
    %359 = vector.extract_strided_slice %11 {offsets = [64, 48], sizes = [32, 16], strides = [1, 1]} : vector<128x128xbf16> to vector<32x16xbf16>
    %360 = vector.extract_strided_slice %13 {offsets = [64, 48], sizes = [32, 16], strides = [1, 1]} : vector<128x128xbf16> to vector<32x16xbf16>
    %cst_101 = arith.constant dense<0.000000e+00> : vector<32x32xf32>
    %361 = tpu.matmul %358, %359, %cst_101 {dimension_numbers = #tpu.dot_dimension_numbers<[1], [1], [0], [0], [0, 0, 1, 0], [], []>} : vector<32x16xbf16>, vector<32x16xbf16>, vector<32x32xf32> -> vector<32x32xf32>
    %cst_102 = arith.constant 2.500000e-01 : f32
    %362 = vector.broadcast %cst_102 : f32 to vector<32x32xf32>
    %363 = arith.mulf %361, %362 : vector<32x32xf32>
    %cst_103 = arith.constant dense<0xFF800000> : vector<32xf32>
    %364 = vector.multi_reduction <maximumf>, %363, %cst_103 [1] : vector<32x32xf32> to vector<32xf32>
    %365 = vector.shape_cast %364 : vector<32xf32> to vector<32x1xf32>
    %366 = vector.broadcast %365 : vector<32x1xf32> to vector<32x32xf32>
    %367 = arith.subf %363, %366 : vector<32x32xf32>
    %368 = math.exp %367 : vector<32x32xf32>
    %cst_104 = arith.constant dense<0.000000e+00> : vector<32xf32>
    %369 = vector.multi_reduction <add>, %368, %cst_104 [1] : vector<32x32xf32> to vector<32xf32>
    %370 = vector.shape_cast %369 : vector<32xf32> to vector<32x1xf32>
    %371 = tpu.reciprocal %370 {approx = true} : vector<32x1xf32> -> vector<32x1xf32>
    %372 = vector.broadcast %371 : vector<32x1xf32> to vector<32x32xf32>
    %373 = arith.mulf %368, %372 : vector<32x32xf32>
    %374 = arith.truncf %373 : vector<32x32xf32> to vector<32x32xbf16>
    %cst_105 = arith.constant dense<0.000000e+00> : vector<32x16xf32>
    %375 = tpu.matmul %374, %360, %cst_105 {dimension_numbers = #tpu.dot_dimension_numbers<[1], [0], [0], [1], [0, 0, 1, 1], [], []>} : vector<32x32xbf16>, vector<32x16xbf16>, vector<32x16xf32> -> vector<32x16xf32>
    %376 = vector.extract_strided_slice %9 {offsets = [64, 64], sizes = [32, 16], strides = [1, 1]} : vector<128x128xbf16> to vector<32x16xbf16>
    %377 = vector.extract_strided_slice %11 {offsets = [64, 64], sizes = [32, 16], strides = [1, 1]} : vector<128x128xbf16> to vector<32x16xbf16>
    %378 = vector.extract_strided_slice %13 {offsets = [64, 64], sizes = [32, 16], strides = [1, 1]} : vector<128x128xbf16> to vector<32x16xbf16>
    %cst_106 = arith.constant dense<0.000000e+00> : vector<32x32xf32>
    %379 = tpu.matmul %376, %377, %cst_106 {dimension_numbers = #tpu.dot_dimension_numbers<[1], [1], [0], [0], [0, 0, 1, 0], [], []>} : vector<32x16xbf16>, vector<32x16xbf16>, vector<32x32xf32> -> vector<32x32xf32>
    %cst_107 = arith.constant 2.500000e-01 : f32
    %380 = vector.broadcast %cst_107 : f32 to vector<32x32xf32>
    %381 = arith.mulf %379, %380 : vector<32x32xf32>
    %cst_108 = arith.constant dense<0xFF800000> : vector<32xf32>
    %382 = vector.multi_reduction <maximumf>, %381, %cst_108 [1] : vector<32x32xf32> to vector<32xf32>
    %383 = vector.shape_cast %382 : vector<32xf32> to vector<32x1xf32>
    %384 = vector.broadcast %383 : vector<32x1xf32> to vector<32x32xf32>
    %385 = arith.subf %381, %384 : vector<32x32xf32>
    %386 = math.exp %385 : vector<32x32xf32>
    %cst_109 = arith.constant dense<0.000000e+00> : vector<32xf32>
    %387 = vector.multi_reduction <add>, %386, %cst_109 [1] : vector<32x32xf32> to vector<32xf32>
    %388 = vector.shape_cast %387 : vector<32xf32> to vector<32x1xf32>
    %389 = tpu.reciprocal %388 {approx = true} : vector<32x1xf32> -> vector<32x1xf32>
    %390 = vector.broadcast %389 : vector<32x1xf32> to vector<32x32xf32>
    %391 = arith.mulf %386, %390 : vector<32x32xf32>
    %392 = arith.truncf %391 : vector<32x32xf32> to vector<32x32xbf16>
    %cst_110 = arith.constant dense<0.000000e+00> : vector<32x16xf32>
    %393 = tpu.matmul %392, %378, %cst_110 {dimension_numbers = #tpu.dot_dimension_numbers<[1], [0], [0], [1], [0, 0, 1, 1], [], []>} : vector<32x32xbf16>, vector<32x16xbf16>, vector<32x16xf32> -> vector<32x16xf32>
    %394 = vector.extract_strided_slice %9 {offsets = [64, 80], sizes = [32, 16], strides = [1, 1]} : vector<128x128xbf16> to vector<32x16xbf16>
    %395 = vector.extract_strided_slice %11 {offsets = [64, 80], sizes = [32, 16], strides = [1, 1]} : vector<128x128xbf16> to vector<32x16xbf16>
    %396 = vector.extract_strided_slice %13 {offsets = [64, 80], sizes = [32, 16], strides = [1, 1]} : vector<128x128xbf16> to vector<32x16xbf16>
    %cst_111 = arith.constant dense<0.000000e+00> : vector<32x32xf32>
    %397 = tpu.matmul %394, %395, %cst_111 {dimension_numbers = #tpu.dot_dimension_numbers<[1], [1], [0], [0], [0, 0, 1, 0], [], []>} : vector<32x16xbf16>, vector<32x16xbf16>, vector<32x32xf32> -> vector<32x32xf32>
    %cst_112 = arith.constant 2.500000e-01 : f32
    %398 = vector.broadcast %cst_112 : f32 to vector<32x32xf32>
    %399 = arith.mulf %397, %398 : vector<32x32xf32>
    %cst_113 = arith.constant dense<0xFF800000> : vector<32xf32>
    %400 = vector.multi_reduction <maximumf>, %399, %cst_113 [1] : vector<32x32xf32> to vector<32xf32>
    %401 = vector.shape_cast %400 : vector<32xf32> to vector<32x1xf32>
    %402 = vector.broadcast %401 : vector<32x1xf32> to vector<32x32xf32>
    %403 = arith.subf %399, %402 : vector<32x32xf32>
    %404 = math.exp %403 : vector<32x32xf32>
    %cst_114 = arith.constant dense<0.000000e+00> : vector<32xf32>
    %405 = vector.multi_reduction <add>, %404, %cst_114 [1] : vector<32x32xf32> to vector<32xf32>
    %406 = vector.shape_cast %405 : vector<32xf32> to vector<32x1xf32>
    %407 = tpu.reciprocal %406 {approx = true} : vector<32x1xf32> -> vector<32x1xf32>
    %408 = vector.broadcast %407 : vector<32x1xf32> to vector<32x32xf32>
    %409 = arith.mulf %404, %408 : vector<32x32xf32>
    %410 = arith.truncf %409 : vector<32x32xf32> to vector<32x32xbf16>
    %cst_115 = arith.constant dense<0.000000e+00> : vector<32x16xf32>
    %411 = tpu.matmul %410, %396, %cst_115 {dimension_numbers = #tpu.dot_dimension_numbers<[1], [0], [0], [1], [0, 0, 1, 1], [], []>} : vector<32x32xbf16>, vector<32x16xbf16>, vector<32x16xf32> -> vector<32x16xf32>
    %412 = vector.extract_strided_slice %9 {offsets = [64, 96], sizes = [32, 16], strides = [1, 1]} : vector<128x128xbf16> to vector<32x16xbf16>
    %413 = vector.extract_strided_slice %11 {offsets = [64, 96], sizes = [32, 16], strides = [1, 1]} : vector<128x128xbf16> to vector<32x16xbf16>
    %414 = vector.extract_strided_slice %13 {offsets = [64, 96], sizes = [32, 16], strides = [1, 1]} : vector<128x128xbf16> to vector<32x16xbf16>
    %cst_116 = arith.constant dense<0.000000e+00> : vector<32x32xf32>
    %415 = tpu.matmul %412, %413, %cst_116 {dimension_numbers = #tpu.dot_dimension_numbers<[1], [1], [0], [0], [0, 0, 1, 0], [], []>} : vector<32x16xbf16>, vector<32x16xbf16>, vector<32x32xf32> -> vector<32x32xf32>
    %cst_117 = arith.constant 2.500000e-01 : f32
    %416 = vector.broadcast %cst_117 : f32 to vector<32x32xf32>
    %417 = arith.mulf %415, %416 : vector<32x32xf32>
    %cst_118 = arith.constant dense<0xFF800000> : vector<32xf32>
    %418 = vector.multi_reduction <maximumf>, %417, %cst_118 [1] : vector<32x32xf32> to vector<32xf32>
    %419 = vector.shape_cast %418 : vector<32xf32> to vector<32x1xf32>
    %420 = vector.broadcast %419 : vector<32x1xf32> to vector<32x32xf32>
    %421 = arith.subf %417, %420 : vector<32x32xf32>
    %422 = math.exp %421 : vector<32x32xf32>
    %cst_119 = arith.constant dense<0.000000e+00> : vector<32xf32>
    %423 = vector.multi_reduction <add>, %422, %cst_119 [1] : vector<32x32xf32> to vector<32xf32>
    %424 = vector.shape_cast %423 : vector<32xf32> to vector<32x1xf32>
    %425 = tpu.reciprocal %424 {approx = true} : vector<32x1xf32> -> vector<32x1xf32>
    %426 = vector.broadcast %425 : vector<32x1xf32> to vector<32x32xf32>
    %427 = arith.mulf %422, %426 : vector<32x32xf32>
    %428 = arith.truncf %427 : vector<32x32xf32> to vector<32x32xbf16>
    %cst_120 = arith.constant dense<0.000000e+00> : vector<32x16xf32>
    %429 = tpu.matmul %428, %414, %cst_120 {dimension_numbers = #tpu.dot_dimension_numbers<[1], [0], [0], [1], [0, 0, 1, 1], [], []>} : vector<32x32xbf16>, vector<32x16xbf16>, vector<32x16xf32> -> vector<32x16xf32>
    %430 = vector.extract_strided_slice %9 {offsets = [64, 112], sizes = [32, 16], strides = [1, 1]} : vector<128x128xbf16> to vector<32x16xbf16>
    %431 = vector.extract_strided_slice %11 {offsets = [64, 112], sizes = [32, 16], strides = [1, 1]} : vector<128x128xbf16> to vector<32x16xbf16>
    %432 = vector.extract_strided_slice %13 {offsets = [64, 112], sizes = [32, 16], strides = [1, 1]} : vector<128x128xbf16> to vector<32x16xbf16>
    %cst_121 = arith.constant dense<0.000000e+00> : vector<32x32xf32>
    %433 = tpu.matmul %430, %431, %cst_121 {dimension_numbers = #tpu.dot_dimension_numbers<[1], [1], [0], [0], [0, 0, 1, 0], [], []>} : vector<32x16xbf16>, vector<32x16xbf16>, vector<32x32xf32> -> vector<32x32xf32>
    %cst_122 = arith.constant 2.500000e-01 : f32
    %434 = vector.broadcast %cst_122 : f32 to vector<32x32xf32>
    %435 = arith.mulf %433, %434 : vector<32x32xf32>
    %cst_123 = arith.constant dense<0xFF800000> : vector<32xf32>
    %436 = vector.multi_reduction <maximumf>, %435, %cst_123 [1] : vector<32x32xf32> to vector<32xf32>
    %437 = vector.shape_cast %436 : vector<32xf32> to vector<32x1xf32>
    %438 = vector.broadcast %437 : vector<32x1xf32> to vector<32x32xf32>
    %439 = arith.subf %435, %438 : vector<32x32xf32>
    %440 = math.exp %439 : vector<32x32xf32>
    %cst_124 = arith.constant dense<0.000000e+00> : vector<32xf32>
    %441 = vector.multi_reduction <add>, %440, %cst_124 [1] : vector<32x32xf32> to vector<32xf32>
    %442 = vector.shape_cast %441 : vector<32xf32> to vector<32x1xf32>
    %443 = tpu.reciprocal %442 {approx = true} : vector<32x1xf32> -> vector<32x1xf32>
    %444 = vector.broadcast %443 : vector<32x1xf32> to vector<32x32xf32>
    %445 = arith.mulf %440, %444 : vector<32x32xf32>
    %446 = arith.truncf %445 : vector<32x32xf32> to vector<32x32xbf16>
    %cst_125 = arith.constant dense<0.000000e+00> : vector<32x16xf32>
    %447 = tpu.matmul %446, %432, %cst_125 {dimension_numbers = #tpu.dot_dimension_numbers<[1], [0], [0], [1], [0, 0, 1, 1], [], []>} : vector<32x32xbf16>, vector<32x16xbf16>, vector<32x16xf32> -> vector<32x16xf32>
    %448 = tpu.concatenate %321, %339, %357, %375, %393, %411, %429, %447 in 1 : vector<32x16xf32>, vector<32x16xf32>, vector<32x16xf32>, vector<32x16xf32>, vector<32x16xf32>, vector<32x16xf32>, vector<32x16xf32>, vector<32x16xf32> -> vector<32x128xf32>
    %449 = vector.extract_strided_slice %9 {offsets = [96, 0], sizes = [32, 16], strides = [1, 1]} : vector<128x128xbf16> to vector<32x16xbf16>
    %450 = vector.extract_strided_slice %11 {offsets = [96, 0], sizes = [32, 16], strides = [1, 1]} : vector<128x128xbf16> to vector<32x16xbf16>
    %451 = vector.extract_strided_slice %13 {offsets = [96, 0], sizes = [32, 16], strides = [1, 1]} : vector<128x128xbf16> to vector<32x16xbf16>
    %cst_126 = arith.constant dense<0.000000e+00> : vector<32x32xf32>
    %452 = tpu.matmul %449, %450, %cst_126 {dimension_numbers = #tpu.dot_dimension_numbers<[1], [1], [0], [0], [0, 0, 1, 0], [], []>} : vector<32x16xbf16>, vector<32x16xbf16>, vector<32x32xf32> -> vector<32x32xf32>
    %cst_127 = arith.constant 2.500000e-01 : f32
    %453 = vector.broadcast %cst_127 : f32 to vector<32x32xf32>
    %454 = arith.mulf %452, %453 : vector<32x32xf32>
    %cst_128 = arith.constant dense<0xFF800000> : vector<32xf32>
    %455 = vector.multi_reduction <maximumf>, %454, %cst_128 [1] : vector<32x32xf32> to vector<32xf32>
    %456 = vector.shape_cast %455 : vector<32xf32> to vector<32x1xf32>
    %457 = vector.broadcast %456 : vector<32x1xf32> to vector<32x32xf32>
    %458 = arith.subf %454, %457 : vector<32x32xf32>
    %459 = math.exp %458 : vector<32x32xf32>
    %cst_129 = arith.constant dense<0.000000e+00> : vector<32xf32>
    %460 = vector.multi_reduction <add>, %459, %cst_129 [1] : vector<32x32xf32> to vector<32xf32>
    %461 = vector.shape_cast %460 : vector<32xf32> to vector<32x1xf32>
    %462 = tpu.reciprocal %461 {approx = true} : vector<32x1xf32> -> vector<32x1xf32>
    %463 = vector.broadcast %462 : vector<32x1xf32> to vector<32x32xf32>
    %464 = arith.mulf %459, %463 : vector<32x32xf32>
    %465 = arith.truncf %464 : vector<32x32xf32> to vector<32x32xbf16>
    %cst_130 = arith.constant dense<0.000000e+00> : vector<32x16xf32>
    %466 = tpu.matmul %465, %451, %cst_130 {dimension_numbers = #tpu.dot_dimension_numbers<[1], [0], [0], [1], [0, 0, 1, 1], [], []>} : vector<32x32xbf16>, vector<32x16xbf16>, vector<32x16xf32> -> vector<32x16xf32>
    %467 = vector.extract_strided_slice %9 {offsets = [96, 16], sizes = [32, 16], strides = [1, 1]} : vector<128x128xbf16> to vector<32x16xbf16>
    %468 = vector.extract_strided_slice %11 {offsets = [96, 16], sizes = [32, 16], strides = [1, 1]} : vector<128x128xbf16> to vector<32x16xbf16>
    %469 = vector.extract_strided_slice %13 {offsets = [96, 16], sizes = [32, 16], strides = [1, 1]} : vector<128x128xbf16> to vector<32x16xbf16>
    %cst_131 = arith.constant dense<0.000000e+00> : vector<32x32xf32>
    %470 = tpu.matmul %467, %468, %cst_131 {dimension_numbers = #tpu.dot_dimension_numbers<[1], [1], [0], [0], [0, 0, 1, 0], [], []>} : vector<32x16xbf16>, vector<32x16xbf16>, vector<32x32xf32> -> vector<32x32xf32>
    %cst_132 = arith.constant 2.500000e-01 : f32
    %471 = vector.broadcast %cst_132 : f32 to vector<32x32xf32>
    %472 = arith.mulf %470, %471 : vector<32x32xf32>
    %cst_133 = arith.constant dense<0xFF800000> : vector<32xf32>
    %473 = vector.multi_reduction <maximumf>, %472, %cst_133 [1] : vector<32x32xf32> to vector<32xf32>
    %474 = vector.shape_cast %473 : vector<32xf32> to vector<32x1xf32>
    %475 = vector.broadcast %474 : vector<32x1xf32> to vector<32x32xf32>
    %476 = arith.subf %472, %475 : vector<32x32xf32>
    %477 = math.exp %476 : vector<32x32xf32>
    %cst_134 = arith.constant dense<0.000000e+00> : vector<32xf32>
    %478 = vector.multi_reduction <add>, %477, %cst_134 [1] : vector<32x32xf32> to vector<32xf32>
    %479 = vector.shape_cast %478 : vector<32xf32> to vector<32x1xf32>
    %480 = tpu.reciprocal %479 {approx = true} : vector<32x1xf32> -> vector<32x1xf32>
    %481 = vector.broadcast %480 : vector<32x1xf32> to vector<32x32xf32>
    %482 = arith.mulf %477, %481 : vector<32x32xf32>
    %483 = arith.truncf %482 : vector<32x32xf32> to vector<32x32xbf16>
    %cst_135 = arith.constant dense<0.000000e+00> : vector<32x16xf32>
    %484 = tpu.matmul %483, %469, %cst_135 {dimension_numbers = #tpu.dot_dimension_numbers<[1], [0], [0], [1], [0, 0, 1, 1], [], []>} : vector<32x32xbf16>, vector<32x16xbf16>, vector<32x16xf32> -> vector<32x16xf32>
    %485 = vector.extract_strided_slice %9 {offsets = [96, 32], sizes = [32, 16], strides = [1, 1]} : vector<128x128xbf16> to vector<32x16xbf16>
    %486 = vector.extract_strided_slice %11 {offsets = [96, 32], sizes = [32, 16], strides = [1, 1]} : vector<128x128xbf16> to vector<32x16xbf16>
    %487 = vector.extract_strided_slice %13 {offsets = [96, 32], sizes = [32, 16], strides = [1, 1]} : vector<128x128xbf16> to vector<32x16xbf16>
    %cst_136 = arith.constant dense<0.000000e+00> : vector<32x32xf32>
    %488 = tpu.matmul %485, %486, %cst_136 {dimension_numbers = #tpu.dot_dimension_numbers<[1], [1], [0], [0], [0, 0, 1, 0], [], []>} : vector<32x16xbf16>, vector<32x16xbf16>, vector<32x32xf32> -> vector<32x32xf32>
    %cst_137 = arith.constant 2.500000e-01 : f32
    %489 = vector.broadcast %cst_137 : f32 to vector<32x32xf32>
    %490 = arith.mulf %488, %489 : vector<32x32xf32>
    %cst_138 = arith.constant dense<0xFF800000> : vector<32xf32>
    %491 = vector.multi_reduction <maximumf>, %490, %cst_138 [1] : vector<32x32xf32> to vector<32xf32>
    %492 = vector.shape_cast %491 : vector<32xf32> to vector<32x1xf32>
    %493 = vector.broadcast %492 : vector<32x1xf32> to vector<32x32xf32>
    %494 = arith.subf %490, %493 : vector<32x32xf32>
    %495 = math.exp %494 : vector<32x32xf32>
    %cst_139 = arith.constant dense<0.000000e+00> : vector<32xf32>
    %496 = vector.multi_reduction <add>, %495, %cst_139 [1] : vector<32x32xf32> to vector<32xf32>
    %497 = vector.shape_cast %496 : vector<32xf32> to vector<32x1xf32>
    %498 = tpu.reciprocal %497 {approx = true} : vector<32x1xf32> -> vector<32x1xf32>
    %499 = vector.broadcast %498 : vector<32x1xf32> to vector<32x32xf32>
    %500 = arith.mulf %495, %499 : vector<32x32xf32>
    %501 = arith.truncf %500 : vector<32x32xf32> to vector<32x32xbf16>
    %cst_140 = arith.constant dense<0.000000e+00> : vector<32x16xf32>
    %502 = tpu.matmul %501, %487, %cst_140 {dimension_numbers = #tpu.dot_dimension_numbers<[1], [0], [0], [1], [0, 0, 1, 1], [], []>} : vector<32x32xbf16>, vector<32x16xbf16>, vector<32x16xf32> -> vector<32x16xf32>
    %503 = vector.extract_strided_slice %9 {offsets = [96, 48], sizes = [32, 16], strides = [1, 1]} : vector<128x128xbf16> to vector<32x16xbf16>
    %504 = vector.extract_strided_slice %11 {offsets = [96, 48], sizes = [32, 16], strides = [1, 1]} : vector<128x128xbf16> to vector<32x16xbf16>
    %505 = vector.extract_strided_slice %13 {offsets = [96, 48], sizes = [32, 16], strides = [1, 1]} : vector<128x128xbf16> to vector<32x16xbf16>
    %cst_141 = arith.constant dense<0.000000e+00> : vector<32x32xf32>
    %506 = tpu.matmul %503, %504, %cst_141 {dimension_numbers = #tpu.dot_dimension_numbers<[1], [1], [0], [0], [0, 0, 1, 0], [], []>} : vector<32x16xbf16>, vector<32x16xbf16>, vector<32x32xf32> -> vector<32x32xf32>
    %cst_142 = arith.constant 2.500000e-01 : f32
    %507 = vector.broadcast %cst_142 : f32 to vector<32x32xf32>
    %508 = arith.mulf %506, %507 : vector<32x32xf32>
    %cst_143 = arith.constant dense<0xFF800000> : vector<32xf32>
    %509 = vector.multi_reduction <maximumf>, %508, %cst_143 [1] : vector<32x32xf32> to vector<32xf32>
    %510 = vector.shape_cast %509 : vector<32xf32> to vector<32x1xf32>
    %511 = vector.broadcast %510 : vector<32x1xf32> to vector<32x32xf32>
    %512 = arith.subf %508, %511 : vector<32x32xf32>
    %513 = math.exp %512 : vector<32x32xf32>
    %cst_144 = arith.constant dense<0.000000e+00> : vector<32xf32>
    %514 = vector.multi_reduction <add>, %513, %cst_144 [1] : vector<32x32xf32> to vector<32xf32>
    %515 = vector.shape_cast %514 : vector<32xf32> to vector<32x1xf32>
    %516 = tpu.reciprocal %515 {approx = true} : vector<32x1xf32> -> vector<32x1xf32>
    %517 = vector.broadcast %516 : vector<32x1xf32> to vector<32x32xf32>
    %518 = arith.mulf %513, %517 : vector<32x32xf32>
    %519 = arith.truncf %518 : vector<32x32xf32> to vector<32x32xbf16>
    %cst_145 = arith.constant dense<0.000000e+00> : vector<32x16xf32>
    %520 = tpu.matmul %519, %505, %cst_145 {dimension_numbers = #tpu.dot_dimension_numbers<[1], [0], [0], [1], [0, 0, 1, 1], [], []>} : vector<32x32xbf16>, vector<32x16xbf16>, vector<32x16xf32> -> vector<32x16xf32>
    %521 = vector.extract_strided_slice %9 {offsets = [96, 64], sizes = [32, 16], strides = [1, 1]} : vector<128x128xbf16> to vector<32x16xbf16>
    %522 = vector.extract_strided_slice %11 {offsets = [96, 64], sizes = [32, 16], strides = [1, 1]} : vector<128x128xbf16> to vector<32x16xbf16>
    %523 = vector.extract_strided_slice %13 {offsets = [96, 64], sizes = [32, 16], strides = [1, 1]} : vector<128x128xbf16> to vector<32x16xbf16>
    %cst_146 = arith.constant dense<0.000000e+00> : vector<32x32xf32>
    %524 = tpu.matmul %521, %522, %cst_146 {dimension_numbers = #tpu.dot_dimension_numbers<[1], [1], [0], [0], [0, 0, 1, 0], [], []>} : vector<32x16xbf16>, vector<32x16xbf16>, vector<32x32xf32> -> vector<32x32xf32>
    %cst_147 = arith.constant 2.500000e-01 : f32
    %525 = vector.broadcast %cst_147 : f32 to vector<32x32xf32>
    %526 = arith.mulf %524, %525 : vector<32x32xf32>
    %cst_148 = arith.constant dense<0xFF800000> : vector<32xf32>
    %527 = vector.multi_reduction <maximumf>, %526, %cst_148 [1] : vector<32x32xf32> to vector<32xf32>
    %528 = vector.shape_cast %527 : vector<32xf32> to vector<32x1xf32>
    %529 = vector.broadcast %528 : vector<32x1xf32> to vector<32x32xf32>
    %530 = arith.subf %526, %529 : vector<32x32xf32>
    %531 = math.exp %530 : vector<32x32xf32>
    %cst_149 = arith.constant dense<0.000000e+00> : vector<32xf32>
    %532 = vector.multi_reduction <add>, %531, %cst_149 [1] : vector<32x32xf32> to vector<32xf32>
    %533 = vector.shape_cast %532 : vector<32xf32> to vector<32x1xf32>
    %534 = tpu.reciprocal %533 {approx = true} : vector<32x1xf32> -> vector<32x1xf32>
    %535 = vector.broadcast %534 : vector<32x1xf32> to vector<32x32xf32>
    %536 = arith.mulf %531, %535 : vector<32x32xf32>
    %537 = arith.truncf %536 : vector<32x32xf32> to vector<32x32xbf16>
    %cst_150 = arith.constant dense<0.000000e+00> : vector<32x16xf32>
    %538 = tpu.matmul %537, %523, %cst_150 {dimension_numbers = #tpu.dot_dimension_numbers<[1], [0], [0], [1], [0, 0, 1, 1], [], []>} : vector<32x32xbf16>, vector<32x16xbf16>, vector<32x16xf32> -> vector<32x16xf32>
    %539 = vector.extract_strided_slice %9 {offsets = [96, 80], sizes = [32, 16], strides = [1, 1]} : vector<128x128xbf16> to vector<32x16xbf16>
    %540 = vector.extract_strided_slice %11 {offsets = [96, 80], sizes = [32, 16], strides = [1, 1]} : vector<128x128xbf16> to vector<32x16xbf16>
    %541 = vector.extract_strided_slice %13 {offsets = [96, 80], sizes = [32, 16], strides = [1, 1]} : vector<128x128xbf16> to vector<32x16xbf16>
    %cst_151 = arith.constant dense<0.000000e+00> : vector<32x32xf32>
    %542 = tpu.matmul %539, %540, %cst_151 {dimension_numbers = #tpu.dot_dimension_numbers<[1], [1], [0], [0], [0, 0, 1, 0], [], []>} : vector<32x16xbf16>, vector<32x16xbf16>, vector<32x32xf32> -> vector<32x32xf32>
    %cst_152 = arith.constant 2.500000e-01 : f32
    %543 = vector.broadcast %cst_152 : f32 to vector<32x32xf32>
    %544 = arith.mulf %542, %543 : vector<32x32xf32>
    %cst_153 = arith.constant dense<0xFF800000> : vector<32xf32>
    %545 = vector.multi_reduction <maximumf>, %544, %cst_153 [1] : vector<32x32xf32> to vector<32xf32>
    %546 = vector.shape_cast %545 : vector<32xf32> to vector<32x1xf32>
    %547 = vector.broadcast %546 : vector<32x1xf32> to vector<32x32xf32>
    %548 = arith.subf %544, %547 : vector<32x32xf32>
    %549 = math.exp %548 : vector<32x32xf32>
    %cst_154 = arith.constant dense<0.000000e+00> : vector<32xf32>
    %550 = vector.multi_reduction <add>, %549, %cst_154 [1] : vector<32x32xf32> to vector<32xf32>
    %551 = vector.shape_cast %550 : vector<32xf32> to vector<32x1xf32>
    %552 = tpu.reciprocal %551 {approx = true} : vector<32x1xf32> -> vector<32x1xf32>
    %553 = vector.broadcast %552 : vector<32x1xf32> to vector<32x32xf32>
    %554 = arith.mulf %549, %553 : vector<32x32xf32>
    %555 = arith.truncf %554 : vector<32x32xf32> to vector<32x32xbf16>
    %cst_155 = arith.constant dense<0.000000e+00> : vector<32x16xf32>
    %556 = tpu.matmul %555, %541, %cst_155 {dimension_numbers = #tpu.dot_dimension_numbers<[1], [0], [0], [1], [0, 0, 1, 1], [], []>} : vector<32x32xbf16>, vector<32x16xbf16>, vector<32x16xf32> -> vector<32x16xf32>
    %557 = vector.extract_strided_slice %9 {offsets = [96, 96], sizes = [32, 16], strides = [1, 1]} : vector<128x128xbf16> to vector<32x16xbf16>
    %558 = vector.extract_strided_slice %11 {offsets = [96, 96], sizes = [32, 16], strides = [1, 1]} : vector<128x128xbf16> to vector<32x16xbf16>
    %559 = vector.extract_strided_slice %13 {offsets = [96, 96], sizes = [32, 16], strides = [1, 1]} : vector<128x128xbf16> to vector<32x16xbf16>
    %cst_156 = arith.constant dense<0.000000e+00> : vector<32x32xf32>
    %560 = tpu.matmul %557, %558, %cst_156 {dimension_numbers = #tpu.dot_dimension_numbers<[1], [1], [0], [0], [0, 0, 1, 0], [], []>} : vector<32x16xbf16>, vector<32x16xbf16>, vector<32x32xf32> -> vector<32x32xf32>
    %cst_157 = arith.constant 2.500000e-01 : f32
    %561 = vector.broadcast %cst_157 : f32 to vector<32x32xf32>
    %562 = arith.mulf %560, %561 : vector<32x32xf32>
    %cst_158 = arith.constant dense<0xFF800000> : vector<32xf32>
    %563 = vector.multi_reduction <maximumf>, %562, %cst_158 [1] : vector<32x32xf32> to vector<32xf32>
    %564 = vector.shape_cast %563 : vector<32xf32> to vector<32x1xf32>
    %565 = vector.broadcast %564 : vector<32x1xf32> to vector<32x32xf32>
    %566 = arith.subf %562, %565 : vector<32x32xf32>
    %567 = math.exp %566 : vector<32x32xf32>
    %cst_159 = arith.constant dense<0.000000e+00> : vector<32xf32>
    %568 = vector.multi_reduction <add>, %567, %cst_159 [1] : vector<32x32xf32> to vector<32xf32>
    %569 = vector.shape_cast %568 : vector<32xf32> to vector<32x1xf32>
    %570 = tpu.reciprocal %569 {approx = true} : vector<32x1xf32> -> vector<32x1xf32>
    %571 = vector.broadcast %570 : vector<32x1xf32> to vector<32x32xf32>
    %572 = arith.mulf %567, %571 : vector<32x32xf32>
    %573 = arith.truncf %572 : vector<32x32xf32> to vector<32x32xbf16>
    %cst_160 = arith.constant dense<0.000000e+00> : vector<32x16xf32>
    %574 = tpu.matmul %573, %559, %cst_160 {dimension_numbers = #tpu.dot_dimension_numbers<[1], [0], [0], [1], [0, 0, 1, 1], [], []>} : vector<32x32xbf16>, vector<32x16xbf16>, vector<32x16xf32> -> vector<32x16xf32>
    %575 = vector.extract_strided_slice %9 {offsets = [96, 112], sizes = [32, 16], strides = [1, 1]} : vector<128x128xbf16> to vector<32x16xbf16>
    %576 = vector.extract_strided_slice %11 {offsets = [96, 112], sizes = [32, 16], strides = [1, 1]} : vector<128x128xbf16> to vector<32x16xbf16>
    %577 = vector.extract_strided_slice %13 {offsets = [96, 112], sizes = [32, 16], strides = [1, 1]} : vector<128x128xbf16> to vector<32x16xbf16>
    %cst_161 = arith.constant dense<0.000000e+00> : vector<32x32xf32>
    %578 = tpu.matmul %575, %576, %cst_161 {dimension_numbers = #tpu.dot_dimension_numbers<[1], [1], [0], [0], [0, 0, 1, 0], [], []>} : vector<32x16xbf16>, vector<32x16xbf16>, vector<32x32xf32> -> vector<32x32xf32>
    %cst_162 = arith.constant 2.500000e-01 : f32
    %579 = vector.broadcast %cst_162 : f32 to vector<32x32xf32>
    %580 = arith.mulf %578, %579 : vector<32x32xf32>
    %cst_163 = arith.constant dense<0xFF800000> : vector<32xf32>
    %581 = vector.multi_reduction <maximumf>, %580, %cst_163 [1] : vector<32x32xf32> to vector<32xf32>
    %582 = vector.shape_cast %581 : vector<32xf32> to vector<32x1xf32>
    %583 = vector.broadcast %582 : vector<32x1xf32> to vector<32x32xf32>
    %584 = arith.subf %580, %583 : vector<32x32xf32>
    %585 = math.exp %584 : vector<32x32xf32>
    %cst_164 = arith.constant dense<0.000000e+00> : vector<32xf32>
    %586 = vector.multi_reduction <add>, %585, %cst_164 [1] : vector<32x32xf32> to vector<32xf32>
    %587 = vector.shape_cast %586 : vector<32xf32> to vector<32x1xf32>
    %588 = tpu.reciprocal %587 {approx = true} : vector<32x1xf32> -> vector<32x1xf32>
    %589 = vector.broadcast %588 : vector<32x1xf32> to vector<32x32xf32>
    %590 = arith.mulf %585, %589 : vector<32x32xf32>
    %591 = arith.truncf %590 : vector<32x32xf32> to vector<32x32xbf16>
    %cst_165 = arith.constant dense<0.000000e+00> : vector<32x16xf32>
    %592 = tpu.matmul %591, %577, %cst_165 {dimension_numbers = #tpu.dot_dimension_numbers<[1], [0], [0], [1], [0, 0, 1, 1], [], []>} : vector<32x32xbf16>, vector<32x16xbf16>, vector<32x16xf32> -> vector<32x16xf32>
    %593 = tpu.concatenate %466, %484, %502, %520, %538, %556, %574, %592 in 1 : vector<32x16xf32>, vector<32x16xf32>, vector<32x16xf32>, vector<32x16xf32>, vector<32x16xf32>, vector<32x16xf32>, vector<32x16xf32>, vector<32x16xf32> -> vector<32x128xf32>
    %594 = tpu.concatenate %158, %303, %448, %593 in 0 : vector<32x128xf32>, vector<32x128xf32>, vector<32x128xf32>, vector<32x128xf32> -> vector<128x128xf32>
    %c0_166 = arith.constant 0 : index
    %c0_167 = arith.constant 0 : index
    %595 = vector.load %arg4[%c0_166, %c0_167] : memref<128x128xbf16, #tpu.memory_space<vmem>>, vector<128x128xbf16>
    %596 = arith.truncf %594 : vector<128x128xf32> to vector<128x128xbf16>
    %cst_168 = arith.constant dense<0.000000e+00> : vector<128x128xf32>
    %597 = tpu.matmul %596, %595, %cst_168 {dimension_numbers = #tpu.dot_dimension_numbers<[1], [0], [0], [1], [0, 0, 1, 1], [], []>} : vector<128x128xbf16>, vector<128x128xbf16>, vector<128x128xf32> -> vector<128x128xf32>
    %c0_169 = arith.constant 0 : index
    %c0_170 = arith.constant 0 : index
    %598 = vector.load %arg5[%c0_169, %c0_170] : memref<1x128xf32, #tpu.memory_space<vmem>>, vector<1x128xf32>
    %599 = vector.broadcast %598 : vector<1x128xf32> to vector<128x128xf32>
    %600 = arith.addf %597, %599 : vector<128x128xf32>
    %601 = vector.shape_cast %600 : vector<128x128xf32> to vector<4x32x128xf32>
    %c0_171 = arith.constant 0 : index
    %c0_172 = arith.constant 0 : index
    %c0_173 = arith.constant 0 : index
    %602 = vector.load %arg6[%c0_171, %c0_172, %c0_173] : memref<4x32x128xf32, #tpu.memory_space<vmem>>, vector<4x32x128xf32>
    tpu.vector_store %arg6[%c0_171, %c0_172, %c0_173], %601 {strides = array<i32>} : memref<4x32x128xf32, #tpu.memory_space<vmem>>, vector<4x32x128xf32>,
    return
  }
  func.func @transform_0(%arg0: i32) -> (i32, i32, i32) {
    %c0_i32 = arith.constant 0 : i32
    %c0_i32_0 = arith.constant 0 : i32
    %c0_i32_1 = arith.constant 0 : i32
    return %arg0, %c0_i32, %c0_i32_0 : i32, i32, i32
  }
  func.func @transform_1(%arg0: i32) -> (i32, i32) {
    %c0_i32 = arith.constant 0 : i32
    %c0_i32_0 = arith.constant 0 : i32
    %c0_i32_1 = arith.constant 0 : i32
    return %c0_i32, %c0_i32_0 : i32, i32
  }
  func.func @transform_2(%arg0: i32) -> (i32, i32) {
    %c0_i32 = arith.constant 0 : i32
    %c0_i32_0 = arith.constant 0 : i32
    %c0_i32_1 = arith.constant 0 : i32
    return %c0_i32, %c0_i32_0 : i32, i32
  }
  func.func @transform_3(%arg0: i32) -> (i32, i32) {
    %c0_i32 = arith.constant 0 : i32
    %c0_i32_0 = arith.constant 0 : i32
    %c0_i32_1 = arith.constant 0 : i32
    return %c0_i32, %c0_i32_0 : i32, i32
  }
  func.func @transform_4(%arg0: i32) -> (i32, i32) {
    %c0_i32 = arith.constant 0 : i32
    %c0_i32_0 = arith.constant 0 : i32
    %c0_i32_1 = arith.constant 0 : i32
    return %c0_i32, %c0_i32_0 : i32, i32
  }
  func.func @transform_5(%arg0: i32) -> (i32, i32, i32) {
    %c0_i32 = arith.constant 0 : i32
    %c0_i32_0 = arith.constant 0 : i32
    %c0_i32_1 = arith.constant 0 : i32
    return %arg0, %c0_i32, %c0_i32_0 : i32, i32, i32
  }
}

</mosaic_0001>

<llo_original>
// kernel: tpu_custom_call.1
$region0: #{tpu_custom_call.1}
  #allocation0 [shape = 'u32[]', space=smem, size = 0x4, offset = 0x4, fixed_abs, tag = 'smem constant byte address 0x4 - core index']
  #allocation1 [shape = 'u32[144,128]{1,0:T(1,128)}', space=vmem, size = 0x12000, scoped, tag = 'internal scratch']
  %s0 = inlined_call_operand.hbm [shape: f32[8,32,128], index: 0, kind: input, shape index: {}]
  %s1 = inlined_call_operand.hbm [shape: bf16[128,384], index: 1, kind: input, shape index: {}]
  %s2 = inlined_call_operand.vmem [shape: f32[1,384], index: 2, kind: input, shape index: {}]
  %s3 = inlined_call_operand.hbm [shape: bf16[128,128], index: 3, kind: input, shape index: {}]
  %s4 = inlined_call_operand.vmem [shape: f32[1,128], index: 4, kind: input, shape index: {}]
  %s5 = inlined_call_operand.hbm [shape: f32[8,32,128], index: 5, kind: output, shape index: {}]
  %s6 = sld [smem:[#allocation0]]
  $region65: #{tpu_custom_call.1} parent=0
    _
  %s8 = ssub.s32 1, %s6
  %s9 = scalar_select 0, %s8, %s6
  $region1: #{tpu_custom_call.1} parent=0
    #allocation2 [shape = 'u8[131072]{0}', space=vmem, size = 0x20000, scoped, tag = 'input window, operand 0']
    #allocation3 [shape = 's32[2]{0}', space=sflag, size = 0x8, scoped, tag = 'scoped memory for tpu_custom_call.1']
    #allocation4 [shape = 's32[2]{0}', space=sflag, size = 0x8, scoped, tag = 'scoped memory for tpu_custom_call.1']
    #allocation5 [shape = 'u8[98304]{0}', space=vmem, size = 0x18000, scoped, tag = 'input window, operand 1, single buffered']
    #allocation6 [shape = 's32[1]{0}', space=sflag, size = 0x4, scoped, tag = 'scoped memory for tpu_custom_call.1']
    #allocation7 [shape = 'u8[32768]{0}', space=vmem, size = 0x8000, scoped, tag = 'input window, operand 3, single buffered']
    #allocation8 [shape = 'u8[131072]{0}', space=vmem, size = 0x20000, scoped, tag = 'output window, operand 0']
    %10 = vsyncpa [#allocation3], 0
    %s11 = scalar_lea.sflag [#allocation3], 1
    %12 = vsyncpa %s11, 0
    %13 = vsyncpa [#allocation6], 0
    %14 = vsyncpa [#allocation4], 0
    %s15 = scalar_lea.sflag [#allocation4], 1
    %16 = vsyncpa %s15, 0
    loop: start=0, step=1, limit=4
    $region2: #{tpu_custom_call.1} parent=1 // loop_pre_header
      _
    $region3: #{tpu_custom_call.1} parent=1 // loop_header
      %s18 = sphi 0, %s22
      %p19 = scmp.ge.s32.totalorder %s18, 4
      %s28 = sphi 0, %s30
      %s31 = sphi 0, %s28
      %s32 = sphi 0, %s31
      %s48 = sphi 0, %s32
      %s52 = sphi 0, %s52
      %s54 = sphi 0, %s52
      %s55 = sphi 0, %s54
      %s69 = sphi 0, %s55
      %s73 = sphi 0, %s73
      %s75 = sphi 0, %s73
      %s76 = sphi 0, %s75
      %s90 = sphi 0, %s76
      %s94 = sphi 0, %s94
      %s96 = sphi 0, %s94
      %s97 = sphi 0, %s96
      %s111 = sphi 0, %s97
      %s115 = sphi 0, %s115
      %s117 = sphi 0, %s115
      %s118 = sphi 0, %s117
      %s132 = sphi 0, %s118
      %s138 = sphi 0, %s140
      %s141 = sphi 0, %s138
      %s142 = sphi 0, %s141
      %s158 = sphi 0, %s142
    $region4: #{tpu_custom_call.1} parent=1 // loop_header_branch
      %21 = sbr.rel (%p19) target = $region8
    $region5: #{tpu_custom_call.1} parent=1 // loop_body
      %s23 = ssub.s32 %s18, 1
      %s24 = ssub.s32 %s18, 2
      %s25 = sadd.s32 %s18, 1
      %s26 = ssub.s32 %s18, %s25
      %p27 = scmp.eq.s32.totalorder %s26, 0
      %s29 = sadd.s32 %s28, 1
      %s30 = scalar_select %p27, %s28, %s29
      %p33 = pneg %p27
      %p34 = scmp.eq.s32.totalorder %s18, 1
      %p35 = por %p33, %p34
      %p36 = scmp.ne.s32.totalorder %s28, %s31
      %p37 = scmp.eq.s32.totalorder %s18, 0
      %p38 = por %p36, %p37
      %p39 = scmp.ne.s32.totalorder %s28, %s31
      %p40 = scmp.eq.s32.totalorder %s23, 1
      %p41 = por %p39, %p40
      %p42 = scmp.ne.s32.totalorder %s31, %s32
      %p43 = scmp.eq.s32.totalorder %s23, 0
      %p44 = por %p42, %p43
      %p45 = scmp.ne.s32.totalorder %s31, %s32
      %p46 = scmp.eq.s32.totalorder %s24, 1
      %p47 = por %p45, %p46
      %p49 = scmp.ne.s32.totalorder %s32, %s48
      %p50 = scmp.eq.s32.totalorder %s24, 0
      %p51 = por %p49, %p50
      %s53 = sadd.s32 %s52, 1
      %p56 = scmp.eq.s32.totalorder %s18, 1
      %p57 = scmp.ne.s32.totalorder %s52, %s54
      %p58 = scmp.eq.s32.totalorder %s18, 0
      %p59 = por %p57, %p58
      %p60 = scmp.ne.s32.totalorder %s52, %s54
      %p61 = scmp.eq.s32.totalorder %s23, 1
      %p62 = por %p60, %p61
      %p63 = scmp.ne.s32.totalorder %s54, %s55
      %p64 = scmp.eq.s32.totalorder %s23, 0
      %p65 = por %p63, %p64
      %p66 = scmp.ne.s32.totalorder %s54, %s55
      %p67 = scmp.eq.s32.totalorder %s24, 1
      %p68 = por %p66, %p67
      %p70 = scmp.ne.s32.totalorder %s55, %s69
      %p71 = scmp.eq.s32.totalorder %s24, 0
      %p72 = por %p70, %p71
      %s74 = sadd.s32 %s73, 1
      %p77 = scmp.eq.s32.totalorder %s18, 1
      %p78 = scmp.ne.s32.totalorder %s73, %s75
      %p79 = scmp.eq.s32.totalorder %s18, 0
      %p80 = por %p78, %p79
      %p81 = scmp.ne.s32.totalorder %s73, %s75
      %p82 = scmp.eq.s32.totalorder %s23, 1
      %p83 = por %p81, %p82
      %p84 = scmp.ne.s32.totalorder %s75, %s76
      %p85 = scmp.eq.s32.totalorder %s23, 0
      %p86 = por %p84, %p85
      %p87 = scmp.ne.s32.totalorder %s75, %s76
      %p88 = scmp.eq.s32.totalorder %s24, 1
      %p89 = por %p87, %p88
      %p91 = scmp.ne.s32.totalorder %s76, %s90
      %p92 = scmp.eq.s32.totalorder %s24, 0
      %p93 = por %p91, %p92
      %s95 = sadd.s32 %s94, 1
      %p98 = scmp.eq.s32.totalorder %s18, 1
      %p99 = scmp.ne.s32.totalorder %s94, %s96
      %p100 = scmp.eq.s32.totalorder %s18, 0
      %p101 = por %p99, %p100
      %p102 = scmp.ne.s32.totalorder %s94, %s96
      %p103 = scmp.eq.s32.totalorder %s23, 1
      %p104 = por %p102, %p103
      %p105 = scmp.ne.s32.totalorder %s96, %s97
      %p106 = scmp.eq.s32.totalorder %s23, 0
      %p107 = por %p105, %p106
      %p108 = scmp.ne.s32.totalorder %s96, %s97
      %p109 = scmp.eq.s32.totalorder %s24, 1
      %p110 = por %p108, %p109
      %p112 = scmp.ne.s32.totalorder %s97, %s111
      %p113 = scmp.eq.s32.totalorder %s24, 0
      %p114 = por %p112, %p113
      %s116 = sadd.s32 %s115, 1
      %p119 = scmp.eq.s32.totalorder %s18, 1
      %p120 = scmp.ne.s32.totalorder %s115, %s117
      %p121 = scmp.eq.s32.totalorder %s18, 0
      %p122 = por %p120, %p121
      %p123 = scmp.ne.s32.totalorder %s115, %s117
      %p124 = scmp.eq.s32.totalorder %s23, 1
      %p125 = por %p123, %p124
      %p126 = scmp.ne.s32.totalorder %s117, %s118
      %p127 = scmp.eq.s32.totalorder %s23, 0
      %p128 = por %p126, %p127
      %p129 = scmp.ne.s32.totalorder %s117, %s118
      %p130 = scmp.eq.s32.totalorder %s24, 1
      %p131 = por %p129, %p130
      %p133 = scmp.ne.s32.totalorder %s118, %s132
      %p134 = scmp.eq.s32.totalorder %s24, 0
      %p135 = por %p133, %p134
      %s136 = ssub.s32 %s18, %s25
      %p137 = scmp.eq.s32.totalorder %s136, 0
      %s139 = sadd.s32 %s138, 1
      %s140 = scalar_select %p137, %s138, %s139
      %p143 = pneg %p137
      %p144 = scmp.eq.s32.totalorder %s18, 1
      %p145 = por %p143, %p144
      %p146 = scmp.ne.s32.totalorder %s138, %s141
      %p147 = scmp.eq.s32.totalorder %s18, 0
      %p148 = por %p146, %p147
      %p149 = scmp.ne.s32.totalorder %s138, %s141
      %p150 = scmp.eq.s32.totalorder %s23, 1
      %p151 = por %p149, %p150
      %p152 = scmp.ne.s32.totalorder %s141, %s142
      %p153 = scmp.eq.s32.totalorder %s23, 0
      %p154 = por %p152, %p153
      %p155 = scmp.ne.s32.totalorder %s141, %s142
      %p156 = scmp.eq.s32.totalorder %s24, 1
      %p157 = por %p155, %p156
      %p159 = scmp.ne.s32.totalorder %s142, %s158
      %p160 = scmp.eq.s32.totalorder %s24, 0
      %p161 = por %p159, %p160
      %p162 = scmp.le.s32.totalorder 1, %s18
      %p163 = scmp.lt.s32.totalorder %s18, 3
      %p164 = pnand %p162, %p163
      %p165 = pneg %p164
      // Predicated region
      $region9: #{tpu_custom_call.1} parent=5 // pred_check
        _
      $region10: #{tpu_custom_call.1} parent=5 // pred_check_branch
        %167 = sbr.rel (%p164) target = $region12
      $region11: #{tpu_custom_call.1} parent=5 // pred_region
        %s168 = ssub.s32 %s18, 1
        // Predicated region
        $region13: #{tpu_custom_call.1} parent=11 // pred_check
          %p169 = pneg %p65
        $region14: #{tpu_custom_call.1} parent=11 // pred_check_branch
          %171 = sbr.rel (%p169) target = $region16
        $region15: #{tpu_custom_call.1} parent=11 // pred_region
          %s173 = ssub.s32 3072, 3072
          %174 = vsyncadd [#allocation6], %s173
          %s175 = sshll.u32 [#allocation5], 4
          %s176 = int_to_ptr.vmem [resolvable:$true] %s175
          %181 = dma.hbm_to_vmem [thread:$0]  %s1, 3072, %s176, [#allocation6], 192, 192, 12
        $region16: #{tpu_custom_call.1} parent=11 // pred_fallthru
          _
        // Predicated region
        $region17: #{tpu_custom_call.1} parent=11 // pred_check
          %p182 = pneg %p86
        $region18: #{tpu_custom_call.1} parent=11 // pred_check_branch
          %184 = sbr.rel (%p182) target = $region20
        $region19: #{tpu_custom_call.1} parent=11 // pred_region
          _
        $region20: #{tpu_custom_call.1} parent=11 // pred_fallthru
          _
        // Predicated region
        $region21: #{tpu_custom_call.1} parent=11 // pred_check
          %p185 = pneg %p107
        $region22: #{tpu_custom_call.1} parent=11 // pred_check_branch
          %187 = sbr.rel (%p185) target = $region24
        $region23: #{tpu_custom_call.1} parent=11 // pred_region
          %s189 = ssub.s32 1024, 1024
          %190 = vsyncadd [#allocation6], %s189
          %s191 = sshll.u32 [#allocation7], 4
          %s192 = int_to_ptr.vmem [resolvable:$true] %s191
          %197 = dma.hbm_to_vmem [thread:$0]  %s3, 1024, %s192, [#allocation6], 64, 64, 4
        $region24: #{tpu_custom_call.1} parent=11 // pred_fallthru
          _
        // Predicated region
        $region25: #{tpu_custom_call.1} parent=11 // pred_check
          %p198 = pneg %p128
        $region26: #{tpu_custom_call.1} parent=11 // pred_check_branch
          %200 = sbr.rel (%p198) target = $region28
        $region27: #{tpu_custom_call.1} parent=11 // pred_region
          _
        $region28: #{tpu_custom_call.1} parent=11 // pred_fallthru
          _
      $region12: #{tpu_custom_call.1} parent=5 // pred_fallthru
        _
      %p201 = scmp.lt.s32.totalorder %s18, 2
      // Predicated region
      $region29: #{tpu_custom_call.1} parent=5 // pred_check
        %p202 = pneg %p201
      $region30: #{tpu_custom_call.1} parent=5 // pred_check_branch
        %204 = sbr.rel (%p202) target = $region32
      $region31: #{tpu_custom_call.1} parent=5 // pred_region
        // Predicated region
        $region33: #{tpu_custom_call.1} parent=31 // pred_check
          %p205 = pneg %p38
        $region34: #{tpu_custom_call.1} parent=31 // pred_check_branch
          %207 = sbr.rel (%p205) target = $region36
        $region35: #{tpu_custom_call.1} parent=31 // pred_region
          %s208 = sand.u32 %s28, 1
          %s209 = scalar_lea.sflag [#allocation3], %s208
          %s210 = sand.u32 %s28, 1
          %s211 = smul.addr %s210, 128
          %s212 = scalar_lea.vmem [#allocation2], %s211
          %s213 = smul.u32 4, %s18
          %s215 = ssub.s32 2048, 2048
          %216 = vsyncadd %s209, %s215
          %s217 = smul.addr %s213, 4
          %s218 = smul.addr %s217, 128
          %s219 = scalar_lea.hbm %s0, %s218
          %s220 = sshll.u32 %s212, 4
          %s221 = int_to_ptr.vmem [resolvable:$true] %s220
          %226 = dma.hbm_to_vmem [thread:$0]  %s219, 2048, %s221, %s209, 128, 128, 8
        $region36: #{tpu_custom_call.1} parent=31 // pred_fallthru
          _
      $region32: #{tpu_custom_call.1} parent=5 // pred_fallthru
        _
      %p227 = scmp.le.s32.totalorder 1, %s18
      %p228 = scmp.lt.s32.totalorder %s18, 3
      %p229 = pnand %p227, %p228
      %p230 = pneg %p229
      // Predicated region
      $region37: #{tpu_custom_call.1} parent=5 // pred_check
        _
      $region38: #{tpu_custom_call.1} parent=5 // pred_check_branch
        %232 = sbr.rel (%p229) target = $region40
      $region39: #{tpu_custom_call.1} parent=5 // pred_region
        %s233 = ssub.s32 %s18, 1
        %s234 = sand.u32 %s31, 1
        %s235 = scalar_lea.sflag [#allocation3], %s234
        %s236 = sand.u32 %s31, 1
        %s237 = smul.addr %s236, 128
        %s238 = scalar_lea.vmem [#allocation2], %s237
        // Predicated region
        $region41: #{tpu_custom_call.1} parent=39 // pred_check
          %p239 = pneg %p44
        $region42: #{tpu_custom_call.1} parent=39 // pred_check_branch
          %241 = sbr.rel (%p239) target = $region44
        $region43: #{tpu_custom_call.1} parent=39 // pred_region
          %242 = dma.done %s235, 2048
        $region44: #{tpu_custom_call.1} parent=39 // pred_fallthru
          _
        // Predicated region
        $region45: #{tpu_custom_call.1} parent=39 // pred_check
          %p243 = pneg %p65
        $region46: #{tpu_custom_call.1} parent=39 // pred_check_branch
          %245 = sbr.rel (%p243) target = $region48
        $region47: #{tpu_custom_call.1} parent=39 // pred_region
          %246 = dma.done [#allocation6], 3072
        $region48: #{tpu_custom_call.1} parent=39 // pred_fallthru
          _
        // Predicated region
        $region49: #{tpu_custom_call.1} parent=39 // pred_check
          %p247 = pneg %p107
        $region50: #{tpu_custom_call.1} parent=39 // pred_check_branch
          %249 = sbr.rel (%p247) target = $region52
        $region51: #{tpu_custom_call.1} parent=39 // pred_region
          %250 = dma.done [#allocation6], 1024
        $region52: #{tpu_custom_call.1} parent=39 // pred_fallthru
          _
        %s251 = sand.u32 %s31, 1
        %s252 = scalar_lea.sflag [#allocation3], %s251
        %s253 = sand.u32 %s31, 1
        %s254 = smul.addr %s253, 128
        %s255 = scalar_lea.vmem [#allocation2], %s254
        %p256 = pneg %p44
        %p257 = pneg %p41
        %p258 = pneg %p65
        %p259 = pneg %p62
        %p260 = pneg %p86
        %p261 = pneg %p83
        %p262 = pneg %p107
        %p263 = pneg %p104
        %p264 = pneg %p128
        %p265 = pneg %p125
        %p266 = pneg %p154
        %p267 = pneg %p151
        %s268 = sand.u32 %s141, 1
        %s269 = scalar_lea.sflag [#allocation4], %s268
        %s270 = sand.u32 %s141, 1
        %s271 = smul.addr %s270, 128
        %s272 = scalar_lea.vmem [#allocation8], %s271
        %s273 = smul.u32 4, %s23
        %s274 = smul.u32 4, %s23
        %v276 = vld [vmem:[%s238] sm:$0xff]
        %v277 = vld [vmem:[%s238 + $0x8] sm:$0xff]
        %v278 = vld [vmem:[%s238 + $0x10] sm:$0xff]
        %v279 = vld [vmem:[%s238 + $0x18] sm:$0xff]
        %v280 = vld [vmem:[%s238 + $0x20] sm:$0xff]
        %v281 = vld [vmem:[%s238 + $0x28] sm:$0xff]
        %v282 = vld [vmem:[%s238 + $0x30] sm:$0xff]
        %v283 = vld [vmem:[%s238 + $0x38] sm:$0xff]
        %v284 = vld [vmem:[%s238 + $0x40] sm:$0xff]
        %v285 = vld [vmem:[%s238 + $0x48] sm:$0xff]
        %v286 = vld [vmem:[%s238 + $0x50] sm:$0xff]
        %v287 = vld [vmem:[%s238 + $0x58] sm:$0xff]
        %v288 = vld [vmem:[%s238 + $0x60] sm:$0xff]
        %v289 = vld [vmem:[%s238 + $0x68] sm:$0xff]
        %v290 = vld [vmem:[%s238 + $0x70] sm:$0xff]
        %v291 = vld [vmem:[%s238 + $0x78] sm:$0xff]
        %v292 = vld [vmem:[#allocation5] sm:$0xff]
        %v293 = vld [vmem:[#allocation5 + $0x8] sm:$0xf]
        %v294 = vld [vmem:[#allocation5 + $0xc] sm:$0xff]
        %v295 = vld [vmem:[#allocation5 + $0x14] sm:$0xf]
        %v296 = vld [vmem:[#allocation5 + $0x18] sm:$0xff]
        %v297 = vld [vmem:[#allocation5 + $0x20] sm:$0xf]
        %v298 = vld [vmem:[#allocation5 + $0x24] sm:$0xff]
        %v299 = vld [vmem:[#allocation5 + $0x2c] sm:$0xf]
        %v300 = vld [vmem:[#allocation5 + $0x30] sm:$0xff]
        %v301 = vld [vmem:[#allocation5 + $0x38] sm:$0xf]
        %v302 = vld [vmem:[#allocation5 + $0x3c] sm:$0xff]
        %v303 = vld [vmem:[#allocation5 + $0x44] sm:$0xf]
        %v304 = vld [vmem:[#allocation5 + $0x48] sm:$0xff]
        %v305 = vld [vmem:[#allocation5 + $0x50] sm:$0xf]
        %v306 = vld [vmem:[#allocation5 + $0x54] sm:$0xff]
        %v307 = vld [vmem:[#allocation5 + $0x5c] sm:$0xf]
        %v308 = vld [vmem:[#allocation5 + $0x60] sm:$0xff]
        %v309 = vld [vmem:[#allocation5 + $0x68] sm:$0xf]
        %v310 = vld [vmem:[#allocation5 + $0x6c] sm:$0xff]
        %v311 = vld [vmem:[#allocation5 + $0x74] sm:$0xf]
        %v312 = vld [vmem:[#allocation5 + $0x78] sm:$0xff]
        %v313 = vld [vmem:[#allocation5 + $0x80] sm:$0xf]
        %v314 = vld [vmem:[#allocation5 + $0x84] sm:$0xff]
        %v315 = vld [vmem:[#allocation5 + $0x8c] sm:$0xf]
        %v316 = vld [vmem:[#allocation5 + $0x90] sm:$0xff]
        %v317 = vld [vmem:[#allocation5 + $0x98] sm:$0xf]
        %v318 = vld [vmem:[#allocation5 + $0x9c] sm:$0xff]
        %v319 = vld [vmem:[#allocation5 + $0xa4] sm:$0xf]
        %v320 = vld [vmem:[#allocation5 + $0xa8] sm:$0xff]
        %v321 = vld [vmem:[#allocation5 + $0xb0] sm:$0xf]
        %v322 = vld [vmem:[#allocation5 + $0xb4] sm:$0xff]
        %v323 = vld [vmem:[#allocation5 + $0xbc] sm:$0xf]
        %v324 = vpack.c.bf16 %v277, %v276
        %v325 = vpack.c.bf16 %v279, %v278
        %v326 = vpack.c.bf16 %v281, %v280
        %v327 = vpack.c.bf16 %v283, %v282
        %v328 = vpack.c.bf16 %v285, %v284
        %v329 = vpack.c.bf16 %v287, %v286
        %v330 = vpack.c.bf16 %v289, %v288
        %v331 = vpack.c.bf16 %v291, %v290
        %v332 = vld [vmem:[%s2] sm:$0x7]
        %v334 = vlaneseq
        %v335 = vshrl.u32 %v334, 7
        %v336 = vsub.s32 0, %v335
        %v337 = vrot.slane %v332, %v336
        %v338 = vlaneseq
        %v339 = vshrl.u32 %v338, 7
        %v340 = vsub.s32 1, %v339
        %v341 = vrot.slane %v332, %v340
        %v342 = vlaneseq
        %v343 = vshrl.u32 %v342, 7
        %v344 = vsub.s32 2, %v343
        %v345 = vrot.slane %v332, %v344
        %v381 = vunpack.c.l.b16 %v292
        %v382 = vunpack.c.h.b16 %v292
        %v383 = vunpack.c.l.b16 %v293
        %v384 = vunpack.c.l.b16 %v294
        %v385 = vunpack.c.h.b16 %v294
        %v386 = vunpack.c.l.b16 %v295
        %v387 = vunpack.c.l.b16 %v296
        %v388 = vunpack.c.h.b16 %v296
        %v389 = vunpack.c.l.b16 %v297
        %v390 = vunpack.c.l.b16 %v298
        %v391 = vunpack.c.h.b16 %v298
        %v392 = vunpack.c.l.b16 %v299
        %v393 = vunpack.c.l.b16 %v300
        %v394 = vunpack.c.h.b16 %v300
        %v395 = vunpack.c.l.b16 %v301
        %v396 = vunpack.c.l.b16 %v302
        %v397 = vunpack.c.h.b16 %v302
        %v398 = vunpack.c.l.b16 %v303
        %v399 = vunpack.c.l.b16 %v304
        %v400 = vunpack.c.h.b16 %v304
        %v401 = vunpack.c.l.b16 %v305
        %v402 = vunpack.c.l.b16 %v306
        %v403 = vunpack.c.h.b16 %v306
        %v404 = vunpack.c.l.b16 %v307
        %v405 = vunpack.c.l.b16 %v308
        %v406 = vunpack.c.h.b16 %v308
        %v407 = vunpack.c.l.b16 %v309
        %v408 = vunpack.c.l.b16 %v310
        %v409 = vunpack.c.h.b16 %v310
        %v410 = vunpack.c.l.b16 %v311
        %v411 = vunpack.c.l.b16 %v312
        %v412 = vunpack.c.h.b16 %v312
        %v413 = vunpack.c.l.b16 %v313
        %v414 = vunpack.c.l.b16 %v314
        %v415 = vunpack.c.h.b16 %v314
        %v416 = vunpack.c.l.b16 %v315
        %v417 = vunpack.c.l.b16 %v316
        %v418 = vunpack.c.h.b16 %v316
        %v419 = vunpack.c.l.b16 %v317
        %v420 = vunpack.c.l.b16 %v318
        %v421 = vunpack.c.h.b16 %v318
        %v422 = vunpack.c.l.b16 %v319
        %v423 = vunpack.c.l.b16 %v320
        %v424 = vunpack.c.h.b16 %v320
        %v425 = vunpack.c.l.b16 %v321
        %v426 = vunpack.c.l.b16 %v322
        %v427 = vunpack.c.h.b16 %v322
        %v428 = vunpack.c.l.b16 %v323
        %v429 = vpack.c.b16 %v384, %v381
        %v430 = vpack.c.b16 %v385, %v382
        %v431 = vpack.c.b16 %v386, %v383
        %v432 = vpack.c.b16 %v390, %v387
        %v433 = vpack.c.b16 %v391, %v388
        %v434 = vpack.c.b16 %v392, %v389
        %v435 = vpack.c.b16 %v396, %v393
        %v436 = vpack.c.b16 %v397, %v394
        %v437 = vpack.c.b16 %v398, %v395
        %v438 = vpack.c.b16 %v402, %v399
        %v439 = vpack.c.b16 %v403, %v400
        %v440 = vpack.c.b16 %v404, %v401
        %v441 = vpack.c.b16 %v408, %v405
        %v442 = vpack.c.b16 %v409, %v406
        %v443 = vpack.c.b16 %v410, %v407
        %v444 = vpack.c.b16 %v414, %v411
        %v445 = vpack.c.b16 %v415, %v412
        %v446 = vpack.c.b16 %v416, %v413
        %v447 = vpack.c.b16 %v420, %v417
        %v448 = vpack.c.b16 %v421, %v418
        %v449 = vpack.c.b16 %v422, %v419
        %v450 = vpack.c.b16 %v426, %v423
        %v451 = vpack.c.b16 %v427, %v424
        %v452 = vpack.c.b16 %v428, %v425
        %477 = vmatprep.subr.bf16.mxu0 %v451
        %478 = vmatpush1.bf16.msra.mxu0 %v450
        %479 = vmatprep.subr.bf16.mxu0 %v448
        %480 = vmatpush1.bf16.msra.mxu0 %v447
        %481 = vmatprep.subr.bf16.mxu0 %v445
        %482 = vmatpush1.bf16.msra.mxu0 %v444
        %483 = vmatprep.subr.bf16.mxu0 %v442
        %484 = vmatpush1.bf16.msra.mxu0 %v441
        %485 = vmatprep.subr.bf16.mxu0 %v439
        %486 = vmatpush1.bf16.msra.mxu0 %v438
        %487 = vmatprep.subr.bf16.mxu0 %v436
        %488 = vmatpush1.bf16.msra.mxu0 %v435
        %489 = vmatprep.subr.bf16.mxu0 %v433
        %490 = vmatpush1.bf16.msra.mxu0 %v432
        %491 = vmatprep.subr.bf16.mxu0 %v430
        %492 = vmatpush1.bf16.msra.mxu0 %v429
        %493 = vmatprep.subr.bf16.mxu0 0
        %494 = vmatpush2.bf16.msra.mxu0 0
        %495 = vmatprep.subr.bf16.mxu0 0
        %496 = vmatpush2.bf16.msra.mxu0 0
        %497 = vmatprep.subr.bf16.mxu0 0
        %498 = vmatpush2.bf16.msra.mxu0 0
        %499 = vmatprep.subr.bf16.mxu0 0
        %500 = vmatpush2.bf16.msra.mxu0 0
        %501 = vmatprep.subr.bf16.mxu0 0
        %502 = vmatpush2.bf16.msra.mxu0 0
        %503 = vmatprep.subr.bf16.mxu0 0
        %504 = vmatpush2.bf16.msra.mxu0 0
        %505 = vmatprep.subr.bf16.mxu0 0
        %506 = vmatpush2.bf16.msra.mxu0 0
        %507 = vmatprep.subr.bf16.mxu0 0
        %508 = vmatpush2.bf16.msra.mxu0 0
        %509 = vmatprep.mubr.bf16.mxu0 0
        %510 = vmatmul.mubr.bf16.gmra.mxu0 %v324
        %v511 = vpop.f32.mrf.mxu0
        %v512 = vadd.f32 %v337, %v511
        %v513 = vpop.f32.mrf.mxu0
        %v514 = vadd.f32 %v341, %v513
        %v515 = vpop.f32.mrf.mxu0
        %v516 = vadd.f32 %v337, %v515
        %v517 = vpop.f32.mrf.mxu0
        %v518 = vadd.f32 %v341, %v517
        %519 = vmatprep.mubr.bf16.mxu0 0
        %520 = vmatmul.mubr.bf16.gmra.mxu0 %v325
        %v521 = vpop.f32.mrf.mxu0
        %v522 = vadd.f32 %v337, %v521
        %v523 = vpop.f32.mrf.mxu0
        %v524 = vadd.f32 %v341, %v523
        %v525 = vpop.f32.mrf.mxu0
        %v526 = vadd.f32 %v337, %v525
        %v527 = vpop.f32.mrf.mxu0
        %v528 = vadd.f32 %v341, %v527
        %529 = vmatprep.mubr.bf16.mxu0 0
        %530 = vmatmul.mubr.bf16.gmra.mxu0 %v326
        %v531 = vpop.f32.mrf.mxu0
        %v532 = vadd.f32 %v337, %v531
        %v533 = vpop.f32.mrf.mxu0
        %v534 = vadd.f32 %v341, %v533
        %v535 = vpop.f32.mrf.mxu0
        %v536 = vadd.f32 %v337, %v535
        %v537 = vpop.f32.mrf.mxu0
        %v538 = vadd.f32 %v341, %v537
        %539 = vmatprep.mubr.bf16.mxu0 0
        %540 = vmatmul.mubr.bf16.gmra.mxu0 %v327
        %v541 = vpop.f32.mrf.mxu0
        %v542 = vadd.f32 %v337, %v541
        %v543 = vpop.f32.mrf.mxu0
        %v544 = vadd.f32 %v341, %v543
        %v545 = vpop.f32.mrf.mxu0
        %v546 = vadd.f32 %v337, %v545
        %v547 = vpop.f32.mrf.mxu0
        %v548 = vadd.f32 %v341, %v547
        %549 = vmatprep.mubr.bf16.mxu0 0
        %550 = vmatmul.mubr.bf16.gmra.mxu0 %v328
        %v551 = vpop.f32.mrf.mxu0
        %v552 = vadd.f32 %v337, %v551
        %v553 = vpop.f32.mrf.mxu0
        %v554 = vadd.f32 %v341, %v553
        %v555 = vpop.f32.mrf.mxu0
        %v556 = vadd.f32 %v337, %v555
        %v557 = vpop.f32.mrf.mxu0
        %v558 = vadd.f32 %v341, %v557
        %559 = vmatprep.mubr.bf16.mxu0 0
        %560 = vmatmul.mubr.bf16.gmra.mxu0 %v329
        %v561 = vpop.f32.mrf.mxu0
        %v562 = vadd.f32 %v337, %v561
        %v563 = vpop.f32.mrf.mxu0
        %v564 = vadd.f32 %v341, %v563
        %v565 = vpop.f32.mrf.mxu0
        %v566 = vadd.f32 %v337, %v565
        %v567 = vpop.f32.mrf.mxu0
        %v568 = vadd.f32 %v341, %v567
        %569 = vmatprep.mubr.bf16.mxu0 0
        %570 = vmatmul.mubr.bf16.gmra.mxu0 %v330
        %v571 = vpop.f32.mrf.mxu0
        %v572 = vadd.f32 %v337, %v571
        %v573 = vpop.f32.mrf.mxu0
        %v574 = vadd.f32 %v341, %v573
        %v575 = vpop.f32.mrf.mxu0
        %v576 = vadd.f32 %v337, %v575
        %v577 = vpop.f32.mrf.mxu0
        %v578 = vadd.f32 %v341, %v577
        %579 = vmatprep.mubr.bf16.mxu0 0
        %580 = vmatmul.mubr.bf16.gmra.mxu0 %v331
        %v581 = vpop.f32.mrf.mxu0
        %v582 = vadd.f32 %v337, %v581
        %v583 = vpop.f32.mrf.mxu0
        %v584 = vadd.f32 %v341, %v583
        %v585 = vpop.f32.mrf.mxu0
        %v586 = vadd.f32 %v337, %v585
        %v587 = vpop.f32.mrf.mxu0
        %v588 = vadd.f32 %v341, %v587
        %589 = vdwg.mxu0
        %590 = vmatprep.subr.bf16.mxu0 0
        %591 = vmatpush1.bf16.msra.mxu0 %v452
        %592 = vmatprep.subr.bf16.mxu0 0
        %593 = vmatpush1.bf16.msra.mxu0 %v449
        %594 = vmatprep.subr.bf16.mxu0 0
        %595 = vmatpush1.bf16.msra.mxu0 %v446
        %596 = vmatprep.subr.bf16.mxu0 0
        %597 = vmatpush1.bf16.msra.mxu0 %v443
        %598 = vmatprep.subr.bf16.mxu0 0
        %599 = vmatpush1.bf16.msra.mxu0 %v440
        %600 = vmatprep.subr.bf16.mxu0 0
        %601 = vmatpush1.bf16.msra.mxu0 %v437
        %602 = vmatprep.subr.bf16.mxu0 0
        %603 = vmatpush1.bf16.msra.mxu0 %v434
        %604 = vmatprep.subr.bf16.mxu0 0
        %605 = vmatpush1.bf16.msra.mxu0 %v431
        %606 = vmatprep.subr.bf16.mxu0 0
        %607 = vmatpush2.bf16.msra.mxu0 0
        %608 = vmatprep.subr.bf16.mxu0 0
        %609 = vmatpush2.bf16.msra.mxu0 0
        %610 = vmatprep.subr.bf16.mxu0 0
        %611 = vmatpush2.bf16.msra.mxu0 0
        %612 = vmatprep.subr.bf16.mxu0 0
        %613 = vmatpush2.bf16.msra.mxu0 0
        %614 = vmatprep.subr.bf16.mxu0 0
        %615 = vmatpush2.bf16.msra.mxu0 0
        %616 = vmatprep.subr.bf16.mxu0 0
        %617 = vmatpush2.bf16.msra.mxu0 0
        %618 = vmatprep.subr.bf16.mxu0 0
        %619 = vmatpush2.bf16.msra.mxu0 0
        %620 = vmatprep.subr.bf16.mxu0 0
        %621 = vmatpush2.bf16.msra.mxu0 0
        %622 = vmatprep.mubr.bf16.mxu0 0
        %623 = vmatmul.mubr.bf16.gmra.mxu0 %v324
        %v624 = vpop.f32.mrf.mxu0
        %v625 = vadd.f32 %v345, %v624
        %v626 = vpop.f32.mrf.mxu0
        %v627 = vpop.f32.mrf.mxu0
        %v628 = vadd.f32 %v345, %v627
        %v629 = vpop.f32.mrf.mxu0
        %630 = vmatprep.mubr.bf16.mxu0 0
        %631 = vmatmul.mubr.bf16.gmra.mxu0 %v325
        %v632 = vpop.f32.mrf.mxu0
        %v633 = vadd.f32 %v345, %v632
        %v634 = vpop.f32.mrf.mxu0
        %v635 = vpop.f32.mrf.mxu0
        %v636 = vadd.f32 %v345, %v635
        %v637 = vpop.f32.mrf.mxu0
        %638 = vmatprep.mubr.bf16.mxu0 0
        %639 = vmatmul.mubr.bf16.gmra.mxu0 %v326
        %v640 = vpop.f32.mrf.mxu0
        %v641 = vadd.f32 %v345, %v640
        %v642 = vpop.f32.mrf.mxu0
        %v643 = vpop.f32.mrf.mxu0
        %v644 = vadd.f32 %v345, %v643
        %v645 = vpop.f32.mrf.mxu0
        %646 = vmatprep.mubr.bf16.mxu0 0
        %647 = vmatmul.mubr.bf16.gmra.mxu0 %v327
        %v648 = vpop.f32.mrf.mxu0
        %v649 = vadd.f32 %v345, %v648
        %v650 = vpop.f32.mrf.mxu0
        %v651 = vpop.f32.mrf.mxu0
        %v652 = vadd.f32 %v345, %v651
        %v653 = vpop.f32.mrf.mxu0
        %654 = vmatprep.mubr.bf16.mxu0 0
        %655 = vmatmul.mubr.bf16.gmra.mxu0 %v328
        %v656 = vpop.f32.mrf.mxu0
        %v657 = vadd.f32 %v345, %v656
        %v658 = vpop.f32.mrf.mxu0
        %v659 = vpop.f32.mrf.mxu0
        %v660 = vadd.f32 %v345, %v659
        %v661 = vpop.f32.mrf.mxu0
        %662 = vmatprep.mubr.bf16.mxu0 0
        %663 = vmatmul.mubr.bf16.gmra.mxu0 %v329
        %v664 = vpop.f32.mrf.mxu0
        %v665 = vadd.f32 %v345, %v664
        %v666 = vpop.f32.mrf.mxu0
        %v667 = vpop.f32.mrf.mxu0
        %v668 = vadd.f32 %v345, %v667
        %v669 = vpop.f32.mrf.mxu0
        %670 = vmatprep.mubr.bf16.mxu0 0
        %671 = vmatmul.mubr.bf16.gmra.mxu0 %v330
        %v672 = vpop.f32.mrf.mxu0
        %v673 = vadd.f32 %v345, %v672
        %v674 = vpop.f32.mrf.mxu0
        %v675 = vpop.f32.mrf.mxu0
        %v676 = vadd.f32 %v345, %v675
        %v677 = vpop.f32.mrf.mxu0
        %678 = vmatprep.mubr.bf16.mxu0 0
        %679 = vmatmul.mubr.bf16.gmra.mxu0 %v331
        %v680 = vpop.f32.mrf.mxu0
        %v681 = vadd.f32 %v345, %v680
        %v682 = vpop.f32.mrf.mxu0
        %v683 = vpop.f32.mrf.mxu0
        %v684 = vadd.f32 %v345, %v683
        %v685 = vpop.f32.mrf.mxu0
        %686 = vdwg.mxu0
        %v687 = vpack.c.bf16 %v516, %v512
        %v688 = vpack.c.bf16 %v526, %v522
        %v689 = vpack.c.bf16 %v536, %v532
        %v690 = vpack.c.bf16 %v546, %v542
        %v691 = vpack.c.bf16 %v556, %v552
        %v692 = vpack.c.bf16 %v566, %v562
        %v693 = vpack.c.bf16 %v576, %v572
        %v694 = vpack.c.bf16 %v586, %v582
        %v695 = vpack.c.bf16 %v518, %v514
        %v696 = vpack.c.bf16 %v528, %v524
        %v697 = vpack.c.bf16 %v538, %v534
        %v698 = vpack.c.bf16 %v548, %v544
        %v699 = vpack.c.bf16 %v558, %v554
        %v700 = vpack.c.bf16 %v568, %v564
        %v701 = vpack.c.bf16 %v578, %v574
        %v702 = vpack.c.bf16 %v588, %v584
        %v703 = vpack.c.bf16 %v628, %v625
        %v704 = vpack.c.bf16 %v636, %v633
        %v705 = vpack.c.bf16 %v644, %v641
        %v706 = vpack.c.bf16 %v652, %v649
        %v707 = vpack.c.bf16 %v660, %v657
        %v708 = vpack.c.bf16 %v668, %v665
        %v709 = vpack.c.bf16 %v676, %v673
        %v710 = vpack.c.bf16 %v684, %v681
        %vm711 = vcmask 130048
        %v713 = vsel %vm711, %v687, 0
        %v716 = vsel %vm711, %v688, 0
        %v719 = vsel %vm711, %v695, 0
        %v722 = vsel %vm711, %v696, 0
        %724 = vmatprep.subr.bf16.mxu0 0
        %725 = vmatpush1.bf16.xpose.msra.mxu0 0
        %726 = vmatprep.subr.bf16.mxu0 0
        %727 = vmatpush1.bf16.xpose.msra.mxu0 0
        %728 = vmatprep.subr.bf16.mxu0 0
        %729 = vmatpush1.bf16.xpose.msra.mxu0 0
        %730 = vmatprep.subr.bf16.mxu0 0
        %731 = vmatpush1.bf16.xpose.msra.mxu0 0
        %732 = vmatprep.subr.bf16.mxu0 0
        %733 = vmatpush1.bf16.xpose.msra.mxu0 0
        %734 = vmatprep.subr.bf16.mxu0 0
        %735 = vmatpush1.bf16.xpose.msra.mxu0 0
        %736 = vmatprep.subr.bf16.mxu0 0
        %737 = vmatpush1.bf16.xpose.msra.mxu0 %v722
        %738 = vmatprep.subr.bf16.mxu0 0
        %739 = vmatpush1.bf16.xpose.msra.mxu0 %v719
        %740 = vmatprep.subr.bf16.mxu0 0
        %741 = vmatpush2.bf16.xpose.msra.mxu0 0
        %742 = vmatprep.subr.bf16.mxu0 0
        %743 = vmatpush2.bf16.xpose.msra.mxu0 0
        %744 = vmatprep.subr.bf16.mxu0 0
        %745 = vmatpush2.bf16.xpose.msra.mxu0 0
        %746 = vmatprep.subr.bf16.mxu0 0
        %747 = vmatpush2.bf16.xpose.msra.mxu0 0
        %748 = vmatprep.subr.bf16.mxu0 0
        %749 = vmatpush2.bf16.xpose.msra.mxu0 0
        %750 = vmatprep.subr.bf16.mxu0 0
        %751 = vmatpush2.bf16.xpose.msra.mxu0 0
        %752 = vmatprep.subr.bf16.mxu0 0
        %753 = vmatpush2.bf16.xpose.msra.mxu0 0
        %754 = vmatprep.subr.bf16.mxu0 0
        %755 = vmatpush2.bf16.xpose.msra.mxu0 0
        %756 = vmatprep.mubr.bf16.mxu0 0
        %757 = vmatmul.mubr.bf16.gmra.mxu0 %v713
        %v758 = vpop.f32.mrf.mxu0
        %v759 = vadd.f32 0.0, %v758
        %v760 = vpop.f32.mrf.mxu0
        %v761 = vpop.f32.mrf.mxu0
        %v762 = vadd.f32 0.0, %v761
        %v763 = vpop.f32.mrf.mxu0
        %764 = vmatprep.mubr.bf16.mxu0 0
        %765 = vmatmul.mubr.bf16.gmra.mxu0 %v716
        %v766 = vpop.f32.mrf.mxu0
        %v767 = vadd.f32 0.0, %v766
        %v768 = vpop.f32.mrf.mxu0
        %v769 = vpop.f32.mrf.mxu0
        %v770 = vadd.f32 0.0, %v769
        %v771 = vpop.f32.mrf.mxu0
        %772 = vdwg.mxu0
        %v773 = vmul.f32 %v759, 0.25
        %v774 = vmul.f32 %v762, 0.25
        %v775 = vmul.f32 %v767, 0.25
        %v776 = vmul.f32 %v770, 0.25
        %vm777 = vcmask 261120
        %v778 = vsel %vm777, %v773, -inf
        %779 = vmax.xlane.f32.xlu0 %v778
        %v780 = vpop.xlane.xlu0 %779
        %v781 = vsel %vm777, %v774, -inf
        %782 = vmax.xlane.f32.xlu0 %v781
        %v783 = vpop.xlane.xlu0 %782
        %v784 = vsel %vm777, %v775, -inf
        %785 = vmax.xlane.f32.xlu0 %v784
        %v786 = vpop.xlane.xlu0 %785
        %v787 = vsel %vm777, %v776, -inf
        %788 = vmax.xlane.f32.xlu0 %v787
        %v789 = vpop.xlane.xlu0 %788
        %v790 = vsub.f32 %v773, %v780
        %v791 = vsub.f32 %v774, %v783
        %v792 = vsub.f32 %v775, %v786
        %v793 = vsub.f32 %v776, %v789
        %v794 = vmul.f32 %v790, 1.442695
        %v795 = vpow.pop %v794
        %v796 = vmul.f32 %v791, 1.442695
        %v797 = vpow.pop %v796
        %v798 = vmul.f32 %v792, 1.442695
        %v799 = vpow.pop %v798
        %v800 = vmul.f32 %v793, 1.442695
        %v801 = vpow.pop %v800
        %v802 = vsel %vm777, %v795, 0.0
        %803 = vadd.xlane.f32.xlu0 %v802
        %v804 = vpop.xlane.xlu0 %803
        %v805 = vsel %vm777, %v797, 0.0
        %806 = vadd.xlane.f32.xlu0 %v805
        %v807 = vpop.xlane.xlu0 %806
        %v808 = vsel %vm777, %v799, 0.0
        %809 = vadd.xlane.f32.xlu0 %v808
        %v810 = vpop.xlane.xlu0 %809
        %v811 = vsel %vm777, %v801, 0.0
        %812 = vadd.xlane.f32.xlu0 %v811
        %v813 = vpop.xlane.xlu0 %812
        %v814 = vrcp.pop %v804
        %v815 = vrcp.pop %v807
        %v816 = vrcp.pop %v810
        %v817 = vrcp.pop %v813
        %v818 = vmul.f32 %v795, %v814
        %v819 = vmul.f32 %v797, %v815
        %v820 = vmul.f32 %v799, %v816
        %v821 = vmul.f32 %v801, %v817
        %v822 = vpack.c.bf16 %v819, %v818
        %v823 = vpack.c.bf16 %v821, %v820
        %v825 = vsel %vm777, %v822, 0
        %v828 = vsel %vm777, %v823, 0
        %830 = vmatprep.subr.bf16.mxu0 0
        %831 = vmatpush1.bf16.msra.mxu0 0
        %832 = vmatprep.subr.bf16.mxu0 0
        %833 = vmatpush1.bf16.msra.mxu0 0
        %834 = vmatprep.subr.bf16.mxu0 0
        %835 = vmatpush1.bf16.msra.mxu0 0
        %836 = vmatprep.subr.bf16.mxu0 0
        %837 = vmatpush1.bf16.msra.mxu0 0
        %838 = vmatprep.subr.bf16.mxu0 0
        %839 = vmatpush1.bf16.msra.mxu0 0
        %840 = vmatprep.subr.bf16.mxu0 0
        %841 = vmatpush1.bf16.msra.mxu0 0
        %842 = vmatprep.subr.bf16.mxu0 0
        %843 = vmatpush1.bf16.msra.mxu0 %v704
        %844 = vmatprep.subr.bf16.mxu0 0
        %845 = vmatpush1.bf16.msra.mxu0 %v703
        %846 = vmatprep.subr.bf16.mxu0 0
        %847 = vmatpush2.bf16.msra.mxu0 0
        %848 = vmatprep.subr.bf16.mxu0 0
        %849 = vmatpush2.bf16.msra.mxu0 0
        %850 = vmatprep.subr.bf16.mxu0 0
        %851 = vmatpush2.bf16.msra.mxu0 0
        %852 = vmatprep.subr.bf16.mxu0 0
        %853 = vmatpush2.bf16.msra.mxu0 0
        %854 = vmatprep.subr.bf16.mxu0 0
        %855 = vmatpush2.bf16.msra.mxu0 0
        %856 = vmatprep.subr.bf16.mxu0 0
        %857 = vmatpush2.bf16.msra.mxu0 0
        %858 = vmatprep.subr.bf16.mxu0 0
        %859 = vmatpush2.bf16.msra.mxu0 0
        %860 = vmatprep.subr.bf16.mxu0 0
        %861 = vmatpush2.bf16.msra.mxu0 0
        %862 = vmatprep.mubr.bf16.mxu0 0
        %863 = vmatmul.mubr.bf16.gmra.mxu0 %v825
        %v864 = vpop.f32.mrf.mxu0
        %v865 = vadd.f32 0.0, %v864
        %v866 = vpop.f32.mrf.mxu0
        %v867 = vpop.f32.mrf.mxu0
        %v868 = vadd.f32 0.0, %v867
        %v869 = vpop.f32.mrf.mxu0
        %870 = vmatprep.mubr.bf16.mxu0 0
        %871 = vmatmul.mubr.bf16.gmra.mxu0 %v828
        %v872 = vpop.f32.mrf.mxu0
        %v873 = vadd.f32 0.0, %v872
        %v874 = vpop.f32.mrf.mxu0
        %v875 = vpop.f32.mrf.mxu0
        %v876 = vadd.f32 0.0, %v875
        %v877 = vpop.f32.mrf.mxu0
        %878 = vdwg.mxu0
        %881 = vrot.lane.b32.xlu0 %v687, 112
        %v882 = vpop.permute.xlu0 %881
        %883 = vrot.lane.b32.xlu0 %v688, 112
        %v884 = vpop.permute.xlu0 %883
        %887 = vrot.lane.b32.xlu0 %v695, 112
        %v888 = vpop.permute.xlu0 %887
        %889 = vrot.lane.b32.xlu0 %v696, 112
        %v890 = vpop.permute.xlu0 %889
        %v892 = vsel %vm711, %v882, 0
        %v895 = vsel %vm711, %v884, 0
        %v898 = vsel %vm711, %v888, 0
        %v901 = vsel %vm711, %v890, 0
        %903 = vmatprep.subr.bf16.mxu0 0
        %904 = vmatpush1.bf16.xpose.msra.mxu0 0
        %905 = vmatprep.subr.bf16.mxu0 0
        %906 = vmatpush1.bf16.xpose.msra.mxu0 0
        %907 = vmatprep.subr.bf16.mxu0 0
        %908 = vmatpush1.bf16.xpose.msra.mxu0 0
        %909 = vmatprep.subr.bf16.mxu0 0
        %910 = vmatpush1.bf16.xpose.msra.mxu0 0
        %911 = vmatprep.subr.bf16.mxu0 0
        %912 = vmatpush1.bf16.xpose.msra.mxu0 0
        %913 = vmatprep.subr.bf16.mxu0 0
        %914 = vmatpush1.bf16.xpose.msra.mxu0 0
        %915 = vmatprep.subr.bf16.mxu0 0
        %916 = vmatpush1.bf16.xpose.msra.mxu0 %v901
        %917 = vmatprep.subr.bf16.mxu0 0
        %918 = vmatpush1.bf16.xpose.msra.mxu0 %v898
        %919 = vmatprep.subr.bf16.mxu0 0
        %920 = vmatpush2.bf16.xpose.msra.mxu0 0
        %921 = vmatprep.subr.bf16.mxu0 0
        %922 = vmatpush2.bf16.xpose.msra.mxu0 0
        %923 = vmatprep.subr.bf16.mxu0 0
        %924 = vmatpush2.bf16.xpose.msra.mxu0 0
        %925 = vmatprep.subr.bf16.mxu0 0
        %926 = vmatpush2.bf16.xpose.msra.mxu0 0
        %927 = vmatprep.subr.bf16.mxu0 0
        %928 = vmatpush2.bf16.xpose.msra.mxu0 0
        %929 = vmatprep.subr.bf16.mxu0 0
        %930 = vmatpush2.bf16.xpose.msra.mxu0 0
        %931 = vmatprep.subr.bf16.mxu0 0
        %932 = vmatpush2.bf16.xpose.msra.mxu0 0
        %933 = vmatprep.subr.bf16.mxu0 0
        %934 = vmatpush2.bf16.xpose.msra.mxu0 0
        %935 = vmatprep.mubr.bf16.mxu0 0
        %936 = vmatmul.mubr.bf16.gmra.mxu0 %v892
        %v937 = vpop.f32.mrf.mxu0
        %v938 = vadd.f32 0.0, %v937
        %v939 = vpop.f32.mrf.mxu0
        %v940 = vpop.f32.mrf.mxu0
        %v941 = vadd.f32 0.0, %v940
        %v942 = vpop.f32.mrf.mxu0
        %943 = vmatprep.mubr.bf16.mxu0 0
        %944 = vmatmul.mubr.bf16.gmra.mxu0 %v895
        %v945 = vpop.f32.mrf.mxu0
        %v946 = vadd.f32 0.0, %v945
        %v947 = vpop.f32.mrf.mxu0
        %v948 = vpop.f32.mrf.mxu0
        %v949 = vadd.f32 0.0, %v948
        %v950 = vpop.f32.mrf.mxu0
        %951 = vdwg.mxu0
        %v952 = vmul.f32 %v938, 0.25
        %v953 = vmul.f32 %v941, 0.25
        %v954 = vmul.f32 %v946, 0.25
        %v955 = vmul.f32 %v949, 0.25
        %v956 = vsel %vm777, %v952, -inf
        %957 = vmax.xlane.f32.xlu0 %v956
        %v958 = vpop.xlane.xlu0 %957
        %v959 = vsel %vm777, %v953, -inf
        %960 = vmax.xlane.f32.xlu0 %v959
        %v961 = vpop.xlane.xlu0 %960
        %v962 = vsel %vm777, %v954, -inf
        %963 = vmax.xlane.f32.xlu0 %v962
        %v964 = vpop.xlane.xlu0 %963
        %v965 = vsel %vm777, %v955, -inf
        %966 = vmax.xlane.f32.xlu0 %v965
        %v967 = vpop.xlane.xlu0 %966
        %v968 = vsub.f32 %v952, %v958
        %v969 = vsub.f32 %v953, %v961
        %v970 = vsub.f32 %v954, %v964
        %v971 = vsub.f32 %v955, %v967
        %v972 = vmul.f32 %v968, 1.442695
        %v973 = vpow.pop %v972
        %v974 = vmul.f32 %v969, 1.442695
        %v975 = vpow.pop %v974
        %v976 = vmul.f32 %v970, 1.442695
        %v977 = vpow.pop %v976
        %v978 = vmul.f32 %v971, 1.442695
        %v979 = vpow.pop %v978
        %v980 = vsel %vm777, %v973, 0.0
        %981 = vadd.xlane.f32.xlu0 %v980
        %v982 = vpop.xlane.xlu0 %981
        %v983 = vsel %vm777, %v975, 0.0
        %984 = vadd.xlane.f32.xlu0 %v983
        %v985 = vpop.xlane.xlu0 %984
        %v986 = vsel %vm777, %v977, 0.0
        %987 = vadd.xlane.f32.xlu0 %v986
        %v988 = vpop.xlane.xlu0 %987
        %v989 = vsel %vm777, %v979, 0.0
        %990 = vadd.xlane.f32.xlu0 %v989
        %v991 = vpop.xlane.xlu0 %990
        %v992 = vrcp.pop %v982
        %v993 = vrcp.pop %v985
        %v994 = vrcp.pop %v988
        %v995 = vrcp.pop %v991
        %v996 = vmul.f32 %v973, %v992
        %v997 = vmul.f32 %v975, %v993
        %v998 = vmul.f32 %v977, %v994
        %v999 = vmul.f32 %v979, %v995
        %v1000 = vpack.c.bf16 %v997, %v996
        %v1001 = vpack.c.bf16 %v999, %v998
        %1004 = vrot.lane.b32.xlu0 %v703, 112
        %v1005 = vpop.permute.xlu0 %1004
        %1006 = vrot.lane.b32.xlu0 %v704, 112
        %v1007 = vpop.permute.xlu0 %1006
        %v1011 = vsel %vm777, %v1000, 0
        %v1014 = vsel %vm777, %v1001, 0
        %1016 = vmatprep.subr.bf16.mxu0 0
        %1017 = vmatpush1.bf16.msra.mxu0 0
        %1018 = vmatprep.subr.bf16.mxu0 0
        %1019 = vmatpush1.bf16.msra.mxu0 0
        %1020 = vmatprep.subr.bf16.mxu0 0
        %1021 = vmatpush1.bf16.msra.mxu0 0
        %1022 = vmatprep.subr.bf16.mxu0 0
        %1023 = vmatpush1.bf16.msra.mxu0 0
        %1024 = vmatprep.subr.bf16.mxu0 0
        %1025 = vmatpush1.bf16.msra.mxu0 0
        %1026 = vmatprep.subr.bf16.mxu0 0
        %1027 = vmatpush1.bf16.msra.mxu0 0
        %1028 = vmatprep.subr.bf16.mxu0 0
        %1029 = vmatpush1.bf16.msra.mxu0 %v1007
        %1030 = vmatprep.subr.bf16.mxu0 0
        %1031 = vmatpush1.bf16.msra.mxu0 %v1005
        %1032 = vmatprep.subr.bf16.mxu0 0
        %1033 = vmatpush2.bf16.msra.mxu0 0
        %1034 = vmatprep.subr.bf16.mxu0 0
        %1035 = vmatpush2.bf16.msra.mxu0 0
        %1036 = vmatprep.subr.bf16.mxu0 0
        %1037 = vmatpush2.bf16.msra.mxu0 0
        %1038 = vmatprep.subr.bf16.mxu0 0
        %1039 = vmatpush2.bf16.msra.mxu0 0
        %1040 = vmatprep.subr.bf16.mxu0 0
        %1041 = vmatpush2.bf16.msra.mxu0 0
        %1042 = vmatprep.subr.bf16.mxu0 0
        %1043 = vmatpush2.bf16.msra.mxu0 0
        %1044 = vmatprep.subr.bf16.mxu0 0
        %1045 = vmatpush2.bf16.msra.mxu0 0
        %1046 = vmatprep.subr.bf16.mxu0 0
        %1047 = vmatpush2.bf16.msra.mxu0 0
        %1048 = vmatprep.mubr.bf16.mxu0 0
        %1049 = vmatmul.mubr.bf16.gmra.mxu0 %v1011
        %v1050 = vpop.f32.mrf.mxu0
        %v1051 = vadd.f32 0.0, %v1050
        %v1052 = vpop.f32.mrf.mxu0
        %v1053 = vpop.f32.mrf.mxu0
        %v1054 = vadd.f32 0.0, %v1053
        %v1055 = vpop.f32.mrf.mxu0
        %1056 = vmatprep.mubr.bf16.mxu0 0
        %1057 = vmatmul.mubr.bf16.gmra.mxu0 %v1014
        %v1058 = vpop.f32.mrf.mxu0
        %v1059 = vadd.f32 0.0, %v1058
        %v1060 = vpop.f32.mrf.mxu0
        %v1061 = vpop.f32.mrf.mxu0
        %v1062 = vadd.f32 0.0, %v1061
        %v1063 = vpop.f32.mrf.mxu0
        %1064 = vdwg.mxu0
        %1065 = vrot.lane.b32.xlu0 %v687, 96
        %v1066 = vpop.permute.xlu0 %1065
        %1067 = vrot.lane.b32.xlu0 %v688, 96
        %v1068 = vpop.permute.xlu0 %1067
        %1069 = vrot.lane.b32.xlu0 %v695, 96
        %v1070 = vpop.permute.xlu0 %1069
        %1071 = vrot.lane.b32.xlu0 %v696, 96
        %v1072 = vpop.permute.xlu0 %1071
        %v1074 = vsel %vm711, %v1066, 0
        %v1077 = vsel %vm711, %v1068, 0
        %v1080 = vsel %vm711, %v1070, 0
        %v1083 = vsel %vm711, %v1072, 0
        %1085 = vmatprep.subr.bf16.mxu0 0
        %1086 = vmatpush1.bf16.xpose.msra.mxu0 0
        %1087 = vmatprep.subr.bf16.mxu0 0
        %1088 = vmatpush1.bf16.xpose.msra.mxu0 0
        %1089 = vmatprep.subr.bf16.mxu0 0
        %1090 = vmatpush1.bf16.xpose.msra.mxu0 0
        %1091 = vmatprep.subr.bf16.mxu0 0
        %1092 = vmatpush1.bf16.xpose.msra.mxu0 0
        %1093 = vmatprep.subr.bf16.mxu0 0
        %1094 = vmatpush1.bf16.xpose.msra.mxu0 0
        %1095 = vmatprep.subr.bf16.mxu0 0
        %1096 = vmatpush1.bf16.xpose.msra.mxu0 0
        %1097 = vmatprep.subr.bf16.mxu0 0
        %1098 = vmatpush1.bf16.xpose.msra.mxu0 %v1083
        %1099 = vmatprep.subr.bf16.mxu0 0
        %1100 = vmatpush1.bf16.xpose.msra.mxu0 %v1080
        %1101 = vmatprep.subr.bf16.mxu0 0
        %1102 = vmatpush2.bf16.xpose.msra.mxu0 0
        %1103 = vmatprep.subr.bf16.mxu0 0
        %1104 = vmatpush2.bf16.xpose.msra.mxu0 0
        %1105 = vmatprep.subr.bf16.mxu0 0
        %1106 = vmatpush2.bf16.xpose.msra.mxu0 0
        %1107 = vmatprep.subr.bf16.mxu0 0
        %1108 = vmatpush2.bf16.xpose.msra.mxu0 0
        %1109 = vmatprep.subr.bf16.mxu0 0
        %1110 = vmatpush2.bf16.xpose.msra.mxu0 0
        %1111 = vmatprep.subr.bf16.mxu0 0
        %1112 = vmatpush2.bf16.xpose.msra.mxu0 0
        %1113 = vmatprep.subr.bf16.mxu0 0
        %1114 = vmatpush2.bf16.xpose.msra.mxu0 0
        %1115 = vmatprep.subr.bf16.mxu0 0
        %1116 = vmatpush2.bf16.xpose.msra.mxu0 0
        %1117 = vmatprep.mubr.bf16.mxu0 0
        %1118 = vmatmul.mubr.bf16.gmra.mxu0 %v1074
        %v1119 = vpop.f32.mrf.mxu0
        %v1120 = vadd.f32 0.0, %v1119
        %v1121 = vpop.f32.mrf.mxu0
        %v1122 = vpop.f32.mrf.mxu0
        %v1123 = vadd.f32 0.0, %v1122
        %v1124 = vpop.f32.mrf.mxu0
        %1125 = vmatprep.mubr.bf16.mxu0 0
        %1126 = vmatmul.mubr.bf16.gmra.mxu0 %v1077
        %v1127 = vpop.f32.mrf.mxu0
        %v1128 = vadd.f32 0.0, %v1127
        %v1129 = vpop.f32.mrf.mxu0
        %v1130 = vpop.f32.mrf.mxu0
        %v1131 = vadd.f32 0.0, %v1130
        %v1132 = vpop.f32.mrf.mxu0
        %1133 = vdwg.mxu0
        %v1134 = vmul.f32 %v1120, 0.25
        %v1135 = vmul.f32 %v1123, 0.25
        %v1136 = vmul.f32 %v1128, 0.25
        %v1137 = vmul.f32 %v1131, 0.25
        %v1138 = vsel %vm777, %v1134, -inf
        %1139 = vmax.xlane.f32.xlu0 %v1138
        %v1140 = vpop.xlane.xlu0 %1139
        %v1141 = vsel %vm777, %v1135, -inf
        %1142 = vmax.xlane.f32.xlu0 %v1141
        %v1143 = vpop.xlane.xlu0 %1142
        %v1144 = vsel %vm777, %v1136, -inf
        %1145 = vmax.xlane.f32.xlu0 %v1144
        %v1146 = vpop.xlane.xlu0 %1145
        %v1147 = vsel %vm777, %v1137, -inf
        %1148 = vmax.xlane.f32.xlu0 %v1147
        %v1149 = vpop.xlane.xlu0 %1148
        %v1150 = vsub.f32 %v1134, %v1140
        %v1151 = vsub.f32 %v1135, %v1143
        %v1152 = vsub.f32 %v1136, %v1146
        %v1153 = vsub.f32 %v1137, %v1149
        %v1154 = vmul.f32 %v1150, 1.442695
        %v1155 = vpow.pop %v1154
        %v1156 = vmul.f32 %v1151, 1.442695
        %v1157 = vpow.pop %v1156
        %v1158 = vmul.f32 %v1152, 1.442695
        %v1159 = vpow.pop %v1158
        %v1160 = vmul.f32 %v1153, 1.442695
        %v1161 = vpow.pop %v1160
        %v1162 = vsel %vm777, %v1155, 0.0
        %1163 = vadd.xlane.f32.xlu0 %v1162
        %v1164 = vpop.xlane.xlu0 %1163
        %v1165 = vsel %vm777, %v1157, 0.0
        %1166 = vadd.xlane.f32.xlu0 %v1165
        %v1167 = vpop.xlane.xlu0 %1166
        %v1168 = vsel %vm777, %v1159, 0.0
        %1169 = vadd.xlane.f32.xlu0 %v1168
        %v1170 = vpop.xlane.xlu0 %1169
        %v1171 = vsel %vm777, %v1161, 0.0
        %1172 = vadd.xlane.f32.xlu0 %v1171
        %v1173 = vpop.xlane.xlu0 %1172
        %v1174 = vrcp.pop %v1164
        %v1175 = vrcp.pop %v1167
        %v1176 = vrcp.pop %v1170
        %v1177 = vrcp.pop %v1173
        %v1178 = vmul.f32 %v1155, %v1174
        %v1179 = vmul.f32 %v1157, %v1175
        %v1180 = vmul.f32 %v1159, %v1176
        %v1181 = vmul.f32 %v1161, %v1177
        %v1182 = vpack.c.bf16 %v1179, %v1178
        %v1183 = vpack.c.bf16 %v1181, %v1180
        %1184 = vrot.lane.b32.xlu0 %v703, 96
        %v1185 = vpop.permute.xlu0 %1184
        %1186 = vrot.lane.b32.xlu0 %v704, 96
        %v1187 = vpop.permute.xlu0 %1186
        %v1191 = vsel %vm777, %v1182, 0
        %v1194 = vsel %vm777, %v1183, 0
        %1196 = vmatprep.subr.bf16.mxu0 0
        %1197 = vmatpush1.bf16.msra.mxu0 0
        %1198 = vmatprep.subr.bf16.mxu0 0
        %1199 = vmatpush1.bf16.msra.mxu0 0
        %1200 = vmatprep.subr.bf16.mxu0 0
        %1201 = vmatpush1.bf16.msra.mxu0 0
        %1202 = vmatprep.subr.bf16.mxu0 0
        %1203 = vmatpush1.bf16.msra.mxu0 0
        %1204 = vmatprep.subr.bf16.mxu0 0
        %1205 = vmatpush1.bf16.msra.mxu0 0
        %1206 = vmatprep.subr.bf16.mxu0 0
        %1207 = vmatpush1.bf16.msra.mxu0 0
        %1208 = vmatprep.subr.bf16.mxu0 0
        %1209 = vmatpush1.bf16.msra.mxu0 %v1187
        %1210 = vmatprep.subr.bf16.mxu0 0
        %1211 = vmatpush1.bf16.msra.mxu0 %v1185
        %1212 = vmatprep.subr.bf16.mxu0 0
        %1213 = vmatpush2.bf16.msra.mxu0 0
        %1214 = vmatprep.subr.bf16.mxu0 0
        %1215 = vmatpush2.bf16.msra.mxu0 0
        %1216 = vmatprep.subr.bf16.mxu0 0
        %1217 = vmatpush2.bf16.msra.mxu0 0
        %1218 = vmatprep.subr.bf16.mxu0 0
        %1219 = vmatpush2.bf16.msra.mxu0 0
        %1220 = vmatprep.subr.bf16.mxu0 0
        %1221 = vmatpush2.bf16.msra.mxu0 0
        %1222 = vmatprep.subr.bf16.mxu0 0
        %1223 = vmatpush2.bf16.msra.mxu0 0
        %1224 = vmatprep.subr.bf16.mxu0 0
        %1225 = vmatpush2.bf16.msra.mxu0 0
        %1226 = vmatprep.subr.bf16.mxu0 0
        %1227 = vmatpush2.bf16.msra.mxu0 0
        %1228 = vmatprep.mubr.bf16.mxu0 0
        %1229 = vmatmul.mubr.bf16.gmra.mxu0 %v1191
        %v1230 = vpop.f32.mrf.mxu0
        %v1231 = vadd.f32 0.0, %v1230
        %v1232 = vpop.f32.mrf.mxu0
        %v1233 = vpop.f32.mrf.mxu0
        %v1234 = vadd.f32 0.0, %v1233
        %v1235 = vpop.f32.mrf.mxu0
        %1236 = vmatprep.mubr.bf16.mxu0 0
        %1237 = vmatmul.mubr.bf16.gmra.mxu0 %v1194
        %v1238 = vpop.f32.mrf.mxu0
        %v1239 = vadd.f32 0.0, %v1238
        %v1240 = vpop.f32.mrf.mxu0
        %v1241 = vpop.f32.mrf.mxu0
        %v1242 = vadd.f32 0.0, %v1241
        %v1243 = vpop.f32.mrf.mxu0
        %1244 = vdwg.mxu0
        %1245 = vrot.lane.b32.xlu0 %v687, 80
        %v1246 = vpop.permute.xlu0 %1245
        %1247 = vrot.lane.b32.xlu0 %v688, 80
        %v1248 = vpop.permute.xlu0 %1247
        %1249 = vrot.lane.b32.xlu0 %v695, 80
        %v1250 = vpop.permute.xlu0 %1249
        %1251 = vrot.lane.b32.xlu0 %v696, 80
        %v1252 = vpop.permute.xlu0 %1251
        %v1254 = vsel %vm711, %v1246, 0
        %v1257 = vsel %vm711, %v1248, 0
        %v1260 = vsel %vm711, %v1250, 0
        %v1263 = vsel %vm711, %v1252, 0
        %1265 = vmatprep.subr.bf16.mxu0 0
        %1266 = vmatpush1.bf16.xpose.msra.mxu0 0
        %1267 = vmatprep.subr.bf16.mxu0 0
        %1268 = vmatpush1.bf16.xpose.msra.mxu0 0
        %1269 = vmatprep.subr.bf16.mxu0 0
        %1270 = vmatpush1.bf16.xpose.msra.mxu0 0
        %1271 = vmatprep.subr.bf16.mxu0 0
        %1272 = vmatpush1.bf16.xpose.msra.mxu0 0
        %1273 = vmatprep.subr.bf16.mxu0 0
        %1274 = vmatpush1.bf16.xpose.msra.mxu0 0
        %1275 = vmatprep.subr.bf16.mxu0 0
        %1276 = vmatpush1.bf16.xpose.msra.mxu0 0
        %1277 = vmatprep.subr.bf16.mxu0 0
        %1278 = vmatpush1.bf16.xpose.msra.mxu0 %v1263
        %1279 = vmatprep.subr.bf16.mxu0 0
        %1280 = vmatpush1.bf16.xpose.msra.mxu0 %v1260
        %1281 = vmatprep.subr.bf16.mxu0 0
        %1282 = vmatpush2.bf16.xpose.msra.mxu0 0
        %1283 = vmatprep.subr.bf16.mxu0 0
        %1284 = vmatpush2.bf16.xpose.msra.mxu0 0
        %1285 = vmatprep.subr.bf16.mxu0 0
        %1286 = vmatpush2.bf16.xpose.msra.mxu0 0
        %1287 = vmatprep.subr.bf16.mxu0 0
        %1288 = vmatpush2.bf16.xpose.msra.mxu0 0
        %1289 = vmatprep.subr.bf16.mxu0 0
        %1290 = vmatpush2.bf16.xpose.msra.mxu0 0
        %1291 = vmatprep.subr.bf16.mxu0 0
        %1292 = vmatpush2.bf16.xpose.msra.mxu0 0
        %1293 = vmatprep.subr.bf16.mxu0 0
        %1294 = vmatpush2.bf16.xpose.msra.mxu0 0
        %1295 = vmatprep.subr.bf16.mxu0 0
        %1296 = vmatpush2.bf16.xpose.msra.mxu0 0
        %1297 = vmatprep.mubr.bf16.mxu0 0
        %1298 = vmatmul.mubr.bf16.gmra.mxu0 %v1254
        %v1299 = vpop.f32.mrf.mxu0
        %v1300 = vadd.f32 0.0, %v1299
        %v1301 = vpop.f32.mrf.mxu0
        %v1302 = vpop.f32.mrf.mxu0
        %v1303 = vadd.f32 0.0, %v1302
        %v1304 = vpop.f32.mrf.mxu0
        %1305 = vmatprep.mubr.bf16.mxu0 0
        %1306 = vmatmul.mubr.bf16.gmra.mxu0 %v1257
        %v1307 = vpop.f32.mrf.mxu0
        %v1308 = vadd.f32 0.0, %v1307
        %v1309 = vpop.f32.mrf.mxu0
        %v1310 = vpop.f32.mrf.mxu0
        %v1311 = vadd.f32 0.0, %v1310
        %v1312 = vpop.f32.mrf.mxu0
        %1313 = vdwg.mxu0
        %v1314 = vmul.f32 %v1300, 0.25
        %v1315 = vmul.f32 %v1303, 0.25
        %v1316 = vmul.f32 %v1308, 0.25
        %v1317 = vmul.f32 %v1311, 0.25
        %v1318 = vsel %vm777, %v1314, -inf
        %1319 = vmax.xlane.f32.xlu0 %v1318
        %v1320 = vpop.xlane.xlu0 %1319
        %v1321 = vsel %vm777, %v1315, -inf
        %1322 = vmax.xlane.f32.xlu0 %v1321
        %v1323 = vpop.xlane.xlu0 %1322
        %v1324 = vsel %vm777, %v1316, -inf
        %1325 = vmax.xlane.f32.xlu0 %v1324
        %v1326 = vpop.xlane.xlu0 %1325
        %v1327 = vsel %vm777, %v1317, -inf
        %1328 = vmax.xlane.f32.xlu0 %v1327
        %v1329 = vpop.xlane.xlu0 %1328
        %v1330 = vsub.f32 %v1314, %v1320
        %v1331 = vsub.f32 %v1315, %v1323
        %v1332 = vsub.f32 %v1316, %v1326
        %v1333 = vsub.f32 %v1317, %v1329
        %v1334 = vmul.f32 %v1330, 1.442695
        %v1335 = vpow.pop %v1334
        %v1336 = vmul.f32 %v1331, 1.442695
        %v1337 = vpow.pop %v1336
        %v1338 = vmul.f32 %v1332, 1.442695
        %v1339 = vpow.pop %v1338
        %v1340 = vmul.f32 %v1333, 1.442695
        %v1341 = vpow.pop %v1340
        %v1342 = vsel %vm777, %v1335, 0.0
        %1343 = vadd.xlane.f32.xlu0 %v1342
        %v1344 = vpop.xlane.xlu0 %1343
        %v1345 = vsel %vm777, %v1337, 0.0
        %1346 = vadd.xlane.f32.xlu0 %v1345
        %v1347 = vpop.xlane.xlu0 %1346
        %v1348 = vsel %vm777, %v1339, 0.0
        %1349 = vadd.xlane.f32.xlu0 %v1348
        %v1350 = vpop.xlane.xlu0 %1349
        %v1351 = vsel %vm777, %v1341, 0.0
        %1352 = vadd.xlane.f32.xlu0 %v1351
        %v1353 = vpop.xlane.xlu0 %1352
        %v1354 = vrcp.pop %v1344
        %v1355 = vrcp.pop %v1347
        %v1356 = vrcp.pop %v1350
        %v1357 = vrcp.pop %v1353
        %v1358 = vmul.f32 %v1335, %v1354
        %v1359 = vmul.f32 %v1337, %v1355
        %v1360 = vmul.f32 %v1339, %v1356
        %v1361 = vmul.f32 %v1341, %v1357
        %v1362 = vpack.c.bf16 %v1359, %v1358
        %v1363 = vpack.c.bf16 %v1361, %v1360
        %1364 = vrot.lane.b32.xlu0 %v703, 80
        %v1365 = vpop.permute.xlu0 %1364
        %1366 = vrot.lane.b32.xlu0 %v704, 80
        %v1367 = vpop.permute.xlu0 %1366
        %v1371 = vsel %vm777, %v1362, 0
        %v1374 = vsel %vm777, %v1363, 0
        %1376 = vmatprep.subr.bf16.mxu0 0
        %1377 = vmatpush1.bf16.msra.mxu0 0
        %1378 = vmatprep.subr.bf16.mxu0 0
        %1379 = vmatpush1.bf16.msra.mxu0 0
        %1380 = vmatprep.subr.bf16.mxu0 0
        %1381 = vmatpush1.bf16.msra.mxu0 0
        %1382 = vmatprep.subr.bf16.mxu0 0
        %1383 = vmatpush1.bf16.msra.mxu0 0
        %1384 = vmatprep.subr.bf16.mxu0 0
        %1385 = vmatpush1.bf16.msra.mxu0 0
        %1386 = vmatprep.subr.bf16.mxu0 0
        %1387 = vmatpush1.bf16.msra.mxu0 0
        %1388 = vmatprep.subr.bf16.mxu0 0
        %1389 = vmatpush1.bf16.msra.mxu0 %v1367
        %1390 = vmatprep.subr.bf16.mxu0 0
        %1391 = vmatpush1.bf16.msra.mxu0 %v1365
        %1392 = vmatprep.subr.bf16.mxu0 0
        %1393 = vmatpush2.bf16.msra.mxu0 0
        %1394 = vmatprep.subr.bf16.mxu0 0
        %1395 = vmatpush2.bf16.msra.mxu0 0
        %1396 = vmatprep.subr.bf16.mxu0 0
        %1397 = vmatpush2.bf16.msra.mxu0 0
        %1398 = vmatprep.subr.bf16.mxu0 0
        %1399 = vmatpush2.bf16.msra.mxu0 0
        %1400 = vmatprep.subr.bf16.mxu0 0
        %1401 = vmatpush2.bf16.msra.mxu0 0
        %1402 = vmatprep.subr.bf16.mxu0 0
        %1403 = vmatpush2.bf16.msra.mxu0 0
        %1404 = vmatprep.subr.bf16.mxu0 0
        %1405 = vmatpush2.bf16.msra.mxu0 0
        %1406 = vmatprep.subr.bf16.mxu0 0
        %1407 = vmatpush2.bf16.msra.mxu0 0
        %1408 = vmatprep.mubr.bf16.mxu0 0
        %1409 = vmatmul.mubr.bf16.gmra.mxu0 %v1371
        %v1410 = vpop.f32.mrf.mxu0
        %v1411 = vadd.f32 0.0, %v1410
        %v1412 = vpop.f32.mrf.mxu0
        %v1413 = vpop.f32.mrf.mxu0
        %v1414 = vadd.f32 0.0, %v1413
        %v1415 = vpop.f32.mrf.mxu0
        %1416 = vmatprep.mubr.bf16.mxu0 0
        %1417 = vmatmul.mubr.bf16.gmra.mxu0 %v1374
        %v1418 = vpop.f32.mrf.mxu0
        %v1419 = vadd.f32 0.0, %v1418
        %v1420 = vpop.f32.mrf.mxu0
        %v1421 = vpop.f32.mrf.mxu0
        %v1422 = vadd.f32 0.0, %v1421
        %v1423 = vpop.f32.mrf.mxu0
        %1424 = vdwg.mxu0
        %1425 = vrot.lane.b32.xlu0 %v687, 64
        %v1426 = vpop.permute.xlu0 %1425
        %1427 = vrot.lane.b32.xlu0 %v688, 64
        %v1428 = vpop.permute.xlu0 %1427
        %1429 = vrot.lane.b32.xlu0 %v695, 64
        %v1430 = vpop.permute.xlu0 %1429
        %1431 = vrot.lane.b32.xlu0 %v696, 64
        %v1432 = vpop.permute.xlu0 %1431
        %v1434 = vsel %vm711, %v1426, 0
        %v1437 = vsel %vm711, %v1428, 0
        %v1440 = vsel %vm711, %v1430, 0
        %v1443 = vsel %vm711, %v1432, 0
        %1445 = vmatprep.subr.bf16.mxu0 0
        %1446 = vmatpush1.bf16.xpose.msra.mxu0 0
        %1447 = vmatprep.subr.bf16.mxu0 0
        %1448 = vmatpush1.bf16.xpose.msra.mxu0 0
        %1449 = vmatprep.subr.bf16.mxu0 0
        %1450 = vmatpush1.bf16.xpose.msra.mxu0 0
        %1451 = vmatprep.subr.bf16.mxu0 0
        %1452 = vmatpush1.bf16.xpose.msra.mxu0 0
        %1453 = vmatprep.subr.bf16.mxu0 0
        %1454 = vmatpush1.bf16.xpose.msra.mxu0 0
        %1455 = vmatprep.subr.bf16.mxu0 0
        %1456 = vmatpush1.bf16.xpose.msra.mxu0 0
        %1457 = vmatprep.subr.bf16.mxu0 0
        %1458 = vmatpush1.bf16.xpose.msra.mxu0 %v1443
        %1459 = vmatprep.subr.bf16.mxu0 0
        %1460 = vmatpush1.bf16.xpose.msra.mxu0 %v1440
        %1461 = vmatprep.subr.bf16.mxu0 0
        %1462 = vmatpush2.bf16.xpose.msra.mxu0 0
        %1463 = vmatprep.subr.bf16.mxu0 0
        %1464 = vmatpush2.bf16.xpose.msra.mxu0 0
        %1465 = vmatprep.subr.bf16.mxu0 0
        %1466 = vmatpush2.bf16.xpose.msra.mxu0 0
        %1467 = vmatprep.subr.bf16.mxu0 0
        %1468 = vmatpush2.bf16.xpose.msra.mxu0 0
        %1469 = vmatprep.subr.bf16.mxu0 0
        %1470 = vmatpush2.bf16.xpose.msra.mxu0 0
        %1471 = vmatprep.subr.bf16.mxu0 0
        %1472 = vmatpush2.bf16.xpose.msra.mxu0 0
        %1473 = vmatprep.subr.bf16.mxu0 0
        %1474 = vmatpush2.bf16.xpose.msra.mxu0 0
        %1475 = vmatprep.subr.bf16.mxu0 0
        %1476 = vmatpush2.bf16.xpose.msra.mxu0 0
        %1477 = vmatprep.mubr.bf16.mxu0 0
        %1478 = vmatmul.mubr.bf16.gmra.mxu0 %v1434
        %v1479 = vpop.f32.mrf.mxu0
        %v1480 = vadd.f32 0.0, %v1479
        %v1481 = vpop.f32.mrf.mxu0
        %v1482 = vpop.f32.mrf.mxu0
        %v1483 = vadd.f32 0.0, %v1482
        %v1484 = vpop.f32.mrf.mxu0
        %1485 = vmatprep.mubr.bf16.mxu0 0
        %1486 = vmatmul.mubr.bf16.gmra.mxu0 %v1437
        %v1487 = vpop.f32.mrf.mxu0
        %v1488 = vadd.f32 0.0, %v1487
        %v1489 = vpop.f32.mrf.mxu0
        %v1490 = vpop.f32.mrf.mxu0
        %v1491 = vadd.f32 0.0, %v1490
        %v1492 = vpop.f32.mrf.mxu0
        %1493 = vdwg.mxu0
        %v1494 = vmul.f32 %v1480, 0.25
        %v1495 = vmul.f32 %v1483, 0.25
        %v1496 = vmul.f32 %v1488, 0.25
        %v1497 = vmul.f32 %v1491, 0.25
        %v1498 = vsel %vm777, %v1494, -inf
        %1499 = vmax.xlane.f32.xlu0 %v1498
        %v1500 = vpop.xlane.xlu0 %1499
        %v1501 = vsel %vm777, %v1495, -inf
        %1502 = vmax.xlane.f32.xlu0 %v1501
        %v1503 = vpop.xlane.xlu0 %1502
        %v1504 = vsel %vm777, %v1496, -inf
        %1505 = vmax.xlane.f32.xlu0 %v1504
        %v1506 = vpop.xlane.xlu0 %1505
        %v1507 = vsel %vm777, %v1497, -inf
        %1508 = vmax.xlane.f32.xlu0 %v1507
        %v1509 = vpop.xlane.xlu0 %1508
        %v1510 = vsub.f32 %v1494, %v1500
        %v1511 = vsub.f32 %v1495, %v1503
        %v1512 = vsub.f32 %v1496, %v1506
        %v1513 = vsub.f32 %v1497, %v1509
        %v1514 = vmul.f32 %v1510, 1.442695
        %v1515 = vpow.pop %v1514
        %v1516 = vmul.f32 %v1511, 1.442695
        %v1517 = vpow.pop %v1516
        %v1518 = vmul.f32 %v1512, 1.442695
        %v1519 = vpow.pop %v1518
        %v1520 = vmul.f32 %v1513, 1.442695
        %v1521 = vpow.pop %v1520
        %v1522 = vsel %vm777, %v1515, 0.0
        %1523 = vadd.xlane.f32.xlu0 %v1522
        %v1524 = vpop.xlane.xlu0 %1523
        %v1525 = vsel %vm777, %v1517, 0.0
        %1526 = vadd.xlane.f32.xlu0 %v1525
        %v1527 = vpop.xlane.xlu0 %1526
        %v1528 = vsel %vm777, %v1519, 0.0
        %1529 = vadd.xlane.f32.xlu0 %v1528
        %v1530 = vpop.xlane.xlu0 %1529
        %v1531 = vsel %vm777, %v1521, 0.0
        %1532 = vadd.xlane.f32.xlu0 %v1531
        %v1533 = vpop.xlane.xlu0 %1532
        %v1534 = vrcp.pop %v1524
        %v1535 = vrcp.pop %v1527
        %v1536 = vrcp.pop %v1530
        %v1537 = vrcp.pop %v1533
        %v1538 = vmul.f32 %v1515, %v1534
        %v1539 = vmul.f32 %v1517, %v1535
        %v1540 = vmul.f32 %v1519, %v1536
        %v1541 = vmul.f32 %v1521, %v1537
        %v1542 = vpack.c.bf16 %v1539, %v1538
        %v1543 = vpack.c.bf16 %v1541, %v1540
        %1544 = vrot.lane.b32.xlu0 %v703, 64
        %v1545 = vpop.permute.xlu0 %1544
        %1546 = vrot.lane.b32.xlu0 %v704, 64
        %v1547 = vpop.permute.xlu0 %1546
        %v1551 = vsel %vm777, %v1542, 0
        %v1554 = vsel %vm777, %v1543, 0
        %1556 = vmatprep.subr.bf16.mxu0 0
        %1557 = vmatpush1.bf16.msra.mxu0 0
        %1558 = vmatprep.subr.bf16.mxu0 0
        %1559 = vmatpush1.bf16.msra.mxu0 0
        %1560 = vmatprep.subr.bf16.mxu0 0
        %1561 = vmatpush1.bf16.msra.mxu0 0
        %1562 = vmatprep.subr.bf16.mxu0 0
        %1563 = vmatpush1.bf16.msra.mxu0 0
        %1564 = vmatprep.subr.bf16.mxu0 0
        %1565 = vmatpush1.bf16.msra.mxu0 0
        %1566 = vmatprep.subr.bf16.mxu0 0
        %1567 = vmatpush1.bf16.msra.mxu0 0
        %1568 = vmatprep.subr.bf16.mxu0 0
        %1569 = vmatpush1.bf16.msra.mxu0 %v1547
        %1570 = vmatprep.subr.bf16.mxu0 0
        %1571 = vmatpush1.bf16.msra.mxu0 %v1545
        %1572 = vmatprep.subr.bf16.mxu0 0
        %1573 = vmatpush2.bf16.msra.mxu0 0
        %1574 = vmatprep.subr.bf16.mxu0 0
        %1575 = vmatpush2.bf16.msra.mxu0 0
        %1576 = vmatprep.subr.bf16.mxu0 0
        %1577 = vmatpush2.bf16.msra.mxu0 0
        %1578 = vmatprep.subr.bf16.mxu0 0
        %1579 = vmatpush2.bf16.msra.mxu0 0
        %1580 = vmatprep.subr.bf16.mxu0 0
        %1581 = vmatpush2.bf16.msra.mxu0 0
        %1582 = vmatprep.subr.bf16.mxu0 0
        %1583 = vmatpush2.bf16.msra.mxu0 0
        %1584 = vmatprep.subr.bf16.mxu0 0
        %1585 = vmatpush2.bf16.msra.mxu0 0
        %1586 = vmatprep.subr.bf16.mxu0 0
        %1587 = vmatpush2.bf16.msra.mxu0 0
        %1588 = vmatprep.mubr.bf16.mxu0 0
        %1589 = vmatmul.mubr.bf16.gmra.mxu0 %v1551
        %v1590 = vpop.f32.mrf.mxu0
        %v1591 = vadd.f32 0.0, %v1590
        %v1592 = vpop.f32.mrf.mxu0
        %v1593 = vpop.f32.mrf.mxu0
        %v1594 = vadd.f32 0.0, %v1593
        %v1595 = vpop.f32.mrf.mxu0
        %1596 = vmatprep.mubr.bf16.mxu0 0
        %1597 = vmatmul.mubr.bf16.gmra.mxu0 %v1554
        %v1598 = vpop.f32.mrf.mxu0
        %v1599 = vadd.f32 0.0, %v1598
        %v1600 = vpop.f32.mrf.mxu0
        %v1601 = vpop.f32.mrf.mxu0
        %v1602 = vadd.f32 0.0, %v1601
        %v1603 = vpop.f32.mrf.mxu0
        %1604 = vdwg.mxu0
        %1605 = vrot.lane.b32.xlu0 %v687, 48
        %v1606 = vpop.permute.xlu0 %1605
        %1607 = vrot.lane.b32.xlu0 %v688, 48
        %v1608 = vpop.permute.xlu0 %1607
        %1609 = vrot.lane.b32.xlu0 %v695, 48
        %v1610 = vpop.permute.xlu0 %1609
        %1611 = vrot.lane.b32.xlu0 %v696, 48
        %v1612 = vpop.permute.xlu0 %1611
        %v1614 = vsel %vm711, %v1606, 0
        %v1617 = vsel %vm711, %v1608, 0
        %v1620 = vsel %vm711, %v1610, 0
        %v1623 = vsel %vm711, %v1612, 0
        %1625 = vmatprep.subr.bf16.mxu0 0
        %1626 = vmatpush1.bf16.xpose.msra.mxu0 0
        %1627 = vmatprep.subr.bf16.mxu0 0
        %1628 = vmatpush1.bf16.xpose.msra.mxu0 0
        %1629 = vmatprep.subr.bf16.mxu0 0
        %1630 = vmatpush1.bf16.xpose.msra.mxu0 0
        %1631 = vmatprep.subr.bf16.mxu0 0
        %1632 = vmatpush1.bf16.xpose.msra.mxu0 0
        %1633 = vmatprep.subr.bf16.mxu0 0
        %1634 = vmatpush1.bf16.xpose.msra.mxu0 0
        %1635 = vmatprep.subr.bf16.mxu0 0
        %1636 = vmatpush1.bf16.xpose.msra.mxu0 0
        %1637 = vmatprep.subr.bf16.mxu0 0
        %1638 = vmatpush1.bf16.xpose.msra.mxu0 %v1623
        %1639 = vmatprep.subr.bf16.mxu0 0
        %1640 = vmatpush1.bf16.xpose.msra.mxu0 %v1620
        %1641 = vmatprep.subr.bf16.mxu0 0
        %1642 = vmatpush2.bf16.xpose.msra.mxu0 0
        %1643 = vmatprep.subr.bf16.mxu0 0
        %1644 = vmatpush2.bf16.xpose.msra.mxu0 0
        %1645 = vmatprep.subr.bf16.mxu0 0
        %1646 = vmatpush2.bf16.xpose.msra.mxu0 0
        %1647 = vmatprep.subr.bf16.mxu0 0
        %1648 = vmatpush2.bf16.xpose.msra.mxu0 0
        %1649 = vmatprep.subr.bf16.mxu0 0
        %1650 = vmatpush2.bf16.xpose.msra.mxu0 0
        %1651 = vmatprep.subr.bf16.mxu0 0
        %1652 = vmatpush2.bf16.xpose.msra.mxu0 0
        %1653 = vmatprep.subr.bf16.mxu0 0
        %1654 = vmatpush2.bf16.xpose.msra.mxu0 0
        %1655 = vmatprep.subr.bf16.mxu0 0
        %1656 = vmatpush2.bf16.xpose.msra.mxu0 0
        %1657 = vmatprep.mubr.bf16.mxu0 0
        %1658 = vmatmul.mubr.bf16.gmra.mxu0 %v1614
        %v1659 = vpop.f32.mrf.mxu0
        %v1660 = vadd.f32 0.0, %v1659
        %v1661 = vpop.f32.mrf.mxu0
        %v1662 = vpop.f32.mrf.mxu0
        %v1663 = vadd.f32 0.0, %v1662
        %v1664 = vpop.f32.mrf.mxu0
        %1665 = vmatprep.mubr.bf16.mxu0 0
        %1666 = vmatmul.mubr.bf16.gmra.mxu0 %v1617
        %v1667 = vpop.f32.mrf.mxu0
        %v1668 = vadd.f32 0.0, %v1667
        %v1669 = vpop.f32.mrf.mxu0
        %v1670 = vpop.f32.mrf.mxu0
        %v1671 = vadd.f32 0.0, %v1670
        %v1672 = vpop.f32.mrf.mxu0
        %1673 = vdwg.mxu0
        %v1674 = vmul.f32 %v1660, 0.25
        %v1675 = vmul.f32 %v1663, 0.25
        %v1676 = vmul.f32 %v1668, 0.25
        %v1677 = vmul.f32 %v1671, 0.25
        %v1678 = vsel %vm777, %v1674, -inf
        %1679 = vmax.xlane.f32.xlu0 %v1678
        %v1680 = vpop.xlane.xlu0 %1679
        %v1681 = vsel %vm777, %v1675, -inf
        %1682 = vmax.xlane.f32.xlu0 %v1681
        %v1683 = vpop.xlane.xlu0 %1682
        %v1684 = vsel %vm777, %v1676, -inf
        %1685 = vmax.xlane.f32.xlu0 %v1684
        %v1686 = vpop.xlane.xlu0 %1685
        %v1687 = vsel %vm777, %v1677, -inf
        %1688 = vmax.xlane.f32.xlu0 %v1687
        %v1689 = vpop.xlane.xlu0 %1688
        %v1690 = vsub.f32 %v1674, %v1680
        %v1691 = vsub.f32 %v1675, %v1683
        %v1692 = vsub.f32 %v1676, %v1686
        %v1693 = vsub.f32 %v1677, %v1689
        %v1694 = vmul.f32 %v1690, 1.442695
        %v1695 = vpow.pop %v1694
        %v1696 = vmul.f32 %v1691, 1.442695
        %v1697 = vpow.pop %v1696
        %v1698 = vmul.f32 %v1692, 1.442695
        %v1699 = vpow.pop %v1698
        %v1700 = vmul.f32 %v1693, 1.442695
        %v1701 = vpow.pop %v1700
        %v1702 = vsel %vm777, %v1695, 0.0
        %1703 = vadd.xlane.f32.xlu0 %v1702
        %v1704 = vpop.xlane.xlu0 %1703
        %v1705 = vsel %vm777, %v1697, 0.0
        %1706 = vadd.xlane.f32.xlu0 %v1705
        %v1707 = vpop.xlane.xlu0 %1706
        %v1708 = vsel %vm777, %v1699, 0.0
        %1709 = vadd.xlane.f32.xlu0 %v1708
        %v1710 = vpop.xlane.xlu0 %1709
        %v1711 = vsel %vm777, %v1701, 0.0
        %1712 = vadd.xlane.f32.xlu0 %v1711
        %v1713 = vpop.xlane.xlu0 %1712
        %v1714 = vrcp.pop %v1704
        %v1715 = vrcp.pop %v1707
        %v1716 = vrcp.pop %v1710
        %v1717 = vrcp.pop %v1713
        %v1718 = vmul.f32 %v1695, %v1714
        %v1719 = vmul.f32 %v1697, %v1715
        %v1720 = vmul.f32 %v1699, %v1716
        %v1721 = vmul.f32 %v1701, %v1717
        %v1722 = vpack.c.bf16 %v1719, %v1718
        %v1723 = vpack.c.bf16 %v1721, %v1720
        %1724 = vrot.lane.b32.xlu0 %v703, 48
        %v1725 = vpop.permute.xlu0 %1724
        %1726 = vrot.lane.b32.xlu0 %v704, 48
        %v1727 = vpop.permute.xlu0 %1726
        %v1731 = vsel %vm777, %v1722, 0
        %v1734 = vsel %vm777, %v1723, 0
        %1736 = vmatprep.subr.bf16.mxu0 0
        %1737 = vmatpush1.bf16.msra.mxu0 0
        %1738 = vmatprep.subr.bf16.mxu0 0
        %1739 = vmatpush1.bf16.msra.mxu0 0
        %1740 = vmatprep.subr.bf16.mxu0 0
        %1741 = vmatpush1.bf16.msra.mxu0 0
        %1742 = vmatprep.subr.bf16.mxu0 0
        %1743 = vmatpush1.bf16.msra.mxu0 0
        %1744 = vmatprep.subr.bf16.mxu0 0
        %1745 = vmatpush1.bf16.msra.mxu0 0
        %1746 = vmatprep.subr.bf16.mxu0 0
        %1747 = vmatpush1.bf16.msra.mxu0 0
        %1748 = vmatprep.subr.bf16.mxu0 0
        %1749 = vmatpush1.bf16.msra.mxu0 %v1727
        %1750 = vmatprep.subr.bf16.mxu0 0
        %1751 = vmatpush1.bf16.msra.mxu0 %v1725
        %1752 = vmatprep.subr.bf16.mxu0 0
        %1753 = vmatpush2.bf16.msra.mxu0 0
        %1754 = vmatprep.subr.bf16.mxu0 0
        %1755 = vmatpush2.bf16.msra.mxu0 0
        %1756 = vmatprep.subr.bf16.mxu0 0
        %1757 = vmatpush2.bf16.msra.mxu0 0
        %1758 = vmatprep.subr.bf16.mxu0 0
        %1759 = vmatpush2.bf16.msra.mxu0 0
        %1760 = vmatprep.subr.bf16.mxu0 0
        %1761 = vmatpush2.bf16.msra.mxu0 0
        %1762 = vmatprep.subr.bf16.mxu0 0
        %1763 = vmatpush2.bf16.msra.mxu0 0
        %1764 = vmatprep.subr.bf16.mxu0 0
        %1765 = vmatpush2.bf16.msra.mxu0 0
        %1766 = vmatprep.subr.bf16.mxu0 0
        %1767 = vmatpush2.bf16.msra.mxu0 0
        %1768 = vmatprep.mubr.bf16.mxu0 0
        %1769 = vmatmul.mubr.bf16.gmra.mxu0 %v1731
        %v1770 = vpop.f32.mrf.mxu0
        %v1771 = vadd.f32 0.0, %v1770
        %v1772 = vpop.f32.mrf.mxu0
        %v1773 = vpop.f32.mrf.mxu0
        %v1774 = vadd.f32 0.0, %v1773
        %v1775 = vpop.f32.mrf.mxu0
        %1776 = vmatprep.mubr.bf16.mxu0 0
        %1777 = vmatmul.mubr.bf16.gmra.mxu0 %v1734
        %v1778 = vpop.f32.mrf.mxu0
        %v1779 = vadd.f32 0.0, %v1778
        %v1780 = vpop.f32.mrf.mxu0
        %v1781 = vpop.f32.mrf.mxu0
        %v1782 = vadd.f32 0.0, %v1781
        %v1783 = vpop.f32.mrf.mxu0
        %1784 = vdwg.mxu0
        %1785 = vrot.lane.b32.xlu0 %v687, 32
        %v1786 = vpop.permute.xlu0 %1785
        %1787 = vrot.lane.b32.xlu0 %v688, 32
        %v1788 = vpop.permute.xlu0 %1787
        %1789 = vrot.lane.b32.xlu0 %v695, 32
        %v1790 = vpop.permute.xlu0 %1789
        %1791 = vrot.lane.b32.xlu0 %v696, 32
        %v1792 = vpop.permute.xlu0 %1791
        %v1794 = vsel %vm711, %v1786, 0
        %v1797 = vsel %vm711, %v1788, 0
        %v1800 = vsel %vm711, %v1790, 0
        %v1803 = vsel %vm711, %v1792, 0
        %1805 = vmatprep.subr.bf16.mxu0 0
        %1806 = vmatpush1.bf16.xpose.msra.mxu0 0
        %1807 = vmatprep.subr.bf16.mxu0 0
        %1808 = vmatpush1.bf16.xpose.msra.mxu0 0
        %1809 = vmatprep.subr.bf16.mxu0 0
        %1810 = vmatpush1.bf16.xpose.msra.mxu0 0
        %1811 = vmatprep.subr.bf16.mxu0 0
        %1812 = vmatpush1.bf16.xpose.msra.mxu0 0
        %1813 = vmatprep.subr.bf16.mxu0 0
        %1814 = vmatpush1.bf16.xpose.msra.mxu0 0
        %1815 = vmatprep.subr.bf16.mxu0 0
        %1816 = vmatpush1.bf16.xpose.msra.mxu0 0
        %1817 = vmatprep.subr.bf16.mxu0 0
        %1818 = vmatpush1.bf16.xpose.msra.mxu0 %v1803
        %1819 = vmatprep.subr.bf16.mxu0 0
        %1820 = vmatpush1.bf16.xpose.msra.mxu0 %v1800
        %1821 = vmatprep.subr.bf16.mxu0 0
        %1822 = vmatpush2.bf16.xpose.msra.mxu0 0
        %1823 = vmatprep.subr.bf16.mxu0 0
        %1824 = vmatpush2.bf16.xpose.msra.mxu0 0
        %1825 = vmatprep.subr.bf16.mxu0 0
        %1826 = vmatpush2.bf16.xpose.msra.mxu0 0
        %1827 = vmatprep.subr.bf16.mxu0 0
        %1828 = vmatpush2.bf16.xpose.msra.mxu0 0
        %1829 = vmatprep.subr.bf16.mxu0 0
        %1830 = vmatpush2.bf16.xpose.msra.mxu0 0
        %1831 = vmatprep.subr.bf16.mxu0 0
        %1832 = vmatpush2.bf16.xpose.msra.mxu0 0
        %1833 = vmatprep.subr.bf16.mxu0 0
        %1834 = vmatpush2.bf16.xpose.msra.mxu0 0
        %1835 = vmatprep.subr.bf16.mxu0 0
        %1836 = vmatpush2.bf16.xpose.msra.mxu0 0
        %1837 = vmatprep.mubr.bf16.mxu0 0
        %1838 = vmatmul.mubr.bf16.gmra.mxu0 %v1794
        %v1839 = vpop.f32.mrf.mxu0
        %v1840 = vadd.f32 0.0, %v1839
        %v1841 = vpop.f32.mrf.mxu0
        %v1842 = vpop.f32.mrf.mxu0
        %v1843 = vadd.f32 0.0, %v1842
        %v1844 = vpop.f32.mrf.mxu0
        %1845 = vmatprep.mubr.bf16.mxu0 0
        %1846 = vmatmul.mubr.bf16.gmra.mxu0 %v1797
        %v1847 = vpop.f32.mrf.mxu0
        %v1848 = vadd.f32 0.0, %v1847
        %v1849 = vpop.f32.mrf.mxu0
        %v1850 = vpop.f32.mrf.mxu0
        %v1851 = vadd.f32 0.0, %v1850
        %v1852 = vpop.f32.mrf.mxu0
        %1853 = vdwg.mxu0
        %v1854 = vmul.f32 %v1840, 0.25
        %v1855 = vmul.f32 %v1843, 0.25
        %v1856 = vmul.f32 %v1848, 0.25
        %v1857 = vmul.f32 %v1851, 0.25
        %v1858 = vsel %vm777, %v1854, -inf
        %1859 = vmax.xlane.f32.xlu0 %v1858
        %v1860 = vpop.xlane.xlu0 %1859
        %v1861 = vsel %vm777, %v1855, -inf
        %1862 = vmax.xlane.f32.xlu0 %v1861
        %v1863 = vpop.xlane.xlu0 %1862
        %v1864 = vsel %vm777, %v1856, -inf
        %1865 = vmax.xlane.f32.xlu0 %v1864
        %v1866 = vpop.xlane.xlu0 %1865
        %v1867 = vsel %vm777, %v1857, -inf
        %1868 = vmax.xlane.f32.xlu0 %v1867
        %v1869 = vpop.xlane.xlu0 %1868
        %v1870 = vsub.f32 %v1854, %v1860
        %v1871 = vsub.f32 %v1855, %v1863
        %v1872 = vsub.f32 %v1856, %v1866
        %v1873 = vsub.f32 %v1857, %v1869
        %v1874 = vmul.f32 %v1870, 1.442695
        %v1875 = vpow.pop %v1874
        %v1876 = vmul.f32 %v1871, 1.442695
        %v1877 = vpow.pop %v1876
        %v1878 = vmul.f32 %v1872, 1.442695
        %v1879 = vpow.pop %v1878
        %v1880 = vmul.f32 %v1873, 1.442695
        %v1881 = vpow.pop %v1880
        %v1882 = vsel %vm777, %v1875, 0.0
        %1883 = vadd.xlane.f32.xlu0 %v1882
        %v1884 = vpop.xlane.xlu0 %1883
        %v1885 = vsel %vm777, %v1877, 0.0
        %1886 = vadd.xlane.f32.xlu0 %v1885
        %v1887 = vpop.xlane.xlu0 %1886
        %v1888 = vsel %vm777, %v1879, 0.0
        %1889 = vadd.xlane.f32.xlu0 %v1888
        %v1890 = vpop.xlane.xlu0 %1889
        %v1891 = vsel %vm777, %v1881, 0.0
        %1892 = vadd.xlane.f32.xlu0 %v1891
        %v1893 = vpop.xlane.xlu0 %1892
        %v1894 = vrcp.pop %v1884
        %v1895 = vrcp.pop %v1887
        %v1896 = vrcp.pop %v1890
        %v1897 = vrcp.pop %v1893
        %v1898 = vmul.f32 %v1875, %v1894
        %v1899 = vmul.f32 %v1877, %v1895
        %v1900 = vmul.f32 %v1879, %v1896
        %v1901 = vmul.f32 %v1881, %v1897
        %v1902 = vpack.c.bf16 %v1899, %v1898
        %v1903 = vpack.c.bf16 %v1901, %v1900
        %1904 = vrot.lane.b32.xlu0 %v703, 32
        %v1905 = vpop.permute.xlu0 %1904
        %1906 = vrot.lane.b32.xlu0 %v704, 32
        %v1907 = vpop.permute.xlu0 %1906
        %v1911 = vsel %vm777, %v1902, 0
        %v1914 = vsel %vm777, %v1903, 0
        %1916 = vmatprep.subr.bf16.mxu0 0
        %1917 = vmatpush1.bf16.msra.mxu0 0
        %1918 = vmatprep.subr.bf16.mxu0 0
        %1919 = vmatpush1.bf16.msra.mxu0 0
        %1920 = vmatprep.subr.bf16.mxu0 0
        %1921 = vmatpush1.bf16.msra.mxu0 0
        %1922 = vmatprep.subr.bf16.mxu0 0
        %1923 = vmatpush1.bf16.msra.mxu0 0
        %1924 = vmatprep.subr.bf16.mxu0 0
        %1925 = vmatpush1.bf16.msra.mxu0 0
        %1926 = vmatprep.subr.bf16.mxu0 0
        %1927 = vmatpush1.bf16.msra.mxu0 0
        %1928 = vmatprep.subr.bf16.mxu0 0
        %1929 = vmatpush1.bf16.msra.mxu0 %v1907
        %1930 = vmatprep.subr.bf16.mxu0 0
        %1931 = vmatpush1.bf16.msra.mxu0 %v1905
        %1932 = vmatprep.subr.bf16.mxu0 0
        %1933 = vmatpush2.bf16.msra.mxu0 0
        %1934 = vmatprep.subr.bf16.mxu0 0
        %1935 = vmatpush2.bf16.msra.mxu0 0
        %1936 = vmatprep.subr.bf16.mxu0 0
        %1937 = vmatpush2.bf16.msra.mxu0 0
        %1938 = vmatprep.subr.bf16.mxu0 0
        %1939 = vmatpush2.bf16.msra.mxu0 0
        %1940 = vmatprep.subr.bf16.mxu0 0
        %1941 = vmatpush2.bf16.msra.mxu0 0
        %1942 = vmatprep.subr.bf16.mxu0 0
        %1943 = vmatpush2.bf16.msra.mxu0 0
        %1944 = vmatprep.subr.bf16.mxu0 0
        %1945 = vmatpush2.bf16.msra.mxu0 0
        %1946 = vmatprep.subr.bf16.mxu0 0
        %1947 = vmatpush2.bf16.msra.mxu0 0
        %1948 = vmatprep.mubr.bf16.mxu0 0
        %1949 = vmatmul.mubr.bf16.gmra.mxu0 %v1911
        %v1950 = vpop.f32.mrf.mxu0
        %v1951 = vadd.f32 0.0, %v1950
        %v1952 = vpop.f32.mrf.mxu0
        %v1953 = vpop.f32.mrf.mxu0
        %v1954 = vadd.f32 0.0, %v1953
        %v1955 = vpop.f32.mrf.mxu0
        %1956 = vmatprep.mubr.bf16.mxu0 0
        %1957 = vmatmul.mubr.bf16.gmra.mxu0 %v1914
        %v1958 = vpop.f32.mrf.mxu0
        %v1959 = vadd.f32 0.0, %v1958
        %v1960 = vpop.f32.mrf.mxu0
        %v1961 = vpop.f32.mrf.mxu0
        %v1962 = vadd.f32 0.0, %v1961
        %v1963 = vpop.f32.mrf.mxu0
        %1964 = vdwg.mxu0
        %1965 = vrot.lane.b32.xlu0 %v687, 16
        %v1966 = vpop.permute.xlu0 %1965
        %1967 = vrot.lane.b32.xlu0 %v688, 16
        %v1968 = vpop.permute.xlu0 %1967
        %1969 = vrot.lane.b32.xlu0 %v695, 16
        %v1970 = vpop.permute.xlu0 %1969
        %1971 = vrot.lane.b32.xlu0 %v696, 16
        %v1972 = vpop.permute.xlu0 %1971
        %v1974 = vsel %vm711, %v1966, 0
        %v1977 = vsel %vm711, %v1968, 0
        %v1980 = vsel %vm711, %v1970, 0
        %v1983 = vsel %vm711, %v1972, 0
        %1985 = vmatprep.subr.bf16.mxu0 0
        %1986 = vmatpush1.bf16.xpose.msra.mxu0 0
        %1987 = vmatprep.subr.bf16.mxu0 0
        %1988 = vmatpush1.bf16.xpose.msra.mxu0 0
        %1989 = vmatprep.subr.bf16.mxu0 0
        %1990 = vmatpush1.bf16.xpose.msra.mxu0 0
        %1991 = vmatprep.subr.bf16.mxu0 0
        %1992 = vmatpush1.bf16.xpose.msra.mxu0 0
        %1993 = vmatprep.subr.bf16.mxu0 0
        %1994 = vmatpush1.bf16.xpose.msra.mxu0 0
        %1995 = vmatprep.subr.bf16.mxu0 0
        %1996 = vmatpush1.bf16.xpose.msra.mxu0 0
        %1997 = vmatprep.subr.bf16.mxu0 0
        %1998 = vmatpush1.bf16.xpose.msra.mxu0 %v1983
        %1999 = vmatprep.subr.bf16.mxu0 0
        %2000 = vmatpush1.bf16.xpose.msra.mxu0 %v1980
        %2001 = vmatprep.subr.bf16.mxu0 0
        %2002 = vmatpush2.bf16.xpose.msra.mxu0 0
        %2003 = vmatprep.subr.bf16.mxu0 0
        %2004 = vmatpush2.bf16.xpose.msra.mxu0 0
        %2005 = vmatprep.subr.bf16.mxu0 0
        %2006 = vmatpush2.bf16.xpose.msra.mxu0 0
        %2007 = vmatprep.subr.bf16.mxu0 0
        %2008 = vmatpush2.bf16.xpose.msra.mxu0 0
        %2009 = vmatprep.subr.bf16.mxu0 0
        %2010 = vmatpush2.bf16.xpose.msra.mxu0 0
        %2011 = vmatprep.subr.bf16.mxu0 0
        %2012 = vmatpush2.bf16.xpose.msra.mxu0 0
        %2013 = vmatprep.subr.bf16.mxu0 0
        %2014 = vmatpush2.bf16.xpose.msra.mxu0 0
        %2015 = vmatprep.subr.bf16.mxu0 0
        %2016 = vmatpush2.bf16.xpose.msra.mxu0 0
        %2017 = vmatprep.mubr.bf16.mxu0 0
        %2018 = vmatmul.mubr.bf16.gmra.mxu0 %v1974
        %v2019 = vpop.f32.mrf.mxu0
        %v2020 = vadd.f32 0.0, %v2019
        %v2021 = vpop.f32.mrf.mxu0
        %v2022 = vpop.f32.mrf.mxu0
        %v2023 = vadd.f32 0.0, %v2022
        %v2024 = vpop.f32.mrf.mxu0
        %2025 = vmatprep.mubr.bf16.mxu0 0
        %2026 = vmatmul.mubr.bf16.gmra.mxu0 %v1977
        %v2027 = vpop.f32.mrf.mxu0
        %v2028 = vadd.f32 0.0, %v2027
        %v2029 = vpop.f32.mrf.mxu0
        %v2030 = vpop.f32.mrf.mxu0
        %v2031 = vadd.f32 0.0, %v2030
        %v2032 = vpop.f32.mrf.mxu0
        %2033 = vdwg.mxu0
        %v2034 = vmul.f32 %v2020, 0.25
        %v2035 = vmul.f32 %v2023, 0.25
        %v2036 = vmul.f32 %v2028, 0.25
        %v2037 = vmul.f32 %v2031, 0.25
        %v2038 = vsel %vm777, %v2034, -inf
        %2039 = vmax.xlane.f32.xlu0 %v2038
        %v2040 = vpop.xlane.xlu0 %2039
        %v2041 = vsel %vm777, %v2035, -inf
        %2042 = vmax.xlane.f32.xlu0 %v2041
        %v2043 = vpop.xlane.xlu0 %2042
        %v2044 = vsel %vm777, %v2036, -inf
        %2045 = vmax.xlane.f32.xlu0 %v2044
        %v2046 = vpop.xlane.xlu0 %2045
        %v2047 = vsel %vm777, %v2037, -inf
        %2048 = vmax.xlane.f32.xlu0 %v2047
        %v2049 = vpop.xlane.xlu0 %2048
        %v2050 = vsub.f32 %v2034, %v2040
        %v2051 = vsub.f32 %v2035, %v2043
        %v2052 = vsub.f32 %v2036, %v2046
        %v2053 = vsub.f32 %v2037, %v2049
        %v2054 = vmul.f32 %v2050, 1.442695
        %v2055 = vpow.pop %v2054
        %v2056 = vmul.f32 %v2051, 1.442695
        %v2057 = vpow.pop %v2056
        %v2058 = vmul.f32 %v2052, 1.442695
        %v2059 = vpow.pop %v2058
        %v2060 = vmul.f32 %v2053, 1.442695
        %v2061 = vpow.pop %v2060
        %v2062 = vsel %vm777, %v2055, 0.0
        %2063 = vadd.xlane.f32.xlu0 %v2062
        %v2064 = vpop.xlane.xlu0 %2063
        %v2065 = vsel %vm777, %v2057, 0.0
        %2066 = vadd.xlane.f32.xlu0 %v2065
        %v2067 = vpop.xlane.xlu0 %2066
        %v2068 = vsel %vm777, %v2059, 0.0
        %2069 = vadd.xlane.f32.xlu0 %v2068
        %v2070 = vpop.xlane.xlu0 %2069
        %v2071 = vsel %vm777, %v2061, 0.0
        %2072 = vadd.xlane.f32.xlu0 %v2071
        %v2073 = vpop.xlane.xlu0 %2072
        %v2074 = vrcp.pop %v2064
        %v2075 = vrcp.pop %v2067
        %v2076 = vrcp.pop %v2070
        %v2077 = vrcp.pop %v2073
        %v2078 = vmul.f32 %v2055, %v2074
        %v2079 = vmul.f32 %v2057, %v2075
        %v2080 = vmul.f32 %v2059, %v2076
        %v2081 = vmul.f32 %v2061, %v2077
        %v2082 = vpack.c.bf16 %v2079, %v2078
        %v2083 = vpack.c.bf16 %v2081, %v2080
        %2084 = vrot.lane.b32.xlu0 %v703, 16
        %v2085 = vpop.permute.xlu0 %2084
        %2086 = vrot.lane.b32.xlu0 %v704, 16
        %v2087 = vpop.permute.xlu0 %2086
        %v2091 = vsel %vm777, %v2082, 0
        %v2094 = vsel %vm777, %v2083, 0
        %2096 = vmatprep.subr.bf16.mxu0 0
        %2097 = vmatpush1.bf16.msra.mxu0 0
        %2098 = vmatprep.subr.bf16.mxu0 0
        %2099 = vmatpush1.bf16.msra.mxu0 0
        %2100 = vmatprep.subr.bf16.mxu0 0
        %2101 = vmatpush1.bf16.msra.mxu0 0
        %2102 = vmatprep.subr.bf16.mxu0 0
        %2103 = vmatpush1.bf16.msra.mxu0 0
        %2104 = vmatprep.subr.bf16.mxu0 0
        %2105 = vmatpush1.bf16.msra.mxu0 0
        %2106 = vmatprep.subr.bf16.mxu0 0
        %2107 = vmatpush1.bf16.msra.mxu0 0
        %2108 = vmatprep.subr.bf16.mxu0 0
        %2109 = vmatpush1.bf16.msra.mxu0 %v2087
        %2110 = vmatprep.subr.bf16.mxu0 0
        %2111 = vmatpush1.bf16.msra.mxu0 %v2085
        %2112 = vmatprep.subr.bf16.mxu0 0
        %2113 = vmatpush2.bf16.msra.mxu0 0
        %2114 = vmatprep.subr.bf16.mxu0 0
        %2115 = vmatpush2.bf16.msra.mxu0 0
        %2116 = vmatprep.subr.bf16.mxu0 0
        %2117 = vmatpush2.bf16.msra.mxu0 0
        %2118 = vmatprep.subr.bf16.mxu0 0
        %2119 = vmatpush2.bf16.msra.mxu0 0
        %2120 = vmatprep.subr.bf16.mxu0 0
        %2121 = vmatpush2.bf16.msra.mxu0 0
        %2122 = vmatprep.subr.bf16.mxu0 0
        %2123 = vmatpush2.bf16.msra.mxu0 0
        %2124 = vmatprep.subr.bf16.mxu0 0
        %2125 = vmatpush2.bf16.msra.mxu0 0
        %2126 = vmatprep.subr.bf16.mxu0 0
        %2127 = vmatpush2.bf16.msra.mxu0 0
        %2128 = vmatprep.mubr.bf16.mxu0 0
        %2129 = vmatmul.mubr.bf16.gmra.mxu0 %v2091
        %v2130 = vpop.f32.mrf.mxu0
        %v2131 = vadd.f32 0.0, %v2130
        %v2132 = vpop.f32.mrf.mxu0
        %v2133 = vpop.f32.mrf.mxu0
        %v2134 = vadd.f32 0.0, %v2133
        %v2135 = vpop.f32.mrf.mxu0
        %2136 = vmatprep.mubr.bf16.mxu0 0
        %2137 = vmatmul.mubr.bf16.gmra.mxu0 %v2094
        %v2138 = vpop.f32.mrf.mxu0
        %v2139 = vadd.f32 0.0, %v2138
        %v2140 = vpop.f32.mrf.mxu0
        %v2141 = vpop.f32.mrf.mxu0
        %v2142 = vadd.f32 0.0, %v2141
        %v2143 = vpop.f32.mrf.mxu0
        %2144 = vdwg.mxu0
        %2149 = vrot.lane.b32.xlu0 %v1051, 16
        %v2150 = vpop.permute.xlu0 %2149
        %2151 = vrot.lane.b32.xlu0 %v1054, 16
        %v2152 = vpop.permute.xlu0 %2151
        %2153 = vrot.lane.b32.xlu0 %v1059, 16
        %v2154 = vpop.permute.xlu0 %2153
        %2155 = vrot.lane.b32.xlu0 %v1062, 16
        %v2156 = vpop.permute.xlu0 %2155
        %2165 = vrot.lane.b32.xlu0 %v1231, 32
        %v2166 = vpop.permute.xlu0 %2165
        %2167 = vrot.lane.b32.xlu0 %v1234, 32
        %v2168 = vpop.permute.xlu0 %2167
        %2169 = vrot.lane.b32.xlu0 %v1239, 32
        %v2170 = vpop.permute.xlu0 %2169
        %2171 = vrot.lane.b32.xlu0 %v1242, 32
        %v2172 = vpop.permute.xlu0 %2171
        %2181 = vrot.lane.b32.xlu0 %v1411, 48
        %v2182 = vpop.permute.xlu0 %2181
        %2183 = vrot.lane.b32.xlu0 %v1414, 48
        %v2184 = vpop.permute.xlu0 %2183
        %2185 = vrot.lane.b32.xlu0 %v1419, 48
        %v2186 = vpop.permute.xlu0 %2185
        %2187 = vrot.lane.b32.xlu0 %v1422, 48
        %v2188 = vpop.permute.xlu0 %2187
        %2197 = vrot.lane.b32.xlu0 %v1591, 64
        %v2198 = vpop.permute.xlu0 %2197
        %2199 = vrot.lane.b32.xlu0 %v1594, 64
        %v2200 = vpop.permute.xlu0 %2199
        %2201 = vrot.lane.b32.xlu0 %v1599, 64
        %v2202 = vpop.permute.xlu0 %2201
        %2203 = vrot.lane.b32.xlu0 %v1602, 64
        %v2204 = vpop.permute.xlu0 %2203
        %2213 = vrot.lane.b32.xlu0 %v1771, 80
        %v2214 = vpop.permute.xlu0 %2213
        %2215 = vrot.lane.b32.xlu0 %v1774, 80
        %v2216 = vpop.permute.xlu0 %2215
        %2217 = vrot.lane.b32.xlu0 %v1779, 80
        %v2218 = vpop.permute.xlu0 %2217
        %2219 = vrot.lane.b32.xlu0 %v1782, 80
        %v2220 = vpop.permute.xlu0 %2219
        %2229 = vrot.lane.b32.xlu0 %v1951, 96
        %v2230 = vpop.permute.xlu0 %2229
        %2231 = vrot.lane.b32.xlu0 %v1954, 96
        %v2232 = vpop.permute.xlu0 %2231
        %2233 = vrot.lane.b32.xlu0 %v1959, 96
        %v2234 = vpop.permute.xlu0 %2233
        %2235 = vrot.lane.b32.xlu0 %v1962, 96
        %v2236 = vpop.permute.xlu0 %2235
        %2245 = vrot.lane.b32.xlu0 %v2131, 112
        %v2246 = vpop.permute.xlu0 %2245
        %2247 = vrot.lane.b32.xlu0 %v2134, 112
        %v2248 = vpop.permute.xlu0 %2247
        %2249 = vrot.lane.b32.xlu0 %v2139, 112
        %v2250 = vpop.permute.xlu0 %2249
        %2251 = vrot.lane.b32.xlu0 %v2142, 112
        %v2252 = vpop.permute.xlu0 %2251
        %v2257 = vsel %vm711, %v865, %v2150
        %v2258 = vsel %vm711, %v868, %v2152
        %v2259 = vsel %vm711, %v873, %v2154
        %v2260 = vsel %vm711, %v876, %v2156
        %v2261 = vsel %vm777, %v2257, %v2166
        %v2262 = vsel %vm777, %v2258, %v2168
        %v2263 = vsel %vm777, %v2259, %v2170
        %v2264 = vsel %vm777, %v2260, %v2172
        %vm2265 = vcmask 392192
        %v2266 = vsel %vm2265, %v2261, %v2182
        %v2267 = vsel %vm2265, %v2262, %v2184
        %v2268 = vsel %vm2265, %v2263, %v2186
        %v2269 = vsel %vm2265, %v2264, %v2188
        %vm2270 = vcmask 523264
        %v2271 = vsel %vm2270, %v2266, %v2198
        %v2272 = vsel %vm2270, %v2267, %v2200
        %v2273 = vsel %vm2270, %v2268, %v2202
        %v2274 = vsel %vm2270, %v2269, %v2204
        %vm2275 = vcmask 654336
        %v2276 = vsel %vm2275, %v2271, %v2214
        %v2277 = vsel %vm2275, %v2272, %v2216
        %v2278 = vsel %vm2275, %v2273, %v2218
        %v2279 = vsel %vm2275, %v2274, %v2220
        %vm2280 = vcmask 785408
        %v2281 = vsel %vm2280, %v2276, %v2230
        %v2282 = vsel %vm2280, %v2277, %v2232
        %v2283 = vsel %vm2280, %v2278, %v2234
        %v2284 = vsel %vm2280, %v2279, %v2236
        %vm2285 = vcmask 916480
        %v2286 = vsel %vm2285, %v2281, %v2246
        %v2287 = vsel %vm2285, %v2282, %v2248
        %v2288 = vsel %vm2285, %v2283, %v2250
        %v2289 = vsel %vm2285, %v2284, %v2252
        %v2291 = vsel %vm711, %v689, 0
        %v2294 = vsel %vm711, %v690, 0
        %v2297 = vsel %vm711, %v697, 0
        %v2300 = vsel %vm711, %v698, 0
        %2302 = vmatprep.subr.bf16.mxu0 0
        %2303 = vmatpush1.bf16.xpose.msra.mxu0 0
        %2304 = vmatprep.subr.bf16.mxu0 0
        %2305 = vmatpush1.bf16.xpose.msra.mxu0 0
        %2306 = vmatprep.subr.bf16.mxu0 0
        %2307 = vmatpush1.bf16.xpose.msra.mxu0 0
        %2308 = vmatprep.subr.bf16.mxu0 0
        %2309 = vmatpush1.bf16.xpose.msra.mxu0 0
        %2310 = vmatprep.subr.bf16.mxu0 0
        %2311 = vmatpush1.bf16.xpose.msra.mxu0 0
        %2312 = vmatprep.subr.bf16.mxu0 0
        %2313 = vmatpush1.bf16.xpose.msra.mxu0 0
        %2314 = vmatprep.subr.bf16.mxu0 0
        %2315 = vmatpush1.bf16.xpose.msra.mxu0 %v2300
        %2316 = vmatprep.subr.bf16.mxu0 0
        %2317 = vmatpush1.bf16.xpose.msra.mxu0 %v2297
        %2318 = vmatprep.subr.bf16.mxu0 0
        %2319 = vmatpush2.bf16.xpose.msra.mxu0 0
        %2320 = vmatprep.subr.bf16.mxu0 0
        %2321 = vmatpush2.bf16.xpose.msra.mxu0 0
        %2322 = vmatprep.subr.bf16.mxu0 0
        %2323 = vmatpush2.bf16.xpose.msra.mxu0 0
        %2324 = vmatprep.subr.bf16.mxu0 0
        %2325 = vmatpush2.bf16.xpose.msra.mxu0 0
        %2326 = vmatprep.subr.bf16.mxu0 0
        %2327 = vmatpush2.bf16.xpose.msra.mxu0 0
        %2328 = vmatprep.subr.bf16.mxu0 0
        %2329 = vmatpush2.bf16.xpose.msra.mxu0 0
        %2330 = vmatprep.subr.bf16.mxu0 0
        %2331 = vmatpush2.bf16.xpose.msra.mxu0 0
        %2332 = vmatprep.subr.bf16.mxu0 0
        %2333 = vmatpush2.bf16.xpose.msra.mxu0 0
        %2334 = vmatprep.mubr.bf16.mxu0 0
        %2335 = vmatmul.mubr.bf16.gmra.mxu0 %v2291
        %v2336 = vpop.f32.mrf.mxu0
        %v2337 = vadd.f32 0.0, %v2336
        %v2338 = vpop.f32.mrf.mxu0
        %v2339 = vpop.f32.mrf.mxu0
        %v2340 = vadd.f32 0.0, %v2339
        %v2341 = vpop.f32.mrf.mxu0
        %2342 = vmatprep.mubr.bf16.mxu0 0
        %2343 = vmatmul.mubr.bf16.gmra.mxu0 %v2294
        %v2344 = vpop.f32.mrf.mxu0
        %v2345 = vadd.f32 0.0, %v2344
        %v2346 = vpop.f32.mrf.mxu0
        %v2347 = vpop.f32.mrf.mxu0
        %v2348 = vadd.f32 0.0, %v2347
        %v2349 = vpop.f32.mrf.mxu0
        %2350 = vdwg.mxu0
        %v2351 = vmul.f32 %v2337, 0.25
        %v2352 = vmul.f32 %v2340, 0.25
        %v2353 = vmul.f32 %v2345, 0.25
        %v2354 = vmul.f32 %v2348, 0.25
        %v2355 = vsel %vm777, %v2351, -inf
        %2356 = vmax.xlane.f32.xlu0 %v2355
        %v2357 = vpop.xlane.xlu0 %2356
        %v2358 = vsel %vm777, %v2352, -inf
        %2359 = vmax.xlane.f32.xlu0 %v2358
        %v2360 = vpop.xlane.xlu0 %2359
        %v2361 = vsel %vm777, %v2353, -inf
        %2362 = vmax.xlane.f32.xlu0 %v2361
        %v2363 = vpop.xlane.xlu0 %2362
        %v2364 = vsel %vm777, %v2354, -inf
        %2365 = vmax.xlane.f32.xlu0 %v2364
        %v2366 = vpop.xlane.xlu0 %2365
        %v2367 = vsub.f32 %v2351, %v2357
        %v2368 = vsub.f32 %v2352, %v2360
        %v2369 = vsub.f32 %v2353, %v2363
        %v2370 = vsub.f32 %v2354, %v2366
        %v2371 = vmul.f32 %v2367, 1.442695
        %v2372 = vpow.pop %v2371
        %v2373 = vmul.f32 %v2368, 1.442695
        %v2374 = vpow.pop %v2373
        %v2375 = vmul.f32 %v2369, 1.442695
        %v2376 = vpow.pop %v2375
        %v2377 = vmul.f32 %v2370, 1.442695
        %v2378 = vpow.pop %v2377
        %v2379 = vsel %vm777, %v2372, 0.0
        %2380 = vadd.xlane.f32.xlu0 %v2379
        %v2381 = vpop.xlane.xlu0 %2380
        %v2382 = vsel %vm777, %v2374, 0.0
        %2383 = vadd.xlane.f32.xlu0 %v2382
        %v2384 = vpop.xlane.xlu0 %2383
        %v2385 = vsel %vm777, %v2376, 0.0
        %2386 = vadd.xlane.f32.xlu0 %v2385
        %v2387 = vpop.xlane.xlu0 %2386
        %v2388 = vsel %vm777, %v2378, 0.0
        %2389 = vadd.xlane.f32.xlu0 %v2388
        %v2390 = vpop.xlane.xlu0 %2389
        %v2391 = vrcp.pop %v2381
        %v2392 = vrcp.pop %v2384
        %v2393 = vrcp.pop %v2387
        %v2394 = vrcp.pop %v2390
        %v2395 = vmul.f32 %v2372, %v2391
        %v2396 = vmul.f32 %v2374, %v2392
        %v2397 = vmul.f32 %v2376, %v2393
        %v2398 = vmul.f32 %v2378, %v2394
        %v2399 = vpack.c.bf16 %v2396, %v2395
        %v2400 = vpack.c.bf16 %v2398, %v2397
        %v2402 = vsel %vm777, %v2399, 0
        %v2405 = vsel %vm777, %v2400, 0
        %2407 = vmatprep.subr.bf16.mxu0 0
        %2408 = vmatpush1.bf16.msra.mxu0 0
        %2409 = vmatprep.subr.bf16.mxu0 0
        %2410 = vmatpush1.bf16.msra.mxu0 0
        %2411 = vmatprep.subr.bf16.mxu0 0
        %2412 = vmatpush1.bf16.msra.mxu0 0
        %2413 = vmatprep.subr.bf16.mxu0 0
        %2414 = vmatpush1.bf16.msra.mxu0 0
        %2415 = vmatprep.subr.bf16.mxu0 0
        %2416 = vmatpush1.bf16.msra.mxu0 0
        %2417 = vmatprep.subr.bf16.mxu0 0
        %2418 = vmatpush1.bf16.msra.mxu0 0
        %2419 = vmatprep.subr.bf16.mxu0 0
        %2420 = vmatpush1.bf16.msra.mxu0 %v706
        %2421 = vmatprep.subr.bf16.mxu0 0
        %2422 = vmatpush1.bf16.msra.mxu0 %v705
        %2423 = vmatprep.subr.bf16.mxu0 0
        %2424 = vmatpush2.bf16.msra.mxu0 0
        %2425 = vmatprep.subr.bf16.mxu0 0
        %2426 = vmatpush2.bf16.msra.mxu0 0
        %2427 = vmatprep.subr.bf16.mxu0 0
        %2428 = vmatpush2.bf16.msra.mxu0 0
        %2429 = vmatprep.subr.bf16.mxu0 0
        %2430 = vmatpush2.bf16.msra.mxu0 0
        %2431 = vmatprep.subr.bf16.mxu0 0
        %2432 = vmatpush2.bf16.msra.mxu0 0
        %2433 = vmatprep.subr.bf16.mxu0 0
        %2434 = vmatpush2.bf16.msra.mxu0 0
        %2435 = vmatprep.subr.bf16.mxu0 0
        %2436 = vmatpush2.bf16.msra.mxu0 0
        %2437 = vmatprep.subr.bf16.mxu0 0
        %2438 = vmatpush2.bf16.msra.mxu0 0
        %2439 = vmatprep.mubr.bf16.mxu0 0
        %2440 = vmatmul.mubr.bf16.gmra.mxu0 %v2402
        %v2441 = vpop.f32.mrf.mxu0
        %v2442 = vadd.f32 0.0, %v2441
        %v2443 = vpop.f32.mrf.mxu0
        %v2444 = vpop.f32.mrf.mxu0
        %v2445 = vadd.f32 0.0, %v2444
        %v2446 = vpop.f32.mrf.mxu0
        %2447 = vmatprep.mubr.bf16.mxu0 0
        %2448 = vmatmul.mubr.bf16.gmra.mxu0 %v2405
        %v2449 = vpop.f32.mrf.mxu0
        %v2450 = vadd.f32 0.0, %v2449
        %v2451 = vpop.f32.mrf.mxu0
        %v2452 = vpop.f32.mrf.mxu0
        %v2453 = vadd.f32 0.0, %v2452
        %v2454 = vpop.f32.mrf.mxu0
        %2455 = vdwg.mxu0
        %2458 = vrot.lane.b32.xlu0 %v689, 112
        %v2459 = vpop.permute.xlu0 %2458
        %2460 = vrot.lane.b32.xlu0 %v690, 112
        %v2461 = vpop.permute.xlu0 %2460
        %2464 = vrot.lane.b32.xlu0 %v697, 112
        %v2465 = vpop.permute.xlu0 %2464
        %2466 = vrot.lane.b32.xlu0 %v698, 112
        %v2467 = vpop.permute.xlu0 %2466
        %v2469 = vsel %vm711, %v2459, 0
        %v2472 = vsel %vm711, %v2461, 0
        %v2475 = vsel %vm711, %v2465, 0
        %v2478 = vsel %vm711, %v2467, 0
        %2480 = vmatprep.subr.bf16.mxu0 0
        %2481 = vmatpush1.bf16.xpose.msra.mxu0 0
        %2482 = vmatprep.subr.bf16.mxu0 0
        %2483 = vmatpush1.bf16.xpose.msra.mxu0 0
        %2484 = vmatprep.subr.bf16.mxu0 0
        %2485 = vmatpush1.bf16.xpose.msra.mxu0 0
        %2486 = vmatprep.subr.bf16.mxu0 0
        %2487 = vmatpush1.bf16.xpose.msra.mxu0 0
        %2488 = vmatprep.subr.bf16.mxu0 0
        %2489 = vmatpush1.bf16.xpose.msra.mxu0 0
        %2490 = vmatprep.subr.bf16.mxu0 0
        %2491 = vmatpush1.bf16.xpose.msra.mxu0 0
        %2492 = vmatprep.subr.bf16.mxu0 0
        %2493 = vmatpush1.bf16.xpose.msra.mxu0 %v2478
        %2494 = vmatprep.subr.bf16.mxu0 0
        %2495 = vmatpush1.bf16.xpose.msra.mxu0 %v2475
        %2496 = vmatprep.subr.bf16.mxu0 0
        %2497 = vmatpush2.bf16.xpose.msra.mxu0 0
        %2498 = vmatprep.subr.bf16.mxu0 0
        %2499 = vmatpush2.bf16.xpose.msra.mxu0 0
        %2500 = vmatprep.subr.bf16.mxu0 0
        %2501 = vmatpush2.bf16.xpose.msra.mxu0 0
        %2502 = vmatprep.subr.bf16.mxu0 0
        %2503 = vmatpush2.bf16.xpose.msra.mxu0 0
        %2504 = vmatprep.subr.bf16.mxu0 0
        %2505 = vmatpush2.bf16.xpose.msra.mxu0 0
        %2506 = vmatprep.subr.bf16.mxu0 0
        %2507 = vmatpush2.bf16.xpose.msra.mxu0 0
        %2508 = vmatprep.subr.bf16.mxu0 0
        %2509 = vmatpush2.bf16.xpose.msra.mxu0 0
        %2510 = vmatprep.subr.bf16.mxu0 0
        %2511 = vmatpush2.bf16.xpose.msra.mxu0 0
        %2512 = vmatprep.mubr.bf16.mxu0 0
        %2513 = vmatmul.mubr.bf16.gmra.mxu0 %v2469
        %v2514 = vpop.f32.mrf.mxu0
        %v2515 = vadd.f32 0.0, %v2514
        %v2516 = vpop.f32.mrf.mxu0
        %v2517 = vpop.f32.mrf.mxu0
        %v2518 = vadd.f32 0.0, %v2517
        %v2519 = vpop.f32.mrf.mxu0
        %2520 = vmatprep.mubr.bf16.mxu0 0
        %2521 = vmatmul.mubr.bf16.gmra.mxu0 %v2472
        %v2522 = vpop.f32.mrf.mxu0
        %v2523 = vadd.f32 0.0, %v2522
        %v2524 = vpop.f32.mrf.mxu0
        %v2525 = vpop.f32.mrf.mxu0
        %v2526 = vadd.f32 0.0, %v2525
        %v2527 = vpop.f32.mrf.mxu0
        %2528 = vdwg.mxu0
        %v2529 = vmul.f32 %v2515, 0.25
        %v2530 = vmul.f32 %v2518, 0.25
        %v2531 = vmul.f32 %v2523, 0.25
        %v2532 = vmul.f32 %v2526, 0.25
        %v2533 = vsel %vm777, %v2529, -inf
        %2534 = vmax.xlane.f32.xlu0 %v2533
        %v2535 = vpop.xlane.xlu0 %2534
        %v2536 = vsel %vm777, %v2530, -inf
        %2537 = vmax.xlane.f32.xlu0 %v2536
        %v2538 = vpop.xlane.xlu0 %2537
        %v2539 = vsel %vm777, %v2531, -inf
        %2540 = vmax.xlane.f32.xlu0 %v2539
        %v2541 = vpop.xlane.xlu0 %2540
        %v2542 = vsel %vm777, %v2532, -inf
        %2543 = vmax.xlane.f32.xlu0 %v2542
        %v2544 = vpop.xlane.xlu0 %2543
        %v2545 = vsub.f32 %v2529, %v2535
        %v2546 = vsub.f32 %v2530, %v2538
        %v2547 = vsub.f32 %v2531, %v2541
        %v2548 = vsub.f32 %v2532, %v2544
        %v2549 = vmul.f32 %v2545, 1.442695
        %v2550 = vpow.pop %v2549
        %v2551 = vmul.f32 %v2546, 1.442695
        %v2552 = vpow.pop %v2551
        %v2553 = vmul.f32 %v2547, 1.442695
        %v2554 = vpow.pop %v2553
        %v2555 = vmul.f32 %v2548, 1.442695
        %v2556 = vpow.pop %v2555
        %v2557 = vsel %vm777, %v2550, 0.0
        %2558 = vadd.xlane.f32.xlu0 %v2557
        %v2559 = vpop.xlane.xlu0 %2558
        %v2560 = vsel %vm777, %v2552, 0.0
        %2561 = vadd.xlane.f32.xlu0 %v2560
        %v2562 = vpop.xlane.xlu0 %2561
        %v2563 = vsel %vm777, %v2554, 0.0
        %2564 = vadd.xlane.f32.xlu0 %v2563
        %v2565 = vpop.xlane.xlu0 %2564
        %v2566 = vsel %vm777, %v2556, 0.0
        %2567 = vadd.xlane.f32.xlu0 %v2566
        %v2568 = vpop.xlane.xlu0 %2567
        %v2569 = vrcp.pop %v2559
        %v2570 = vrcp.pop %v2562
        %v2571 = vrcp.pop %v2565
        %v2572 = vrcp.pop %v2568
        %v2573 = vmul.f32 %v2550, %v2569
        %v2574 = vmul.f32 %v2552, %v2570
        %v2575 = vmul.f32 %v2554, %v2571
        %v2576 = vmul.f32 %v2556, %v2572
        %v2577 = vpack.c.bf16 %v2574, %v2573
        %v2578 = vpack.c.bf16 %v2576, %v2575
        %2581 = vrot.lane.b32.xlu0 %v705, 112
        %v2582 = vpop.permute.xlu0 %2581
        %2583 = vrot.lane.b32.xlu0 %v706, 112
        %v2584 = vpop.permute.xlu0 %2583
        %v2588 = vsel %vm777, %v2577, 0
        %v2591 = vsel %vm777, %v2578, 0
        %2593 = vmatprep.subr.bf16.mxu0 0
        %2594 = vmatpush1.bf16.msra.mxu0 0
        %2595 = vmatprep.subr.bf16.mxu0 0
        %2596 = vmatpush1.bf16.msra.mxu0 0
        %2597 = vmatprep.subr.bf16.mxu0 0
        %2598 = vmatpush1.bf16.msra.mxu0 0
        %2599 = vmatprep.subr.bf16.mxu0 0
        %2600 = vmatpush1.bf16.msra.mxu0 0
        %2601 = vmatprep.subr.bf16.mxu0 0
        %2602 = vmatpush1.bf16.msra.mxu0 0
        %2603 = vmatprep.subr.bf16.mxu0 0
        %2604 = vmatpush1.bf16.msra.mxu0 0
        %2605 = vmatprep.subr.bf16.mxu0 0
        %2606 = vmatpush1.bf16.msra.mxu0 %v2584
        %2607 = vmatprep.subr.bf16.mxu0 0
        %2608 = vmatpush1.bf16.msra.mxu0 %v2582
        %2609 = vmatprep.subr.bf16.mxu0 0
        %2610 = vmatpush2.bf16.msra.mxu0 0
        %2611 = vmatprep.subr.bf16.mxu0 0
        %2612 = vmatpush2.bf16.msra.mxu0 0
        %2613 = vmatprep.subr.bf16.mxu0 0
        %2614 = vmatpush2.bf16.msra.mxu0 0
        %2615 = vmatprep.subr.bf16.mxu0 0
        %2616 = vmatpush2.bf16.msra.mxu0 0
        %2617 = vmatprep.subr.bf16.mxu0 0
        %2618 = vmatpush2.bf16.msra.mxu0 0
        %2619 = vmatprep.subr.bf16.mxu0 0
        %2620 = vmatpush2.bf16.msra.mxu0 0
        %2621 = vmatprep.subr.bf16.mxu0 0
        %2622 = vmatpush2.bf16.msra.mxu0 0
        %2623 = vmatprep.subr.bf16.mxu0 0
        %2624 = vmatpush2.bf16.msra.mxu0 0
        %2625 = vmatprep.mubr.bf16.mxu0 0
        %2626 = vmatmul.mubr.bf16.gmra.mxu0 %v2588
        %v2627 = vpop.f32.mrf.mxu0
        %v2628 = vadd.f32 0.0, %v2627
        %v2629 = vpop.f32.mrf.mxu0
        %v2630 = vpop.f32.mrf.mxu0
        %v2631 = vadd.f32 0.0, %v2630
        %v2632 = vpop.f32.mrf.mxu0
        %2633 = vmatprep.mubr.bf16.mxu0 0
        %2634 = vmatmul.mubr.bf16.gmra.mxu0 %v2591
        %v2635 = vpop.f32.mrf.mxu0
        %v2636 = vadd.f32 0.0, %v2635
        %v2637 = vpop.f32.mrf.mxu0
        %v2638 = vpop.f32.mrf.mxu0
        %v2639 = vadd.f32 0.0, %v2638
        %v2640 = vpop.f32.mrf.mxu0
        %2641 = vdwg.mxu0
        %2642 = vrot.lane.b32.xlu0 %v689, 96
        %v2643 = vpop.permute.xlu0 %2642
        %2644 = vrot.lane.b32.xlu0 %v690, 96
        %v2645 = vpop.permute.xlu0 %2644
        %2646 = vrot.lane.b32.xlu0 %v697, 96
        %v2647 = vpop.permute.xlu0 %2646
        %2648 = vrot.lane.b32.xlu0 %v698, 96
        %v2649 = vpop.permute.xlu0 %2648
        %v2651 = vsel %vm711, %v2643, 0
        %v2654 = vsel %vm711, %v2645, 0
        %v2657 = vsel %vm711, %v2647, 0
        %v2660 = vsel %vm711, %v2649, 0
        %2662 = vmatprep.subr.bf16.mxu0 0
        %2663 = vmatpush1.bf16.xpose.msra.mxu0 0
        %2664 = vmatprep.subr.bf16.mxu0 0
        %2665 = vmatpush1.bf16.xpose.msra.mxu0 0
        %2666 = vmatprep.subr.bf16.mxu0 0
        %2667 = vmatpush1.bf16.xpose.msra.mxu0 0
        %2668 = vmatprep.subr.bf16.mxu0 0
        %2669 = vmatpush1.bf16.xpose.msra.mxu0 0
        %2670 = vmatprep.subr.bf16.mxu0 0
        %2671 = vmatpush1.bf16.xpose.msra.mxu0 0
        %2672 = vmatprep.subr.bf16.mxu0 0
        %2673 = vmatpush1.bf16.xpose.msra.mxu0 0
        %2674 = vmatprep.subr.bf16.mxu0 0
        %2675 = vmatpush1.bf16.xpose.msra.mxu0 %v2660
        %2676 = vmatprep.subr.bf16.mxu0 0
        %2677 = vmatpush1.bf16.xpose.msra.mxu0 %v2657
        %2678 = vmatprep.subr.bf16.mxu0 0
        %2679 = vmatpush2.bf16.xpose.msra.mxu0 0
        %2680 = vmatprep.subr.bf16.mxu0 0
        %2681 = vmatpush2.bf16.xpose.msra.mxu0 0
        %2682 = vmatprep.subr.bf16.mxu0 0
        %2683 = vmatpush2.bf16.xpose.msra.mxu0 0
        %2684 = vmatprep.subr.bf16.mxu0 0
        %2685 = vmatpush2.bf16.xpose.msra.mxu0 0
        %2686 = vmatprep.subr.bf16.mxu0 0
        %2687 = vmatpush2.bf16.xpose.msra.mxu0 0
        %2688 = vmatprep.subr.bf16.mxu0 0
        %2689 = vmatpush2.bf16.xpose.msra.mxu0 0
        %2690 = vmatprep.subr.bf16.mxu0 0
        %2691 = vmatpush2.bf16.xpose.msra.mxu0 0
        %2692 = vmatprep.subr.bf16.mxu0 0
        %2693 = vmatpush2.bf16.xpose.msra.mxu0 0
        %2694 = vmatprep.mubr.bf16.mxu0 0
        %2695 = vmatmul.mubr.bf16.gmra.mxu0 %v2651
        %v2696 = vpop.f32.mrf.mxu0
        %v2697 = vadd.f32 0.0, %v2696
        %v2698 = vpop.f32.mrf.mxu0
        %v2699 = vpop.f32.mrf.mxu0
        %v2700 = vadd.f32 0.0, %v2699
        %v2701 = vpop.f32.mrf.mxu0
        %2702 = vmatprep.mubr.bf16.mxu0 0
        %2703 = vmatmul.mubr.bf16.gmra.mxu0 %v2654
        %v2704 = vpop.f32.mrf.mxu0
        %v2705 = vadd.f32 0.0, %v2704
        %v2706 = vpop.f32.mrf.mxu0
        %v2707 = vpop.f32.mrf.mxu0
        %v2708 = vadd.f32 0.0, %v2707
        %v2709 = vpop.f32.mrf.mxu0
        %2710 = vdwg.mxu0
        %v2711 = vmul.f32 %v2697, 0.25
        %v2712 = vmul.f32 %v2700, 0.25
        %v2713 = vmul.f32 %v2705, 0.25
        %v2714 = vmul.f32 %v2708, 0.25
        %v2715 = vsel %vm777, %v2711, -inf
        %2716 = vmax.xlane.f32.xlu0 %v2715
        %v2717 = vpop.xlane.xlu0 %2716
        %v2718 = vsel %vm777, %v2712, -inf
        %2719 = vmax.xlane.f32.xlu0 %v2718
        %v2720 = vpop.xlane.xlu0 %2719
        %v2721 = vsel %vm777, %v2713, -inf
        %2722 = vmax.xlane.f32.xlu0 %v2721
        %v2723 = vpop.xlane.xlu0 %2722
        %v2724 = vsel %vm777, %v2714, -inf
        %2725 = vmax.xlane.f32.xlu0 %v2724
        %v2726 = vpop.xlane.xlu0 %2725
        %v2727 = vsub.f32 %v2711, %v2717
        %v2728 = vsub.f32 %v2712, %v2720
        %v2729 = vsub.f32 %v2713, %v2723
        %v2730 = vsub.f32 %v2714, %v2726
        %v2731 = vmul.f32 %v2727, 1.442695
        %v2732 = vpow.pop %v2731
        %v2733 = vmul.f32 %v2728, 1.442695
        %v2734 = vpow.pop %v2733
        %v2735 = vmul.f32 %v2729, 1.442695
        %v2736 = vpow.pop %v2735
        %v2737 = vmul.f32 %v2730, 1.442695
        %v2738 = vpow.pop %v2737
        %v2739 = vsel %vm777, %v2732, 0.0
        %2740 = vadd.xlane.f32.xlu0 %v2739
        %v2741 = vpop.xlane.xlu0 %2740
        %v2742 = vsel %vm777, %v2734, 0.0
        %2743 = vadd.xlane.f32.xlu0 %v2742
        %v2744 = vpop.xlane.xlu0 %2743
        %v2745 = vsel %vm777, %v2736, 0.0
        %2746 = vadd.xlane.f32.xlu0 %v2745
        %v2747 = vpop.xlane.xlu0 %2746
        %v2748 = vsel %vm777, %v2738, 0.0
        %2749 = vadd.xlane.f32.xlu0 %v2748
        %v2750 = vpop.xlane.xlu0 %2749
        %v2751 = vrcp.pop %v2741
        %v2752 = vrcp.pop %v2744
        %v2753 = vrcp.pop %v2747
        %v2754 = vrcp.pop %v2750
        %v2755 = vmul.f32 %v2732, %v2751
        %v2756 = vmul.f32 %v2734, %v2752
        %v2757 = vmul.f32 %v2736, %v2753
        %v2758 = vmul.f32 %v2738, %v2754
        %v2759 = vpack.c.bf16 %v2756, %v2755
        %v2760 = vpack.c.bf16 %v2758, %v2757
        %2761 = vrot.lane.b32.xlu0 %v705, 96
        %v2762 = vpop.permute.xlu0 %2761
        %2763 = vrot.lane.b32.xlu0 %v706, 96
        %v2764 = vpop.permute.xlu0 %2763
        %v2768 = vsel %vm777, %v2759, 0
        %v2771 = vsel %vm777, %v2760, 0
        %2773 = vmatprep.subr.bf16.mxu0 0
        %2774 = vmatpush1.bf16.msra.mxu0 0
        %2775 = vmatprep.subr.bf16.mxu0 0
        %2776 = vmatpush1.bf16.msra.mxu0 0
        %2777 = vmatprep.subr.bf16.mxu0 0
        %2778 = vmatpush1.bf16.msra.mxu0 0
        %2779 = vmatprep.subr.bf16.mxu0 0
        %2780 = vmatpush1.bf16.msra.mxu0 0
        %2781 = vmatprep.subr.bf16.mxu0 0
        %2782 = vmatpush1.bf16.msra.mxu0 0
        %2783 = vmatprep.subr.bf16.mxu0 0
        %2784 = vmatpush1.bf16.msra.mxu0 0
        %2785 = vmatprep.subr.bf16.mxu0 0
        %2786 = vmatpush1.bf16.msra.mxu0 %v2764
        %2787 = vmatprep.subr.bf16.mxu0 0
        %2788 = vmatpush1.bf16.msra.mxu0 %v2762
        %2789 = vmatprep.subr.bf16.mxu0 0
        %2790 = vmatpush2.bf16.msra.mxu0 0
        %2791 = vmatprep.subr.bf16.mxu0 0
        %2792 = vmatpush2.bf16.msra.mxu0 0
        %2793 = vmatprep.subr.bf16.mxu0 0
        %2794 = vmatpush2.bf16.msra.mxu0 0
        %2795 = vmatprep.subr.bf16.mxu0 0
        %2796 = vmatpush2.bf16.msra.mxu0 0
        %2797 = vmatprep.subr.bf16.mxu0 0
        %2798 = vmatpush2.bf16.msra.mxu0 0
        %2799 = vmatprep.subr.bf16.mxu0 0
        %2800 = vmatpush2.bf16.msra.mxu0 0
        %2801 = vmatprep.subr.bf16.mxu0 0
        %2802 = vmatpush2.bf16.msra.mxu0 0
        %2803 = vmatprep.subr.bf16.mxu0 0
        %2804 = vmatpush2.bf16.msra.mxu0 0
        %2805 = vmatprep.mubr.bf16.mxu0 0
        %2806 = vmatmul.mubr.bf16.gmra.mxu0 %v2768
        %v2807 = vpop.f32.mrf.mxu0
        %v2808 = vadd.f32 0.0, %v2807
        %v2809 = vpop.f32.mrf.mxu0
        %v2810 = vpop.f32.mrf.mxu0
        %v2811 = vadd.f32 0.0, %v2810
        %v2812 = vpop.f32.mrf.mxu0
        %2813 = vmatprep.mubr.bf16.mxu0 0
        %2814 = vmatmul.mubr.bf16.gmra.mxu0 %v2771
        %v2815 = vpop.f32.mrf.mxu0
        %v2816 = vadd.f32 0.0, %v2815
        %v2817 = vpop.f32.mrf.mxu0
        %v2818 = vpop.f32.mrf.mxu0
        %v2819 = vadd.f32 0.0, %v2818
        %v2820 = vpop.f32.mrf.mxu0
        %2821 = vdwg.mxu0
        %2822 = vrot.lane.b32.xlu0 %v689, 80
        %v2823 = vpop.permute.xlu0 %2822
        %2824 = vrot.lane.b32.xlu0 %v690, 80
        %v2825 = vpop.permute.xlu0 %2824
        %2826 = vrot.lane.b32.xlu0 %v697, 80
        %v2827 = vpop.permute.xlu0 %2826
        %2828 = vrot.lane.b32.xlu0 %v698, 80
        %v2829 = vpop.permute.xlu0 %2828
        %v2831 = vsel %vm711, %v2823, 0
        %v2834 = vsel %vm711, %v2825, 0
        %v2837 = vsel %vm711, %v2827, 0
        %v2840 = vsel %vm711, %v2829, 0
        %2842 = vmatprep.subr.bf16.mxu0 0
        %2843 = vmatpush1.bf16.xpose.msra.mxu0 0
        %2844 = vmatprep.subr.bf16.mxu0 0
        %2845 = vmatpush1.bf16.xpose.msra.mxu0 0
        %2846 = vmatprep.subr.bf16.mxu0 0
        %2847 = vmatpush1.bf16.xpose.msra.mxu0 0
        %2848 = vmatprep.subr.bf16.mxu0 0
        %2849 = vmatpush1.bf16.xpose.msra.mxu0 0
        %2850 = vmatprep.subr.bf16.mxu0 0
        %2851 = vmatpush1.bf16.xpose.msra.mxu0 0
        %2852 = vmatprep.subr.bf16.mxu0 0
        %2853 = vmatpush1.bf16.xpose.msra.mxu0 0
        %2854 = vmatprep.subr.bf16.mxu0 0
        %2855 = vmatpush1.bf16.xpose.msra.mxu0 %v2840
        %2856 = vmatprep.subr.bf16.mxu0 0
        %2857 = vmatpush1.bf16.xpose.msra.mxu0 %v2837
        %2858 = vmatprep.subr.bf16.mxu0 0
        %2859 = vmatpush2.bf16.xpose.msra.mxu0 0
        %2860 = vmatprep.subr.bf16.mxu0 0
        %2861 = vmatpush2.bf16.xpose.msra.mxu0 0
        %2862 = vmatprep.subr.bf16.mxu0 0
        %2863 = vmatpush2.bf16.xpose.msra.mxu0 0
        %2864 = vmatprep.subr.bf16.mxu0 0
        %2865 = vmatpush2.bf16.xpose.msra.mxu0 0
        %2866 = vmatprep.subr.bf16.mxu0 0
        %2867 = vmatpush2.bf16.xpose.msra.mxu0 0
        %2868 = vmatprep.subr.bf16.mxu0 0
        %2869 = vmatpush2.bf16.xpose.msra.mxu0 0
        %2870 = vmatprep.subr.bf16.mxu0 0
        %2871 = vmatpush2.bf16.xpose.msra.mxu0 0
        %2872 = vmatprep.subr.bf16.mxu0 0
        %2873 = vmatpush2.bf16.xpose.msra.mxu0 0
        %2874 = vmatprep.mubr.bf16.mxu0 0
        %2875 = vmatmul.mubr.bf16.gmra.mxu0 %v2831
        %v2876 = vpop.f32.mrf.mxu0
        %v2877 = vadd.f32 0.0, %v2876
        %v2878 = vpop.f32.mrf.mxu0
        %v2879 = vpop.f32.mrf.mxu0
        %v2880 = vadd.f32 0.0, %v2879
        %v2881 = vpop.f32.mrf.mxu0
        %2882 = vmatprep.mubr.bf16.mxu0 0
        %2883 = vmatmul.mubr.bf16.gmra.mxu0 %v2834
        %v2884 = vpop.f32.mrf.mxu0
        %v2885 = vadd.f32 0.0, %v2884
        %v2886 = vpop.f32.mrf.mxu0
        %v2887 = vpop.f32.mrf.mxu0
        %v2888 = vadd.f32 0.0, %v2887
        %v2889 = vpop.f32.mrf.mxu0
        %2890 = vdwg.mxu0
        %v2891 = vmul.f32 %v2877, 0.25
        %v2892 = vmul.f32 %v2880, 0.25
        %v2893 = vmul.f32 %v2885, 0.25
        %v2894 = vmul.f32 %v2888, 0.25
        %v2895 = vsel %vm777, %v2891, -inf
        %2896 = vmax.xlane.f32.xlu0 %v2895
        %v2897 = vpop.xlane.xlu0 %2896
        %v2898 = vsel %vm777, %v2892, -inf
        %2899 = vmax.xlane.f32.xlu0 %v2898
        %v2900 = vpop.xlane.xlu0 %2899
        %v2901 = vsel %vm777, %v2893, -inf
        %2902 = vmax.xlane.f32.xlu0 %v2901
        %v2903 = vpop.xlane.xlu0 %2902
        %v2904 = vsel %vm777, %v2894, -inf
        %2905 = vmax.xlane.f32.xlu0 %v2904
        %v2906 = vpop.xlane.xlu0 %2905
        %v2907 = vsub.f32 %v2891, %v2897
        %v2908 = vsub.f32 %v2892, %v2900
        %v2909 = vsub.f32 %v2893, %v2903
        %v2910 = vsub.f32 %v2894, %v2906
        %v2911 = vmul.f32 %v2907, 1.442695
        %v2912 = vpow.pop %v2911
        %v2913 = vmul.f32 %v2908, 1.442695
        %v2914 = vpow.pop %v2913
        %v2915 = vmul.f32 %v2909, 1.442695
        %v2916 = vpow.pop %v2915
        %v2917 = vmul.f32 %v2910, 1.442695
        %v2918 = vpow.pop %v2917
        %v2919 = vsel %vm777, %v2912, 0.0
        %2920 = vadd.xlane.f32.xlu0 %v2919
        %v2921 = vpop.xlane.xlu0 %2920
        %v2922 = vsel %vm777, %v2914, 0.0
        %2923 = vadd.xlane.f32.xlu0 %v2922
        %v2924 = vpop.xlane.xlu0 %2923
        %v2925 = vsel %vm777, %v2916, 0.0
        %2926 = vadd.xlane.f32.xlu0 %v2925
        %v2927 = vpop.xlane.xlu0 %2926
        %v2928 = vsel %vm777, %v2918, 0.0
        %2929 = vadd.xlane.f32.xlu0 %v2928
        %v2930 = vpop.xlane.xlu0 %2929
        %v2931 = vrcp.pop %v2921
        %v2932 = vrcp.pop %v2924
        %v2933 = vrcp.pop %v2927
        %v2934 = vrcp.pop %v2930
        %v2935 = vmul.f32 %v2912, %v2931
        %v2936 = vmul.f32 %v2914, %v2932
        %v2937 = vmul.f32 %v2916, %v2933
        %v2938 = vmul.f32 %v2918, %v2934
        %v2939 = vpack.c.bf16 %v2936, %v2935
        %v2940 = vpack.c.bf16 %v2938, %v2937
        %2941 = vrot.lane.b32.xlu0 %v705, 80
        %v2942 = vpop.permute.xlu0 %2941
        %2943 = vrot.lane.b32.xlu0 %v706, 80
        %v2944 = vpop.permute.xlu0 %2943
        %v2948 = vsel %vm777, %v2939, 0
        %v2951 = vsel %vm777, %v2940, 0
        %2953 = vmatprep.subr.bf16.mxu0 0
        %2954 = vmatpush1.bf16.msra.mxu0 0
        %2955 = vmatprep.subr.bf16.mxu0 0
        %2956 = vmatpush1.bf16.msra.mxu0 0
        %2957 = vmatprep.subr.bf16.mxu0 0
        %2958 = vmatpush1.bf16.msra.mxu0 0
        %2959 = vmatprep.subr.bf16.mxu0 0
        %2960 = vmatpush1.bf16.msra.mxu0 0
        %2961 = vmatprep.subr.bf16.mxu0 0
        %2962 = vmatpush1.bf16.msra.mxu0 0
        %2963 = vmatprep.subr.bf16.mxu0 0
        %2964 = vmatpush1.bf16.msra.mxu0 0
        %2965 = vmatprep.subr.bf16.mxu0 0
        %2966 = vmatpush1.bf16.msra.mxu0 %v2944
        %2967 = vmatprep.subr.bf16.mxu0 0
        %2968 = vmatpush1.bf16.msra.mxu0 %v2942
        %2969 = vmatprep.subr.bf16.mxu0 0
        %2970 = vmatpush2.bf16.msra.mxu0 0
        %2971 = vmatprep.subr.bf16.mxu0 0
        %2972 = vmatpush2.bf16.msra.mxu0 0
        %2973 = vmatprep.subr.bf16.mxu0 0
        %2974 = vmatpush2.bf16.msra.mxu0 0
        %2975 = vmatprep.subr.bf16.mxu0 0
        %2976 = vmatpush2.bf16.msra.mxu0 0
        %2977 = vmatprep.subr.bf16.mxu0 0
        %2978 = vmatpush2.bf16.msra.mxu0 0
        %2979 = vmatprep.subr.bf16.mxu0 0
        %2980 = vmatpush2.bf16.msra.mxu0 0
        %2981 = vmatprep.subr.bf16.mxu0 0
        %2982 = vmatpush2.bf16.msra.mxu0 0
        %2983 = vmatprep.subr.bf16.mxu0 0
        %2984 = vmatpush2.bf16.msra.mxu0 0
        %2985 = vmatprep.mubr.bf16.mxu0 0
        %2986 = vmatmul.mubr.bf16.gmra.mxu0 %v2948
        %v2987 = vpop.f32.mrf.mxu0
        %v2988 = vadd.f32 0.0, %v2987
        %v2989 = vpop.f32.mrf.mxu0
        %v2990 = vpop.f32.mrf.mxu0
        %v2991 = vadd.f32 0.0, %v2990
        %v2992 = vpop.f32.mrf.mxu0
        %2993 = vmatprep.mubr.bf16.mxu0 0
        %2994 = vmatmul.mubr.bf16.gmra.mxu0 %v2951
        %v2995 = vpop.f32.mrf.mxu0
        %v2996 = vadd.f32 0.0, %v2995
        %v2997 = vpop.f32.mrf.mxu0
        %v2998 = vpop.f32.mrf.mxu0
        %v2999 = vadd.f32 0.0, %v2998
        %v3000 = vpop.f32.mrf.mxu0
        %3001 = vdwg.mxu0
        %3002 = vrot.lane.b32.xlu0 %v689, 64
        %v3003 = vpop.permute.xlu0 %3002
        %3004 = vrot.lane.b32.xlu0 %v690, 64
        %v3005 = vpop.permute.xlu0 %3004
        %3006 = vrot.lane.b32.xlu0 %v697, 64
        %v3007 = vpop.permute.xlu0 %3006
        %3008 = vrot.lane.b32.xlu0 %v698, 64
        %v3009 = vpop.permute.xlu0 %3008
        %v3011 = vsel %vm711, %v3003, 0
        %v3014 = vsel %vm711, %v3005, 0
        %v3017 = vsel %vm711, %v3007, 0
        %v3020 = vsel %vm711, %v3009, 0
        %3022 = vmatprep.subr.bf16.mxu0 0
        %3023 = vmatpush1.bf16.xpose.msra.mxu0 0
        %3024 = vmatprep.subr.bf16.mxu0 0
        %3025 = vmatpush1.bf16.xpose.msra.mxu0 0
        %3026 = vmatprep.subr.bf16.mxu0 0
        %3027 = vmatpush1.bf16.xpose.msra.mxu0 0
        %3028 = vmatprep.subr.bf16.mxu0 0
        %3029 = vmatpush1.bf16.xpose.msra.mxu0 0
        %3030 = vmatprep.subr.bf16.mxu0 0
        %3031 = vmatpush1.bf16.xpose.msra.mxu0 0
        %3032 = vmatprep.subr.bf16.mxu0 0
        %3033 = vmatpush1.bf16.xpose.msra.mxu0 0
        %3034 = vmatprep.subr.bf16.mxu0 0
        %3035 = vmatpush1.bf16.xpose.msra.mxu0 %v3020
        %3036 = vmatprep.subr.bf16.mxu0 0
        %3037 = vmatpush1.bf16.xpose.msra.mxu0 %v3017
        %3038 = vmatprep.subr.bf16.mxu0 0
        %3039 = vmatpush2.bf16.xpose.msra.mxu0 0
        %3040 = vmatprep.subr.bf16.mxu0 0
        %3041 = vmatpush2.bf16.xpose.msra.mxu0 0
        %3042 = vmatprep.subr.bf16.mxu0 0
        %3043 = vmatpush2.bf16.xpose.msra.mxu0 0
        %3044 = vmatprep.subr.bf16.mxu0 0
        %3045 = vmatpush2.bf16.xpose.msra.mxu0 0
        %3046 = vmatprep.subr.bf16.mxu0 0
        %3047 = vmatpush2.bf16.xpose.msra.mxu0 0
        %3048 = vmatprep.subr.bf16.mxu0 0
        %3049 = vmatpush2.bf16.xpose.msra.mxu0 0
        %3050 = vmatprep.subr.bf16.mxu0 0
        %3051 = vmatpush2.bf16.xpose.msra.mxu0 0
        %3052 = vmatprep.subr.bf16.mxu0 0
        %3053 = vmatpush2.bf16.xpose.msra.mxu0 0
        %3054 = vmatprep.mubr.bf16.mxu0 0
        %3055 = vmatmul.mubr.bf16.gmra.mxu0 %v3011
        %v3056 = vpop.f32.mrf.mxu0
        %v3057 = vadd.f32 0.0, %v3056
        %v3058 = vpop.f32.mrf.mxu0
        %v3059 = vpop.f32.mrf.mxu0
        %v3060 = vadd.f32 0.0, %v3059
        %v3061 = vpop.f32.mrf.mxu0
        %3062 = vmatprep.mubr.bf16.mxu0 0
        %3063 = vmatmul.mubr.bf16.gmra.mxu0 %v3014
        %v3064 = vpop.f32.mrf.mxu0
        %v3065 = vadd.f32 0.0, %v3064
        %v3066 = vpop.f32.mrf.mxu0
        %v3067 = vpop.f32.mrf.mxu0
        %v3068 = vadd.f32 0.0, %v3067
        %v3069 = vpop.f32.mrf.mxu0
        %3070 = vdwg.mxu0
        %v3071 = vmul.f32 %v3057, 0.25
        %v3072 = vmul.f32 %v3060, 0.25
        %v3073 = vmul.f32 %v3065, 0.25
        %v3074 = vmul.f32 %v3068, 0.25
        %v3075 = vsel %vm777, %v3071, -inf
        %3076 = vmax.xlane.f32.xlu0 %v3075
        %v3077 = vpop.xlane.xlu0 %3076
        %v3078 = vsel %vm777, %v3072, -inf
        %3079 = vmax.xlane.f32.xlu0 %v3078
        %v3080 = vpop.xlane.xlu0 %3079
        %v3081 = vsel %vm777, %v3073, -inf
        %3082 = vmax.xlane.f32.xlu0 %v3081
        %v3083 = vpop.xlane.xlu0 %3082
        %v3084 = vsel %vm777, %v3074, -inf
        %3085 = vmax.xlane.f32.xlu0 %v3084
        %v3086 = vpop.xlane.xlu0 %3085
        %v3087 = vsub.f32 %v3071, %v3077
        %v3088 = vsub.f32 %v3072, %v3080
        %v3089 = vsub.f32 %v3073, %v3083
        %v3090 = vsub.f32 %v3074, %v3086
        %v3091 = vmul.f32 %v3087, 1.442695
        %v3092 = vpow.pop %v3091
        %v3093 = vmul.f32 %v3088, 1.442695
        %v3094 = vpow.pop %v3093
        %v3095 = vmul.f32 %v3089, 1.442695
        %v3096 = vpow.pop %v3095
        %v3097 = vmul.f32 %v3090, 1.442695
        %v3098 = vpow.pop %v3097
        %v3099 = vsel %vm777, %v3092, 0.0
        %3100 = vadd.xlane.f32.xlu0 %v3099
        %v3101 = vpop.xlane.xlu0 %3100
        %v3102 = vsel %vm777, %v3094, 0.0
        %3103 = vadd.xlane.f32.xlu0 %v3102
        %v3104 = vpop.xlane.xlu0 %3103
        %v3105 = vsel %vm777, %v3096, 0.0
        %3106 = vadd.xlane.f32.xlu0 %v3105
        %v3107 = vpop.xlane.xlu0 %3106
        %v3108 = vsel %vm777, %v3098, 0.0
        %3109 = vadd.xlane.f32.xlu0 %v3108
        %v3110 = vpop.xlane.xlu0 %3109
        %v3111 = vrcp.pop %v3101
        %v3112 = vrcp.pop %v3104
        %v3113 = vrcp.pop %v3107
        %v3114 = vrcp.pop %v3110
        %v3115 = vmul.f32 %v3092, %v3111
        %v3116 = vmul.f32 %v3094, %v3112
        %v3117 = vmul.f32 %v3096, %v3113
        %v3118 = vmul.f32 %v3098, %v3114
        %v3119 = vpack.c.bf16 %v3116, %v3115
        %v3120 = vpack.c.bf16 %v3118, %v3117
        %3121 = vrot.lane.b32.xlu0 %v705, 64
        %v3122 = vpop.permute.xlu0 %3121
        %3123 = vrot.lane.b32.xlu0 %v706, 64
        %v3124 = vpop.permute.xlu0 %3123
        %v3128 = vsel %vm777, %v3119, 0
        %v3131 = vsel %vm777, %v3120, 0
        %3133 = vmatprep.subr.bf16.mxu0 0
        %3134 = vmatpush1.bf16.msra.mxu0 0
        %3135 = vmatprep.subr.bf16.mxu0 0
        %3136 = vmatpush1.bf16.msra.mxu0 0
        %3137 = vmatprep.subr.bf16.mxu0 0
        %3138 = vmatpush1.bf16.msra.mxu0 0
        %3139 = vmatprep.subr.bf16.mxu0 0
        %3140 = vmatpush1.bf16.msra.mxu0 0
        %3141 = vmatprep.subr.bf16.mxu0 0
        %3142 = vmatpush1.bf16.msra.mxu0 0
        %3143 = vmatprep.subr.bf16.mxu0 0
        %3144 = vmatpush1.bf16.msra.mxu0 0
        %3145 = vmatprep.subr.bf16.mxu0 0
        %3146 = vmatpush1.bf16.msra.mxu0 %v3124
        %3147 = vmatprep.subr.bf16.mxu0 0
        %3148 = vmatpush1.bf16.msra.mxu0 %v3122
        %3149 = vmatprep.subr.bf16.mxu0 0
        %3150 = vmatpush2.bf16.msra.mxu0 0
        %3151 = vmatprep.subr.bf16.mxu0 0
        %3152 = vmatpush2.bf16.msra.mxu0 0
        %3153 = vmatprep.subr.bf16.mxu0 0
        %3154 = vmatpush2.bf16.msra.mxu0 0
        %3155 = vmatprep.subr.bf16.mxu0 0
        %3156 = vmatpush2.bf16.msra.mxu0 0
        %3157 = vmatprep.subr.bf16.mxu0 0
        %3158 = vmatpush2.bf16.msra.mxu0 0
        %3159 = vmatprep.subr.bf16.mxu0 0
        %3160 = vmatpush2.bf16.msra.mxu0 0
        %3161 = vmatprep.subr.bf16.mxu0 0
        %3162 = vmatpush2.bf16.msra.mxu0 0
        %3163 = vmatprep.subr.bf16.mxu0 0
        %3164 = vmatpush2.bf16.msra.mxu0 0
        %3165 = vmatprep.mubr.bf16.mxu0 0
        %3166 = vmatmul.mubr.bf16.gmra.mxu0 %v3128
        %v3167 = vpop.f32.mrf.mxu0
        %v3168 = vadd.f32 0.0, %v3167
        %v3169 = vpop.f32.mrf.mxu0
        %v3170 = vpop.f32.mrf.mxu0
        %v3171 = vadd.f32 0.0, %v3170
        %v3172 = vpop.f32.mrf.mxu0
        %3173 = vmatprep.mubr.bf16.mxu0 0
        %3174 = vmatmul.mubr.bf16.gmra.mxu0 %v3131
        %v3175 = vpop.f32.mrf.mxu0
        %v3176 = vadd.f32 0.0, %v3175
        %v3177 = vpop.f32.mrf.mxu0
        %v3178 = vpop.f32.mrf.mxu0
        %v3179 = vadd.f32 0.0, %v3178
        %v3180 = vpop.f32.mrf.mxu0
        %3181 = vdwg.mxu0
        %3182 = vrot.lane.b32.xlu0 %v689, 48
        %v3183 = vpop.permute.xlu0 %3182
        %3184 = vrot.lane.b32.xlu0 %v690, 48
        %v3185 = vpop.permute.xlu0 %3184
        %3186 = vrot.lane.b32.xlu0 %v697, 48
        %v3187 = vpop.permute.xlu0 %3186
        %3188 = vrot.lane.b32.xlu0 %v698, 48
        %v3189 = vpop.permute.xlu0 %3188
        %v3191 = vsel %vm711, %v3183, 0
        %v3194 = vsel %vm711, %v3185, 0
        %v3197 = vsel %vm711, %v3187, 0
        %v3200 = vsel %vm711, %v3189, 0
        %3202 = vmatprep.subr.bf16.mxu0 0
        %3203 = vmatpush1.bf16.xpose.msra.mxu0 0
        %3204 = vmatprep.subr.bf16.mxu0 0
        %3205 = vmatpush1.bf16.xpose.msra.mxu0 0
        %3206 = vmatprep.subr.bf16.mxu0 0
        %3207 = vmatpush1.bf16.xpose.msra.mxu0 0
        %3208 = vmatprep.subr.bf16.mxu0 0
        %3209 = vmatpush1.bf16.xpose.msra.mxu0 0
        %3210 = vmatprep.subr.bf16.mxu0 0
        %3211 = vmatpush1.bf16.xpose.msra.mxu0 0
        %3212 = vmatprep.subr.bf16.mxu0 0
        %3213 = vmatpush1.bf16.xpose.msra.mxu0 0
        %3214 = vmatprep.subr.bf16.mxu0 0
        %3215 = vmatpush1.bf16.xpose.msra.mxu0 %v3200
        %3216 = vmatprep.subr.bf16.mxu0 0
        %3217 = vmatpush1.bf16.xpose.msra.mxu0 %v3197
        %3218 = vmatprep.subr.bf16.mxu0 0
        %3219 = vmatpush2.bf16.xpose.msra.mxu0 0
        %3220 = vmatprep.subr.bf16.mxu0 0
        %3221 = vmatpush2.bf16.xpose.msra.mxu0 0
        %3222 = vmatprep.subr.bf16.mxu0 0
        %3223 = vmatpush2.bf16.xpose.msra.mxu0 0
        %3224 = vmatprep.subr.bf16.mxu0 0
        %3225 = vmatpush2.bf16.xpose.msra.mxu0 0
        %3226 = vmatprep.subr.bf16.mxu0 0
        %3227 = vmatpush2.bf16.xpose.msra.mxu0 0
        %3228 = vmatprep.subr.bf16.mxu0 0
        %3229 = vmatpush2.bf16.xpose.msra.mxu0 0
        %3230 = vmatprep.subr.bf16.mxu0 0
        %3231 = vmatpush2.bf16.xpose.msra.mxu0 0
        %3232 = vmatprep.subr.bf16.mxu0 0
        %3233 = vmatpush2.bf16.xpose.msra.mxu0 0
        %3234 = vmatprep.mubr.bf16.mxu0 0
        %3235 = vmatmul.mubr.bf16.gmra.mxu0 %v3191
        %v3236 = vpop.f32.mrf.mxu0
        %v3237 = vadd.f32 0.0, %v3236
        %v3238 = vpop.f32.mrf.mxu0
        %v3239 = vpop.f32.mrf.mxu0
        %v3240 = vadd.f32 0.0, %v3239
        %v3241 = vpop.f32.mrf.mxu0
        %3242 = vmatprep.mubr.bf16.mxu0 0
        %3243 = vmatmul.mubr.bf16.gmra.mxu0 %v3194
        %v3244 = vpop.f32.mrf.mxu0
        %v3245 = vadd.f32 0.0, %v3244
        %v3246 = vpop.f32.mrf.mxu0
        %v3247 = vpop.f32.mrf.mxu0
        %v3248 = vadd.f32 0.0, %v3247
        %v3249 = vpop.f32.mrf.mxu0
        %3250 = vdwg.mxu0
        %v3251 = vmul.f32 %v3237, 0.25
        %v3252 = vmul.f32 %v3240, 0.25
        %v3253 = vmul.f32 %v3245, 0.25
        %v3254 = vmul.f32 %v3248, 0.25
        %v3255 = vsel %vm777, %v3251, -inf
        %3256 = vmax.xlane.f32.xlu0 %v3255
        %v3257 = vpop.xlane.xlu0 %3256
        %v3258 = vsel %vm777, %v3252, -inf
        %3259 = vmax.xlane.f32.xlu0 %v3258
        %v3260 = vpop.xlane.xlu0 %3259
        %v3261 = vsel %vm777, %v3253, -inf
        %3262 = vmax.xlane.f32.xlu0 %v3261
        %v3263 = vpop.xlane.xlu0 %3262
        %v3264 = vsel %vm777, %v3254, -inf
        %3265 = vmax.xlane.f32.xlu0 %v3264
        %v3266 = vpop.xlane.xlu0 %3265
        %v3267 = vsub.f32 %v3251, %v3257
        %v3268 = vsub.f32 %v3252, %v3260
        %v3269 = vsub.f32 %v3253, %v3263
        %v3270 = vsub.f32 %v3254, %v3266
        %v3271 = vmul.f32 %v3267, 1.442695
        %v3272 = vpow.pop %v3271
        %v3273 = vmul.f32 %v3268, 1.442695
        %v3274 = vpow.pop %v3273
        %v3275 = vmul.f32 %v3269, 1.442695
        %v3276 = vpow.pop %v3275
        %v3277 = vmul.f32 %v3270, 1.442695
        %v3278 = vpow.pop %v3277
        %v3279 = vsel %vm777, %v3272, 0.0
        %3280 = vadd.xlane.f32.xlu0 %v3279
        %v3281 = vpop.xlane.xlu0 %3280
        %v3282 = vsel %vm777, %v3274, 0.0
        %3283 = vadd.xlane.f32.xlu0 %v3282
        %v3284 = vpop.xlane.xlu0 %3283
        %v3285 = vsel %vm777, %v3276, 0.0
        %3286 = vadd.xlane.f32.xlu0 %v3285
        %v3287 = vpop.xlane.xlu0 %3286
        %v3288 = vsel %vm777, %v3278, 0.0
        %3289 = vadd.xlane.f32.xlu0 %v3288
        %v3290 = vpop.xlane.xlu0 %3289
        %v3291 = vrcp.pop %v3281
        %v3292 = vrcp.pop %v3284
        %v3293 = vrcp.pop %v3287
        %v3294 = vrcp.pop %v3290
        %v3295 = vmul.f32 %v3272, %v3291
        %v3296 = vmul.f32 %v3274, %v3292
        %v3297 = vmul.f32 %v3276, %v3293
        %v3298 = vmul.f32 %v3278, %v3294
        %v3299 = vpack.c.bf16 %v3296, %v3295
        %v3300 = vpack.c.bf16 %v3298, %v3297
        %3301 = vrot.lane.b32.xlu0 %v705, 48
        %v3302 = vpop.permute.xlu0 %3301
        %3303 = vrot.lane.b32.xlu0 %v706, 48
        %v3304 = vpop.permute.xlu0 %3303
        %v3308 = vsel %vm777, %v3299, 0
        %v3311 = vsel %vm777, %v3300, 0
        %3313 = vmatprep.subr.bf16.mxu0 0
        %3314 = vmatpush1.bf16.msra.mxu0 0
        %3315 = vmatprep.subr.bf16.mxu0 0
        %3316 = vmatpush1.bf16.msra.mxu0 0
        %3317 = vmatprep.subr.bf16.mxu0 0
        %3318 = vmatpush1.bf16.msra.mxu0 0
        %3319 = vmatprep.subr.bf16.mxu0 0
        %3320 = vmatpush1.bf16.msra.mxu0 0
        %3321 = vmatprep.subr.bf16.mxu0 0
        %3322 = vmatpush1.bf16.msra.mxu0 0
        %3323 = vmatprep.subr.bf16.mxu0 0
        %3324 = vmatpush1.bf16.msra.mxu0 0
        %3325 = vmatprep.subr.bf16.mxu0 0
        %3326 = vmatpush1.bf16.msra.mxu0 %v3304
        %3327 = vmatprep.subr.bf16.mxu0 0
        %3328 = vmatpush1.bf16.msra.mxu0 %v3302
        %3329 = vmatprep.subr.bf16.mxu0 0
        %3330 = vmatpush2.bf16.msra.mxu0 0
        %3331 = vmatprep.subr.bf16.mxu0 0
        %3332 = vmatpush2.bf16.msra.mxu0 0
        %3333 = vmatprep.subr.bf16.mxu0 0
        %3334 = vmatpush2.bf16.msra.mxu0 0
        %3335 = vmatprep.subr.bf16.mxu0 0
        %3336 = vmatpush2.bf16.msra.mxu0 0
        %3337 = vmatprep.subr.bf16.mxu0 0
        %3338 = vmatpush2.bf16.msra.mxu0 0
        %3339 = vmatprep.subr.bf16.mxu0 0
        %3340 = vmatpush2.bf16.msra.mxu0 0
        %3341 = vmatprep.subr.bf16.mxu0 0
        %3342 = vmatpush2.bf16.msra.mxu0 0
        %3343 = vmatprep.subr.bf16.mxu0 0
        %3344 = vmatpush2.bf16.msra.mxu0 0
        %3345 = vmatprep.mubr.bf16.mxu0 0
        %3346 = vmatmul.mubr.bf16.gmra.mxu0 %v3308
        %v3347 = vpop.f32.mrf.mxu0
        %v3348 = vadd.f32 0.0, %v3347
        %v3349 = vpop.f32.mrf.mxu0
        %v3350 = vpop.f32.mrf.mxu0
        %v3351 = vadd.f32 0.0, %v3350
        %v3352 = vpop.f32.mrf.mxu0
        %3353 = vmatprep.mubr.bf16.mxu0 0
        %3354 = vmatmul.mubr.bf16.gmra.mxu0 %v3311
        %v3355 = vpop.f32.mrf.mxu0
        %v3356 = vadd.f32 0.0, %v3355
        %v3357 = vpop.f32.mrf.mxu0
        %v3358 = vpop.f32.mrf.mxu0
        %v3359 = vadd.f32 0.0, %v3358
        %v3360 = vpop.f32.mrf.mxu0
        %3361 = vdwg.mxu0
        %3362 = vrot.lane.b32.xlu0 %v689, 32
        %v3363 = vpop.permute.xlu0 %3362
        %3364 = vrot.lane.b32.xlu0 %v690, 32
        %v3365 = vpop.permute.xlu0 %3364
        %3366 = vrot.lane.b32.xlu0 %v697, 32
        %v3367 = vpop.permute.xlu0 %3366
        %3368 = vrot.lane.b32.xlu0 %v698, 32
        %v3369 = vpop.permute.xlu0 %3368
        %v3371 = vsel %vm711, %v3363, 0
        %v3374 = vsel %vm711, %v3365, 0
        %v3377 = vsel %vm711, %v3367, 0
        %v3380 = vsel %vm711, %v3369, 0
        %3382 = vmatprep.subr.bf16.mxu0 0
        %3383 = vmatpush1.bf16.xpose.msra.mxu0 0
        %3384 = vmatprep.subr.bf16.mxu0 0
        %3385 = vmatpush1.bf16.xpose.msra.mxu0 0
        %3386 = vmatprep.subr.bf16.mxu0 0
        %3387 = vmatpush1.bf16.xpose.msra.mxu0 0
        %3388 = vmatprep.subr.bf16.mxu0 0
        %3389 = vmatpush1.bf16.xpose.msra.mxu0 0
        %3390 = vmatprep.subr.bf16.mxu0 0
        %3391 = vmatpush1.bf16.xpose.msra.mxu0 0
        %3392 = vmatprep.subr.bf16.mxu0 0
        %3393 = vmatpush1.bf16.xpose.msra.mxu0 0
        %3394 = vmatprep.subr.bf16.mxu0 0
        %3395 = vmatpush1.bf16.xpose.msra.mxu0 %v3380
        %3396 = vmatprep.subr.bf16.mxu0 0
        %3397 = vmatpush1.bf16.xpose.msra.mxu0 %v3377
        %3398 = vmatprep.subr.bf16.mxu0 0
        %3399 = vmatpush2.bf16.xpose.msra.mxu0 0
        %3400 = vmatprep.subr.bf16.mxu0 0
        %3401 = vmatpush2.bf16.xpose.msra.mxu0 0
        %3402 = vmatprep.subr.bf16.mxu0 0
        %3403 = vmatpush2.bf16.xpose.msra.mxu0 0
        %3404 = vmatprep.subr.bf16.mxu0 0
        %3405 = vmatpush2.bf16.xpose.msra.mxu0 0
        %3406 = vmatprep.subr.bf16.mxu0 0
        %3407 = vmatpush2.bf16.xpose.msra.mxu0 0
        %3408 = vmatprep.subr.bf16.mxu0 0
        %3409 = vmatpush2.bf16.xpose.msra.mxu0 0
        %3410 = vmatprep.subr.bf16.mxu0 0
        %3411 = vmatpush2.bf16.xpose.msra.mxu0 0
        %3412 = vmatprep.subr.bf16.mxu0 0
        %3413 = vmatpush2.bf16.xpose.msra.mxu0 0
        %3414 = vmatprep.mubr.bf16.mxu0 0
        %3415 = vmatmul.mubr.bf16.gmra.mxu0 %v3371
        %v3416 = vpop.f32.mrf.mxu0
        %v3417 = vadd.f32 0.0, %v3416
        %v3418 = vpop.f32.mrf.mxu0
        %v3419 = vpop.f32.mrf.mxu0
        %v3420 = vadd.f32 0.0, %v3419
        %v3421 = vpop.f32.mrf.mxu0
        %3422 = vmatprep.mubr.bf16.mxu0 0
        %3423 = vmatmul.mubr.bf16.gmra.mxu0 %v3374
        %v3424 = vpop.f32.mrf.mxu0
        %v3425 = vadd.f32 0.0, %v3424
        %v3426 = vpop.f32.mrf.mxu0
        %v3427 = vpop.f32.mrf.mxu0
        %v3428 = vadd.f32 0.0, %v3427
        %v3429 = vpop.f32.mrf.mxu0
        %3430 = vdwg.mxu0
        %v3431 = vmul.f32 %v3417, 0.25
        %v3432 = vmul.f32 %v3420, 0.25
        %v3433 = vmul.f32 %v3425, 0.25
        %v3434 = vmul.f32 %v3428, 0.25
        %v3435 = vsel %vm777, %v3431, -inf
        %3436 = vmax.xlane.f32.xlu0 %v3435
        %v3437 = vpop.xlane.xlu0 %3436
        %v3438 = vsel %vm777, %v3432, -inf
        %3439 = vmax.xlane.f32.xlu0 %v3438
        %v3440 = vpop.xlane.xlu0 %3439
        %v3441 = vsel %vm777, %v3433, -inf
        %3442 = vmax.xlane.f32.xlu0 %v3441
        %v3443 = vpop.xlane.xlu0 %3442
        %v3444 = vsel %vm777, %v3434, -inf
        %3445 = vmax.xlane.f32.xlu0 %v3444
        %v3446 = vpop.xlane.xlu0 %3445
        %v3447 = vsub.f32 %v3431, %v3437
        %v3448 = vsub.f32 %v3432, %v3440
        %v3449 = vsub.f32 %v3433, %v3443
        %v3450 = vsub.f32 %v3434, %v3446
        %v3451 = vmul.f32 %v3447, 1.442695
        %v3452 = vpow.pop %v3451
        %v3453 = vmul.f32 %v3448, 1.442695
        %v3454 = vpow.pop %v3453
        %v3455 = vmul.f32 %v3449, 1.442695
        %v3456 = vpow.pop %v3455
        %v3457 = vmul.f32 %v3450, 1.442695
        %v3458 = vpow.pop %v3457
        %v3459 = vsel %vm777, %v3452, 0.0
        %3460 = vadd.xlane.f32.xlu0 %v3459
        %v3461 = vpop.xlane.xlu0 %3460
        %v3462 = vsel %vm777, %v3454, 0.0
        %3463 = vadd.xlane.f32.xlu0 %v3462
        %v3464 = vpop.xlane.xlu0 %3463
        %v3465 = vsel %vm777, %v3456, 0.0
        %3466 = vadd.xlane.f32.xlu0 %v3465
        %v3467 = vpop.xlane.xlu0 %3466
        %v3468 = vsel %vm777, %v3458, 0.0
        %3469 = vadd.xlane.f32.xlu0 %v3468
        %v3470 = vpop.xlane.xlu0 %3469
        %v3471 = vrcp.pop %v3461
        %v3472 = vrcp.pop %v3464
        %v3473 = vrcp.pop %v3467
        %v3474 = vrcp.pop %v3470
        %v3475 = vmul.f32 %v3452, %v3471
        %v3476 = vmul.f32 %v3454, %v3472
        %v3477 = vmul.f32 %v3456, %v3473
        %v3478 = vmul.f32 %v3458, %v3474
        %v3479 = vpack.c.bf16 %v3476, %v3475
        %v3480 = vpack.c.bf16 %v3478, %v3477
        %3481 = vrot.lane.b32.xlu0 %v705, 32
        %v3482 = vpop.permute.xlu0 %3481
        %3483 = vrot.lane.b32.xlu0 %v706, 32
        %v3484 = vpop.permute.xlu0 %3483
        %v3488 = vsel %vm777, %v3479, 0
        %v3491 = vsel %vm777, %v3480, 0
        %3493 = vmatprep.subr.bf16.mxu0 0
        %3494 = vmatpush1.bf16.msra.mxu0 0
        %3495 = vmatprep.subr.bf16.mxu0 0
        %3496 = vmatpush1.bf16.msra.mxu0 0
        %3497 = vmatprep.subr.bf16.mxu0 0
        %3498 = vmatpush1.bf16.msra.mxu0 0
        %3499 = vmatprep.subr.bf16.mxu0 0
        %3500 = vmatpush1.bf16.msra.mxu0 0
        %3501 = vmatprep.subr.bf16.mxu0 0
        %3502 = vmatpush1.bf16.msra.mxu0 0
        %3503 = vmatprep.subr.bf16.mxu0 0
        %3504 = vmatpush1.bf16.msra.mxu0 0
        %3505 = vmatprep.subr.bf16.mxu0 0
        %3506 = vmatpush1.bf16.msra.mxu0 %v3484
        %3507 = vmatprep.subr.bf16.mxu0 0
        %3508 = vmatpush1.bf16.msra.mxu0 %v3482
        %3509 = vmatprep.subr.bf16.mxu0 0
        %3510 = vmatpush2.bf16.msra.mxu0 0
        %3511 = vmatprep.subr.bf16.mxu0 0
        %3512 = vmatpush2.bf16.msra.mxu0 0
        %3513 = vmatprep.subr.bf16.mxu0 0
        %3514 = vmatpush2.bf16.msra.mxu0 0
        %3515 = vmatprep.subr.bf16.mxu0 0
        %3516 = vmatpush2.bf16.msra.mxu0 0
        %3517 = vmatprep.subr.bf16.mxu0 0
        %3518 = vmatpush2.bf16.msra.mxu0 0
        %3519 = vmatprep.subr.bf16.mxu0 0
        %3520 = vmatpush2.bf16.msra.mxu0 0
        %3521 = vmatprep.subr.bf16.mxu0 0
        %3522 = vmatpush2.bf16.msra.mxu0 0
        %3523 = vmatprep.subr.bf16.mxu0 0
        %3524 = vmatpush2.bf16.msra.mxu0 0
        %3525 = vmatprep.mubr.bf16.mxu0 0
        %3526 = vmatmul.mubr.bf16.gmra.mxu0 %v3488
        %v3527 = vpop.f32.mrf.mxu0
        %v3528 = vadd.f32 0.0, %v3527
        %v3529 = vpop.f32.mrf.mxu0
        %v3530 = vpop.f32.mrf.mxu0
        %v3531 = vadd.f32 0.0, %v3530
        %v3532 = vpop.f32.mrf.mxu0
        %3533 = vmatprep.mubr.bf16.mxu0 0
        %3534 = vmatmul.mubr.bf16.gmra.mxu0 %v3491
        %v3535 = vpop.f32.mrf.mxu0
        %v3536 = vadd.f32 0.0, %v3535
        %v3537 = vpop.f32.mrf.mxu0
        %v3538 = vpop.f32.mrf.mxu0
        %v3539 = vadd.f32 0.0, %v3538
        %v3540 = vpop.f32.mrf.mxu0
        %3541 = vdwg.mxu0
        %3542 = vrot.lane.b32.xlu0 %v689, 16
        %v3543 = vpop.permute.xlu0 %3542
        %3544 = vrot.lane.b32.xlu0 %v690, 16
        %v3545 = vpop.permute.xlu0 %3544
        %3546 = vrot.lane.b32.xlu0 %v697, 16
        %v3547 = vpop.permute.xlu0 %3546
        %3548 = vrot.lane.b32.xlu0 %v698, 16
        %v3549 = vpop.permute.xlu0 %3548
        %v3551 = vsel %vm711, %v3543, 0
        %v3554 = vsel %vm711, %v3545, 0
        %v3557 = vsel %vm711, %v3547, 0
        %v3560 = vsel %vm711, %v3549, 0
        %3562 = vmatprep.subr.bf16.mxu0 0
        %3563 = vmatpush1.bf16.xpose.msra.mxu0 0
        %3564 = vmatprep.subr.bf16.mxu0 0
        %3565 = vmatpush1.bf16.xpose.msra.mxu0 0
        %3566 = vmatprep.subr.bf16.mxu0 0
        %3567 = vmatpush1.bf16.xpose.msra.mxu0 0
        %3568 = vmatprep.subr.bf16.mxu0 0
        %3569 = vmatpush1.bf16.xpose.msra.mxu0 0
        %3570 = vmatprep.subr.bf16.mxu0 0
        %3571 = vmatpush1.bf16.xpose.msra.mxu0 0
        %3572 = vmatprep.subr.bf16.mxu0 0
        %3573 = vmatpush1.bf16.xpose.msra.mxu0 0
        %3574 = vmatprep.subr.bf16.mxu0 0
        %3575 = vmatpush1.bf16.xpose.msra.mxu0 %v3560
        %3576 = vmatprep.subr.bf16.mxu0 0
        %3577 = vmatpush1.bf16.xpose.msra.mxu0 %v3557
        %3578 = vmatprep.subr.bf16.mxu0 0
        %3579 = vmatpush2.bf16.xpose.msra.mxu0 0
        %3580 = vmatprep.subr.bf16.mxu0 0
        %3581 = vmatpush2.bf16.xpose.msra.mxu0 0
        %3582 = vmatprep.subr.bf16.mxu0 0
        %3583 = vmatpush2.bf16.xpose.msra.mxu0 0
        %3584 = vmatprep.subr.bf16.mxu0 0
        %3585 = vmatpush2.bf16.xpose.msra.mxu0 0
        %3586 = vmatprep.subr.bf16.mxu0 0
        %3587 = vmatpush2.bf16.xpose.msra.mxu0 0
        %3588 = vmatprep.subr.bf16.mxu0 0
        %3589 = vmatpush2.bf16.xpose.msra.mxu0 0
        %3590 = vmatprep.subr.bf16.mxu0 0
        %3591 = vmatpush2.bf16.xpose.msra.mxu0 0
        %3592 = vmatprep.subr.bf16.mxu0 0
        %3593 = vmatpush2.bf16.xpose.msra.mxu0 0
        %3594 = vmatprep.mubr.bf16.mxu0 0
        %3595 = vmatmul.mubr.bf16.gmra.mxu0 %v3551
        %v3596 = vpop.f32.mrf.mxu0
        %v3597 = vadd.f32 0.0, %v3596
        %v3598 = vpop.f32.mrf.mxu0
        %v3599 = vpop.f32.mrf.mxu0
        %v3600 = vadd.f32 0.0, %v3599
        %v3601 = vpop.f32.mrf.mxu0
        %3602 = vmatprep.mubr.bf16.mxu0 0
        %3603 = vmatmul.mubr.bf16.gmra.mxu0 %v3554
        %v3604 = vpop.f32.mrf.mxu0
        %v3605 = vadd.f32 0.0, %v3604
        %v3606 = vpop.f32.mrf.mxu0
        %v3607 = vpop.f32.mrf.mxu0
        %v3608 = vadd.f32 0.0, %v3607
        %v3609 = vpop.f32.mrf.mxu0
        %3610 = vdwg.mxu0
        %v3611 = vmul.f32 %v3597, 0.25
        %v3612 = vmul.f32 %v3600, 0.25
        %v3613 = vmul.f32 %v3605, 0.25
        %v3614 = vmul.f32 %v3608, 0.25
        %v3615 = vsel %vm777, %v3611, -inf
        %3616 = vmax.xlane.f32.xlu0 %v3615
        %v3617 = vpop.xlane.xlu0 %3616
        %v3618 = vsel %vm777, %v3612, -inf
        %3619 = vmax.xlane.f32.xlu0 %v3618
        %v3620 = vpop.xlane.xlu0 %3619
        %v3621 = vsel %vm777, %v3613, -inf
        %3622 = vmax.xlane.f32.xlu0 %v3621
        %v3623 = vpop.xlane.xlu0 %3622
        %v3624 = vsel %vm777, %v3614, -inf
        %3625 = vmax.xlane.f32.xlu0 %v3624
        %v3626 = vpop.xlane.xlu0 %3625
        %v3627 = vsub.f32 %v3611, %v3617
        %v3628 = vsub.f32 %v3612, %v3620
        %v3629 = vsub.f32 %v3613, %v3623
        %v3630 = vsub.f32 %v3614, %v3626
        %v3631 = vmul.f32 %v3627, 1.442695
        %v3632 = vpow.pop %v3631
        %v3633 = vmul.f32 %v3628, 1.442695
        %v3634 = vpow.pop %v3633
        %v3635 = vmul.f32 %v3629, 1.442695
        %v3636 = vpow.pop %v3635
        %v3637 = vmul.f32 %v3630, 1.442695
        %v3638 = vpow.pop %v3637
        %v3639 = vsel %vm777, %v3632, 0.0
        %3640 = vadd.xlane.f32.xlu0 %v3639
        %v3641 = vpop.xlane.xlu0 %3640
        %v3642 = vsel %vm777, %v3634, 0.0
        %3643 = vadd.xlane.f32.xlu0 %v3642
        %v3644 = vpop.xlane.xlu0 %3643
        %v3645 = vsel %vm777, %v3636, 0.0
        %3646 = vadd.xlane.f32.xlu0 %v3645
        %v3647 = vpop.xlane.xlu0 %3646
        %v3648 = vsel %vm777, %v3638, 0.0
        %3649 = vadd.xlane.f32.xlu0 %v3648
        %v3650 = vpop.xlane.xlu0 %3649
        %v3651 = vrcp.pop %v3641
        %v3652 = vrcp.pop %v3644
        %v3653 = vrcp.pop %v3647
        %v3654 = vrcp.pop %v3650
        %v3655 = vmul.f32 %v3632, %v3651
        %v3656 = vmul.f32 %v3634, %v3652
        %v3657 = vmul.f32 %v3636, %v3653
        %v3658 = vmul.f32 %v3638, %v3654
        %v3659 = vpack.c.bf16 %v3656, %v3655
        %v3660 = vpack.c.bf16 %v3658, %v3657
        %3661 = vrot.lane.b32.xlu0 %v705, 16
        %v3662 = vpop.permute.xlu0 %3661
        %3663 = vrot.lane.b32.xlu0 %v706, 16
        %v3664 = vpop.permute.xlu0 %3663
        %v3668 = vsel %vm777, %v3659, 0
        %v3671 = vsel %vm777, %v3660, 0
        %3673 = vmatprep.subr.bf16.mxu0 0
        %3674 = vmatpush1.bf16.msra.mxu0 0
        %3675 = vmatprep.subr.bf16.mxu0 0
        %3676 = vmatpush1.bf16.msra.mxu0 0
        %3677 = vmatprep.subr.bf16.mxu0 0
        %3678 = vmatpush1.bf16.msra.mxu0 0
        %3679 = vmatprep.subr.bf16.mxu0 0
        %3680 = vmatpush1.bf16.msra.mxu0 0
        %3681 = vmatprep.subr.bf16.mxu0 0
        %3682 = vmatpush1.bf16.msra.mxu0 0
        %3683 = vmatprep.subr.bf16.mxu0 0
        %3684 = vmatpush1.bf16.msra.mxu0 0
        %3685 = vmatprep.subr.bf16.mxu0 0
        %3686 = vmatpush1.bf16.msra.mxu0 %v3664
        %3687 = vmatprep.subr.bf16.mxu0 0
        %3688 = vmatpush1.bf16.msra.mxu0 %v3662
        %3689 = vmatprep.subr.bf16.mxu0 0
        %3690 = vmatpush2.bf16.msra.mxu0 0
        %3691 = vmatprep.subr.bf16.mxu0 0
        %3692 = vmatpush2.bf16.msra.mxu0 0
        %3693 = vmatprep.subr.bf16.mxu0 0
        %3694 = vmatpush2.bf16.msra.mxu0 0
        %3695 = vmatprep.subr.bf16.mxu0 0
        %3696 = vmatpush2.bf16.msra.mxu0 0
        %3697 = vmatprep.subr.bf16.mxu0 0
        %3698 = vmatpush2.bf16.msra.mxu0 0
        %3699 = vmatprep.subr.bf16.mxu0 0
        %3700 = vmatpush2.bf16.msra.mxu0 0
        %3701 = vmatprep.subr.bf16.mxu0 0
        %3702 = vmatpush2.bf16.msra.mxu0 0
        %3703 = vmatprep.subr.bf16.mxu0 0
        %3704 = vmatpush2.bf16.msra.mxu0 0
        %3705 = vmatprep.mubr.bf16.mxu0 0
        %3706 = vmatmul.mubr.bf16.gmra.mxu0 %v3668
        %v3707 = vpop.f32.mrf.mxu0
        %v3708 = vadd.f32 0.0, %v3707
        %v3709 = vpop.f32.mrf.mxu0
        %v3710 = vpop.f32.mrf.mxu0
        %v3711 = vadd.f32 0.0, %v3710
        %v3712 = vpop.f32.mrf.mxu0
        %3713 = vmatprep.mubr.bf16.mxu0 0
        %3714 = vmatmul.mubr.bf16.gmra.mxu0 %v3671
        %v3715 = vpop.f32.mrf.mxu0
        %v3716 = vadd.f32 0.0, %v3715
        %v3717 = vpop.f32.mrf.mxu0
        %v3718 = vpop.f32.mrf.mxu0
        %v3719 = vadd.f32 0.0, %v3718
        %v3720 = vpop.f32.mrf.mxu0
        %3721 = vdwg.mxu0
        %3726 = vrot.lane.b32.xlu0 %v2628, 16
        %v3727 = vpop.permute.xlu0 %3726
        %3728 = vrot.lane.b32.xlu0 %v2631, 16
        %v3729 = vpop.permute.xlu0 %3728
        %3730 = vrot.lane.b32.xlu0 %v2636, 16
        %v3731 = vpop.permute.xlu0 %3730
        %3732 = vrot.lane.b32.xlu0 %v2639, 16
        %v3733 = vpop.permute.xlu0 %3732
        %3742 = vrot.lane.b32.xlu0 %v2808, 32
        %v3743 = vpop.permute.xlu0 %3742
        %3744 = vrot.lane.b32.xlu0 %v2811, 32
        %v3745 = vpop.permute.xlu0 %3744
        %3746 = vrot.lane.b32.xlu0 %v2816, 32
        %v3747 = vpop.permute.xlu0 %3746
        %3748 = vrot.lane.b32.xlu0 %v2819, 32
        %v3749 = vpop.permute.xlu0 %3748
        %3758 = vrot.lane.b32.xlu0 %v2988, 48
        %v3759 = vpop.permute.xlu0 %3758
        %3760 = vrot.lane.b32.xlu0 %v2991, 48
        %v3761 = vpop.permute.xlu0 %3760
        %3762 = vrot.lane.b32.xlu0 %v2996, 48
        %v3763 = vpop.permute.xlu0 %3762
        %3764 = vrot.lane.b32.xlu0 %v2999, 48
        %v3765 = vpop.permute.xlu0 %3764
        %3774 = vrot.lane.b32.xlu0 %v3168, 64
        %v3775 = vpop.permute.xlu0 %3774
        %3776 = vrot.lane.b32.xlu0 %v3171, 64
        %v3777 = vpop.permute.xlu0 %3776
        %3778 = vrot.lane.b32.xlu0 %v3176, 64
        %v3779 = vpop.permute.xlu0 %3778
        %3780 = vrot.lane.b32.xlu0 %v3179, 64
        %v3781 = vpop.permute.xlu0 %3780
        %3790 = vrot.lane.b32.xlu0 %v3348, 80
        %v3791 = vpop.permute.xlu0 %3790
        %3792 = vrot.lane.b32.xlu0 %v3351, 80
        %v3793 = vpop.permute.xlu0 %3792
        %3794 = vrot.lane.b32.xlu0 %v3356, 80
        %v3795 = vpop.permute.xlu0 %3794
        %3796 = vrot.lane.b32.xlu0 %v3359, 80
        %v3797 = vpop.permute.xlu0 %3796
        %3806 = vrot.lane.b32.xlu0 %v3528, 96
        %v3807 = vpop.permute.xlu0 %3806
        %3808 = vrot.lane.b32.xlu0 %v3531, 96
        %v3809 = vpop.permute.xlu0 %3808
        %3810 = vrot.lane.b32.xlu0 %v3536, 96
        %v3811 = vpop.permute.xlu0 %3810
        %3812 = vrot.lane.b32.xlu0 %v3539, 96
        %v3813 = vpop.permute.xlu0 %3812
        %3822 = vrot.lane.b32.xlu0 %v3708, 112
        %v3823 = vpop.permute.xlu0 %3822
        %3824 = vrot.lane.b32.xlu0 %v3711, 112
        %v3825 = vpop.permute.xlu0 %3824
        %3826 = vrot.lane.b32.xlu0 %v3716, 112
        %v3827 = vpop.permute.xlu0 %3826
        %3828 = vrot.lane.b32.xlu0 %v3719, 112
        %v3829 = vpop.permute.xlu0 %3828
        %v3834 = vsel %vm711, %v2442, %v3727
        %v3835 = vsel %vm711, %v2445, %v3729
        %v3836 = vsel %vm711, %v2450, %v3731
        %v3837 = vsel %vm711, %v2453, %v3733
        %v3838 = vsel %vm777, %v3834, %v3743
        %v3839 = vsel %vm777, %v3835, %v3745
        %v3840 = vsel %vm777, %v3836, %v3747
        %v3841 = vsel %vm777, %v3837, %v3749
        %v3842 = vsel %vm2265, %v3838, %v3759
        %v3843 = vsel %vm2265, %v3839, %v3761
        %v3844 = vsel %vm2265, %v3840, %v3763
        %v3845 = vsel %vm2265, %v3841, %v3765
        %v3846 = vsel %vm2270, %v3842, %v3775
        %v3847 = vsel %vm2270, %v3843, %v3777
        %v3848 = vsel %vm2270, %v3844, %v3779
        %v3849 = vsel %vm2270, %v3845, %v3781
        %v3850 = vsel %vm2275, %v3846, %v3791
        %v3851 = vsel %vm2275, %v3847, %v3793
        %v3852 = vsel %vm2275, %v3848, %v3795
        %v3853 = vsel %vm2275, %v3849, %v3797
        %v3854 = vsel %vm2280, %v3850, %v3807
        %v3855 = vsel %vm2280, %v3851, %v3809
        %v3856 = vsel %vm2280, %v3852, %v3811
        %v3857 = vsel %vm2280, %v3853, %v3813
        %v3858 = vsel %vm2285, %v3854, %v3823
        %v3859 = vsel %vm2285, %v3855, %v3825
        %v3860 = vsel %vm2285, %v3856, %v3827
        %v3861 = vsel %vm2285, %v3857, %v3829
        %v3863 = vsel %vm711, %v691, 0
        %v3866 = vsel %vm711, %v692, 0
        %v3869 = vsel %vm711, %v699, 0
        %v3872 = vsel %vm711, %v700, 0
        %3874 = vmatprep.subr.bf16.mxu0 0
        %3875 = vmatpush1.bf16.xpose.msra.mxu0 0
        %3876 = vmatprep.subr.bf16.mxu0 0
        %3877 = vmatpush1.bf16.xpose.msra.mxu0 0
        %3878 = vmatprep.subr.bf16.mxu0 0
        %3879 = vmatpush1.bf16.xpose.msra.mxu0 0
        %3880 = vmatprep.subr.bf16.mxu0 0
        %3881 = vmatpush1.bf16.xpose.msra.mxu0 0
        %3882 = vmatprep.subr.bf16.mxu0 0
        %3883 = vmatpush1.bf16.xpose.msra.mxu0 0
        %3884 = vmatprep.subr.bf16.mxu0 0
        %3885 = vmatpush1.bf16.xpose.msra.mxu0 0
        %3886 = vmatprep.subr.bf16.mxu0 0
        %3887 = vmatpush1.bf16.xpose.msra.mxu0 %v3872
        %3888 = vmatprep.subr.bf16.mxu0 0
        %3889 = vmatpush1.bf16.xpose.msra.mxu0 %v3869
        %3890 = vmatprep.subr.bf16.mxu0 0
        %3891 = vmatpush2.bf16.xpose.msra.mxu0 0
        %3892 = vmatprep.subr.bf16.mxu0 0
        %3893 = vmatpush2.bf16.xpose.msra.mxu0 0
        %3894 = vmatprep.subr.bf16.mxu0 0
        %3895 = vmatpush2.bf16.xpose.msra.mxu0 0
        %3896 = vmatprep.subr.bf16.mxu0 0
        %3897 = vmatpush2.bf16.xpose.msra.mxu0 0
        %3898 = vmatprep.subr.bf16.mxu0 0
        %3899 = vmatpush2.bf16.xpose.msra.mxu0 0
        %3900 = vmatprep.subr.bf16.mxu0 0
        %3901 = vmatpush2.bf16.xpose.msra.mxu0 0
        %3902 = vmatprep.subr.bf16.mxu0 0
        %3903 = vmatpush2.bf16.xpose.msra.mxu0 0
        %3904 = vmatprep.subr.bf16.mxu0 0
        %3905 = vmatpush2.bf16.xpose.msra.mxu0 0
        %3906 = vmatprep.mubr.bf16.mxu0 0
        %3907 = vmatmul.mubr.bf16.gmra.mxu0 %v3863
        %v3908 = vpop.f32.mrf.mxu0
        %v3909 = vadd.f32 0.0, %v3908
        %v3910 = vpop.f32.mrf.mxu0
        %v3911 = vpop.f32.mrf.mxu0
        %v3912 = vadd.f32 0.0, %v3911
        %v3913 = vpop.f32.mrf.mxu0
        %3914 = vmatprep.mubr.bf16.mxu0 0
        %3915 = vmatmul.mubr.bf16.gmra.mxu0 %v3866
        %v3916 = vpop.f32.mrf.mxu0
        %v3917 = vadd.f32 0.0, %v3916
        %v3918 = vpop.f32.mrf.mxu0
        %v3919 = vpop.f32.mrf.mxu0
        %v3920 = vadd.f32 0.0, %v3919
        %v3921 = vpop.f32.mrf.mxu0
        %3922 = vdwg.mxu0
        %v3923 = vmul.f32 %v3909, 0.25
        %v3924 = vmul.f32 %v3912, 0.25
        %v3925 = vmul.f32 %v3917, 0.25
        %v3926 = vmul.f32 %v3920, 0.25
        %v3927 = vsel %vm777, %v3923, -inf
        %3928 = vmax.xlane.f32.xlu0 %v3927
        %v3929 = vpop.xlane.xlu0 %3928
        %v3930 = vsel %vm777, %v3924, -inf
        %3931 = vmax.xlane.f32.xlu0 %v3930
        %v3932 = vpop.xlane.xlu0 %3931
        %v3933 = vsel %vm777, %v3925, -inf
        %3934 = vmax.xlane.f32.xlu0 %v3933
        %v3935 = vpop.xlane.xlu0 %3934
        %v3936 = vsel %vm777, %v3926, -inf
        %3937 = vmax.xlane.f32.xlu0 %v3936
        %v3938 = vpop.xlane.xlu0 %3937
        %v3939 = vsub.f32 %v3923, %v3929
        %v3940 = vsub.f32 %v3924, %v3932
        %v3941 = vsub.f32 %v3925, %v3935
        %v3942 = vsub.f32 %v3926, %v3938
        %v3943 = vmul.f32 %v3939, 1.442695
        %v3944 = vpow.pop %v3943
        %v3945 = vmul.f32 %v3940, 1.442695
        %v3946 = vpow.pop %v3945
        %v3947 = vmul.f32 %v3941, 1.442695
        %v3948 = vpow.pop %v3947
        %v3949 = vmul.f32 %v3942, 1.442695
        %v3950 = vpow.pop %v3949
        %v3951 = vsel %vm777, %v3944, 0.0
        %3952 = vadd.xlane.f32.xlu0 %v3951
        %v3953 = vpop.xlane.xlu0 %3952
        %v3954 = vsel %vm777, %v3946, 0.0
        %3955 = vadd.xlane.f32.xlu0 %v3954
        %v3956 = vpop.xlane.xlu0 %3955
        %v3957 = vsel %vm777, %v3948, 0.0
        %3958 = vadd.xlane.f32.xlu0 %v3957
        %v3959 = vpop.xlane.xlu0 %3958
        %v3960 = vsel %vm777, %v3950, 0.0
        %3961 = vadd.xlane.f32.xlu0 %v3960
        %v3962 = vpop.xlane.xlu0 %3961
        %v3963 = vrcp.pop %v3953
        %v3964 = vrcp.pop %v3956
        %v3965 = vrcp.pop %v3959
        %v3966 = vrcp.pop %v3962
        %v3967 = vmul.f32 %v3944, %v3963
        %v3968 = vmul.f32 %v3946, %v3964
        %v3969 = vmul.f32 %v3948, %v3965
        %v3970 = vmul.f32 %v3950, %v3966
        %v3971 = vpack.c.bf16 %v3968, %v3967
        %v3972 = vpack.c.bf16 %v3970, %v3969
        %v3974 = vsel %vm777, %v3971, 0
        %v3977 = vsel %vm777, %v3972, 0
        %3979 = vmatprep.subr.bf16.mxu0 0
        %3980 = vmatpush1.bf16.msra.mxu0 0
        %3981 = vmatprep.subr.bf16.mxu0 0
        %3982 = vmatpush1.bf16.msra.mxu0 0
        %3983 = vmatprep.subr.bf16.mxu0 0
        %3984 = vmatpush1.bf16.msra.mxu0 0
        %3985 = vmatprep.subr.bf16.mxu0 0
        %3986 = vmatpush1.bf16.msra.mxu0 0
        %3987 = vmatprep.subr.bf16.mxu0 0
        %3988 = vmatpush1.bf16.msra.mxu0 0
        %3989 = vmatprep.subr.bf16.mxu0 0
        %3990 = vmatpush1.bf16.msra.mxu0 0
        %3991 = vmatprep.subr.bf16.mxu0 0
        %3992 = vmatpush1.bf16.msra.mxu0 %v708
        %3993 = vmatprep.subr.bf16.mxu0 0
        %3994 = vmatpush1.bf16.msra.mxu0 %v707
        %3995 = vmatprep.subr.bf16.mxu0 0
        %3996 = vmatpush2.bf16.msra.mxu0 0
        %3997 = vmatprep.subr.bf16.mxu0 0
        %3998 = vmatpush2.bf16.msra.mxu0 0
        %3999 = vmatprep.subr.bf16.mxu0 0
        %4000 = vmatpush2.bf16.msra.mxu0 0
        %4001 = vmatprep.subr.bf16.mxu0 0
        %4002 = vmatpush2.bf16.msra.mxu0 0
        %4003 = vmatprep.subr.bf16.mxu0 0
        %4004 = vmatpush2.bf16.msra.mxu0 0
        %4005 = vmatprep.subr.bf16.mxu0 0
        %4006 = vmatpush2.bf16.msra.mxu0 0
        %4007 = vmatprep.subr.bf16.mxu0 0
        %4008 = vmatpush2.bf16.msra.mxu0 0
        %4009 = vmatprep.subr.bf16.mxu0 0
        %4010 = vmatpush2.bf16.msra.mxu0 0
        %4011 = vmatprep.mubr.bf16.mxu0 0
        %4012 = vmatmul.mubr.bf16.gmra.mxu0 %v3974
        %v4013 = vpop.f32.mrf.mxu0
        %v4014 = vadd.f32 0.0, %v4013
        %v4015 = vpop.f32.mrf.mxu0
        %v4016 = vpop.f32.mrf.mxu0
        %v4017 = vadd.f32 0.0, %v4016
        %v4018 = vpop.f32.mrf.mxu0
        %4019 = vmatprep.mubr.bf16.mxu0 0
        %4020 = vmatmul.mubr.bf16.gmra.mxu0 %v3977
        %v4021 = vpop.f32.mrf.mxu0
        %v4022 = vadd.f32 0.0, %v4021
        %v4023 = vpop.f32.mrf.mxu0
        %v4024 = vpop.f32.mrf.mxu0
        %v4025 = vadd.f32 0.0, %v4024
        %v4026 = vpop.f32.mrf.mxu0
        %4027 = vdwg.mxu0
        %4030 = vrot.lane.b32.xlu0 %v691, 112
        %v4031 = vpop.permute.xlu0 %4030
        %4032 = vrot.lane.b32.xlu0 %v692, 112
        %v4033 = vpop.permute.xlu0 %4032
        %4036 = vrot.lane.b32.xlu0 %v699, 112
        %v4037 = vpop.permute.xlu0 %4036
        %4038 = vrot.lane.b32.xlu0 %v700, 112
        %v4039 = vpop.permute.xlu0 %4038
        %v4041 = vsel %vm711, %v4031, 0
        %v4044 = vsel %vm711, %v4033, 0
        %v4047 = vsel %vm711, %v4037, 0
        %v4050 = vsel %vm711, %v4039, 0
        %4052 = vmatprep.subr.bf16.mxu0 0
        %4053 = vmatpush1.bf16.xpose.msra.mxu0 0
        %4054 = vmatprep.subr.bf16.mxu0 0
        %4055 = vmatpush1.bf16.xpose.msra.mxu0 0
        %4056 = vmatprep.subr.bf16.mxu0 0
        %4057 = vmatpush1.bf16.xpose.msra.mxu0 0
        %4058 = vmatprep.subr.bf16.mxu0 0
        %4059 = vmatpush1.bf16.xpose.msra.mxu0 0
        %4060 = vmatprep.subr.bf16.mxu0 0
        %4061 = vmatpush1.bf16.xpose.msra.mxu0 0
        %4062 = vmatprep.subr.bf16.mxu0 0
        %4063 = vmatpush1.bf16.xpose.msra.mxu0 0
        %4064 = vmatprep.subr.bf16.mxu0 0
        %4065 = vmatpush1.bf16.xpose.msra.mxu0 %v4050
        %4066 = vmatprep.subr.bf16.mxu0 0
        %4067 = vmatpush1.bf16.xpose.msra.mxu0 %v4047
        %4068 = vmatprep.subr.bf16.mxu0 0
        %4069 = vmatpush2.bf16.xpose.msra.mxu0 0
        %4070 = vmatprep.subr.bf16.mxu0 0
        %4071 = vmatpush2.bf16.xpose.msra.mxu0 0
        %4072 = vmatprep.subr.bf16.mxu0 0
        %4073 = vmatpush2.bf16.xpose.msra.mxu0 0
        %4074 = vmatprep.subr.bf16.mxu0 0
        %4075 = vmatpush2.bf16.xpose.msra.mxu0 0
        %4076 = vmatprep.subr.bf16.mxu0 0
        %4077 = vmatpush2.bf16.xpose.msra.mxu0 0
        %4078 = vmatprep.subr.bf16.mxu0 0
        %4079 = vmatpush2.bf16.xpose.msra.mxu0 0
        %4080 = vmatprep.subr.bf16.mxu0 0
        %4081 = vmatpush2.bf16.xpose.msra.mxu0 0
        %4082 = vmatprep.subr.bf16.mxu0 0
        %4083 = vmatpush2.bf16.xpose.msra.mxu0 0
        %4084 = vmatprep.mubr.bf16.mxu0 0
        %4085 = vmatmul.mubr.bf16.gmra.mxu0 %v4041
        %v4086 = vpop.f32.mrf.mxu0
        %v4087 = vadd.f32 0.0, %v4086
        %v4088 = vpop.f32.mrf.mxu0
        %v4089 = vpop.f32.mrf.mxu0
        %v4090 = vadd.f32 0.0, %v4089
        %v4091 = vpop.f32.mrf.mxu0
        %4092 = vmatprep.mubr.bf16.mxu0 0
        %4093 = vmatmul.mubr.bf16.gmra.mxu0 %v4044
        %v4094 = vpop.f32.mrf.mxu0
        %v4095 = vadd.f32 0.0, %v4094
        %v4096 = vpop.f32.mrf.mxu0
        %v4097 = vpop.f32.mrf.mxu0
        %v4098 = vadd.f32 0.0, %v4097
        %v4099 = vpop.f32.mrf.mxu0
        %4100 = vdwg.mxu0
        %v4101 = vmul.f32 %v4087, 0.25
        %v4102 = vmul.f32 %v4090, 0.25
        %v4103 = vmul.f32 %v4095, 0.25
        %v4104 = vmul.f32 %v4098, 0.25
        %v4105 = vsel %vm777, %v4101, -inf
        %4106 = vmax.xlane.f32.xlu0 %v4105
        %v4107 = vpop.xlane.xlu0 %4106
        %v4108 = vsel %vm777, %v4102, -inf
        %4109 = vmax.xlane.f32.xlu0 %v4108
        %v4110 = vpop.xlane.xlu0 %4109
        %v4111 = vsel %vm777, %v4103, -inf
        %4112 = vmax.xlane.f32.xlu0 %v4111
        %v4113 = vpop.xlane.xlu0 %4112
        %v4114 = vsel %vm777, %v4104, -inf
        %4115 = vmax.xlane.f32.xlu0 %v4114
        %v4116 = vpop.xlane.xlu0 %4115
        %v4117 = vsub.f32 %v4101, %v4107
        %v4118 = vsub.f32 %v4102, %v4110
        %v4119 = vsub.f32 %v4103, %v4113
        %v4120 = vsub.f32 %v4104, %v4116
        %v4121 = vmul.f32 %v4117, 1.442695
        %v4122 = vpow.pop %v4121
        %v4123 = vmul.f32 %v4118, 1.442695
        %v4124 = vpow.pop %v4123
        %v4125 = vmul.f32 %v4119, 1.442695
        %v4126 = vpow.pop %v4125
        %v4127 = vmul.f32 %v4120, 1.442695
        %v4128 = vpow.pop %v4127
        %v4129 = vsel %vm777, %v4122, 0.0
        %4130 = vadd.xlane.f32.xlu0 %v4129
        %v4131 = vpop.xlane.xlu0 %4130
        %v4132 = vsel %vm777, %v4124, 0.0
        %4133 = vadd.xlane.f32.xlu0 %v4132
        %v4134 = vpop.xlane.xlu0 %4133
        %v4135 = vsel %vm777, %v4126, 0.0
        %4136 = vadd.xlane.f32.xlu0 %v4135
        %v4137 = vpop.xlane.xlu0 %4136
        %v4138 = vsel %vm777, %v4128, 0.0
        %4139 = vadd.xlane.f32.xlu0 %v4138
        %v4140 = vpop.xlane.xlu0 %4139
        %v4141 = vrcp.pop %v4131
        %v4142 = vrcp.pop %v4134
        %v4143 = vrcp.pop %v4137
        %v4144 = vrcp.pop %v4140
        %v4145 = vmul.f32 %v4122, %v4141
        %v4146 = vmul.f32 %v4124, %v4142
        %v4147 = vmul.f32 %v4126, %v4143
        %v4148 = vmul.f32 %v4128, %v4144
        %v4149 = vpack.c.bf16 %v4146, %v4145
        %v4150 = vpack.c.bf16 %v4148, %v4147
        %4153 = vrot.lane.b32.xlu0 %v707, 112
        %v4154 = vpop.permute.xlu0 %4153
        %4155 = vrot.lane.b32.xlu0 %v708, 112
        %v4156 = vpop.permute.xlu0 %4155
        %v4160 = vsel %vm777, %v4149, 0
        %v4163 = vsel %vm777, %v4150, 0
        %4165 = vmatprep.subr.bf16.mxu0 0
        %4166 = vmatpush1.bf16.msra.mxu0 0
        %4167 = vmatprep.subr.bf16.mxu0 0
        %4168 = vmatpush1.bf16.msra.mxu0 0
        %4169 = vmatprep.subr.bf16.mxu0 0
        %4170 = vmatpush1.bf16.msra.mxu0 0
        %4171 = vmatprep.subr.bf16.mxu0 0
        %4172 = vmatpush1.bf16.msra.mxu0 0
        %4173 = vmatprep.subr.bf16.mxu0 0
        %4174 = vmatpush1.bf16.msra.mxu0 0
        %4175 = vmatprep.subr.bf16.mxu0 0
        %4176 = vmatpush1.bf16.msra.mxu0 0
        %4177 = vmatprep.subr.bf16.mxu0 0
        %4178 = vmatpush1.bf16.msra.mxu0 %v4156
        %4179 = vmatprep.subr.bf16.mxu0 0
        %4180 = vmatpush1.bf16.msra.mxu0 %v4154
        %4181 = vmatprep.subr.bf16.mxu0 0
        %4182 = vmatpush2.bf16.msra.mxu0 0
        %4183 = vmatprep.subr.bf16.mxu0 0
        %4184 = vmatpush2.bf16.msra.mxu0 0
        %4185 = vmatprep.subr.bf16.mxu0 0
        %4186 = vmatpush2.bf16.msra.mxu0 0
        %4187 = vmatprep.subr.bf16.mxu0 0
        %4188 = vmatpush2.bf16.msra.mxu0 0
        %4189 = vmatprep.subr.bf16.mxu0 0
        %4190 = vmatpush2.bf16.msra.mxu0 0
        %4191 = vmatprep.subr.bf16.mxu0 0
        %4192 = vmatpush2.bf16.msra.mxu0 0
        %4193 = vmatprep.subr.bf16.mxu0 0
        %4194 = vmatpush2.bf16.msra.mxu0 0
        %4195 = vmatprep.subr.bf16.mxu0 0
        %4196 = vmatpush2.bf16.msra.mxu0 0
        %4197 = vmatprep.mubr.bf16.mxu0 0
        %4198 = vmatmul.mubr.bf16.gmra.mxu0 %v4160
        %v4199 = vpop.f32.mrf.mxu0
        %v4200 = vadd.f32 0.0, %v4199
        %v4201 = vpop.f32.mrf.mxu0
        %v4202 = vpop.f32.mrf.mxu0
        %v4203 = vadd.f32 0.0, %v4202
        %v4204 = vpop.f32.mrf.mxu0
        %4205 = vmatprep.mubr.bf16.mxu0 0
        %4206 = vmatmul.mubr.bf16.gmra.mxu0 %v4163
        %v4207 = vpop.f32.mrf.mxu0
        %v4208 = vadd.f32 0.0, %v4207
        %v4209 = vpop.f32.mrf.mxu0
        %v4210 = vpop.f32.mrf.mxu0
        %v4211 = vadd.f32 0.0, %v4210
        %v4212 = vpop.f32.mrf.mxu0
        %4213 = vdwg.mxu0
        %4214 = vrot.lane.b32.xlu0 %v691, 96
        %v4215 = vpop.permute.xlu0 %4214
        %4216 = vrot.lane.b32.xlu0 %v692, 96
        %v4217 = vpop.permute.xlu0 %4216
        %4218 = vrot.lane.b32.xlu0 %v699, 96
        %v4219 = vpop.permute.xlu0 %4218
        %4220 = vrot.lane.b32.xlu0 %v700, 96
        %v4221 = vpop.permute.xlu0 %4220
        %v4223 = vsel %vm711, %v4215, 0
        %v4226 = vsel %vm711, %v4217, 0
        %v4229 = vsel %vm711, %v4219, 0
        %v4232 = vsel %vm711, %v4221, 0
        %4234 = vmatprep.subr.bf16.mxu0 0
        %4235 = vmatpush1.bf16.xpose.msra.mxu0 0
        %4236 = vmatprep.subr.bf16.mxu0 0
        %4237 = vmatpush1.bf16.xpose.msra.mxu0 0
        %4238 = vmatprep.subr.bf16.mxu0 0
        %4239 = vmatpush1.bf16.xpose.msra.mxu0 0
        %4240 = vmatprep.subr.bf16.mxu0 0
        %4241 = vmatpush1.bf16.xpose.msra.mxu0 0
        %4242 = vmatprep.subr.bf16.mxu0 0
        %4243 = vmatpush1.bf16.xpose.msra.mxu0 0
        %4244 = vmatprep.subr.bf16.mxu0 0
        %4245 = vmatpush1.bf16.xpose.msra.mxu0 0
        %4246 = vmatprep.subr.bf16.mxu0 0
        %4247 = vmatpush1.bf16.xpose.msra.mxu0 %v4232
        %4248 = vmatprep.subr.bf16.mxu0 0
        %4249 = vmatpush1.bf16.xpose.msra.mxu0 %v4229
        %4250 = vmatprep.subr.bf16.mxu0 0
        %4251 = vmatpush2.bf16.xpose.msra.mxu0 0
        %4252 = vmatprep.subr.bf16.mxu0 0
        %4253 = vmatpush2.bf16.xpose.msra.mxu0 0
        %4254 = vmatprep.subr.bf16.mxu0 0
        %4255 = vmatpush2.bf16.xpose.msra.mxu0 0
        %4256 = vmatprep.subr.bf16.mxu0 0
        %4257 = vmatpush2.bf16.xpose.msra.mxu0 0
        %4258 = vmatprep.subr.bf16.mxu0 0
        %4259 = vmatpush2.bf16.xpose.msra.mxu0 0
        %4260 = vmatprep.subr.bf16.mxu0 0
        %4261 = vmatpush2.bf16.xpose.msra.mxu0 0
        %4262 = vmatprep.subr.bf16.mxu0 0
        %4263 = vmatpush2.bf16.xpose.msra.mxu0 0
        %4264 = vmatprep.subr.bf16.mxu0 0
        %4265 = vmatpush2.bf16.xpose.msra.mxu0 0
        %4266 = vmatprep.mubr.bf16.mxu0 0
        %4267 = vmatmul.mubr.bf16.gmra.mxu0 %v4223
        %v4268 = vpop.f32.mrf.mxu0
        %v4269 = vadd.f32 0.0, %v4268
        %v4270 = vpop.f32.mrf.mxu0
        %v4271 = vpop.f32.mrf.mxu0
        %v4272 = vadd.f32 0.0, %v4271
        %v4273 = vpop.f32.mrf.mxu0
        %4274 = vmatprep.mubr.bf16.mxu0 0
        %4275 = vmatmul.mubr.bf16.gmra.mxu0 %v4226
        %v4276 = vpop.f32.mrf.mxu0
        %v4277 = vadd.f32 0.0, %v4276
        %v4278 = vpop.f32.mrf.mxu0
        %v4279 = vpop.f32.mrf.mxu0
        %v4280 = vadd.f32 0.0, %v4279
        %v4281 = vpop.f32.mrf.mxu0
        %4282 = vdwg.mxu0
        %v4283 = vmul.f32 %v4269, 0.25
        %v4284 = vmul.f32 %v4272, 0.25
        %v4285 = vmul.f32 %v4277, 0.25
        %v4286 = vmul.f32 %v4280, 0.25
        %v4287 = vsel %vm777, %v4283, -inf
        %4288 = vmax.xlane.f32.xlu0 %v4287
        %v4289 = vpop.xlane.xlu0 %4288
        %v4290 = vsel %vm777, %v4284, -inf
        %4291 = vmax.xlane.f32.xlu0 %v4290
        %v4292 = vpop.xlane.xlu0 %4291
        %v4293 = vsel %vm777, %v4285, -inf
        %4294 = vmax.xlane.f32.xlu0 %v4293
        %v4295 = vpop.xlane.xlu0 %4294
        %v4296 = vsel %vm777, %v4286, -inf
        %4297 = vmax.xlane.f32.xlu0 %v4296
        %v4298 = vpop.xlane.xlu0 %4297
        %v4299 = vsub.f32 %v4283, %v4289
        %v4300 = vsub.f32 %v4284, %v4292
        %v4301 = vsub.f32 %v4285, %v4295
        %v4302 = vsub.f32 %v4286, %v4298
        %v4303 = vmul.f32 %v4299, 1.442695
        %v4304 = vpow.pop %v4303
        %v4305 = vmul.f32 %v4300, 1.442695
        %v4306 = vpow.pop %v4305
        %v4307 = vmul.f32 %v4301, 1.442695
        %v4308 = vpow.pop %v4307
        %v4309 = vmul.f32 %v4302, 1.442695
        %v4310 = vpow.pop %v4309
        %v4311 = vsel %vm777, %v4304, 0.0
        %4312 = vadd.xlane.f32.xlu0 %v4311
        %v4313 = vpop.xlane.xlu0 %4312
        %v4314 = vsel %vm777, %v4306, 0.0
        %4315 = vadd.xlane.f32.xlu0 %v4314
        %v4316 = vpop.xlane.xlu0 %4315
        %v4317 = vsel %vm777, %v4308, 0.0
        %4318 = vadd.xlane.f32.xlu0 %v4317
        %v4319 = vpop.xlane.xlu0 %4318
        %v4320 = vsel %vm777, %v4310, 0.0
        %4321 = vadd.xlane.f32.xlu0 %v4320
        %v4322 = vpop.xlane.xlu0 %4321
        %v4323 = vrcp.pop %v4313
        %v4324 = vrcp.pop %v4316
        %v4325 = vrcp.pop %v4319
        %v4326 = vrcp.pop %v4322
        %v4327 = vmul.f32 %v4304, %v4323
        %v4328 = vmul.f32 %v4306, %v4324
        %v4329 = vmul.f32 %v4308, %v4325
        %v4330 = vmul.f32 %v4310, %v4326
        %v4331 = vpack.c.bf16 %v4328, %v4327
        %v4332 = vpack.c.bf16 %v4330, %v4329
        %4333 = vrot.lane.b32.xlu0 %v707, 96
        %v4334 = vpop.permute.xlu0 %4333
        %4335 = vrot.lane.b32.xlu0 %v708, 96
        %v4336 = vpop.permute.xlu0 %4335
        %v4340 = vsel %vm777, %v4331, 0
        %v4343 = vsel %vm777, %v4332, 0
        %4345 = vmatprep.subr.bf16.mxu0 0
        %4346 = vmatpush1.bf16.msra.mxu0 0
        %4347 = vmatprep.subr.bf16.mxu0 0
        %4348 = vmatpush1.bf16.msra.mxu0 0
        %4349 = vmatprep.subr.bf16.mxu0 0
        %4350 = vmatpush1.bf16.msra.mxu0 0
        %4351 = vmatprep.subr.bf16.mxu0 0
        %4352 = vmatpush1.bf16.msra.mxu0 0
        %4353 = vmatprep.subr.bf16.mxu0 0
        %4354 = vmatpush1.bf16.msra.mxu0 0
        %4355 = vmatprep.subr.bf16.mxu0 0
        %4356 = vmatpush1.bf16.msra.mxu0 0
        %4357 = vmatprep.subr.bf16.mxu0 0
        %4358 = vmatpush1.bf16.msra.mxu0 %v4336
        %4359 = vmatprep.subr.bf16.mxu0 0
        %4360 = vmatpush1.bf16.msra.mxu0 %v4334
        %4361 = vmatprep.subr.bf16.mxu0 0
        %4362 = vmatpush2.bf16.msra.mxu0 0
        %4363 = vmatprep.subr.bf16.mxu0 0
        %4364 = vmatpush2.bf16.msra.mxu0 0
        %4365 = vmatprep.subr.bf16.mxu0 0
        %4366 = vmatpush2.bf16.msra.mxu0 0
        %4367 = vmatprep.subr.bf16.mxu0 0
        %4368 = vmatpush2.bf16.msra.mxu0 0
        %4369 = vmatprep.subr.bf16.mxu0 0
        %4370 = vmatpush2.bf16.msra.mxu0 0
        %4371 = vmatprep.subr.bf16.mxu0 0
        %4372 = vmatpush2.bf16.msra.mxu0 0
        %4373 = vmatprep.subr.bf16.mxu0 0
        %4374 = vmatpush2.bf16.msra.mxu0 0
        %4375 = vmatprep.subr.bf16.mxu0 0
        %4376 = vmatpush2.bf16.msra.mxu0 0
        %4377 = vmatprep.mubr.bf16.mxu0 0
        %4378 = vmatmul.mubr.bf16.gmra.mxu0 %v4340
        %v4379 = vpop.f32.mrf.mxu0
        %v4380 = vadd.f32 0.0, %v4379
        %v4381 = vpop.f32.mrf.mxu0
        %v4382 = vpop.f32.mrf.mxu0
        %v4383 = vadd.f32 0.0, %v4382
        %v4384 = vpop.f32.mrf.mxu0
        %4385 = vmatprep.mubr.bf16.mxu0 0
        %4386 = vmatmul.mubr.bf16.gmra.mxu0 %v4343
        %v4387 = vpop.f32.mrf.mxu0
        %v4388 = vadd.f32 0.0, %v4387
        %v4389 = vpop.f32.mrf.mxu0
        %v4390 = vpop.f32.mrf.mxu0
        %v4391 = vadd.f32 0.0, %v4390
        %v4392 = vpop.f32.mrf.mxu0
        %4393 = vdwg.mxu0
        %4394 = vrot.lane.b32.xlu0 %v691, 80
        %v4395 = vpop.permute.xlu0 %4394
        %4396 = vrot.lane.b32.xlu0 %v692, 80
        %v4397 = vpop.permute.xlu0 %4396
        %4398 = vrot.lane.b32.xlu0 %v699, 80
        %v4399 = vpop.permute.xlu0 %4398
        %4400 = vrot.lane.b32.xlu0 %v700, 80
        %v4401 = vpop.permute.xlu0 %4400
        %v4403 = vsel %vm711, %v4395, 0
        %v4406 = vsel %vm711, %v4397, 0
        %v4409 = vsel %vm711, %v4399, 0
        %v4412 = vsel %vm711, %v4401, 0
        %4414 = vmatprep.subr.bf16.mxu0 0
        %4415 = vmatpush1.bf16.xpose.msra.mxu0 0
        %4416 = vmatprep.subr.bf16.mxu0 0
        %4417 = vmatpush1.bf16.xpose.msra.mxu0 0
        %4418 = vmatprep.subr.bf16.mxu0 0
        %4419 = vmatpush1.bf16.xpose.msra.mxu0 0
        %4420 = vmatprep.subr.bf16.mxu0 0
        %4421 = vmatpush1.bf16.xpose.msra.mxu0 0
        %4422 = vmatprep.subr.bf16.mxu0 0
        %4423 = vmatpush1.bf16.xpose.msra.mxu0 0
        %4424 = vmatprep.subr.bf16.mxu0 0
        %4425 = vmatpush1.bf16.xpose.msra.mxu0 0
        %4426 = vmatprep.subr.bf16.mxu0 0
        %4427 = vmatpush1.bf16.xpose.msra.mxu0 %v4412
        %4428 = vmatprep.subr.bf16.mxu0 0
        %4429 = vmatpush1.bf16.xpose.msra.mxu0 %v4409
        %4430 = vmatprep.subr.bf16.mxu0 0
        %4431 = vmatpush2.bf16.xpose.msra.mxu0 0
        %4432 = vmatprep.subr.bf16.mxu0 0
        %4433 = vmatpush2.bf16.xpose.msra.mxu0 0
        %4434 = vmatprep.subr.bf16.mxu0 0
        %4435 = vmatpush2.bf16.xpose.msra.mxu0 0
        %4436 = vmatprep.subr.bf16.mxu0 0
        %4437 = vmatpush2.bf16.xpose.msra.mxu0 0
        %4438 = vmatprep.subr.bf16.mxu0 0
        %4439 = vmatpush2.bf16.xpose.msra.mxu0 0
        %4440 = vmatprep.subr.bf16.mxu0 0
        %4441 = vmatpush2.bf16.xpose.msra.mxu0 0
        %4442 = vmatprep.subr.bf16.mxu0 0
        %4443 = vmatpush2.bf16.xpose.msra.mxu0 0
        %4444 = vmatprep.subr.bf16.mxu0 0
        %4445 = vmatpush2.bf16.xpose.msra.mxu0 0
        %4446 = vmatprep.mubr.bf16.mxu0 0
        %4447 = vmatmul.mubr.bf16.gmra.mxu0 %v4403
        %v4448 = vpop.f32.mrf.mxu0
        %v4449 = vadd.f32 0.0, %v4448
        %v4450 = vpop.f32.mrf.mxu0
        %v4451 = vpop.f32.mrf.mxu0
        %v4452 = vadd.f32 0.0, %v4451
        %v4453 = vpop.f32.mrf.mxu0
        %4454 = vmatprep.mubr.bf16.mxu0 0
        %4455 = vmatmul.mubr.bf16.gmra.mxu0 %v4406
        %v4456 = vpop.f32.mrf.mxu0
        %v4457 = vadd.f32 0.0, %v4456
        %v4458 = vpop.f32.mrf.mxu0
        %v4459 = vpop.f32.mrf.mxu0
        %v4460 = vadd.f32 0.0, %v4459
        %v4461 = vpop.f32.mrf.mxu0
        %4462 = vdwg.mxu0
        %v4463 = vmul.f32 %v4449, 0.25
        %v4464 = vmul.f32 %v4452, 0.25
        %v4465 = vmul.f32 %v4457, 0.25
        %v4466 = vmul.f32 %v4460, 0.25
        %v4467 = vsel %vm777, %v4463, -inf
        %4468 = vmax.xlane.f32.xlu0 %v4467
        %v4469 = vpop.xlane.xlu0 %4468
        %v4470 = vsel %vm777, %v4464, -inf
        %4471 = vmax.xlane.f32.xlu0 %v4470
        %v4472 = vpop.xlane.xlu0 %4471
        %v4473 = vsel %vm777, %v4465, -inf
        %4474 = vmax.xlane.f32.xlu0 %v4473
        %v4475 = vpop.xlane.xlu0 %4474
        %v4476 = vsel %vm777, %v4466, -inf
        %4477 = vmax.xlane.f32.xlu0 %v4476
        %v4478 = vpop.xlane.xlu0 %4477
        %v4479 = vsub.f32 %v4463, %v4469
        %v4480 = vsub.f32 %v4464, %v4472
        %v4481 = vsub.f32 %v4465, %v4475
        %v4482 = vsub.f32 %v4466, %v4478
        %v4483 = vmul.f32 %v4479, 1.442695
        %v4484 = vpow.pop %v4483
        %v4485 = vmul.f32 %v4480, 1.442695
        %v4486 = vpow.pop %v4485
        %v4487 = vmul.f32 %v4481, 1.442695
        %v4488 = vpow.pop %v4487
        %v4489 = vmul.f32 %v4482, 1.442695
        %v4490 = vpow.pop %v4489
        %v4491 = vsel %vm777, %v4484, 0.0
        %4492 = vadd.xlane.f32.xlu0 %v4491
        %v4493 = vpop.xlane.xlu0 %4492
        %v4494 = vsel %vm777, %v4486, 0.0
        %4495 = vadd.xlane.f32.xlu0 %v4494
        %v4496 = vpop.xlane.xlu0 %4495
        %v4497 = vsel %vm777, %v4488, 0.0
        %4498 = vadd.xlane.f32.xlu0 %v4497
        %v4499 = vpop.xlane.xlu0 %4498
        %v4500 = vsel %vm777, %v4490, 0.0
        %4501 = vadd.xlane.f32.xlu0 %v4500
        %v4502 = vpop.xlane.xlu0 %4501
        %v4503 = vrcp.pop %v4493
        %v4504 = vrcp.pop %v4496
        %v4505 = vrcp.pop %v4499
        %v4506 = vrcp.pop %v4502
        %v4507 = vmul.f32 %v4484, %v4503
        %v4508 = vmul.f32 %v4486, %v4504
        %v4509 = vmul.f32 %v4488, %v4505
        %v4510 = vmul.f32 %v4490, %v4506
        %v4511 = vpack.c.bf16 %v4508, %v4507
        %v4512 = vpack.c.bf16 %v4510, %v4509
        %4513 = vrot.lane.b32.xlu0 %v707, 80
        %v4514 = vpop.permute.xlu0 %4513
        %4515 = vrot.lane.b32.xlu0 %v708, 80
        %v4516 = vpop.permute.xlu0 %4515
        %v4520 = vsel %vm777, %v4511, 0
        %v4523 = vsel %vm777, %v4512, 0
        %4525 = vmatprep.subr.bf16.mxu0 0
        %4526 = vmatpush1.bf16.msra.mxu0 0
        %4527 = vmatprep.subr.bf16.mxu0 0
        %4528 = vmatpush1.bf16.msra.mxu0 0
        %4529 = vmatprep.subr.bf16.mxu0 0
        %4530 = vmatpush1.bf16.msra.mxu0 0
        %4531 = vmatprep.subr.bf16.mxu0 0
        %4532 = vmatpush1.bf16.msra.mxu0 0
        %4533 = vmatprep.subr.bf16.mxu0 0
        %4534 = vmatpush1.bf16.msra.mxu0 0
        %4535 = vmatprep.subr.bf16.mxu0 0
        %4536 = vmatpush1.bf16.msra.mxu0 0
        %4537 = vmatprep.subr.bf16.mxu0 0
        %4538 = vmatpush1.bf16.msra.mxu0 %v4516
        %4539 = vmatprep.subr.bf16.mxu0 0
        %4540 = vmatpush1.bf16.msra.mxu0 %v4514
        %4541 = vmatprep.subr.bf16.mxu0 0
        %4542 = vmatpush2.bf16.msra.mxu0 0
        %4543 = vmatprep.subr.bf16.mxu0 0
        %4544 = vmatpush2.bf16.msra.mxu0 0
        %4545 = vmatprep.subr.bf16.mxu0 0
        %4546 = vmatpush2.bf16.msra.mxu0 0
        %4547 = vmatprep.subr.bf16.mxu0 0
        %4548 = vmatpush2.bf16.msra.mxu0 0
        %4549 = vmatprep.subr.bf16.mxu0 0
        %4550 = vmatpush2.bf16.msra.mxu0 0
        %4551 = vmatprep.subr.bf16.mxu0 0
        %4552 = vmatpush2.bf16.msra.mxu0 0
        %4553 = vmatprep.subr.bf16.mxu0 0
        %4554 = vmatpush2.bf16.msra.mxu0 0
        %4555 = vmatprep.subr.bf16.mxu0 0
        %4556 = vmatpush2.bf16.msra.mxu0 0
        %4557 = vmatprep.mubr.bf16.mxu0 0
        %4558 = vmatmul.mubr.bf16.gmra.mxu0 %v4520
        %v4559 = vpop.f32.mrf.mxu0
        %v4560 = vadd.f32 0.0, %v4559
        %v4561 = vpop.f32.mrf.mxu0
        %v4562 = vpop.f32.mrf.mxu0
        %v4563 = vadd.f32 0.0, %v4562
        %v4564 = vpop.f32.mrf.mxu0
        %4565 = vmatprep.mubr.bf16.mxu0 0
        %4566 = vmatmul.mubr.bf16.gmra.mxu0 %v4523
        %v4567 = vpop.f32.mrf.mxu0
        %v4568 = vadd.f32 0.0, %v4567
        %v4569 = vpop.f32.mrf.mxu0
        %v4570 = vpop.f32.mrf.mxu0
        %v4571 = vadd.f32 0.0, %v4570
        %v4572 = vpop.f32.mrf.mxu0
        %4573 = vdwg.mxu0
        %4574 = vrot.lane.b32.xlu0 %v691, 64
        %v4575 = vpop.permute.xlu0 %4574
        %4576 = vrot.lane.b32.xlu0 %v692, 64
        %v4577 = vpop.permute.xlu0 %4576
        %4578 = vrot.lane.b32.xlu0 %v699, 64
        %v4579 = vpop.permute.xlu0 %4578
        %4580 = vrot.lane.b32.xlu0 %v700, 64
        %v4581 = vpop.permute.xlu0 %4580
        %v4583 = vsel %vm711, %v4575, 0
        %v4586 = vsel %vm711, %v4577, 0
        %v4589 = vsel %vm711, %v4579, 0
        %v4592 = vsel %vm711, %v4581, 0
        %4594 = vmatprep.subr.bf16.mxu0 0
        %4595 = vmatpush1.bf16.xpose.msra.mxu0 0
        %4596 = vmatprep.subr.bf16.mxu0 0
        %4597 = vmatpush1.bf16.xpose.msra.mxu0 0
        %4598 = vmatprep.subr.bf16.mxu0 0
        %4599 = vmatpush1.bf16.xpose.msra.mxu0 0
        %4600 = vmatprep.subr.bf16.mxu0 0
        %4601 = vmatpush1.bf16.xpose.msra.mxu0 0
        %4602 = vmatprep.subr.bf16.mxu0 0
        %4603 = vmatpush1.bf16.xpose.msra.mxu0 0
        %4604 = vmatprep.subr.bf16.mxu0 0
        %4605 = vmatpush1.bf16.xpose.msra.mxu0 0
        %4606 = vmatprep.subr.bf16.mxu0 0
        %4607 = vmatpush1.bf16.xpose.msra.mxu0 %v4592
        %4608 = vmatprep.subr.bf16.mxu0 0
        %4609 = vmatpush1.bf16.xpose.msra.mxu0 %v4589
        %4610 = vmatprep.subr.bf16.mxu0 0
        %4611 = vmatpush2.bf16.xpose.msra.mxu0 0
        %4612 = vmatprep.subr.bf16.mxu0 0
        %4613 = vmatpush2.bf16.xpose.msra.mxu0 0
        %4614 = vmatprep.subr.bf16.mxu0 0
        %4615 = vmatpush2.bf16.xpose.msra.mxu0 0
        %4616 = vmatprep.subr.bf16.mxu0 0
        %4617 = vmatpush2.bf16.xpose.msra.mxu0 0
        %4618 = vmatprep.subr.bf16.mxu0 0
        %4619 = vmatpush2.bf16.xpose.msra.mxu0 0
        %4620 = vmatprep.subr.bf16.mxu0 0
        %4621 = vmatpush2.bf16.xpose.msra.mxu0 0
        %4622 = vmatprep.subr.bf16.mxu0 0
        %4623 = vmatpush2.bf16.xpose.msra.mxu0 0
        %4624 = vmatprep.subr.bf16.mxu0 0
        %4625 = vmatpush2.bf16.xpose.msra.mxu0 0
        %4626 = vmatprep.mubr.bf16.mxu0 0
        %4627 = vmatmul.mubr.bf16.gmra.mxu0 %v4583
        %v4628 = vpop.f32.mrf.mxu0
        %v4629 = vadd.f32 0.0, %v4628
        %v4630 = vpop.f32.mrf.mxu0
        %v4631 = vpop.f32.mrf.mxu0
        %v4632 = vadd.f32 0.0, %v4631
        %v4633 = vpop.f32.mrf.mxu0
        %4634 = vmatprep.mubr.bf16.mxu0 0
        %4635 = vmatmul.mubr.bf16.gmra.mxu0 %v4586
        %v4636 = vpop.f32.mrf.mxu0
        %v4637 = vadd.f32 0.0, %v4636
        %v4638 = vpop.f32.mrf.mxu0
        %v4639 = vpop.f32.mrf.mxu0
        %v4640 = vadd.f32 0.0, %v4639
        %v4641 = vpop.f32.mrf.mxu0
        %4642 = vdwg.mxu0
        %v4643 = vmul.f32 %v4629, 0.25
        %v4644 = vmul.f32 %v4632, 0.25
        %v4645 = vmul.f32 %v4637, 0.25
        %v4646 = vmul.f32 %v4640, 0.25
        %v4647 = vsel %vm777, %v4643, -inf
        %4648 = vmax.xlane.f32.xlu0 %v4647
        %v4649 = vpop.xlane.xlu0 %4648
        %v4650 = vsel %vm777, %v4644, -inf
        %4651 = vmax.xlane.f32.xlu0 %v4650
        %v4652 = vpop.xlane.xlu0 %4651
        %v4653 = vsel %vm777, %v4645, -inf
        %4654 = vmax.xlane.f32.xlu0 %v4653
        %v4655 = vpop.xlane.xlu0 %4654
        %v4656 = vsel %vm777, %v4646, -inf
        %4657 = vmax.xlane.f32.xlu0 %v4656
        %v4658 = vpop.xlane.xlu0 %4657
        %v4659 = vsub.f32 %v4643, %v4649
        %v4660 = vsub.f32 %v4644, %v4652
        %v4661 = vsub.f32 %v4645, %v4655
        %v4662 = vsub.f32 %v4646, %v4658
        %v4663 = vmul.f32 %v4659, 1.442695
        %v4664 = vpow.pop %v4663
        %v4665 = vmul.f32 %v4660, 1.442695
        %v4666 = vpow.pop %v4665
        %v4667 = vmul.f32 %v4661, 1.442695
        %v4668 = vpow.pop %v4667
        %v4669 = vmul.f32 %v4662, 1.442695
        %v4670 = vpow.pop %v4669
        %v4671 = vsel %vm777, %v4664, 0.0
        %4672 = vadd.xlane.f32.xlu0 %v4671
        %v4673 = vpop.xlane.xlu0 %4672
        %v4674 = vsel %vm777, %v4666, 0.0
        %4675 = vadd.xlane.f32.xlu0 %v4674
        %v4676 = vpop.xlane.xlu0 %4675
        %v4677 = vsel %vm777, %v4668, 0.0
        %4678 = vadd.xlane.f32.xlu0 %v4677
        %v4679 = vpop.xlane.xlu0 %4678
        %v4680 = vsel %vm777, %v4670, 0.0
        %4681 = vadd.xlane.f32.xlu0 %v4680
        %v4682 = vpop.xlane.xlu0 %4681
        %v4683 = vrcp.pop %v4673
        %v4684 = vrcp.pop %v4676
        %v4685 = vrcp.pop %v4679
        %v4686 = vrcp.pop %v4682
        %v4687 = vmul.f32 %v4664, %v4683
        %v4688 = vmul.f32 %v4666, %v4684
        %v4689 = vmul.f32 %v4668, %v4685
        %v4690 = vmul.f32 %v4670, %v4686
        %v4691 = vpack.c.bf16 %v4688, %v4687
        %v4692 = vpack.c.bf16 %v4690, %v4689
        %4693 = vrot.lane.b32.xlu0 %v707, 64
        %v4694 = vpop.permute.xlu0 %4693
        %4695 = vrot.lane.b32.xlu0 %v708, 64
        %v4696 = vpop.permute.xlu0 %4695
        %v4700 = vsel %vm777, %v4691, 0
        %v4703 = vsel %vm777, %v4692, 0
        %4705 = vmatprep.subr.bf16.mxu0 0
        %4706 = vmatpush1.bf16.msra.mxu0 0
        %4707 = vmatprep.subr.bf16.mxu0 0
        %4708 = vmatpush1.bf16.msra.mxu0 0
        %4709 = vmatprep.subr.bf16.mxu0 0
        %4710 = vmatpush1.bf16.msra.mxu0 0
        %4711 = vmatprep.subr.bf16.mxu0 0
        %4712 = vmatpush1.bf16.msra.mxu0 0
        %4713 = vmatprep.subr.bf16.mxu0 0
        %4714 = vmatpush1.bf16.msra.mxu0 0
        %4715 = vmatprep.subr.bf16.mxu0 0
        %4716 = vmatpush1.bf16.msra.mxu0 0
        %4717 = vmatprep.subr.bf16.mxu0 0
        %4718 = vmatpush1.bf16.msra.mxu0 %v4696
        %4719 = vmatprep.subr.bf16.mxu0 0
        %4720 = vmatpush1.bf16.msra.mxu0 %v4694
        %4721 = vmatprep.subr.bf16.mxu0 0
        %4722 = vmatpush2.bf16.msra.mxu0 0
        %4723 = vmatprep.subr.bf16.mxu0 0
        %4724 = vmatpush2.bf16.msra.mxu0 0
        %4725 = vmatprep.subr.bf16.mxu0 0
        %4726 = vmatpush2.bf16.msra.mxu0 0
        %4727 = vmatprep.subr.bf16.mxu0 0
        %4728 = vmatpush2.bf16.msra.mxu0 0
        %4729 = vmatprep.subr.bf16.mxu0 0
        %4730 = vmatpush2.bf16.msra.mxu0 0
        %4731 = vmatprep.subr.bf16.mxu0 0
        %4732 = vmatpush2.bf16.msra.mxu0 0
        %4733 = vmatprep.subr.bf16.mxu0 0
        %4734 = vmatpush2.bf16.msra.mxu0 0
        %4735 = vmatprep.subr.bf16.mxu0 0
        %4736 = vmatpush2.bf16.msra.mxu0 0
        %4737 = vmatprep.mubr.bf16.mxu0 0
        %4738 = vmatmul.mubr.bf16.gmra.mxu0 %v4700
        %v4739 = vpop.f32.mrf.mxu0
        %v4740 = vadd.f32 0.0, %v4739
        %v4741 = vpop.f32.mrf.mxu0
        %v4742 = vpop.f32.mrf.mxu0
        %v4743 = vadd.f32 0.0, %v4742
        %v4744 = vpop.f32.mrf.mxu0
        %4745 = vmatprep.mubr.bf16.mxu0 0
        %4746 = vmatmul.mubr.bf16.gmra.mxu0 %v4703
        %v4747 = vpop.f32.mrf.mxu0
        %v4748 = vadd.f32 0.0, %v4747
        %v4749 = vpop.f32.mrf.mxu0
        %v4750 = vpop.f32.mrf.mxu0
        %v4751 = vadd.f32 0.0, %v4750
        %v4752 = vpop.f32.mrf.mxu0
        %4753 = vdwg.mxu0
        %4754 = vrot.lane.b32.xlu0 %v691, 48
        %v4755 = vpop.permute.xlu0 %4754
        %4756 = vrot.lane.b32.xlu0 %v692, 48
        %v4757 = vpop.permute.xlu0 %4756
        %4758 = vrot.lane.b32.xlu0 %v699, 48
        %v4759 = vpop.permute.xlu0 %4758
        %4760 = vrot.lane.b32.xlu0 %v700, 48
        %v4761 = vpop.permute.xlu0 %4760
        %v4763 = vsel %vm711, %v4755, 0
        %v4766 = vsel %vm711, %v4757, 0
        %v4769 = vsel %vm711, %v4759, 0
        %v4772 = vsel %vm711, %v4761, 0
        %4774 = vmatprep.subr.bf16.mxu0 0
        %4775 = vmatpush1.bf16.xpose.msra.mxu0 0
        %4776 = vmatprep.subr.bf16.mxu0 0
        %4777 = vmatpush1.bf16.xpose.msra.mxu0 0
        %4778 = vmatprep.subr.bf16.mxu0 0
        %4779 = vmatpush1.bf16.xpose.msra.mxu0 0
        %4780 = vmatprep.subr.bf16.mxu0 0
        %4781 = vmatpush1.bf16.xpose.msra.mxu0 0
        %4782 = vmatprep.subr.bf16.mxu0 0
        %4783 = vmatpush1.bf16.xpose.msra.mxu0 0
        %4784 = vmatprep.subr.bf16.mxu0 0
        %4785 = vmatpush1.bf16.xpose.msra.mxu0 0
        %4786 = vmatprep.subr.bf16.mxu0 0
        %4787 = vmatpush1.bf16.xpose.msra.mxu0 %v4772
        %4788 = vmatprep.subr.bf16.mxu0 0
        %4789 = vmatpush1.bf16.xpose.msra.mxu0 %v4769
        %4790 = vmatprep.subr.bf16.mxu0 0
        %4791 = vmatpush2.bf16.xpose.msra.mxu0 0
        %4792 = vmatprep.subr.bf16.mxu0 0
        %4793 = vmatpush2.bf16.xpose.msra.mxu0 0
        %4794 = vmatprep.subr.bf16.mxu0 0
        %4795 = vmatpush2.bf16.xpose.msra.mxu0 0
        %4796 = vmatprep.subr.bf16.mxu0 0
        %4797 = vmatpush2.bf16.xpose.msra.mxu0 0
        %4798 = vmatprep.subr.bf16.mxu0 0
        %4799 = vmatpush2.bf16.xpose.msra.mxu0 0
        %4800 = vmatprep.subr.bf16.mxu0 0
        %4801 = vmatpush2.bf16.xpose.msra.mxu0 0
        %4802 = vmatprep.subr.bf16.mxu0 0
        %4803 = vmatpush2.bf16.xpose.msra.mxu0 0
        %4804 = vmatprep.subr.bf16.mxu0 0
        %4805 = vmatpush2.bf16.xpose.msra.mxu0 0
        %4806 = vmatprep.mubr.bf16.mxu0 0
        %4807 = vmatmul.mubr.bf16.gmra.mxu0 %v4763
        %v4808 = vpop.f32.mrf.mxu0
        %v4809 = vadd.f32 0.0, %v4808
        %v4810 = vpop.f32.mrf.mxu0
        %v4811 = vpop.f32.mrf.mxu0
        %v4812 = vadd.f32 0.0, %v4811
        %v4813 = vpop.f32.mrf.mxu0
        %4814 = vmatprep.mubr.bf16.mxu0 0
        %4815 = vmatmul.mubr.bf16.gmra.mxu0 %v4766
        %v4816 = vpop.f32.mrf.mxu0
        %v4817 = vadd.f32 0.0, %v4816
        %v4818 = vpop.f32.mrf.mxu0
        %v4819 = vpop.f32.mrf.mxu0
        %v4820 = vadd.f32 0.0, %v4819
        %v4821 = vpop.f32.mrf.mxu0
        %4822 = vdwg.mxu0
        %v4823 = vmul.f32 %v4809, 0.25
        %v4824 = vmul.f32 %v4812, 0.25
        %v4825 = vmul.f32 %v4817, 0.25
        %v4826 = vmul.f32 %v4820, 0.25
        %v4827 = vsel %vm777, %v4823, -inf
        %4828 = vmax.xlane.f32.xlu0 %v4827
        %v4829 = vpop.xlane.xlu0 %4828
        %v4830 = vsel %vm777, %v4824, -inf
        %4831 = vmax.xlane.f32.xlu0 %v4830
        %v4832 = vpop.xlane.xlu0 %4831
        %v4833 = vsel %vm777, %v4825, -inf
        %4834 = vmax.xlane.f32.xlu0 %v4833
        %v4835 = vpop.xlane.xlu0 %4834
        %v4836 = vsel %vm777, %v4826, -inf
        %4837 = vmax.xlane.f32.xlu0 %v4836
        %v4838 = vpop.xlane.xlu0 %4837
        %v4839 = vsub.f32 %v4823, %v4829
        %v4840 = vsub.f32 %v4824, %v4832
        %v4841 = vsub.f32 %v4825, %v4835
        %v4842 = vsub.f32 %v4826, %v4838
        %v4843 = vmul.f32 %v4839, 1.442695
        %v4844 = vpow.pop %v4843
        %v4845 = vmul.f32 %v4840, 1.442695
        %v4846 = vpow.pop %v4845
        %v4847 = vmul.f32 %v4841, 1.442695
        %v4848 = vpow.pop %v4847
        %v4849 = vmul.f32 %v4842, 1.442695
        %v4850 = vpow.pop %v4849
        %v4851 = vsel %vm777, %v4844, 0.0
        %4852 = vadd.xlane.f32.xlu0 %v4851
        %v4853 = vpop.xlane.xlu0 %4852
        %v4854 = vsel %vm777, %v4846, 0.0
        %4855 = vadd.xlane.f32.xlu0 %v4854
        %v4856 = vpop.xlane.xlu0 %4855
        %v4857 = vsel %vm777, %v4848, 0.0
        %4858 = vadd.xlane.f32.xlu0 %v4857
        %v4859 = vpop.xlane.xlu0 %4858
        %v4860 = vsel %vm777, %v4850, 0.0
        %4861 = vadd.xlane.f32.xlu0 %v4860
        %v4862 = vpop.xlane.xlu0 %4861
        %v4863 = vrcp.pop %v4853
        %v4864 = vrcp.pop %v4856
        %v4865 = vrcp.pop %v4859
        %v4866 = vrcp.pop %v4862
        %v4867 = vmul.f32 %v4844, %v4863
        %v4868 = vmul.f32 %v4846, %v4864
        %v4869 = vmul.f32 %v4848, %v4865
        %v4870 = vmul.f32 %v4850, %v4866
        %v4871 = vpack.c.bf16 %v4868, %v4867
        %v4872 = vpack.c.bf16 %v4870, %v4869
        %4873 = vrot.lane.b32.xlu0 %v707, 48
        %v4874 = vpop.permute.xlu0 %4873
        %4875 = vrot.lane.b32.xlu0 %v708, 48
        %v4876 = vpop.permute.xlu0 %4875
        %v4880 = vsel %vm777, %v4871, 0
        %v4883 = vsel %vm777, %v4872, 0
        %4885 = vmatprep.subr.bf16.mxu0 0
        %4886 = vmatpush1.bf16.msra.mxu0 0
        %4887 = vmatprep.subr.bf16.mxu0 0
        %4888 = vmatpush1.bf16.msra.mxu0 0
        %4889 = vmatprep.subr.bf16.mxu0 0
        %4890 = vmatpush1.bf16.msra.mxu0 0
        %4891 = vmatprep.subr.bf16.mxu0 0
        %4892 = vmatpush1.bf16.msra.mxu0 0
        %4893 = vmatprep.subr.bf16.mxu0 0
        %4894 = vmatpush1.bf16.msra.mxu0 0
        %4895 = vmatprep.subr.bf16.mxu0 0
        %4896 = vmatpush1.bf16.msra.mxu0 0
        %4897 = vmatprep.subr.bf16.mxu0 0
        %4898 = vmatpush1.bf16.msra.mxu0 %v4876
        %4899 = vmatprep.subr.bf16.mxu0 0
        %4900 = vmatpush1.bf16.msra.mxu0 %v4874
        %4901 = vmatprep.subr.bf16.mxu0 0
        %4902 = vmatpush2.bf16.msra.mxu0 0
        %4903 = vmatprep.subr.bf16.mxu0 0
        %4904 = vmatpush2.bf16.msra.mxu0 0
        %4905 = vmatprep.subr.bf16.mxu0 0
        %4906 = vmatpush2.bf16.msra.mxu0 0
        %4907 = vmatprep.subr.bf16.mxu0 0
        %4908 = vmatpush2.bf16.msra.mxu0 0
        %4909 = vmatprep.subr.bf16.mxu0 0
        %4910 = vmatpush2.bf16.msra.mxu0 0
        %4911 = vmatprep.subr.bf16.mxu0 0
        %4912 = vmatpush2.bf16.msra.mxu0 0
        %4913 = vmatprep.subr.bf16.mxu0 0
        %4914 = vmatpush2.bf16.msra.mxu0 0
        %4915 = vmatprep.subr.bf16.mxu0 0
        %4916 = vmatpush2.bf16.msra.mxu0 0
        %4917 = vmatprep.mubr.bf16.mxu0 0
        %4918 = vmatmul.mubr.bf16.gmra.mxu0 %v4880
        %v4919 = vpop.f32.mrf.mxu0
        %v4920 = vadd.f32 0.0, %v4919
        %v4921 = vpop.f32.mrf.mxu0
        %v4922 = vpop.f32.mrf.mxu0
        %v4923 = vadd.f32 0.0, %v4922
        %v4924 = vpop.f32.mrf.mxu0
        %4925 = vmatprep.mubr.bf16.mxu0 0
        %4926 = vmatmul.mubr.bf16.gmra.mxu0 %v4883
        %v4927 = vpop.f32.mrf.mxu0
        %v4928 = vadd.f32 0.0, %v4927
        %v4929 = vpop.f32.mrf.mxu0
        %v4930 = vpop.f32.mrf.mxu0
        %v4931 = vadd.f32 0.0, %v4930
        %v4932 = vpop.f32.mrf.mxu0
        %4933 = vdwg.mxu0
        %4934 = vrot.lane.b32.xlu0 %v691, 32
        %v4935 = vpop.permute.xlu0 %4934
        %4936 = vrot.lane.b32.xlu0 %v692, 32
        %v4937 = vpop.permute.xlu0 %4936
        %4938 = vrot.lane.b32.xlu0 %v699, 32
        %v4939 = vpop.permute.xlu0 %4938
        %4940 = vrot.lane.b32.xlu0 %v700, 32
        %v4941 = vpop.permute.xlu0 %4940
        %v4943 = vsel %vm711, %v4935, 0
        %v4946 = vsel %vm711, %v4937, 0
        %v4949 = vsel %vm711, %v4939, 0
        %v4952 = vsel %vm711, %v4941, 0
        %4954 = vmatprep.subr.bf16.mxu0 0
        %4955 = vmatpush1.bf16.xpose.msra.mxu0 0
        %4956 = vmatprep.subr.bf16.mxu0 0
        %4957 = vmatpush1.bf16.xpose.msra.mxu0 0
        %4958 = vmatprep.subr.bf16.mxu0 0
        %4959 = vmatpush1.bf16.xpose.msra.mxu0 0
        %4960 = vmatprep.subr.bf16.mxu0 0
        %4961 = vmatpush1.bf16.xpose.msra.mxu0 0
        %4962 = vmatprep.subr.bf16.mxu0 0
        %4963 = vmatpush1.bf16.xpose.msra.mxu0 0
        %4964 = vmatprep.subr.bf16.mxu0 0
        %4965 = vmatpush1.bf16.xpose.msra.mxu0 0
        %4966 = vmatprep.subr.bf16.mxu0 0
        %4967 = vmatpush1.bf16.xpose.msra.mxu0 %v4952
        %4968 = vmatprep.subr.bf16.mxu0 0
        %4969 = vmatpush1.bf16.xpose.msra.mxu0 %v4949
        %4970 = vmatprep.subr.bf16.mxu0 0
        %4971 = vmatpush2.bf16.xpose.msra.mxu0 0
        %4972 = vmatprep.subr.bf16.mxu0 0
        %4973 = vmatpush2.bf16.xpose.msra.mxu0 0
        %4974 = vmatprep.subr.bf16.mxu0 0
        %4975 = vmatpush2.bf16.xpose.msra.mxu0 0
        %4976 = vmatprep.subr.bf16.mxu0 0
        %4977 = vmatpush2.bf16.xpose.msra.mxu0 0
        %4978 = vmatprep.subr.bf16.mxu0 0
        %4979 = vmatpush2.bf16.xpose.msra.mxu0 0
        %4980 = vmatprep.subr.bf16.mxu0 0
        %4981 = vmatpush2.bf16.xpose.msra.mxu0 0
        %4982 = vmatprep.subr.bf16.mxu0 0
        %4983 = vmatpush2.bf16.xpose.msra.mxu0 0
        %4984 = vmatprep.subr.bf16.mxu0 0
        %4985 = vmatpush2.bf16.xpose.msra.mxu0 0
        %4986 = vmatprep.mubr.bf16.mxu0 0
        %4987 = vmatmul.mubr.bf16.gmra.mxu0 %v4943
        %v4988 = vpop.f32.mrf.mxu0
        %v4989 = vadd.f32 0.0, %v4988
        %v4990 = vpop.f32.mrf.mxu0
        %v4991 = vpop.f32.mrf.mxu0
        %v4992 = vadd.f32 0.0, %v4991
        %v4993 = vpop.f32.mrf.mxu0
        %4994 = vmatprep.mubr.bf16.mxu0 0
        %4995 = vmatmul.mubr.bf16.gmra.mxu0 %v4946
        %v4996 = vpop.f32.mrf.mxu0
        %v4997 = vadd.f32 0.0, %v4996
        %v4998 = vpop.f32.mrf.mxu0
        %v4999 = vpop.f32.mrf.mxu0
        %v5000 = vadd.f32 0.0, %v4999
        %v5001 = vpop.f32.mrf.mxu0
        %5002 = vdwg.mxu0
        %v5003 = vmul.f32 %v4989, 0.25
        %v5004 = vmul.f32 %v4992, 0.25
        %v5005 = vmul.f32 %v4997, 0.25
        %v5006 = vmul.f32 %v5000, 0.25
        %v5007 = vsel %vm777, %v5003, -inf
        %5008 = vmax.xlane.f32.xlu0 %v5007
        %v5009 = vpop.xlane.xlu0 %5008
        %v5010 = vsel %vm777, %v5004, -inf
        %5011 = vmax.xlane.f32.xlu0 %v5010
        %v5012 = vpop.xlane.xlu0 %5011
        %v5013 = vsel %vm777, %v5005, -inf
        %5014 = vmax.xlane.f32.xlu0 %v5013
        %v5015 = vpop.xlane.xlu0 %5014
        %v5016 = vsel %vm777, %v5006, -inf
        %5017 = vmax.xlane.f32.xlu0 %v5016
        %v5018 = vpop.xlane.xlu0 %5017
        %v5019 = vsub.f32 %v5003, %v5009
        %v5020 = vsub.f32 %v5004, %v5012
        %v5021 = vsub.f32 %v5005, %v5015
        %v5022 = vsub.f32 %v5006, %v5018
        %v5023 = vmul.f32 %v5019, 1.442695
        %v5024 = vpow.pop %v5023
        %v5025 = vmul.f32 %v5020, 1.442695
        %v5026 = vpow.pop %v5025
        %v5027 = vmul.f32 %v5021, 1.442695
        %v5028 = vpow.pop %v5027
        %v5029 = vmul.f32 %v5022, 1.442695
        %v5030 = vpow.pop %v5029
        %v5031 = vsel %vm777, %v5024, 0.0
        %5032 = vadd.xlane.f32.xlu0 %v5031
        %v5033 = vpop.xlane.xlu0 %5032
        %v5034 = vsel %vm777, %v5026, 0.0
        %5035 = vadd.xlane.f32.xlu0 %v5034
        %v5036 = vpop.xlane.xlu0 %5035
        %v5037 = vsel %vm777, %v5028, 0.0
        %5038 = vadd.xlane.f32.xlu0 %v5037
        %v5039 = vpop.xlane.xlu0 %5038
        %v5040 = vsel %vm777, %v5030, 0.0
        %5041 = vadd.xlane.f32.xlu0 %v5040
        %v5042 = vpop.xlane.xlu0 %5041
        %v5043 = vrcp.pop %v5033
        %v5044 = vrcp.pop %v5036
        %v5045 = vrcp.pop %v5039
        %v5046 = vrcp.pop %v5042
        %v5047 = vmul.f32 %v5024, %v5043
        %v5048 = vmul.f32 %v5026, %v5044
        %v5049 = vmul.f32 %v5028, %v5045
        %v5050 = vmul.f32 %v5030, %v5046
        %v5051 = vpack.c.bf16 %v5048, %v5047
        %v5052 = vpack.c.bf16 %v5050, %v5049
        %5053 = vrot.lane.b32.xlu0 %v707, 32
        %v5054 = vpop.permute.xlu0 %5053
        %5055 = vrot.lane.b32.xlu0 %v708, 32
        %v5056 = vpop.permute.xlu0 %5055
        %v5060 = vsel %vm777, %v5051, 0
        %v5063 = vsel %vm777, %v5052, 0
        %5065 = vmatprep.subr.bf16.mxu0 0
        %5066 = vmatpush1.bf16.msra.mxu0 0
        %5067 = vmatprep.subr.bf16.mxu0 0
        %5068 = vmatpush1.bf16.msra.mxu0 0
        %5069 = vmatprep.subr.bf16.mxu0 0
        %5070 = vmatpush1.bf16.msra.mxu0 0
        %5071 = vmatprep.subr.bf16.mxu0 0
        %5072 = vmatpush1.bf16.msra.mxu0 0
        %5073 = vmatprep.subr.bf16.mxu0 0
        %5074 = vmatpush1.bf16.msra.mxu0 0
        %5075 = vmatprep.subr.bf16.mxu0 0
        %5076 = vmatpush1.bf16.msra.mxu0 0
        %5077 = vmatprep.subr.bf16.mxu0 0
        %5078 = vmatpush1.bf16.msra.mxu0 %v5056
        %5079 = vmatprep.subr.bf16.mxu0 0
        %5080 = vmatpush1.bf16.msra.mxu0 %v5054
        %5081 = vmatprep.subr.bf16.mxu0 0
        %5082 = vmatpush2.bf16.msra.mxu0 0
        %5083 = vmatprep.subr.bf16.mxu0 0
        %5084 = vmatpush2.bf16.msra.mxu0 0
        %5085 = vmatprep.subr.bf16.mxu0 0
        %5086 = vmatpush2.bf16.msra.mxu0 0
        %5087 = vmatprep.subr.bf16.mxu0 0
        %5088 = vmatpush2.bf16.msra.mxu0 0
        %5089 = vmatprep.subr.bf16.mxu0 0
        %5090 = vmatpush2.bf16.msra.mxu0 0
        %5091 = vmatprep.subr.bf16.mxu0 0
        %5092 = vmatpush2.bf16.msra.mxu0 0
        %5093 = vmatprep.subr.bf16.mxu0 0
        %5094 = vmatpush2.bf16.msra.mxu0 0
        %5095 = vmatprep.subr.bf16.mxu0 0
        %5096 = vmatpush2.bf16.msra.mxu0 0
        %5097 = vmatprep.mubr.bf16.mxu0 0
        %5098 = vmatmul.mubr.bf16.gmra.mxu0 %v5060
        %v5099 = vpop.f32.mrf.mxu0
        %v5100 = vadd.f32 0.0, %v5099
        %v5101 = vpop.f32.mrf.mxu0
        %v5102 = vpop.f32.mrf.mxu0
        %v5103 = vadd.f32 0.0, %v5102
        %v5104 = vpop.f32.mrf.mxu0
        %5105 = vmatprep.mubr.bf16.mxu0 0
        %5106 = vmatmul.mubr.bf16.gmra.mxu0 %v5063
        %v5107 = vpop.f32.mrf.mxu0
        %v5108 = vadd.f32 0.0, %v5107
        %v5109 = vpop.f32.mrf.mxu0
        %v5110 = vpop.f32.mrf.mxu0
        %v5111 = vadd.f32 0.0, %v5110
        %v5112 = vpop.f32.mrf.mxu0
        %5113 = vdwg.mxu0
        %5114 = vrot.lane.b32.xlu0 %v691, 16
        %v5115 = vpop.permute.xlu0 %5114
        %5116 = vrot.lane.b32.xlu0 %v692, 16
        %v5117 = vpop.permute.xlu0 %5116
        %5118 = vrot.lane.b32.xlu0 %v699, 16
        %v5119 = vpop.permute.xlu0 %5118
        %5120 = vrot.lane.b32.xlu0 %v700, 16
        %v5121 = vpop.permute.xlu0 %5120
        %v5123 = vsel %vm711, %v5115, 0
        %v5126 = vsel %vm711, %v5117, 0
        %v5129 = vsel %vm711, %v5119, 0
        %v5132 = vsel %vm711, %v5121, 0
        %5134 = vmatprep.subr.bf16.mxu0 0
        %5135 = vmatpush1.bf16.xpose.msra.mxu0 0
        %5136 = vmatprep.subr.bf16.mxu0 0
        %5137 = vmatpush1.bf16.xpose.msra.mxu0 0
        %5138 = vmatprep.subr.bf16.mxu0 0
        %5139 = vmatpush1.bf16.xpose.msra.mxu0 0
        %5140 = vmatprep.subr.bf16.mxu0 0
        %5141 = vmatpush1.bf16.xpose.msra.mxu0 0
        %5142 = vmatprep.subr.bf16.mxu0 0
        %5143 = vmatpush1.bf16.xpose.msra.mxu0 0
        %5144 = vmatprep.subr.bf16.mxu0 0
        %5145 = vmatpush1.bf16.xpose.msra.mxu0 0
        %5146 = vmatprep.subr.bf16.mxu0 0
        %5147 = vmatpush1.bf16.xpose.msra.mxu0 %v5132
        %5148 = vmatprep.subr.bf16.mxu0 0
        %5149 = vmatpush1.bf16.xpose.msra.mxu0 %v5129
        %5150 = vmatprep.subr.bf16.mxu0 0
        %5151 = vmatpush2.bf16.xpose.msra.mxu0 0
        %5152 = vmatprep.subr.bf16.mxu0 0
        %5153 = vmatpush2.bf16.xpose.msra.mxu0 0
        %5154 = vmatprep.subr.bf16.mxu0 0
        %5155 = vmatpush2.bf16.xpose.msra.mxu0 0
        %5156 = vmatprep.subr.bf16.mxu0 0
        %5157 = vmatpush2.bf16.xpose.msra.mxu0 0
        %5158 = vmatprep.subr.bf16.mxu0 0
        %5159 = vmatpush2.bf16.xpose.msra.mxu0 0
        %5160 = vmatprep.subr.bf16.mxu0 0
        %5161 = vmatpush2.bf16.xpose.msra.mxu0 0
        %5162 = vmatprep.subr.bf16.mxu0 0
        %5163 = vmatpush2.bf16.xpose.msra.mxu0 0
        %5164 = vmatprep.subr.bf16.mxu0 0
        %5165 = vmatpush2.bf16.xpose.msra.mxu0 0
        %5166 = vmatprep.mubr.bf16.mxu0 0
        %5167 = vmatmul.mubr.bf16.gmra.mxu0 %v5123
        %v5168 = vpop.f32.mrf.mxu0
        %v5169 = vadd.f32 0.0, %v5168
        %v5170 = vpop.f32.mrf.mxu0
        %v5171 = vpop.f32.mrf.mxu0
        %v5172 = vadd.f32 0.0, %v5171
        %v5173 = vpop.f32.mrf.mxu0
        %5174 = vmatprep.mubr.bf16.mxu0 0
        %5175 = vmatmul.mubr.bf16.gmra.mxu0 %v5126
        %v5176 = vpop.f32.mrf.mxu0
        %v5177 = vadd.f32 0.0, %v5176
        %v5178 = vpop.f32.mrf.mxu0
        %v5179 = vpop.f32.mrf.mxu0
        %v5180 = vadd.f32 0.0, %v5179
        %v5181 = vpop.f32.mrf.mxu0
        %5182 = vdwg.mxu0
        %v5183 = vmul.f32 %v5169, 0.25
        %v5184 = vmul.f32 %v5172, 0.25
        %v5185 = vmul.f32 %v5177, 0.25
        %v5186 = vmul.f32 %v5180, 0.25
        %v5187 = vsel %vm777, %v5183, -inf
        %5188 = vmax.xlane.f32.xlu0 %v5187
        %v5189 = vpop.xlane.xlu0 %5188
        %v5190 = vsel %vm777, %v5184, -inf
        %5191 = vmax.xlane.f32.xlu0 %v5190
        %v5192 = vpop.xlane.xlu0 %5191
        %v5193 = vsel %vm777, %v5185, -inf
        %5194 = vmax.xlane.f32.xlu0 %v5193
        %v5195 = vpop.xlane.xlu0 %5194
        %v5196 = vsel %vm777, %v5186, -inf
        %5197 = vmax.xlane.f32.xlu0 %v5196
        %v5198 = vpop.xlane.xlu0 %5197
        %v5199 = vsub.f32 %v5183, %v5189
        %v5200 = vsub.f32 %v5184, %v5192
        %v5201 = vsub.f32 %v5185, %v5195
        %v5202 = vsub.f32 %v5186, %v5198
        %v5203 = vmul.f32 %v5199, 1.442695
        %v5204 = vpow.pop %v5203
        %v5205 = vmul.f32 %v5200, 1.442695
        %v5206 = vpow.pop %v5205
        %v5207 = vmul.f32 %v5201, 1.442695
        %v5208 = vpow.pop %v5207
        %v5209 = vmul.f32 %v5202, 1.442695
        %v5210 = vpow.pop %v5209
        %v5211 = vsel %vm777, %v5204, 0.0
        %5212 = vadd.xlane.f32.xlu0 %v5211
        %v5213 = vpop.xlane.xlu0 %5212
        %v5214 = vsel %vm777, %v5206, 0.0
        %5215 = vadd.xlane.f32.xlu0 %v5214
        %v5216 = vpop.xlane.xlu0 %5215
        %v5217 = vsel %vm777, %v5208, 0.0
        %5218 = vadd.xlane.f32.xlu0 %v5217
        %v5219 = vpop.xlane.xlu0 %5218
        %v5220 = vsel %vm777, %v5210, 0.0
        %5221 = vadd.xlane.f32.xlu0 %v5220
        %v5222 = vpop.xlane.xlu0 %5221
        %v5223 = vrcp.pop %v5213
        %v5224 = vrcp.pop %v5216
        %v5225 = vrcp.pop %v5219
        %v5226 = vrcp.pop %v5222
        %v5227 = vmul.f32 %v5204, %v5223
        %v5228 = vmul.f32 %v5206, %v5224
        %v5229 = vmul.f32 %v5208, %v5225
        %v5230 = vmul.f32 %v5210, %v5226
        %v5231 = vpack.c.bf16 %v5228, %v5227
        %v5232 = vpack.c.bf16 %v5230, %v5229
        %5233 = vrot.lane.b32.xlu0 %v707, 16
        %v5234 = vpop.permute.xlu0 %5233
        %5235 = vrot.lane.b32.xlu0 %v708, 16
        %v5236 = vpop.permute.xlu0 %5235
        %v5240 = vsel %vm777, %v5231, 0
        %v5243 = vsel %vm777, %v5232, 0
        %5245 = vmatprep.subr.bf16.mxu0 0
        %5246 = vmatpush1.bf16.msra.mxu0 0
        %5247 = vmatprep.subr.bf16.mxu0 0
        %5248 = vmatpush1.bf16.msra.mxu0 0
        %5249 = vmatprep.subr.bf16.mxu0 0
        %5250 = vmatpush1.bf16.msra.mxu0 0
        %5251 = vmatprep.subr.bf16.mxu0 0
        %5252 = vmatpush1.bf16.msra.mxu0 0
        %5253 = vmatprep.subr.bf16.mxu0 0
        %5254 = vmatpush1.bf16.msra.mxu0 0
        %5255 = vmatprep.subr.bf16.mxu0 0
        %5256 = vmatpush1.bf16.msra.mxu0 0
        %5257 = vmatprep.subr.bf16.mxu0 0
        %5258 = vmatpush1.bf16.msra.mxu0 %v5236
        %5259 = vmatprep.subr.bf16.mxu0 0
        %5260 = vmatpush1.bf16.msra.mxu0 %v5234
        %5261 = vmatprep.subr.bf16.mxu0 0
        %5262 = vmatpush2.bf16.msra.mxu0 0
        %5263 = vmatprep.subr.bf16.mxu0 0
        %5264 = vmatpush2.bf16.msra.mxu0 0
        %5265 = vmatprep.subr.bf16.mxu0 0
        %5266 = vmatpush2.bf16.msra.mxu0 0
        %5267 = vmatprep.subr.bf16.mxu0 0
        %5268 = vmatpush2.bf16.msra.mxu0 0
        %5269 = vmatprep.subr.bf16.mxu0 0
        %5270 = vmatpush2.bf16.msra.mxu0 0
        %5271 = vmatprep.subr.bf16.mxu0 0
        %5272 = vmatpush2.bf16.msra.mxu0 0
        %5273 = vmatprep.subr.bf16.mxu0 0
        %5274 = vmatpush2.bf16.msra.mxu0 0
        %5275 = vmatprep.subr.bf16.mxu0 0
        %5276 = vmatpush2.bf16.msra.mxu0 0
        %5277 = vmatprep.mubr.bf16.mxu0 0
        %5278 = vmatmul.mubr.bf16.gmra.mxu0 %v5240
        %v5279 = vpop.f32.mrf.mxu0
        %v5280 = vadd.f32 0.0, %v5279
        %v5281 = vpop.f32.mrf.mxu0
        %v5282 = vpop.f32.mrf.mxu0
        %v5283 = vadd.f32 0.0, %v5282
        %v5284 = vpop.f32.mrf.mxu0
        %5285 = vmatprep.mubr.bf16.mxu0 0
        %5286 = vmatmul.mubr.bf16.gmra.mxu0 %v5243
        %v5287 = vpop.f32.mrf.mxu0
        %v5288 = vadd.f32 0.0, %v5287
        %v5289 = vpop.f32.mrf.mxu0
        %v5290 = vpop.f32.mrf.mxu0
        %v5291 = vadd.f32 0.0, %v5290
        %v5292 = vpop.f32.mrf.mxu0
        %5293 = vdwg.mxu0
        %5298 = vrot.lane.b32.xlu0 %v4200, 16
        %v5299 = vpop.permute.xlu0 %5298
        %5300 = vrot.lane.b32.xlu0 %v4203, 16
        %v5301 = vpop.permute.xlu0 %5300
        %5302 = vrot.lane.b32.xlu0 %v4208, 16
        %v5303 = vpop.permute.xlu0 %5302
        %5304 = vrot.lane.b32.xlu0 %v4211, 16
        %v5305 = vpop.permute.xlu0 %5304
        %5314 = vrot.lane.b32.xlu0 %v4380, 32
        %v5315 = vpop.permute.xlu0 %5314
        %5316 = vrot.lane.b32.xlu0 %v4383, 32
        %v5317 = vpop.permute.xlu0 %5316
        %5318 = vrot.lane.b32.xlu0 %v4388, 32
        %v5319 = vpop.permute.xlu0 %5318
        %5320 = vrot.lane.b32.xlu0 %v4391, 32
        %v5321 = vpop.permute.xlu0 %5320
        %5330 = vrot.lane.b32.xlu0 %v4560, 48
        %v5331 = vpop.permute.xlu0 %5330
        %5332 = vrot.lane.b32.xlu0 %v4563, 48
        %v5333 = vpop.permute.xlu0 %5332
        %5334 = vrot.lane.b32.xlu0 %v4568, 48
        %v5335 = vpop.permute.xlu0 %5334
        %5336 = vrot.lane.b32.xlu0 %v4571, 48
        %v5337 = vpop.permute.xlu0 %5336
        %5346 = vrot.lane.b32.xlu0 %v4740, 64
        %v5347 = vpop.permute.xlu0 %5346
        %5348 = vrot.lane.b32.xlu0 %v4743, 64
        %v5349 = vpop.permute.xlu0 %5348
        %5350 = vrot.lane.b32.xlu0 %v4748, 64
        %v5351 = vpop.permute.xlu0 %5350
        %5352 = vrot.lane.b32.xlu0 %v4751, 64
        %v5353 = vpop.permute.xlu0 %5352
        %5362 = vrot.lane.b32.xlu0 %v4920, 80
        %v5363 = vpop.permute.xlu0 %5362
        %5364 = vrot.lane.b32.xlu0 %v4923, 80
        %v5365 = vpop.permute.xlu0 %5364
        %5366 = vrot.lane.b32.xlu0 %v4928, 80
        %v5367 = vpop.permute.xlu0 %5366
        %5368 = vrot.lane.b32.xlu0 %v4931, 80
        %v5369 = vpop.permute.xlu0 %5368
        %5378 = vrot.lane.b32.xlu0 %v5100, 96
        %v5379 = vpop.permute.xlu0 %5378
        %5380 = vrot.lane.b32.xlu0 %v5103, 96
        %v5381 = vpop.permute.xlu0 %5380
        %5382 = vrot.lane.b32.xlu0 %v5108, 96
        %v5383 = vpop.permute.xlu0 %5382
        %5384 = vrot.lane.b32.xlu0 %v5111, 96
        %v5385 = vpop.permute.xlu0 %5384
        %5394 = vrot.lane.b32.xlu0 %v5280, 112
        %v5395 = vpop.permute.xlu0 %5394
        %5396 = vrot.lane.b32.xlu0 %v5283, 112
        %v5397 = vpop.permute.xlu0 %5396
        %5398 = vrot.lane.b32.xlu0 %v5288, 112
        %v5399 = vpop.permute.xlu0 %5398
        %5400 = vrot.lane.b32.xlu0 %v5291, 112
        %v5401 = vpop.permute.xlu0 %5400
        %v5406 = vsel %vm711, %v4014, %v5299
        %v5407 = vsel %vm711, %v4017, %v5301
        %v5408 = vsel %vm711, %v4022, %v5303
        %v5409 = vsel %vm711, %v4025, %v5305
        %v5410 = vsel %vm777, %v5406, %v5315
        %v5411 = vsel %vm777, %v5407, %v5317
        %v5412 = vsel %vm777, %v5408, %v5319
        %v5413 = vsel %vm777, %v5409, %v5321
        %v5414 = vsel %vm2265, %v5410, %v5331
        %v5415 = vsel %vm2265, %v5411, %v5333
        %v5416 = vsel %vm2265, %v5412, %v5335
        %v5417 = vsel %vm2265, %v5413, %v5337
        %v5418 = vsel %vm2270, %v5414, %v5347
        %v5419 = vsel %vm2270, %v5415, %v5349
        %v5420 = vsel %vm2270, %v5416, %v5351
        %v5421 = vsel %vm2270, %v5417, %v5353
        %v5422 = vsel %vm2275, %v5418, %v5363
        %v5423 = vsel %vm2275, %v5419, %v5365
        %v5424 = vsel %vm2275, %v5420, %v5367
        %v5425 = vsel %vm2275, %v5421, %v5369
        %v5426 = vsel %vm2280, %v5422, %v5379
        %v5427 = vsel %vm2280, %v5423, %v5381
        %v5428 = vsel %vm2280, %v5424, %v5383
        %v5429 = vsel %vm2280, %v5425, %v5385
        %v5430 = vsel %vm2285, %v5426, %v5395
        %v5431 = vsel %vm2285, %v5427, %v5397
        %v5432 = vsel %vm2285, %v5428, %v5399
        %v5433 = vsel %vm2285, %v5429, %v5401
        %v5435 = vsel %vm711, %v693, 0
        %v5438 = vsel %vm711, %v694, 0
        %v5441 = vsel %vm711, %v701, 0
        %v5444 = vsel %vm711, %v702, 0
        %5446 = vmatprep.subr.bf16.mxu0 0
        %5447 = vmatpush1.bf16.xpose.msra.mxu0 0
        %5448 = vmatprep.subr.bf16.mxu0 0
        %5449 = vmatpush1.bf16.xpose.msra.mxu0 0
        %5450 = vmatprep.subr.bf16.mxu0 0
        %5451 = vmatpush1.bf16.xpose.msra.mxu0 0
        %5452 = vmatprep.subr.bf16.mxu0 0
        %5453 = vmatpush1.bf16.xpose.msra.mxu0 0
        %5454 = vmatprep.subr.bf16.mxu0 0
        %5455 = vmatpush1.bf16.xpose.msra.mxu0 0
        %5456 = vmatprep.subr.bf16.mxu0 0
        %5457 = vmatpush1.bf16.xpose.msra.mxu0 0
        %5458 = vmatprep.subr.bf16.mxu0 0
        %5459 = vmatpush1.bf16.xpose.msra.mxu0 %v5444
        %5460 = vmatprep.subr.bf16.mxu0 0
        %5461 = vmatpush1.bf16.xpose.msra.mxu0 %v5441
        %5462 = vmatprep.subr.bf16.mxu0 0
        %5463 = vmatpush2.bf16.xpose.msra.mxu0 0
        %5464 = vmatprep.subr.bf16.mxu0 0
        %5465 = vmatpush2.bf16.xpose.msra.mxu0 0
        %5466 = vmatprep.subr.bf16.mxu0 0
        %5467 = vmatpush2.bf16.xpose.msra.mxu0 0
        %5468 = vmatprep.subr.bf16.mxu0 0
        %5469 = vmatpush2.bf16.xpose.msra.mxu0 0
        %5470 = vmatprep.subr.bf16.mxu0 0
        %5471 = vmatpush2.bf16.xpose.msra.mxu0 0
        %5472 = vmatprep.subr.bf16.mxu0 0
        %5473 = vmatpush2.bf16.xpose.msra.mxu0 0
        %5474 = vmatprep.subr.bf16.mxu0 0
        %5475 = vmatpush2.bf16.xpose.msra.mxu0 0
        %5476 = vmatprep.subr.bf16.mxu0 0
        %5477 = vmatpush2.bf16.xpose.msra.mxu0 0
        %5478 = vmatprep.mubr.bf16.mxu0 0
        %5479 = vmatmul.mubr.bf16.gmra.mxu0 %v5435
        %v5480 = vpop.f32.mrf.mxu0
        %v5481 = vadd.f32 0.0, %v5480
        %v5482 = vpop.f32.mrf.mxu0
        %v5483 = vpop.f32.mrf.mxu0
        %v5484 = vadd.f32 0.0, %v5483
        %v5485 = vpop.f32.mrf.mxu0
        %5486 = vmatprep.mubr.bf16.mxu0 0
        %5487 = vmatmul.mubr.bf16.gmra.mxu0 %v5438
        %v5488 = vpop.f32.mrf.mxu0
        %v5489 = vadd.f32 0.0, %v5488
        %v5490 = vpop.f32.mrf.mxu0
        %v5491 = vpop.f32.mrf.mxu0
        %v5492 = vadd.f32 0.0, %v5491
        %v5493 = vpop.f32.mrf.mxu0
        %5494 = vdwg.mxu0
        %v5495 = vmul.f32 %v5481, 0.25
        %v5496 = vmul.f32 %v5484, 0.25
        %v5497 = vmul.f32 %v5489, 0.25
        %v5498 = vmul.f32 %v5492, 0.25
        %v5499 = vsel %vm777, %v5495, -inf
        %5500 = vmax.xlane.f32.xlu0 %v5499
        %v5501 = vpop.xlane.xlu0 %5500
        %v5502 = vsel %vm777, %v5496, -inf
        %5503 = vmax.xlane.f32.xlu0 %v5502
        %v5504 = vpop.xlane.xlu0 %5503
        %v5505 = vsel %vm777, %v5497, -inf
        %5506 = vmax.xlane.f32.xlu0 %v5505
        %v5507 = vpop.xlane.xlu0 %5506
        %v5508 = vsel %vm777, %v5498, -inf
        %5509 = vmax.xlane.f32.xlu0 %v5508
        %v5510 = vpop.xlane.xlu0 %5509
        %v5511 = vsub.f32 %v5495, %v5501
        %v5512 = vsub.f32 %v5496, %v5504
        %v5513 = vsub.f32 %v5497, %v5507
        %v5514 = vsub.f32 %v5498, %v5510
        %v5515 = vmul.f32 %v5511, 1.442695
        %v5516 = vpow.pop %v5515
        %v5517 = vmul.f32 %v5512, 1.442695
        %v5518 = vpow.pop %v5517
        %v5519 = vmul.f32 %v5513, 1.442695
        %v5520 = vpow.pop %v5519
        %v5521 = vmul.f32 %v5514, 1.442695
        %v5522 = vpow.pop %v5521
        %v5523 = vsel %vm777, %v5516, 0.0
        %5524 = vadd.xlane.f32.xlu0 %v5523
        %v5525 = vpop.xlane.xlu0 %5524
        %v5526 = vsel %vm777, %v5518, 0.0
        %5527 = vadd.xlane.f32.xlu0 %v5526
        %v5528 = vpop.xlane.xlu0 %5527
        %v5529 = vsel %vm777, %v5520, 0.0
        %5530 = vadd.xlane.f32.xlu0 %v5529
        %v5531 = vpop.xlane.xlu0 %5530
        %v5532 = vsel %vm777, %v5522, 0.0
        %5533 = vadd.xlane.f32.xlu0 %v5532
        %v5534 = vpop.xlane.xlu0 %5533
        %v5535 = vrcp.pop %v5525
        %v5536 = vrcp.pop %v5528
        %v5537 = vrcp.pop %v5531
        %v5538 = vrcp.pop %v5534
        %v5539 = vmul.f32 %v5516, %v5535
        %v5540 = vmul.f32 %v5518, %v5536
        %v5541 = vmul.f32 %v5520, %v5537
        %v5542 = vmul.f32 %v5522, %v5538
        %v5543 = vpack.c.bf16 %v5540, %v5539
        %v5544 = vpack.c.bf16 %v5542, %v5541
        %v5546 = vsel %vm777, %v5543, 0
        %v5549 = vsel %vm777, %v5544, 0
        %5551 = vmatprep.subr.bf16.mxu0 0
        %5552 = vmatpush1.bf16.msra.mxu0 0
        %5553 = vmatprep.subr.bf16.mxu0 0
        %5554 = vmatpush1.bf16.msra.mxu0 0
        %5555 = vmatprep.subr.bf16.mxu0 0
        %5556 = vmatpush1.bf16.msra.mxu0 0
        %5557 = vmatprep.subr.bf16.mxu0 0
        %5558 = vmatpush1.bf16.msra.mxu0 0
        %5559 = vmatprep.subr.bf16.mxu0 0
        %5560 = vmatpush1.bf16.msra.mxu0 0
        %5561 = vmatprep.subr.bf16.mxu0 0
        %5562 = vmatpush1.bf16.msra.mxu0 0
        %5563 = vmatprep.subr.bf16.mxu0 0
        %5564 = vmatpush1.bf16.msra.mxu0 %v710
        %5565 = vmatprep.subr.bf16.mxu0 0
        %5566 = vmatpush1.bf16.msra.mxu0 %v709
        %5567 = vmatprep.subr.bf16.mxu0 0
        %5568 = vmatpush2.bf16.msra.mxu0 0
        %5569 = vmatprep.subr.bf16.mxu0 0
        %5570 = vmatpush2.bf16.msra.mxu0 0
        %5571 = vmatprep.subr.bf16.mxu0 0
        %5572 = vmatpush2.bf16.msra.mxu0 0
        %5573 = vmatprep.subr.bf16.mxu0 0
        %5574 = vmatpush2.bf16.msra.mxu0 0
        %5575 = vmatprep.subr.bf16.mxu0 0
        %5576 = vmatpush2.bf16.msra.mxu0 0
        %5577 = vmatprep.subr.bf16.mxu0 0
        %5578 = vmatpush2.bf16.msra.mxu0 0
        %5579 = vmatprep.subr.bf16.mxu0 0
        %5580 = vmatpush2.bf16.msra.mxu0 0
        %5581 = vmatprep.subr.bf16.mxu0 0
        %5582 = vmatpush2.bf16.msra.mxu0 0
        %5583 = vmatprep.mubr.bf16.mxu0 0
        %5584 = vmatmul.mubr.bf16.gmra.mxu0 %v5546
        %v5585 = vpop.f32.mrf.mxu0
        %v5586 = vadd.f32 0.0, %v5585
        %v5587 = vpop.f32.mrf.mxu0
        %v5588 = vpop.f32.mrf.mxu0
        %v5589 = vadd.f32 0.0, %v5588
        %v5590 = vpop.f32.mrf.mxu0
        %5591 = vmatprep.mubr.bf16.mxu0 0
        %5592 = vmatmul.mubr.bf16.gmra.mxu0 %v5549
        %v5593 = vpop.f32.mrf.mxu0
        %v5594 = vadd.f32 0.0, %v5593
        %v5595 = vpop.f32.mrf.mxu0
        %v5596 = vpop.f32.mrf.mxu0
        %v5597 = vadd.f32 0.0, %v5596
        %v5598 = vpop.f32.mrf.mxu0
        %5599 = vdwg.mxu0
        %5602 = vrot.lane.b32.xlu0 %v693, 112
        %v5603 = vpop.permute.xlu0 %5602
        %5604 = vrot.lane.b32.xlu0 %v694, 112
        %v5605 = vpop.permute.xlu0 %5604
        %5608 = vrot.lane.b32.xlu0 %v701, 112
        %v5609 = vpop.permute.xlu0 %5608
        %5610 = vrot.lane.b32.xlu0 %v702, 112
        %v5611 = vpop.permute.xlu0 %5610
        %v5613 = vsel %vm711, %v5603, 0
        %v5616 = vsel %vm711, %v5605, 0
        %v5619 = vsel %vm711, %v5609, 0
        %v5622 = vsel %vm711, %v5611, 0
        %5624 = vmatprep.subr.bf16.mxu0 0
        %5625 = vmatpush1.bf16.xpose.msra.mxu0 0
        %5626 = vmatprep.subr.bf16.mxu0 0
        %5627 = vmatpush1.bf16.xpose.msra.mxu0 0
        %5628 = vmatprep.subr.bf16.mxu0 0
        %5629 = vmatpush1.bf16.xpose.msra.mxu0 0
        %5630 = vmatprep.subr.bf16.mxu0 0
        %5631 = vmatpush1.bf16.xpose.msra.mxu0 0
        %5632 = vmatprep.subr.bf16.mxu0 0
        %5633 = vmatpush1.bf16.xpose.msra.mxu0 0
        %5634 = vmatprep.subr.bf16.mxu0 0
        %5635 = vmatpush1.bf16.xpose.msra.mxu0 0
        %5636 = vmatprep.subr.bf16.mxu0 0
        %5637 = vmatpush1.bf16.xpose.msra.mxu0 %v5622
        %5638 = vmatprep.subr.bf16.mxu0 0
        %5639 = vmatpush1.bf16.xpose.msra.mxu0 %v5619
        %5640 = vmatprep.subr.bf16.mxu0 0
        %5641 = vmatpush2.bf16.xpose.msra.mxu0 0
        %5642 = vmatprep.subr.bf16.mxu0 0
        %5643 = vmatpush2.bf16.xpose.msra.mxu0 0
        %5644 = vmatprep.subr.bf16.mxu0 0
        %5645 = vmatpush2.bf16.xpose.msra.mxu0 0
        %5646 = vmatprep.subr.bf16.mxu0 0
        %5647 = vmatpush2.bf16.xpose.msra.mxu0 0
        %5648 = vmatprep.subr.bf16.mxu0 0
        %5649 = vmatpush2.bf16.xpose.msra.mxu0 0
        %5650 = vmatprep.subr.bf16.mxu0 0
        %5651 = vmatpush2.bf16.xpose.msra.mxu0 0
        %5652 = vmatprep.subr.bf16.mxu0 0
        %5653 = vmatpush2.bf16.xpose.msra.mxu0 0
        %5654 = vmatprep.subr.bf16.mxu0 0
        %5655 = vmatpush2.bf16.xpose.msra.mxu0 0
        %5656 = vmatprep.mubr.bf16.mxu0 0
        %5657 = vmatmul.mubr.bf16.gmra.mxu0 %v5613
        %v5658 = vpop.f32.mrf.mxu0
        %v5659 = vadd.f32 0.0, %v5658
        %v5660 = vpop.f32.mrf.mxu0
        %v5661 = vpop.f32.mrf.mxu0
        %v5662 = vadd.f32 0.0, %v5661
        %v5663 = vpop.f32.mrf.mxu0
        %5664 = vmatprep.mubr.bf16.mxu0 0
        %5665 = vmatmul.mubr.bf16.gmra.mxu0 %v5616
        %v5666 = vpop.f32.mrf.mxu0
        %v5667 = vadd.f32 0.0, %v5666
        %v5668 = vpop.f32.mrf.mxu0
        %v5669 = vpop.f32.mrf.mxu0
        %v5670 = vadd.f32 0.0, %v5669
        %v5671 = vpop.f32.mrf.mxu0
        %5672 = vdwg.mxu0
        %v5673 = vmul.f32 %v5659, 0.25
        %v5674 = vmul.f32 %v5662, 0.25
        %v5675 = vmul.f32 %v5667, 0.25
        %v5676 = vmul.f32 %v5670, 0.25
        %v5677 = vsel %vm777, %v5673, -inf
        %5678 = vmax.xlane.f32.xlu0 %v5677
        %v5679 = vpop.xlane.xlu0 %5678
        %v5680 = vsel %vm777, %v5674, -inf
        %5681 = vmax.xlane.f32.xlu0 %v5680
        %v5682 = vpop.xlane.xlu0 %5681
        %v5683 = vsel %vm777, %v5675, -inf
        %5684 = vmax.xlane.f32.xlu0 %v5683
        %v5685 = vpop.xlane.xlu0 %5684
        %v5686 = vsel %vm777, %v5676, -inf
        %5687 = vmax.xlane.f32.xlu0 %v5686
        %v5688 = vpop.xlane.xlu0 %5687
        %v5689 = vsub.f32 %v5673, %v5679
        %v5690 = vsub.f32 %v5674, %v5682
        %v5691 = vsub.f32 %v5675, %v5685
        %v5692 = vsub.f32 %v5676, %v5688
        %v5693 = vmul.f32 %v5689, 1.442695
        %v5694 = vpow.pop %v5693
        %v5695 = vmul.f32 %v5690, 1.442695
        %v5696 = vpow.pop %v5695
        %v5697 = vmul.f32 %v5691, 1.442695
        %v5698 = vpow.pop %v5697
        %v5699 = vmul.f32 %v5692, 1.442695
        %v5700 = vpow.pop %v5699
        %v5701 = vsel %vm777, %v5694, 0.0
        %5702 = vadd.xlane.f32.xlu0 %v5701
        %v5703 = vpop.xlane.xlu0 %5702
        %v5704 = vsel %vm777, %v5696, 0.0
        %5705 = vadd.xlane.f32.xlu0 %v5704
        %v5706 = vpop.xlane.xlu0 %5705
        %v5707 = vsel %vm777, %v5698, 0.0
        %5708 = vadd.xlane.f32.xlu0 %v5707
        %v5709 = vpop.xlane.xlu0 %5708
        %v5710 = vsel %vm777, %v5700, 0.0
        %5711 = vadd.xlane.f32.xlu0 %v5710
        %v5712 = vpop.xlane.xlu0 %5711
        %v5713 = vrcp.pop %v5703
        %v5714 = vrcp.pop %v5706
        %v5715 = vrcp.pop %v5709
        %v5716 = vrcp.pop %v5712
        %v5717 = vmul.f32 %v5694, %v5713
        %v5718 = vmul.f32 %v5696, %v5714
        %v5719 = vmul.f32 %v5698, %v5715
        %v5720 = vmul.f32 %v5700, %v5716
        %v5721 = vpack.c.bf16 %v5718, %v5717
        %v5722 = vpack.c.bf16 %v5720, %v5719
        %5725 = vrot.lane.b32.xlu0 %v709, 112
        %v5726 = vpop.permute.xlu0 %5725
        %5727 = vrot.lane.b32.xlu0 %v710, 112
        %v5728 = vpop.permute.xlu0 %5727
        %v5732 = vsel %vm777, %v5721, 0
        %v5735 = vsel %vm777, %v5722, 0
        %5737 = vmatprep.subr.bf16.mxu0 0
        %5738 = vmatpush1.bf16.msra.mxu0 0
        %5739 = vmatprep.subr.bf16.mxu0 0
        %5740 = vmatpush1.bf16.msra.mxu0 0
        %5741 = vmatprep.subr.bf16.mxu0 0
        %5742 = vmatpush1.bf16.msra.mxu0 0
        %5743 = vmatprep.subr.bf16.mxu0 0
        %5744 = vmatpush1.bf16.msra.mxu0 0
        %5745 = vmatprep.subr.bf16.mxu0 0
        %5746 = vmatpush1.bf16.msra.mxu0 0
        %5747 = vmatprep.subr.bf16.mxu0 0
        %5748 = vmatpush1.bf16.msra.mxu0 0
        %5749 = vmatprep.subr.bf16.mxu0 0
        %5750 = vmatpush1.bf16.msra.mxu0 %v5728
        %5751 = vmatprep.subr.bf16.mxu0 0
        %5752 = vmatpush1.bf16.msra.mxu0 %v5726
        %5753 = vmatprep.subr.bf16.mxu0 0
        %5754 = vmatpush2.bf16.msra.mxu0 0
        %5755 = vmatprep.subr.bf16.mxu0 0
        %5756 = vmatpush2.bf16.msra.mxu0 0
        %5757 = vmatprep.subr.bf16.mxu0 0
        %5758 = vmatpush2.bf16.msra.mxu0 0
        %5759 = vmatprep.subr.bf16.mxu0 0
        %5760 = vmatpush2.bf16.msra.mxu0 0
        %5761 = vmatprep.subr.bf16.mxu0 0
        %5762 = vmatpush2.bf16.msra.mxu0 0
        %5763 = vmatprep.subr.bf16.mxu0 0
        %5764 = vmatpush2.bf16.msra.mxu0 0
        %5765 = vmatprep.subr.bf16.mxu0 0
        %5766 = vmatpush2.bf16.msra.mxu0 0
        %5767 = vmatprep.subr.bf16.mxu0 0
        %5768 = vmatpush2.bf16.msra.mxu0 0
        %5769 = vmatprep.mubr.bf16.mxu0 0
        %5770 = vmatmul.mubr.bf16.gmra.mxu0 %v5732
        %v5771 = vpop.f32.mrf.mxu0
        %v5772 = vadd.f32 0.0, %v5771
        %v5773 = vpop.f32.mrf.mxu0
        %v5774 = vpop.f32.mrf.mxu0
        %v5775 = vadd.f32 0.0, %v5774
        %v5776 = vpop.f32.mrf.mxu0
        %5777 = vmatprep.mubr.bf16.mxu0 0
        %5778 = vmatmul.mubr.bf16.gmra.mxu0 %v5735
        %v5779 = vpop.f32.mrf.mxu0
        %v5780 = vadd.f32 0.0, %v5779
        %v5781 = vpop.f32.mrf.mxu0
        %v5782 = vpop.f32.mrf.mxu0
        %v5783 = vadd.f32 0.0, %v5782
        %v5784 = vpop.f32.mrf.mxu0
        %5785 = vdwg.mxu0
        %5786 = vrot.lane.b32.xlu0 %v693, 96
        %v5787 = vpop.permute.xlu0 %5786
        %5788 = vrot.lane.b32.xlu0 %v694, 96
        %v5789 = vpop.permute.xlu0 %5788
        %5790 = vrot.lane.b32.xlu0 %v701, 96
        %v5791 = vpop.permute.xlu0 %5790
        %5792 = vrot.lane.b32.xlu0 %v702, 96
        %v5793 = vpop.permute.xlu0 %5792
        %v5795 = vsel %vm711, %v5787, 0
        %v5798 = vsel %vm711, %v5789, 0
        %v5801 = vsel %vm711, %v5791, 0
        %v5804 = vsel %vm711, %v5793, 0
        %5806 = vmatprep.subr.bf16.mxu0 0
        %5807 = vmatpush1.bf16.xpose.msra.mxu0 0
        %5808 = vmatprep.subr.bf16.mxu0 0
        %5809 = vmatpush1.bf16.xpose.msra.mxu0 0
        %5810 = vmatprep.subr.bf16.mxu0 0
        %5811 = vmatpush1.bf16.xpose.msra.mxu0 0
        %5812 = vmatprep.subr.bf16.mxu0 0
        %5813 = vmatpush1.bf16.xpose.msra.mxu0 0
        %5814 = vmatprep.subr.bf16.mxu0 0
        %5815 = vmatpush1.bf16.xpose.msra.mxu0 0
        %5816 = vmatprep.subr.bf16.mxu0 0
        %5817 = vmatpush1.bf16.xpose.msra.mxu0 0
        %5818 = vmatprep.subr.bf16.mxu0 0
        %5819 = vmatpush1.bf16.xpose.msra.mxu0 %v5804
        %5820 = vmatprep.subr.bf16.mxu0 0
        %5821 = vmatpush1.bf16.xpose.msra.mxu0 %v5801
        %5822 = vmatprep.subr.bf16.mxu0 0
        %5823 = vmatpush2.bf16.xpose.msra.mxu0 0
        %5824 = vmatprep.subr.bf16.mxu0 0
        %5825 = vmatpush2.bf16.xpose.msra.mxu0 0
        %5826 = vmatprep.subr.bf16.mxu0 0
        %5827 = vmatpush2.bf16.xpose.msra.mxu0 0
        %5828 = vmatprep.subr.bf16.mxu0 0
        %5829 = vmatpush2.bf16.xpose.msra.mxu0 0
        %5830 = vmatprep.subr.bf16.mxu0 0
        %5831 = vmatpush2.bf16.xpose.msra.mxu0 0
        %5832 = vmatprep.subr.bf16.mxu0 0
        %5833 = vmatpush2.bf16.xpose.msra.mxu0 0
        %5834 = vmatprep.subr.bf16.mxu0 0
        %5835 = vmatpush2.bf16.xpose.msra.mxu0 0
        %5836 = vmatprep.subr.bf16.mxu0 0
        %5837 = vmatpush2.bf16.xpose.msra.mxu0 0
        %5838 = vmatprep.mubr.bf16.mxu0 0
        %5839 = vmatmul.mubr.bf16.gmra.mxu0 %v5795
        %v5840 = vpop.f32.mrf.mxu0
        %v5841 = vadd.f32 0.0, %v5840
        %v5842 = vpop.f32.mrf.mxu0
        %v5843 = vpop.f32.mrf.mxu0
        %v5844 = vadd.f32 0.0, %v5843
        %v5845 = vpop.f32.mrf.mxu0
        %5846 = vmatprep.mubr.bf16.mxu0 0
        %5847 = vmatmul.mubr.bf16.gmra.mxu0 %v5798
        %v5848 = vpop.f32.mrf.mxu0
        %v5849 = vadd.f32 0.0, %v5848
        %v5850 = vpop.f32.mrf.mxu0
        %v5851 = vpop.f32.mrf.mxu0
        %v5852 = vadd.f32 0.0, %v5851
        %v5853 = vpop.f32.mrf.mxu0
        %5854 = vdwg.mxu0
        %v5855 = vmul.f32 %v5841, 0.25
        %v5856 = vmul.f32 %v5844, 0.25
        %v5857 = vmul.f32 %v5849, 0.25
        %v5858 = vmul.f32 %v5852, 0.25
        %v5859 = vsel %vm777, %v5855, -inf
        %5860 = vmax.xlane.f32.xlu0 %v5859
        %v5861 = vpop.xlane.xlu0 %5860
        %v5862 = vsel %vm777, %v5856, -inf
        %5863 = vmax.xlane.f32.xlu0 %v5862
        %v5864 = vpop.xlane.xlu0 %5863
        %v5865 = vsel %vm777, %v5857, -inf
        %5866 = vmax.xlane.f32.xlu0 %v5865
        %v5867 = vpop.xlane.xlu0 %5866
        %v5868 = vsel %vm777, %v5858, -inf
        %5869 = vmax.xlane.f32.xlu0 %v5868
        %v5870 = vpop.xlane.xlu0 %5869
        %v5871 = vsub.f32 %v5855, %v5861
        %v5872 = vsub.f32 %v5856, %v5864
        %v5873 = vsub.f32 %v5857, %v5867
        %v5874 = vsub.f32 %v5858, %v5870
        %v5875 = vmul.f32 %v5871, 1.442695
        %v5876 = vpow.pop %v5875
        %v5877 = vmul.f32 %v5872, 1.442695
        %v5878 = vpow.pop %v5877
        %v5879 = vmul.f32 %v5873, 1.442695
        %v5880 = vpow.pop %v5879
        %v5881 = vmul.f32 %v5874, 1.442695
        %v5882 = vpow.pop %v5881
        %v5883 = vsel %vm777, %v5876, 0.0
        %5884 = vadd.xlane.f32.xlu0 %v5883
        %v5885 = vpop.xlane.xlu0 %5884
        %v5886 = vsel %vm777, %v5878, 0.0
        %5887 = vadd.xlane.f32.xlu0 %v5886
        %v5888 = vpop.xlane.xlu0 %5887
        %v5889 = vsel %vm777, %v5880, 0.0
        %5890 = vadd.xlane.f32.xlu0 %v5889
        %v5891 = vpop.xlane.xlu0 %5890
        %v5892 = vsel %vm777, %v5882, 0.0
        %5893 = vadd.xlane.f32.xlu0 %v5892
        %v5894 = vpop.xlane.xlu0 %5893
        %v5895 = vrcp.pop %v5885
        %v5896 = vrcp.pop %v5888
        %v5897 = vrcp.pop %v5891
        %v5898 = vrcp.pop %v5894
        %v5899 = vmul.f32 %v5876, %v5895
        %v5900 = vmul.f32 %v5878, %v5896
        %v5901 = vmul.f32 %v5880, %v5897
        %v5902 = vmul.f32 %v5882, %v5898
        %v5903 = vpack.c.bf16 %v5900, %v5899
        %v5904 = vpack.c.bf16 %v5902, %v5901
        %5905 = vrot.lane.b32.xlu0 %v709, 96
        %v5906 = vpop.permute.xlu0 %5905
        %5907 = vrot.lane.b32.xlu0 %v710, 96
        %v5908 = vpop.permute.xlu0 %5907
        %v5912 = vsel %vm777, %v5903, 0
        %v5915 = vsel %vm777, %v5904, 0
        %5917 = vmatprep.subr.bf16.mxu0 0
        %5918 = vmatpush1.bf16.msra.mxu0 0
        %5919 = vmatprep.subr.bf16.mxu0 0
        %5920 = vmatpush1.bf16.msra.mxu0 0
        %5921 = vmatprep.subr.bf16.mxu0 0
        %5922 = vmatpush1.bf16.msra.mxu0 0
        %5923 = vmatprep.subr.bf16.mxu0 0
        %5924 = vmatpush1.bf16.msra.mxu0 0
        %5925 = vmatprep.subr.bf16.mxu0 0
        %5926 = vmatpush1.bf16.msra.mxu0 0
        %5927 = vmatprep.subr.bf16.mxu0 0
        %5928 = vmatpush1.bf16.msra.mxu0 0
        %5929 = vmatprep.subr.bf16.mxu0 0
        %5930 = vmatpush1.bf16.msra.mxu0 %v5908
        %5931 = vmatprep.subr.bf16.mxu0 0
        %5932 = vmatpush1.bf16.msra.mxu0 %v5906
        %5933 = vmatprep.subr.bf16.mxu0 0
        %5934 = vmatpush2.bf16.msra.mxu0 0
        %5935 = vmatprep.subr.bf16.mxu0 0
        %5936 = vmatpush2.bf16.msra.mxu0 0
        %5937 = vmatprep.subr.bf16.mxu0 0
        %5938 = vmatpush2.bf16.msra.mxu0 0
        %5939 = vmatprep.subr.bf16.mxu0 0
        %5940 = vmatpush2.bf16.msra.mxu0 0
        %5941 = vmatprep.subr.bf16.mxu0 0
        %5942 = vmatpush2.bf16.msra.mxu0 0
        %5943 = vmatprep.subr.bf16.mxu0 0
        %5944 = vmatpush2.bf16.msra.mxu0 0
        %5945 = vmatprep.subr.bf16.mxu0 0
        %5946 = vmatpush2.bf16.msra.mxu0 0
        %5947 = vmatprep.subr.bf16.mxu0 0
        %5948 = vmatpush2.bf16.msra.mxu0 0
        %5949 = vmatprep.mubr.bf16.mxu0 0
        %5950 = vmatmul.mubr.bf16.gmra.mxu0 %v5912
        %v5951 = vpop.f32.mrf.mxu0
        %v5952 = vadd.f32 0.0, %v5951
        %v5953 = vpop.f32.mrf.mxu0
        %v5954 = vpop.f32.mrf.mxu0
        %v5955 = vadd.f32 0.0, %v5954
        %v5956 = vpop.f32.mrf.mxu0
        %5957 = vmatprep.mubr.bf16.mxu0 0
        %5958 = vmatmul.mubr.bf16.gmra.mxu0 %v5915
        %v5959 = vpop.f32.mrf.mxu0
        %v5960 = vadd.f32 0.0, %v5959
        %v5961 = vpop.f32.mrf.mxu0
        %v5962 = vpop.f32.mrf.mxu0
        %v5963 = vadd.f32 0.0, %v5962
        %v5964 = vpop.f32.mrf.mxu0
        %5965 = vdwg.mxu0
        %5966 = vrot.lane.b32.xlu0 %v693, 80
        %v5967 = vpop.permute.xlu0 %5966
        %5968 = vrot.lane.b32.xlu0 %v694, 80
        %v5969 = vpop.permute.xlu0 %5968
        %5970 = vrot.lane.b32.xlu0 %v701, 80
        %v5971 = vpop.permute.xlu0 %5970
        %5972 = vrot.lane.b32.xlu0 %v702, 80
        %v5973 = vpop.permute.xlu0 %5972
        %v5975 = vsel %vm711, %v5967, 0
        %v5978 = vsel %vm711, %v5969, 0
        %v5981 = vsel %vm711, %v5971, 0
        %v5984 = vsel %vm711, %v5973, 0
        %5986 = vmatprep.subr.bf16.mxu0 0
        %5987 = vmatpush1.bf16.xpose.msra.mxu0 0
        %5988 = vmatprep.subr.bf16.mxu0 0
        %5989 = vmatpush1.bf16.xpose.msra.mxu0 0
        %5990 = vmatprep.subr.bf16.mxu0 0
        %5991 = vmatpush1.bf16.xpose.msra.mxu0 0
        %5992 = vmatprep.subr.bf16.mxu0 0
        %5993 = vmatpush1.bf16.xpose.msra.mxu0 0
        %5994 = vmatprep.subr.bf16.mxu0 0
        %5995 = vmatpush1.bf16.xpose.msra.mxu0 0
        %5996 = vmatprep.subr.bf16.mxu0 0
        %5997 = vmatpush1.bf16.xpose.msra.mxu0 0
        %5998 = vmatprep.subr.bf16.mxu0 0
        %5999 = vmatpush1.bf16.xpose.msra.mxu0 %v5984
        %6000 = vmatprep.subr.bf16.mxu0 0
        %6001 = vmatpush1.bf16.xpose.msra.mxu0 %v5981
        %6002 = vmatprep.subr.bf16.mxu0 0
        %6003 = vmatpush2.bf16.xpose.msra.mxu0 0
        %6004 = vmatprep.subr.bf16.mxu0 0
        %6005 = vmatpush2.bf16.xpose.msra.mxu0 0
        %6006 = vmatprep.subr.bf16.mxu0 0
        %6007 = vmatpush2.bf16.xpose.msra.mxu0 0
        %6008 = vmatprep.subr.bf16.mxu0 0
        %6009 = vmatpush2.bf16.xpose.msra.mxu0 0
        %6010 = vmatprep.subr.bf16.mxu0 0
        %6011 = vmatpush2.bf16.xpose.msra.mxu0 0
        %6012 = vmatprep.subr.bf16.mxu0 0
        %6013 = vmatpush2.bf16.xpose.msra.mxu0 0
        %6014 = vmatprep.subr.bf16.mxu0 0
        %6015 = vmatpush2.bf16.xpose.msra.mxu0 0
        %6016 = vmatprep.subr.bf16.mxu0 0
        %6017 = vmatpush2.bf16.xpose.msra.mxu0 0
        %6018 = vmatprep.mubr.bf16.mxu0 0
        %6019 = vmatmul.mubr.bf16.gmra.mxu0 %v5975
        %v6020 = vpop.f32.mrf.mxu0
        %v6021 = vadd.f32 0.0, %v6020
        %v6022 = vpop.f32.mrf.mxu0
        %v6023 = vpop.f32.mrf.mxu0
        %v6024 = vadd.f32 0.0, %v6023
        %v6025 = vpop.f32.mrf.mxu0
        %6026 = vmatprep.mubr.bf16.mxu0 0
        %6027 = vmatmul.mubr.bf16.gmra.mxu0 %v5978
        %v6028 = vpop.f32.mrf.mxu0
        %v6029 = vadd.f32 0.0, %v6028
        %v6030 = vpop.f32.mrf.mxu0
        %v6031 = vpop.f32.mrf.mxu0
        %v6032 = vadd.f32 0.0, %v6031
        %v6033 = vpop.f32.mrf.mxu0
        %6034 = vdwg.mxu0
        %v6035 = vmul.f32 %v6021, 0.25
        %v6036 = vmul.f32 %v6024, 0.25
        %v6037 = vmul.f32 %v6029, 0.25
        %v6038 = vmul.f32 %v6032, 0.25
        %v6039 = vsel %vm777, %v6035, -inf
        %6040 = vmax.xlane.f32.xlu0 %v6039
        %v6041 = vpop.xlane.xlu0 %6040
        %v6042 = vsel %vm777, %v6036, -inf
        %6043 = vmax.xlane.f32.xlu0 %v6042
        %v6044 = vpop.xlane.xlu0 %6043
        %v6045 = vsel %vm777, %v6037, -inf
        %6046 = vmax.xlane.f32.xlu0 %v6045
        %v6047 = vpop.xlane.xlu0 %6046
        %v6048 = vsel %vm777, %v6038, -inf
        %6049 = vmax.xlane.f32.xlu0 %v6048
        %v6050 = vpop.xlane.xlu0 %6049
        %v6051 = vsub.f32 %v6035, %v6041
        %v6052 = vsub.f32 %v6036, %v6044
        %v6053 = vsub.f32 %v6037, %v6047
        %v6054 = vsub.f32 %v6038, %v6050
        %v6055 = vmul.f32 %v6051, 1.442695
        %v6056 = vpow.pop %v6055
        %v6057 = vmul.f32 %v6052, 1.442695
        %v6058 = vpow.pop %v6057
        %v6059 = vmul.f32 %v6053, 1.442695
        %v6060 = vpow.pop %v6059
        %v6061 = vmul.f32 %v6054, 1.442695
        %v6062 = vpow.pop %v6061
        %v6063 = vsel %vm777, %v6056, 0.0
        %6064 = vadd.xlane.f32.xlu0 %v6063
        %v6065 = vpop.xlane.xlu0 %6064
        %v6066 = vsel %vm777, %v6058, 0.0
        %6067 = vadd.xlane.f32.xlu0 %v6066
        %v6068 = vpop.xlane.xlu0 %6067
        %v6069 = vsel %vm777, %v6060, 0.0
        %6070 = vadd.xlane.f32.xlu0 %v6069
        %v6071 = vpop.xlane.xlu0 %6070
        %v6072 = vsel %vm777, %v6062, 0.0
        %6073 = vadd.xlane.f32.xlu0 %v6072
        %v6074 = vpop.xlane.xlu0 %6073
        %v6075 = vrcp.pop %v6065
        %v6076 = vrcp.pop %v6068
        %v6077 = vrcp.pop %v6071
        %v6078 = vrcp.pop %v6074
        %v6079 = vmul.f32 %v6056, %v6075
        %v6080 = vmul.f32 %v6058, %v6076
        %v6081 = vmul.f32 %v6060, %v6077
        %v6082 = vmul.f32 %v6062, %v6078
        %v6083 = vpack.c.bf16 %v6080, %v6079
        %v6084 = vpack.c.bf16 %v6082, %v6081
        %6085 = vrot.lane.b32.xlu0 %v709, 80
        %v6086 = vpop.permute.xlu0 %6085
        %6087 = vrot.lane.b32.xlu0 %v710, 80
        %v6088 = vpop.permute.xlu0 %6087
        %v6092 = vsel %vm777, %v6083, 0
        %v6095 = vsel %vm777, %v6084, 0
        %6097 = vmatprep.subr.bf16.mxu0 0
        %6098 = vmatpush1.bf16.msra.mxu0 0
        %6099 = vmatprep.subr.bf16.mxu0 0
        %6100 = vmatpush1.bf16.msra.mxu0 0
        %6101 = vmatprep.subr.bf16.mxu0 0
        %6102 = vmatpush1.bf16.msra.mxu0 0
        %6103 = vmatprep.subr.bf16.mxu0 0
        %6104 = vmatpush1.bf16.msra.mxu0 0
        %6105 = vmatprep.subr.bf16.mxu0 0
        %6106 = vmatpush1.bf16.msra.mxu0 0
        %6107 = vmatprep.subr.bf16.mxu0 0
        %6108 = vmatpush1.bf16.msra.mxu0 0
        %6109 = vmatprep.subr.bf16.mxu0 0
        %6110 = vmatpush1.bf16.msra.mxu0 %v6088
        %6111 = vmatprep.subr.bf16.mxu0 0
        %6112 = vmatpush1.bf16.msra.mxu0 %v6086
        %6113 = vmatprep.subr.bf16.mxu0 0
        %6114 = vmatpush2.bf16.msra.mxu0 0
        %6115 = vmatprep.subr.bf16.mxu0 0
        %6116 = vmatpush2.bf16.msra.mxu0 0
        %6117 = vmatprep.subr.bf16.mxu0 0
        %6118 = vmatpush2.bf16.msra.mxu0 0
        %6119 = vmatprep.subr.bf16.mxu0 0
        %6120 = vmatpush2.bf16.msra.mxu0 0
        %6121 = vmatprep.subr.bf16.mxu0 0
        %6122 = vmatpush2.bf16.msra.mxu0 0
        %6123 = vmatprep.subr.bf16.mxu0 0
        %6124 = vmatpush2.bf16.msra.mxu0 0
        %6125 = vmatprep.subr.bf16.mxu0 0
        %6126 = vmatpush2.bf16.msra.mxu0 0
        %6127 = vmatprep.subr.bf16.mxu0 0
        %6128 = vmatpush2.bf16.msra.mxu0 0
        %6129 = vmatprep.mubr.bf16.mxu0 0
        %6130 = vmatmul.mubr.bf16.gmra.mxu0 %v6092
        %v6131 = vpop.f32.mrf.mxu0
        %v6132 = vadd.f32 0.0, %v6131
        %v6133 = vpop.f32.mrf.mxu0
        %v6134 = vpop.f32.mrf.mxu0
        %v6135 = vadd.f32 0.0, %v6134
        %v6136 = vpop.f32.mrf.mxu0
        %6137 = vmatprep.mubr.bf16.mxu0 0
        %6138 = vmatmul.mubr.bf16.gmra.mxu0 %v6095
        %v6139 = vpop.f32.mrf.mxu0
        %v6140 = vadd.f32 0.0, %v6139
        %v6141 = vpop.f32.mrf.mxu0
        %v6142 = vpop.f32.mrf.mxu0
        %v6143 = vadd.f32 0.0, %v6142
        %v6144 = vpop.f32.mrf.mxu0
        %6145 = vdwg.mxu0
        %6146 = vrot.lane.b32.xlu0 %v693, 64
        %v6147 = vpop.permute.xlu0 %6146
        %6148 = vrot.lane.b32.xlu0 %v694, 64
        %v6149 = vpop.permute.xlu0 %6148
        %6150 = vrot.lane.b32.xlu0 %v701, 64
        %v6151 = vpop.permute.xlu0 %6150
        %6152 = vrot.lane.b32.xlu0 %v702, 64
        %v6153 = vpop.permute.xlu0 %6152
        %v6155 = vsel %vm711, %v6147, 0
        %v6158 = vsel %vm711, %v6149, 0
        %v6161 = vsel %vm711, %v6151, 0
        %v6164 = vsel %vm711, %v6153, 0
        %6166 = vmatprep.subr.bf16.mxu0 0
        %6167 = vmatpush1.bf16.xpose.msra.mxu0 0
        %6168 = vmatprep.subr.bf16.mxu0 0
        %6169 = vmatpush1.bf16.xpose.msra.mxu0 0
        %6170 = vmatprep.subr.bf16.mxu0 0
        %6171 = vmatpush1.bf16.xpose.msra.mxu0 0
        %6172 = vmatprep.subr.bf16.mxu0 0
        %6173 = vmatpush1.bf16.xpose.msra.mxu0 0
        %6174 = vmatprep.subr.bf16.mxu0 0
        %6175 = vmatpush1.bf16.xpose.msra.mxu0 0
        %6176 = vmatprep.subr.bf16.mxu0 0
        %6177 = vmatpush1.bf16.xpose.msra.mxu0 0
        %6178 = vmatprep.subr.bf16.mxu0 0
        %6179 = vmatpush1.bf16.xpose.msra.mxu0 %v6164
        %6180 = vmatprep.subr.bf16.mxu0 0
        %6181 = vmatpush1.bf16.xpose.msra.mxu0 %v6161
        %6182 = vmatprep.subr.bf16.mxu0 0
        %6183 = vmatpush2.bf16.xpose.msra.mxu0 0
        %6184 = vmatprep.subr.bf16.mxu0 0
        %6185 = vmatpush2.bf16.xpose.msra.mxu0 0
        %6186 = vmatprep.subr.bf16.mxu0 0
        %6187 = vmatpush2.bf16.xpose.msra.mxu0 0
        %6188 = vmatprep.subr.bf16.mxu0 0
        %6189 = vmatpush2.bf16.xpose.msra.mxu0 0
        %6190 = vmatprep.subr.bf16.mxu0 0
        %6191 = vmatpush2.bf16.xpose.msra.mxu0 0
        %6192 = vmatprep.subr.bf16.mxu0 0
        %6193 = vmatpush2.bf16.xpose.msra.mxu0 0
        %6194 = vmatprep.subr.bf16.mxu0 0
        %6195 = vmatpush2.bf16.xpose.msra.mxu0 0
        %6196 = vmatprep.subr.bf16.mxu0 0
        %6197 = vmatpush2.bf16.xpose.msra.mxu0 0
        %6198 = vmatprep.mubr.bf16.mxu0 0
        %6199 = vmatmul.mubr.bf16.gmra.mxu0 %v6155
        %v6200 = vpop.f32.mrf.mxu0
        %v6201 = vadd.f32 0.0, %v6200
        %v6202 = vpop.f32.mrf.mxu0
        %v6203 = vpop.f32.mrf.mxu0
        %v6204 = vadd.f32 0.0, %v6203
        %v6205 = vpop.f32.mrf.mxu0
        %6206 = vmatprep.mubr.bf16.mxu0 0
        %6207 = vmatmul.mubr.bf16.gmra.mxu0 %v6158
        %v6208 = vpop.f32.mrf.mxu0
        %v6209 = vadd.f32 0.0, %v6208
        %v6210 = vpop.f32.mrf.mxu0
        %v6211 = vpop.f32.mrf.mxu0
        %v6212 = vadd.f32 0.0, %v6211
        %v6213 = vpop.f32.mrf.mxu0
        %6214 = vdwg.mxu0
        %v6215 = vmul.f32 %v6201, 0.25
        %v6216 = vmul.f32 %v6204, 0.25
        %v6217 = vmul.f32 %v6209, 0.25
        %v6218 = vmul.f32 %v6212, 0.25
        %v6219 = vsel %vm777, %v6215, -inf
        %6220 = vmax.xlane.f32.xlu0 %v6219
        %v6221 = vpop.xlane.xlu0 %6220
        %v6222 = vsel %vm777, %v6216, -inf
        %6223 = vmax.xlane.f32.xlu0 %v6222
        %v6224 = vpop.xlane.xlu0 %6223
        %v6225 = vsel %vm777, %v6217, -inf
        %6226 = vmax.xlane.f32.xlu0 %v6225
        %v6227 = vpop.xlane.xlu0 %6226
        %v6228 = vsel %vm777, %v6218, -inf
        %6229 = vmax.xlane.f32.xlu0 %v6228
        %v6230 = vpop.xlane.xlu0 %6229
        %v6231 = vsub.f32 %v6215, %v6221
        %v6232 = vsub.f32 %v6216, %v6224
        %v6233 = vsub.f32 %v6217, %v6227
        %v6234 = vsub.f32 %v6218, %v6230
        %v6235 = vmul.f32 %v6231, 1.442695
        %v6236 = vpow.pop %v6235
        %v6237 = vmul.f32 %v6232, 1.442695
        %v6238 = vpow.pop %v6237
        %v6239 = vmul.f32 %v6233, 1.442695
        %v6240 = vpow.pop %v6239
        %v6241 = vmul.f32 %v6234, 1.442695
        %v6242 = vpow.pop %v6241
        %v6243 = vsel %vm777, %v6236, 0.0
        %6244 = vadd.xlane.f32.xlu0 %v6243
        %v6245 = vpop.xlane.xlu0 %6244
        %v6246 = vsel %vm777, %v6238, 0.0
        %6247 = vadd.xlane.f32.xlu0 %v6246
        %v6248 = vpop.xlane.xlu0 %6247
        %v6249 = vsel %vm777, %v6240, 0.0
        %6250 = vadd.xlane.f32.xlu0 %v6249
        %v6251 = vpop.xlane.xlu0 %6250
        %v6252 = vsel %vm777, %v6242, 0.0
        %6253 = vadd.xlane.f32.xlu0 %v6252
        %v6254 = vpop.xlane.xlu0 %6253
        %v6255 = vrcp.pop %v6245
        %v6256 = vrcp.pop %v6248
        %v6257 = vrcp.pop %v6251
        %v6258 = vrcp.pop %v6254
        %v6259 = vmul.f32 %v6236, %v6255
        %v6260 = vmul.f32 %v6238, %v6256
        %v6261 = vmul.f32 %v6240, %v6257
        %v6262 = vmul.f32 %v6242, %v6258
        %v6263 = vpack.c.bf16 %v6260, %v6259
        %v6264 = vpack.c.bf16 %v6262, %v6261
        %6265 = vrot.lane.b32.xlu0 %v709, 64
        %v6266 = vpop.permute.xlu0 %6265
        %6267 = vrot.lane.b32.xlu0 %v710, 64
        %v6268 = vpop.permute.xlu0 %6267
        %v6272 = vsel %vm777, %v6263, 0
        %v6275 = vsel %vm777, %v6264, 0
        %6277 = vmatprep.subr.bf16.mxu0 0
        %6278 = vmatpush1.bf16.msra.mxu0 0
        %6279 = vmatprep.subr.bf16.mxu0 0
        %6280 = vmatpush1.bf16.msra.mxu0 0
        %6281 = vmatprep.subr.bf16.mxu0 0
        %6282 = vmatpush1.bf16.msra.mxu0 0
        %6283 = vmatprep.subr.bf16.mxu0 0
        %6284 = vmatpush1.bf16.msra.mxu0 0
        %6285 = vmatprep.subr.bf16.mxu0 0
        %6286 = vmatpush1.bf16.msra.mxu0 0
        %6287 = vmatprep.subr.bf16.mxu0 0
        %6288 = vmatpush1.bf16.msra.mxu0 0
        %6289 = vmatprep.subr.bf16.mxu0 0
        %6290 = vmatpush1.bf16.msra.mxu0 %v6268
        %6291 = vmatprep.subr.bf16.mxu0 0
        %6292 = vmatpush1.bf16.msra.mxu0 %v6266
        %6293 = vmatprep.subr.bf16.mxu0 0
        %6294 = vmatpush2.bf16.msra.mxu0 0
        %6295 = vmatprep.subr.bf16.mxu0 0
        %6296 = vmatpush2.bf16.msra.mxu0 0
        %6297 = vmatprep.subr.bf16.mxu0 0
        %6298 = vmatpush2.bf16.msra.mxu0 0
        %6299 = vmatprep.subr.bf16.mxu0 0
        %6300 = vmatpush2.bf16.msra.mxu0 0
        %6301 = vmatprep.subr.bf16.mxu0 0
        %6302 = vmatpush2.bf16.msra.mxu0 0
        %6303 = vmatprep.subr.bf16.mxu0 0
        %6304 = vmatpush2.bf16.msra.mxu0 0
        %6305 = vmatprep.subr.bf16.mxu0 0
        %6306 = vmatpush2.bf16.msra.mxu0 0
        %6307 = vmatprep.subr.bf16.mxu0 0
        %6308 = vmatpush2.bf16.msra.mxu0 0
        %6309 = vmatprep.mubr.bf16.mxu0 0
        %6310 = vmatmul.mubr.bf16.gmra.mxu0 %v6272
        %v6311 = vpop.f32.mrf.mxu0
        %v6312 = vadd.f32 0.0, %v6311
        %v6313 = vpop.f32.mrf.mxu0
        %v6314 = vpop.f32.mrf.mxu0
        %v6315 = vadd.f32 0.0, %v6314
        %v6316 = vpop.f32.mrf.mxu0
        %6317 = vmatprep.mubr.bf16.mxu0 0
        %6318 = vmatmul.mubr.bf16.gmra.mxu0 %v6275
        %v6319 = vpop.f32.mrf.mxu0
        %v6320 = vadd.f32 0.0, %v6319
        %v6321 = vpop.f32.mrf.mxu0
        %v6322 = vpop.f32.mrf.mxu0
        %v6323 = vadd.f32 0.0, %v6322
        %v6324 = vpop.f32.mrf.mxu0
        %6325 = vdwg.mxu0
        %6326 = vrot.lane.b32.xlu0 %v693, 48
        %v6327 = vpop.permute.xlu0 %6326
        %6328 = vrot.lane.b32.xlu0 %v694, 48
        %v6329 = vpop.permute.xlu0 %6328
        %6330 = vrot.lane.b32.xlu0 %v701, 48
        %v6331 = vpop.permute.xlu0 %6330
        %6332 = vrot.lane.b32.xlu0 %v702, 48
        %v6333 = vpop.permute.xlu0 %6332
        %v6335 = vsel %vm711, %v6327, 0
        %v6338 = vsel %vm711, %v6329, 0
        %v6341 = vsel %vm711, %v6331, 0
        %v6344 = vsel %vm711, %v6333, 0
        %6346 = vmatprep.subr.bf16.mxu0 0
        %6347 = vmatpush1.bf16.xpose.msra.mxu0 0
        %6348 = vmatprep.subr.bf16.mxu0 0
        %6349 = vmatpush1.bf16.xpose.msra.mxu0 0
        %6350 = vmatprep.subr.bf16.mxu0 0
        %6351 = vmatpush1.bf16.xpose.msra.mxu0 0
        %6352 = vmatprep.subr.bf16.mxu0 0
        %6353 = vmatpush1.bf16.xpose.msra.mxu0 0
        %6354 = vmatprep.subr.bf16.mxu0 0
        %6355 = vmatpush1.bf16.xpose.msra.mxu0 0
        %6356 = vmatprep.subr.bf16.mxu0 0
        %6357 = vmatpush1.bf16.xpose.msra.mxu0 0
        %6358 = vmatprep.subr.bf16.mxu0 0
        %6359 = vmatpush1.bf16.xpose.msra.mxu0 %v6344
        %6360 = vmatprep.subr.bf16.mxu0 0
        %6361 = vmatpush1.bf16.xpose.msra.mxu0 %v6341
        %6362 = vmatprep.subr.bf16.mxu0 0
        %6363 = vmatpush2.bf16.xpose.msra.mxu0 0
        %6364 = vmatprep.subr.bf16.mxu0 0
        %6365 = vmatpush2.bf16.xpose.msra.mxu0 0
        %6366 = vmatprep.subr.bf16.mxu0 0
        %6367 = vmatpush2.bf16.xpose.msra.mxu0 0
        %6368 = vmatprep.subr.bf16.mxu0 0
        %6369 = vmatpush2.bf16.xpose.msra.mxu0 0
        %6370 = vmatprep.subr.bf16.mxu0 0
        %6371 = vmatpush2.bf16.xpose.msra.mxu0 0
        %6372 = vmatprep.subr.bf16.mxu0 0
        %6373 = vmatpush2.bf16.xpose.msra.mxu0 0
        %6374 = vmatprep.subr.bf16.mxu0 0
        %6375 = vmatpush2.bf16.xpose.msra.mxu0 0
        %6376 = vmatprep.subr.bf16.mxu0 0
        %6377 = vmatpush2.bf16.xpose.msra.mxu0 0
        %6378 = vmatprep.mubr.bf16.mxu0 0
        %6379 = vmatmul.mubr.bf16.gmra.mxu0 %v6335
        %v6380 = vpop.f32.mrf.mxu0
        %v6381 = vadd.f32 0.0, %v6380
        %v6382 = vpop.f32.mrf.mxu0
        %v6383 = vpop.f32.mrf.mxu0
        %v6384 = vadd.f32 0.0, %v6383
        %v6385 = vpop.f32.mrf.mxu0
        %6386 = vmatprep.mubr.bf16.mxu0 0
        %6387 = vmatmul.mubr.bf16.gmra.mxu0 %v6338
        %v6388 = vpop.f32.mrf.mxu0
        %v6389 = vadd.f32 0.0, %v6388
        %v6390 = vpop.f32.mrf.mxu0
        %v6391 = vpop.f32.mrf.mxu0
        %v6392 = vadd.f32 0.0, %v6391
        %v6393 = vpop.f32.mrf.mxu0
        %6394 = vdwg.mxu0
        %v6395 = vmul.f32 %v6381, 0.25
        %v6396 = vmul.f32 %v6384, 0.25
        %v6397 = vmul.f32 %v6389, 0.25
        %v6398 = vmul.f32 %v6392, 0.25
        %v6399 = vsel %vm777, %v6395, -inf
        %6400 = vmax.xlane.f32.xlu0 %v6399
        %v6401 = vpop.xlane.xlu0 %6400
        %v6402 = vsel %vm777, %v6396, -inf
        %6403 = vmax.xlane.f32.xlu0 %v6402
        %v6404 = vpop.xlane.xlu0 %6403
        %v6405 = vsel %vm777, %v6397, -inf
        %6406 = vmax.xlane.f32.xlu0 %v6405
        %v6407 = vpop.xlane.xlu0 %6406
        %v6408 = vsel %vm777, %v6398, -inf
        %6409 = vmax.xlane.f32.xlu0 %v6408
        %v6410 = vpop.xlane.xlu0 %6409
        %v6411 = vsub.f32 %v6395, %v6401
        %v6412 = vsub.f32 %v6396, %v6404
        %v6413 = vsub.f32 %v6397, %v6407
        %v6414 = vsub.f32 %v6398, %v6410
        %v6415 = vmul.f32 %v6411, 1.442695
        %v6416 = vpow.pop %v6415
        %v6417 = vmul.f32 %v6412, 1.442695
        %v6418 = vpow.pop %v6417
        %v6419 = vmul.f32 %v6413, 1.442695
        %v6420 = vpow.pop %v6419
        %v6421 = vmul.f32 %v6414, 1.442695
        %v6422 = vpow.pop %v6421
        %v6423 = vsel %vm777, %v6416, 0.0
        %6424 = vadd.xlane.f32.xlu0 %v6423
        %v6425 = vpop.xlane.xlu0 %6424
        %v6426 = vsel %vm777, %v6418, 0.0
        %6427 = vadd.xlane.f32.xlu0 %v6426
        %v6428 = vpop.xlane.xlu0 %6427
        %v6429 = vsel %vm777, %v6420, 0.0
        %6430 = vadd.xlane.f32.xlu0 %v6429
        %v6431 = vpop.xlane.xlu0 %6430
        %v6432 = vsel %vm777, %v6422, 0.0
        %6433 = vadd.xlane.f32.xlu0 %v6432
        %v6434 = vpop.xlane.xlu0 %6433
        %v6435 = vrcp.pop %v6425
        %v6436 = vrcp.pop %v6428
        %v6437 = vrcp.pop %v6431
        %v6438 = vrcp.pop %v6434
        %v6439 = vmul.f32 %v6416, %v6435
        %v6440 = vmul.f32 %v6418, %v6436
        %v6441 = vmul.f32 %v6420, %v6437
        %v6442 = vmul.f32 %v6422, %v6438
        %v6443 = vpack.c.bf16 %v6440, %v6439
        %v6444 = vpack.c.bf16 %v6442, %v6441
        %6445 = vrot.lane.b32.xlu0 %v709, 48
        %v6446 = vpop.permute.xlu0 %6445
        %6447 = vrot.lane.b32.xlu0 %v710, 48
        %v6448 = vpop.permute.xlu0 %6447
        %v6452 = vsel %vm777, %v6443, 0
        %v6455 = vsel %vm777, %v6444, 0
        %6457 = vmatprep.subr.bf16.mxu0 0
        %6458 = vmatpush1.bf16.msra.mxu0 0
        %6459 = vmatprep.subr.bf16.mxu0 0
        %6460 = vmatpush1.bf16.msra.mxu0 0
        %6461 = vmatprep.subr.bf16.mxu0 0
        %6462 = vmatpush1.bf16.msra.mxu0 0
        %6463 = vmatprep.subr.bf16.mxu0 0
        %6464 = vmatpush1.bf16.msra.mxu0 0
        %6465 = vmatprep.subr.bf16.mxu0 0
        %6466 = vmatpush1.bf16.msra.mxu0 0
        %6467 = vmatprep.subr.bf16.mxu0 0
        %6468 = vmatpush1.bf16.msra.mxu0 0
        %6469 = vmatprep.subr.bf16.mxu0 0
        %6470 = vmatpush1.bf16.msra.mxu0 %v6448
        %6471 = vmatprep.subr.bf16.mxu0 0
        %6472 = vmatpush1.bf16.msra.mxu0 %v6446
        %6473 = vmatprep.subr.bf16.mxu0 0
        %6474 = vmatpush2.bf16.msra.mxu0 0
        %6475 = vmatprep.subr.bf16.mxu0 0
        %6476 = vmatpush2.bf16.msra.mxu0 0
        %6477 = vmatprep.subr.bf16.mxu0 0
        %6478 = vmatpush2.bf16.msra.mxu0 0
        %6479 = vmatprep.subr.bf16.mxu0 0
        %6480 = vmatpush2.bf16.msra.mxu0 0
        %6481 = vmatprep.subr.bf16.mxu0 0
        %6482 = vmatpush2.bf16.msra.mxu0 0
        %6483 = vmatprep.subr.bf16.mxu0 0
        %6484 = vmatpush2.bf16.msra.mxu0 0
        %6485 = vmatprep.subr.bf16.mxu0 0
        %6486 = vmatpush2.bf16.msra.mxu0 0
        %6487 = vmatprep.subr.bf16.mxu0 0
        %6488 = vmatpush2.bf16.msra.mxu0 0
        %6489 = vmatprep.mubr.bf16.mxu0 0
        %6490 = vmatmul.mubr.bf16.gmra.mxu0 %v6452
        %v6491 = vpop.f32.mrf.mxu0
        %v6492 = vadd.f32 0.0, %v6491
        %v6493 = vpop.f32.mrf.mxu0
        %v6494 = vpop.f32.mrf.mxu0
        %v6495 = vadd.f32 0.0, %v6494
        %v6496 = vpop.f32.mrf.mxu0
        %6497 = vmatprep.mubr.bf16.mxu0 0
        %6498 = vmatmul.mubr.bf16.gmra.mxu0 %v6455
        %v6499 = vpop.f32.mrf.mxu0
        %v6500 = vadd.f32 0.0, %v6499
        %v6501 = vpop.f32.mrf.mxu0
        %v6502 = vpop.f32.mrf.mxu0
        %v6503 = vadd.f32 0.0, %v6502
        %v6504 = vpop.f32.mrf.mxu0
        %6505 = vdwg.mxu0
        %6506 = vrot.lane.b32.xlu0 %v693, 32
        %v6507 = vpop.permute.xlu0 %6506
        %6508 = vrot.lane.b32.xlu0 %v694, 32
        %v6509 = vpop.permute.xlu0 %6508
        %6510 = vrot.lane.b32.xlu0 %v701, 32
        %v6511 = vpop.permute.xlu0 %6510
        %6512 = vrot.lane.b32.xlu0 %v702, 32
        %v6513 = vpop.permute.xlu0 %6512
        %v6515 = vsel %vm711, %v6507, 0
        %v6518 = vsel %vm711, %v6509, 0
        %v6521 = vsel %vm711, %v6511, 0
        %v6524 = vsel %vm711, %v6513, 0
        %6526 = vmatprep.subr.bf16.mxu0 0
        %6527 = vmatpush1.bf16.xpose.msra.mxu0 0
        %6528 = vmatprep.subr.bf16.mxu0 0
        %6529 = vmatpush1.bf16.xpose.msra.mxu0 0
        %6530 = vmatprep.subr.bf16.mxu0 0
        %6531 = vmatpush1.bf16.xpose.msra.mxu0 0
        %6532 = vmatprep.subr.bf16.mxu0 0
        %6533 = vmatpush1.bf16.xpose.msra.mxu0 0
        %6534 = vmatprep.subr.bf16.mxu0 0
        %6535 = vmatpush1.bf16.xpose.msra.mxu0 0
        %6536 = vmatprep.subr.bf16.mxu0 0
        %6537 = vmatpush1.bf16.xpose.msra.mxu0 0
        %6538 = vmatprep.subr.bf16.mxu0 0
        %6539 = vmatpush1.bf16.xpose.msra.mxu0 %v6524
        %6540 = vmatprep.subr.bf16.mxu0 0
        %6541 = vmatpush1.bf16.xpose.msra.mxu0 %v6521
        %6542 = vmatprep.subr.bf16.mxu0 0
        %6543 = vmatpush2.bf16.xpose.msra.mxu0 0
        %6544 = vmatprep.subr.bf16.mxu0 0
        %6545 = vmatpush2.bf16.xpose.msra.mxu0 0
        %6546 = vmatprep.subr.bf16.mxu0 0
        %6547 = vmatpush2.bf16.xpose.msra.mxu0 0
        %6548 = vmatprep.subr.bf16.mxu0 0
        %6549 = vmatpush2.bf16.xpose.msra.mxu0 0
        %6550 = vmatprep.subr.bf16.mxu0 0
        %6551 = vmatpush2.bf16.xpose.msra.mxu0 0
        %6552 = vmatprep.subr.bf16.mxu0 0
        %6553 = vmatpush2.bf16.xpose.msra.mxu0 0
        %6554 = vmatprep.subr.bf16.mxu0 0
        %6555 = vmatpush2.bf16.xpose.msra.mxu0 0
        %6556 = vmatprep.subr.bf16.mxu0 0
        %6557 = vmatpush2.bf16.xpose.msra.mxu0 0
        %6558 = vmatprep.mubr.bf16.mxu0 0
        %6559 = vmatmul.mubr.bf16.gmra.mxu0 %v6515
        %v6560 = vpop.f32.mrf.mxu0
        %v6561 = vadd.f32 0.0, %v6560
        %v6562 = vpop.f32.mrf.mxu0
        %v6563 = vpop.f32.mrf.mxu0
        %v6564 = vadd.f32 0.0, %v6563
        %v6565 = vpop.f32.mrf.mxu0
        %6566 = vmatprep.mubr.bf16.mxu0 0
        %6567 = vmatmul.mubr.bf16.gmra.mxu0 %v6518
        %v6568 = vpop.f32.mrf.mxu0
        %v6569 = vadd.f32 0.0, %v6568
        %v6570 = vpop.f32.mrf.mxu0
        %v6571 = vpop.f32.mrf.mxu0
        %v6572 = vadd.f32 0.0, %v6571
        %v6573 = vpop.f32.mrf.mxu0
        %6574 = vdwg.mxu0
        %v6575 = vmul.f32 %v6561, 0.25
        %v6576 = vmul.f32 %v6564, 0.25
        %v6577 = vmul.f32 %v6569, 0.25
        %v6578 = vmul.f32 %v6572, 0.25
        %v6579 = vsel %vm777, %v6575, -inf
        %6580 = vmax.xlane.f32.xlu0 %v6579
        %v6581 = vpop.xlane.xlu0 %6580
        %v6582 = vsel %vm777, %v6576, -inf
        %6583 = vmax.xlane.f32.xlu0 %v6582
        %v6584 = vpop.xlane.xlu0 %6583
        %v6585 = vsel %vm777, %v6577, -inf
        %6586 = vmax.xlane.f32.xlu0 %v6585
        %v6587 = vpop.xlane.xlu0 %6586
        %v6588 = vsel %vm777, %v6578, -inf
        %6589 = vmax.xlane.f32.xlu0 %v6588
        %v6590 = vpop.xlane.xlu0 %6589
        %v6591 = vsub.f32 %v6575, %v6581
        %v6592 = vsub.f32 %v6576, %v6584
        %v6593 = vsub.f32 %v6577, %v6587
        %v6594 = vsub.f32 %v6578, %v6590
        %v6595 = vmul.f32 %v6591, 1.442695
        %v6596 = vpow.pop %v6595
        %v6597 = vmul.f32 %v6592, 1.442695
        %v6598 = vpow.pop %v6597
        %v6599 = vmul.f32 %v6593, 1.442695
        %v6600 = vpow.pop %v6599
        %v6601 = vmul.f32 %v6594, 1.442695
        %v6602 = vpow.pop %v6601
        %v6603 = vsel %vm777, %v6596, 0.0
        %6604 = vadd.xlane.f32.xlu0 %v6603
        %v6605 = vpop.xlane.xlu0 %6604
        %v6606 = vsel %vm777, %v6598, 0.0
        %6607 = vadd.xlane.f32.xlu0 %v6606
        %v6608 = vpop.xlane.xlu0 %6607
        %v6609 = vsel %vm777, %v6600, 0.0
        %6610 = vadd.xlane.f32.xlu0 %v6609
        %v6611 = vpop.xlane.xlu0 %6610
        %v6612 = vsel %vm777, %v6602, 0.0
        %6613 = vadd.xlane.f32.xlu0 %v6612
        %v6614 = vpop.xlane.xlu0 %6613
        %v6615 = vrcp.pop %v6605
        %v6616 = vrcp.pop %v6608
        %v6617 = vrcp.pop %v6611
        %v6618 = vrcp.pop %v6614
        %v6619 = vmul.f32 %v6596, %v6615
        %v6620 = vmul.f32 %v6598, %v6616
        %v6621 = vmul.f32 %v6600, %v6617
        %v6622 = vmul.f32 %v6602, %v6618
        %v6623 = vpack.c.bf16 %v6620, %v6619
        %v6624 = vpack.c.bf16 %v6622, %v6621
        %6625 = vrot.lane.b32.xlu0 %v709, 32
        %v6626 = vpop.permute.xlu0 %6625
        %6627 = vrot.lane.b32.xlu0 %v710, 32
        %v6628 = vpop.permute.xlu0 %6627
        %v6632 = vsel %vm777, %v6623, 0
        %v6635 = vsel %vm777, %v6624, 0
        %6637 = vmatprep.subr.bf16.mxu0 0
        %6638 = vmatpush1.bf16.msra.mxu0 0
        %6639 = vmatprep.subr.bf16.mxu0 0
        %6640 = vmatpush1.bf16.msra.mxu0 0
        %6641 = vmatprep.subr.bf16.mxu0 0
        %6642 = vmatpush1.bf16.msra.mxu0 0
        %6643 = vmatprep.subr.bf16.mxu0 0
        %6644 = vmatpush1.bf16.msra.mxu0 0
        %6645 = vmatprep.subr.bf16.mxu0 0
        %6646 = vmatpush1.bf16.msra.mxu0 0
        %6647 = vmatprep.subr.bf16.mxu0 0
        %6648 = vmatpush1.bf16.msra.mxu0 0
        %6649 = vmatprep.subr.bf16.mxu0 0
        %6650 = vmatpush1.bf16.msra.mxu0 %v6628
        %6651 = vmatprep.subr.bf16.mxu0 0
        %6652 = vmatpush1.bf16.msra.mxu0 %v6626
        %6653 = vmatprep.subr.bf16.mxu0 0
        %6654 = vmatpush2.bf16.msra.mxu0 0
        %6655 = vmatprep.subr.bf16.mxu0 0
        %6656 = vmatpush2.bf16.msra.mxu0 0
        %6657 = vmatprep.subr.bf16.mxu0 0
        %6658 = vmatpush2.bf16.msra.mxu0 0
        %6659 = vmatprep.subr.bf16.mxu0 0
        %6660 = vmatpush2.bf16.msra.mxu0 0
        %6661 = vmatprep.subr.bf16.mxu0 0
        %6662 = vmatpush2.bf16.msra.mxu0 0
        %6663 = vmatprep.subr.bf16.mxu0 0
        %6664 = vmatpush2.bf16.msra.mxu0 0
        %6665 = vmatprep.subr.bf16.mxu0 0
        %6666 = vmatpush2.bf16.msra.mxu0 0
        %6667 = vmatprep.subr.bf16.mxu0 0
        %6668 = vmatpush2.bf16.msra.mxu0 0
        %6669 = vmatprep.mubr.bf16.mxu0 0
        %6670 = vmatmul.mubr.bf16.gmra.mxu0 %v6632
        %v6671 = vpop.f32.mrf.mxu0
        %v6672 = vadd.f32 0.0, %v6671
        %v6673 = vpop.f32.mrf.mxu0
        %v6674 = vpop.f32.mrf.mxu0
        %v6675 = vadd.f32 0.0, %v6674
        %v6676 = vpop.f32.mrf.mxu0
        %6677 = vmatprep.mubr.bf16.mxu0 0
        %6678 = vmatmul.mubr.bf16.gmra.mxu0 %v6635
        %v6679 = vpop.f32.mrf.mxu0
        %v6680 = vadd.f32 0.0, %v6679
        %v6681 = vpop.f32.mrf.mxu0
        %v6682 = vpop.f32.mrf.mxu0
        %v6683 = vadd.f32 0.0, %v6682
        %v6684 = vpop.f32.mrf.mxu0
        %6685 = vdwg.mxu0
        %6686 = vrot.lane.b32.xlu0 %v693, 16
        %v6687 = vpop.permute.xlu0 %6686
        %6688 = vrot.lane.b32.xlu0 %v694, 16
        %v6689 = vpop.permute.xlu0 %6688
        %6690 = vrot.lane.b32.xlu0 %v701, 16
        %v6691 = vpop.permute.xlu0 %6690
        %6692 = vrot.lane.b32.xlu0 %v702, 16
        %v6693 = vpop.permute.xlu0 %6692
        %v6695 = vsel %vm711, %v6687, 0
        %v6698 = vsel %vm711, %v6689, 0
        %v6701 = vsel %vm711, %v6691, 0
        %v6704 = vsel %vm711, %v6693, 0
        %6706 = vmatprep.subr.bf16.mxu0 0
        %6707 = vmatpush1.bf16.xpose.msra.mxu0 0
        %6708 = vmatprep.subr.bf16.mxu0 0
        %6709 = vmatpush1.bf16.xpose.msra.mxu0 0
        %6710 = vmatprep.subr.bf16.mxu0 0
        %6711 = vmatpush1.bf16.xpose.msra.mxu0 0
        %6712 = vmatprep.subr.bf16.mxu0 0
        %6713 = vmatpush1.bf16.xpose.msra.mxu0 0
        %6714 = vmatprep.subr.bf16.mxu0 0
        %6715 = vmatpush1.bf16.xpose.msra.mxu0 0
        %6716 = vmatprep.subr.bf16.mxu0 0
        %6717 = vmatpush1.bf16.xpose.msra.mxu0 0
        %6718 = vmatprep.subr.bf16.mxu0 0
        %6719 = vmatpush1.bf16.xpose.msra.mxu0 %v6704
        %6720 = vmatprep.subr.bf16.mxu0 0
        %6721 = vmatpush1.bf16.xpose.msra.mxu0 %v6701
        %6722 = vmatprep.subr.bf16.mxu0 0
        %6723 = vmatpush2.bf16.xpose.msra.mxu0 0
        %6724 = vmatprep.subr.bf16.mxu0 0
        %6725 = vmatpush2.bf16.xpose.msra.mxu0 0
        %6726 = vmatprep.subr.bf16.mxu0 0
        %6727 = vmatpush2.bf16.xpose.msra.mxu0 0
        %6728 = vmatprep.subr.bf16.mxu0 0
        %6729 = vmatpush2.bf16.xpose.msra.mxu0 0
        %6730 = vmatprep.subr.bf16.mxu0 0
        %6731 = vmatpush2.bf16.xpose.msra.mxu0 0
        %6732 = vmatprep.subr.bf16.mxu0 0
        %6733 = vmatpush2.bf16.xpose.msra.mxu0 0
        %6734 = vmatprep.subr.bf16.mxu0 0
        %6735 = vmatpush2.bf16.xpose.msra.mxu0 0
        %6736 = vmatprep.subr.bf16.mxu0 0
        %6737 = vmatpush2.bf16.xpose.msra.mxu0 0
        %6738 = vmatprep.mubr.bf16.mxu0 0
        %6739 = vmatmul.mubr.bf16.gmra.mxu0 %v6695
        %v6740 = vpop.f32.mrf.mxu0
        %v6741 = vadd.f32 0.0, %v6740
        %v6742 = vpop.f32.mrf.mxu0
        %v6743 = vpop.f32.mrf.mxu0
        %v6744 = vadd.f32 0.0, %v6743
        %v6745 = vpop.f32.mrf.mxu0
        %6746 = vmatprep.mubr.bf16.mxu0 0
        %6747 = vmatmul.mubr.bf16.gmra.mxu0 %v6698
        %v6748 = vpop.f32.mrf.mxu0
        %v6749 = vadd.f32 0.0, %v6748
        %v6750 = vpop.f32.mrf.mxu0
        %v6751 = vpop.f32.mrf.mxu0
        %v6752 = vadd.f32 0.0, %v6751
        %v6753 = vpop.f32.mrf.mxu0
        %6754 = vdwg.mxu0
        %v6755 = vmul.f32 %v6741, 0.25
        %v6756 = vmul.f32 %v6744, 0.25
        %v6757 = vmul.f32 %v6749, 0.25
        %v6758 = vmul.f32 %v6752, 0.25
        %v6759 = vsel %vm777, %v6755, -inf
        %6760 = vmax.xlane.f32.xlu0 %v6759
        %v6761 = vpop.xlane.xlu0 %6760
        %v6762 = vsel %vm777, %v6756, -inf
        %6763 = vmax.xlane.f32.xlu0 %v6762
        %v6764 = vpop.xlane.xlu0 %6763
        %v6765 = vsel %vm777, %v6757, -inf
        %6766 = vmax.xlane.f32.xlu0 %v6765
        %v6767 = vpop.xlane.xlu0 %6766
        %v6768 = vsel %vm777, %v6758, -inf
        %6769 = vmax.xlane.f32.xlu0 %v6768
        %v6770 = vpop.xlane.xlu0 %6769
        %v6771 = vsub.f32 %v6755, %v6761
        %v6772 = vsub.f32 %v6756, %v6764
        %v6773 = vsub.f32 %v6757, %v6767
        %v6774 = vsub.f32 %v6758, %v6770
        %v6775 = vmul.f32 %v6771, 1.442695
        %v6776 = vpow.pop %v6775
        %v6777 = vmul.f32 %v6772, 1.442695
        %v6778 = vpow.pop %v6777
        %v6779 = vmul.f32 %v6773, 1.442695
        %v6780 = vpow.pop %v6779
        %v6781 = vmul.f32 %v6774, 1.442695
        %v6782 = vpow.pop %v6781
        %v6783 = vsel %vm777, %v6776, 0.0
        %6784 = vadd.xlane.f32.xlu0 %v6783
        %v6785 = vpop.xlane.xlu0 %6784
        %v6786 = vsel %vm777, %v6778, 0.0
        %6787 = vadd.xlane.f32.xlu0 %v6786
        %v6788 = vpop.xlane.xlu0 %6787
        %v6789 = vsel %vm777, %v6780, 0.0
        %6790 = vadd.xlane.f32.xlu0 %v6789
        %v6791 = vpop.xlane.xlu0 %6790
        %v6792 = vsel %vm777, %v6782, 0.0
        %6793 = vadd.xlane.f32.xlu0 %v6792
        %v6794 = vpop.xlane.xlu0 %6793
        %v6795 = vrcp.pop %v6785
        %v6796 = vrcp.pop %v6788
        %v6797 = vrcp.pop %v6791
        %v6798 = vrcp.pop %v6794
        %v6799 = vmul.f32 %v6776, %v6795
        %v6800 = vmul.f32 %v6778, %v6796
        %v6801 = vmul.f32 %v6780, %v6797
        %v6802 = vmul.f32 %v6782, %v6798
        %v6803 = vpack.c.bf16 %v6800, %v6799
        %v6804 = vpack.c.bf16 %v6802, %v6801
        %6805 = vrot.lane.b32.xlu0 %v709, 16
        %v6806 = vpop.permute.xlu0 %6805
        %6807 = vrot.lane.b32.xlu0 %v710, 16
        %v6808 = vpop.permute.xlu0 %6807
        %v6812 = vsel %vm777, %v6803, 0
        %v6815 = vsel %vm777, %v6804, 0
        %6817 = vmatprep.subr.bf16.mxu0 0
        %6818 = vmatpush1.bf16.msra.mxu0 0
        %6819 = vmatprep.subr.bf16.mxu0 0
        %6820 = vmatpush1.bf16.msra.mxu0 0
        %6821 = vmatprep.subr.bf16.mxu0 0
        %6822 = vmatpush1.bf16.msra.mxu0 0
        %6823 = vmatprep.subr.bf16.mxu0 0
        %6824 = vmatpush1.bf16.msra.mxu0 0
        %6825 = vmatprep.subr.bf16.mxu0 0
        %6826 = vmatpush1.bf16.msra.mxu0 0
        %6827 = vmatprep.subr.bf16.mxu0 0
        %6828 = vmatpush1.bf16.msra.mxu0 0
        %6829 = vmatprep.subr.bf16.mxu0 0
        %6830 = vmatpush1.bf16.msra.mxu0 %v6808
        %6831 = vmatprep.subr.bf16.mxu0 0
        %6832 = vmatpush1.bf16.msra.mxu0 %v6806
        %6833 = vmatprep.subr.bf16.mxu0 0
        %6834 = vmatpush2.bf16.msra.mxu0 0
        %6835 = vmatprep.subr.bf16.mxu0 0
        %6836 = vmatpush2.bf16.msra.mxu0 0
        %6837 = vmatprep.subr.bf16.mxu0 0
        %6838 = vmatpush2.bf16.msra.mxu0 0
        %6839 = vmatprep.subr.bf16.mxu0 0
        %6840 = vmatpush2.bf16.msra.mxu0 0
        %6841 = vmatprep.subr.bf16.mxu0 0
        %6842 = vmatpush2.bf16.msra.mxu0 0
        %6843 = vmatprep.subr.bf16.mxu0 0
        %6844 = vmatpush2.bf16.msra.mxu0 0
        %6845 = vmatprep.subr.bf16.mxu0 0
        %6846 = vmatpush2.bf16.msra.mxu0 0
        %6847 = vmatprep.subr.bf16.mxu0 0
        %6848 = vmatpush2.bf16.msra.mxu0 0
        %6849 = vmatprep.mubr.bf16.mxu0 0
        %6850 = vmatmul.mubr.bf16.gmra.mxu0 %v6812
        %v6851 = vpop.f32.mrf.mxu0
        %v6852 = vadd.f32 0.0, %v6851
        %v6853 = vpop.f32.mrf.mxu0
        %v6854 = vpop.f32.mrf.mxu0
        %v6855 = vadd.f32 0.0, %v6854
        %v6856 = vpop.f32.mrf.mxu0
        %6857 = vmatprep.mubr.bf16.mxu0 0
        %6858 = vmatmul.mubr.bf16.gmra.mxu0 %v6815
        %v6859 = vpop.f32.mrf.mxu0
        %v6860 = vadd.f32 0.0, %v6859
        %v6861 = vpop.f32.mrf.mxu0
        %v6862 = vpop.f32.mrf.mxu0
        %v6863 = vadd.f32 0.0, %v6862
        %v6864 = vpop.f32.mrf.mxu0
        %6865 = vdwg.mxu0
        %6870 = vrot.lane.b32.xlu0 %v5772, 16
        %v6871 = vpop.permute.xlu0 %6870
        %6872 = vrot.lane.b32.xlu0 %v5775, 16
        %v6873 = vpop.permute.xlu0 %6872
        %6874 = vrot.lane.b32.xlu0 %v5780, 16
        %v6875 = vpop.permute.xlu0 %6874
        %6876 = vrot.lane.b32.xlu0 %v5783, 16
        %v6877 = vpop.permute.xlu0 %6876
        %6886 = vrot.lane.b32.xlu0 %v5952, 32
        %v6887 = vpop.permute.xlu0 %6886
        %6888 = vrot.lane.b32.xlu0 %v5955, 32
        %v6889 = vpop.permute.xlu0 %6888
        %6890 = vrot.lane.b32.xlu0 %v5960, 32
        %v6891 = vpop.permute.xlu0 %6890
        %6892 = vrot.lane.b32.xlu0 %v5963, 32
        %v6893 = vpop.permute.xlu0 %6892
        %6902 = vrot.lane.b32.xlu0 %v6132, 48
        %v6903 = vpop.permute.xlu0 %6902
        %6904 = vrot.lane.b32.xlu0 %v6135, 48
        %v6905 = vpop.permute.xlu0 %6904
        %6906 = vrot.lane.b32.xlu0 %v6140, 48
        %v6907 = vpop.permute.xlu0 %6906
        %6908 = vrot.lane.b32.xlu0 %v6143, 48
        %v6909 = vpop.permute.xlu0 %6908
        %6918 = vrot.lane.b32.xlu0 %v6312, 64
        %v6919 = vpop.permute.xlu0 %6918
        %6920 = vrot.lane.b32.xlu0 %v6315, 64
        %v6921 = vpop.permute.xlu0 %6920
        %6922 = vrot.lane.b32.xlu0 %v6320, 64
        %v6923 = vpop.permute.xlu0 %6922
        %6924 = vrot.lane.b32.xlu0 %v6323, 64
        %v6925 = vpop.permute.xlu0 %6924
        %6934 = vrot.lane.b32.xlu0 %v6492, 80
        %v6935 = vpop.permute.xlu0 %6934
        %6936 = vrot.lane.b32.xlu0 %v6495, 80
        %v6937 = vpop.permute.xlu0 %6936
        %6938 = vrot.lane.b32.xlu0 %v6500, 80
        %v6939 = vpop.permute.xlu0 %6938
        %6940 = vrot.lane.b32.xlu0 %v6503, 80
        %v6941 = vpop.permute.xlu0 %6940
        %6950 = vrot.lane.b32.xlu0 %v6672, 96
        %v6951 = vpop.permute.xlu0 %6950
        %6952 = vrot.lane.b32.xlu0 %v6675, 96
        %v6953 = vpop.permute.xlu0 %6952
        %6954 = vrot.lane.b32.xlu0 %v6680, 96
        %v6955 = vpop.permute.xlu0 %6954
        %6956 = vrot.lane.b32.xlu0 %v6683, 96
        %v6957 = vpop.permute.xlu0 %6956
        %6966 = vrot.lane.b32.xlu0 %v6852, 112
        %v6967 = vpop.permute.xlu0 %6966
        %6968 = vrot.lane.b32.xlu0 %v6855, 112
        %v6969 = vpop.permute.xlu0 %6968
        %6970 = vrot.lane.b32.xlu0 %v6860, 112
        %v6971 = vpop.permute.xlu0 %6970
        %6972 = vrot.lane.b32.xlu0 %v6863, 112
        %v6973 = vpop.permute.xlu0 %6972
        %v6978 = vsel %vm711, %v5586, %v6871
        %v6979 = vsel %vm711, %v5589, %v6873
        %v6980 = vsel %vm711, %v5594, %v6875
        %v6981 = vsel %vm711, %v5597, %v6877
        %v6982 = vsel %vm777, %v6978, %v6887
        %v6983 = vsel %vm777, %v6979, %v6889
        %v6984 = vsel %vm777, %v6980, %v6891
        %v6985 = vsel %vm777, %v6981, %v6893
        %v6986 = vsel %vm2265, %v6982, %v6903
        %v6987 = vsel %vm2265, %v6983, %v6905
        %v6988 = vsel %vm2265, %v6984, %v6907
        %v6989 = vsel %vm2265, %v6985, %v6909
        %v6990 = vsel %vm2270, %v6986, %v6919
        %v6991 = vsel %vm2270, %v6987, %v6921
        %v6992 = vsel %vm2270, %v6988, %v6923
        %v6993 = vsel %vm2270, %v6989, %v6925
        %v6994 = vsel %vm2275, %v6990, %v6935
        %v6995 = vsel %vm2275, %v6991, %v6937
        %v6996 = vsel %vm2275, %v6992, %v6939
        %v6997 = vsel %vm2275, %v6993, %v6941
        %v6998 = vsel %vm2280, %v6994, %v6951
        %v6999 = vsel %vm2280, %v6995, %v6953
        %v7000 = vsel %vm2280, %v6996, %v6955
        %v7001 = vsel %vm2280, %v6997, %v6957
        %v7002 = vsel %vm2285, %v6998, %v6967
        %v7003 = vsel %vm2285, %v6999, %v6969
        %v7004 = vsel %vm2285, %v7000, %v6971
        %v7005 = vsel %vm2285, %v7001, %v6973
        %v7006 = vld [vmem:[#allocation7] sm:$0xf]
        %v7007 = vld [vmem:[#allocation7 + $0x4] sm:$0xf]
        %v7008 = vld [vmem:[#allocation7 + $0x8] sm:$0xf]
        %v7009 = vld [vmem:[#allocation7 + $0xc] sm:$0xf]
        %v7010 = vld [vmem:[#allocation7 + $0x10] sm:$0xf]
        %v7011 = vld [vmem:[#allocation7 + $0x14] sm:$0xf]
        %v7012 = vld [vmem:[#allocation7 + $0x18] sm:$0xf]
        %v7013 = vld [vmem:[#allocation7 + $0x1c] sm:$0xf]
        %v7014 = vld [vmem:[#allocation7 + $0x20] sm:$0xf]
        %v7015 = vld [vmem:[#allocation7 + $0x24] sm:$0xf]
        %v7016 = vld [vmem:[#allocation7 + $0x28] sm:$0xf]
        %v7017 = vld [vmem:[#allocation7 + $0x2c] sm:$0xf]
        %v7018 = vld [vmem:[#allocation7 + $0x30] sm:$0xf]
        %v7019 = vld [vmem:[#allocation7 + $0x34] sm:$0xf]
        %v7020 = vld [vmem:[#allocation7 + $0x38] sm:$0xf]
        %v7021 = vld [vmem:[#allocation7 + $0x3c] sm:$0xf]
        %v7022 = vpack.c.bf16 %v2287, %v2286
        %v7023 = vpack.c.bf16 %v2289, %v2288
        %v7024 = vpack.c.bf16 %v3859, %v3858
        %v7025 = vpack.c.bf16 %v3861, %v3860
        %v7026 = vpack.c.bf16 %v5431, %v5430
        %v7027 = vpack.c.bf16 %v5433, %v5432
        %v7028 = vpack.c.bf16 %v7003, %v7002
        %v7029 = vpack.c.bf16 %v7005, %v7004
        %v7030 = vld [vmem:[%s4] sm:$0x1]
        %v7032 = vlaneseq
        %v7033 = vshrl.u32 %v7032, 7
        %v7034 = vsub.s32 0, %v7033
        %v7035 = vrot.slane %v7030, %v7034
        %v7053 = vunpack.c.l.b16 %v7006
        %v7054 = vunpack.c.l.b16 %v7007
        %v7055 = vunpack.c.l.b16 %v7008
        %v7056 = vunpack.c.l.b16 %v7009
        %v7057 = vunpack.c.l.b16 %v7010
        %v7058 = vunpack.c.l.b16 %v7011
        %v7059 = vunpack.c.l.b16 %v7012
        %v7060 = vunpack.c.l.b16 %v7013
        %v7061 = vunpack.c.l.b16 %v7014
        %v7062 = vunpack.c.l.b16 %v7015
        %v7063 = vunpack.c.l.b16 %v7016
        %v7064 = vunpack.c.l.b16 %v7017
        %v7065 = vunpack.c.l.b16 %v7018
        %v7066 = vunpack.c.l.b16 %v7019
        %v7067 = vunpack.c.l.b16 %v7020
        %v7068 = vunpack.c.l.b16 %v7021
        %v7069 = vpack.c.b16 %v7054, %v7053
        %v7070 = vpack.c.b16 %v7056, %v7055
        %v7071 = vpack.c.b16 %v7058, %v7057
        %v7072 = vpack.c.b16 %v7060, %v7059
        %v7073 = vpack.c.b16 %v7062, %v7061
        %v7074 = vpack.c.b16 %v7064, %v7063
        %v7075 = vpack.c.b16 %v7066, %v7065
        %v7076 = vpack.c.b16 %v7068, %v7067
        %7085 = vmatprep.subr.bf16.mxu0 0
        %7086 = vmatpush1.bf16.msra.mxu0 %v7076
        %7087 = vmatprep.subr.bf16.mxu0 0
        %7088 = vmatpush1.bf16.msra.mxu0 %v7075
        %7089 = vmatprep.subr.bf16.mxu0 0
        %7090 = vmatpush1.bf16.msra.mxu0 %v7074
        %7091 = vmatprep.subr.bf16.mxu0 0
        %7092 = vmatpush1.bf16.msra.mxu0 %v7073
        %7093 = vmatprep.subr.bf16.mxu0 0
        %7094 = vmatpush1.bf16.msra.mxu0 %v7072
        %7095 = vmatprep.subr.bf16.mxu0 0
        %7096 = vmatpush1.bf16.msra.mxu0 %v7071
        %7097 = vmatprep.subr.bf16.mxu0 0
        %7098 = vmatpush1.bf16.msra.mxu0 %v7070
        %7099 = vmatprep.subr.bf16.mxu0 0
        %7100 = vmatpush1.bf16.msra.mxu0 %v7069
        %7101 = vmatprep.subr.bf16.mxu0 0
        %7102 = vmatpush2.bf16.msra.mxu0 0
        %7103 = vmatprep.subr.bf16.mxu0 0
        %7104 = vmatpush2.bf16.msra.mxu0 0
        %7105 = vmatprep.subr.bf16.mxu0 0
        %7106 = vmatpush2.bf16.msra.mxu0 0
        %7107 = vmatprep.subr.bf16.mxu0 0
        %7108 = vmatpush2.bf16.msra.mxu0 0
        %7109 = vmatprep.subr.bf16.mxu0 0
        %7110 = vmatpush2.bf16.msra.mxu0 0
        %7111 = vmatprep.subr.bf16.mxu0 0
        %7112 = vmatpush2.bf16.msra.mxu0 0
        %7113 = vmatprep.subr.bf16.mxu0 0
        %7114 = vmatpush2.bf16.msra.mxu0 0
        %7115 = vmatprep.subr.bf16.mxu0 0
        %7116 = vmatpush2.bf16.msra.mxu0 0
        %7117 = vmatprep.mubr.bf16.mxu0 0
        %7118 = vmatmul.mubr.bf16.gmra.mxu0 %v7022
        %v7119 = vpop.f32.mrf.mxu0
        %v7120 = vadd.f32 %v7035, %v7119
        %v7121 = vpop.f32.mrf.mxu0
        %v7122 = vpop.f32.mrf.mxu0
        %v7123 = vadd.f32 %v7035, %v7122
        %v7124 = vpop.f32.mrf.mxu0
        %7125 = vmatprep.mubr.bf16.mxu0 0
        %7126 = vmatmul.mubr.bf16.gmra.mxu0 %v7023
        %v7127 = vpop.f32.mrf.mxu0
        %v7128 = vadd.f32 %v7035, %v7127
        %v7129 = vpop.f32.mrf.mxu0
        %v7130 = vpop.f32.mrf.mxu0
        %v7131 = vadd.f32 %v7035, %v7130
        %v7132 = vpop.f32.mrf.mxu0
        %7133 = vmatprep.mubr.bf16.mxu0 0
        %7134 = vmatmul.mubr.bf16.gmra.mxu0 %v7024
        %v7135 = vpop.f32.mrf.mxu0
        %v7136 = vadd.f32 %v7035, %v7135
        %v7137 = vpop.f32.mrf.mxu0
        %v7138 = vpop.f32.mrf.mxu0
        %v7139 = vadd.f32 %v7035, %v7138
        %v7140 = vpop.f32.mrf.mxu0
        %7141 = vmatprep.mubr.bf16.mxu0 0
        %7142 = vmatmul.mubr.bf16.gmra.mxu0 %v7025
        %v7143 = vpop.f32.mrf.mxu0
        %v7144 = vadd.f32 %v7035, %v7143
        %v7145 = vpop.f32.mrf.mxu0
        %v7146 = vpop.f32.mrf.mxu0
        %v7147 = vadd.f32 %v7035, %v7146
        %v7148 = vpop.f32.mrf.mxu0
        %7149 = vmatprep.mubr.bf16.mxu0 0
        %7150 = vmatmul.mubr.bf16.gmra.mxu0 %v7026
        %v7151 = vpop.f32.mrf.mxu0
        %v7152 = vadd.f32 %v7035, %v7151
        %v7153 = vpop.f32.mrf.mxu0
        %v7154 = vpop.f32.mrf.mxu0
        %v7155 = vadd.f32 %v7035, %v7154
        %v7156 = vpop.f32.mrf.mxu0
        %7157 = vmatprep.mubr.bf16.mxu0 0
        %7158 = vmatmul.mubr.bf16.gmra.mxu0 %v7027
        %v7159 = vpop.f32.mrf.mxu0
        %v7160 = vadd.f32 %v7035, %v7159
        %v7161 = vpop.f32.mrf.mxu0
        %v7162 = vpop.f32.mrf.mxu0
        %v7163 = vadd.f32 %v7035, %v7162
        %v7164 = vpop.f32.mrf.mxu0
        %7165 = vmatprep.mubr.bf16.mxu0 0
        %7166 = vmatmul.mubr.bf16.gmra.mxu0 %v7028
        %v7167 = vpop.f32.mrf.mxu0
        %v7168 = vadd.f32 %v7035, %v7167
        %v7169 = vpop.f32.mrf.mxu0
        %v7170 = vpop.f32.mrf.mxu0
        %v7171 = vadd.f32 %v7035, %v7170
        %v7172 = vpop.f32.mrf.mxu0
        %7173 = vmatprep.mubr.bf16.mxu0 0
        %7174 = vmatmul.mubr.bf16.gmra.mxu0 %v7029
        %v7175 = vpop.f32.mrf.mxu0
        %v7176 = vadd.f32 %v7035, %v7175
        %v7177 = vpop.f32.mrf.mxu0
        %v7178 = vpop.f32.mrf.mxu0
        %v7179 = vadd.f32 %v7035, %v7178
        %v7180 = vpop.f32.mrf.mxu0
        %7181 = vdwg.mxu0
        %7182 = vst [vmem:[%s272] sm:$0xff] %v7120
        %7183 = vst [vmem:[%s272 + $0x8] sm:$0xff] %v7123
        %7184 = vst [vmem:[%s272 + $0x10] sm:$0xff] %v7128
        %7185 = vst [vmem:[%s272 + $0x18] sm:$0xff] %v7131
        %7186 = vst [vmem:[%s272 + $0x20] sm:$0xff] %v7136
        %7187 = vst [vmem:[%s272 + $0x28] sm:$0xff] %v7139
        %7188 = vst [vmem:[%s272 + $0x30] sm:$0xff] %v7144
        %7189 = vst [vmem:[%s272 + $0x38] sm:$0xff] %v7147
        %7190 = vst [vmem:[%s272 + $0x40] sm:$0xff] %v7152
        %7191 = vst [vmem:[%s272 + $0x48] sm:$0xff] %v7155
        %7192 = vst [vmem:[%s272 + $0x50] sm:$0xff] %v7160
        %7193 = vst [vmem:[%s272 + $0x58] sm:$0xff] %v7163
        %7194 = vst [vmem:[%s272 + $0x60] sm:$0xff] %v7168
        %7195 = vst [vmem:[%s272 + $0x68] sm:$0xff] %v7171
        %7196 = vst [vmem:[%s272 + $0x70] sm:$0xff] %v7176
        %7197 = vst [vmem:[%s272 + $0x78] sm:$0xff] %v7179
        %s7198 = sand.u32 %s141, 1
        %s7199 = scalar_lea.sflag [#allocation4], %s7198
        %s7200 = sand.u32 %s141, 1
        %s7201 = smul.addr %s7200, 128
        %s7202 = scalar_lea.vmem [#allocation8], %s7201
        // Predicated region
        $region53: #{tpu_custom_call.1} parent=39 // pred_check
          %p7203 = pneg %p151
        $region54: #{tpu_custom_call.1} parent=39 // pred_check_branch
          %7205 = sbr.rel (%p7203) target = $region56
        $region55: #{tpu_custom_call.1} parent=39 // pred_region
          %s7206 = smul.u32 4, %s23
          %s7208 = ssub.s32 2048, 2048
          %7209 = vsyncadd %s7199, %s7208
          %s7210 = smul.addr %s7206, 4
          %s7211 = smul.addr %s7210, 128
          %s7212 = scalar_lea.hbm %s5, %s7211
          %s7213 = sshll.u32 %s7202, 4
          %s7214 = int_to_ptr.vmem [resolvable:$true] %s7213
          %7219 = dma.vmem_to_hbm [thread:$0]  %s7214, 2048, %s7212, %s7199, 128, 128, 8
        $region56: #{tpu_custom_call.1} parent=39 // pred_fallthru
          _
      $region40: #{tpu_custom_call.1} parent=5 // pred_fallthru
        _
      %p7220 = scmp.le.s32.totalorder 2, %s18
      // Predicated region
      $region57: #{tpu_custom_call.1} parent=5 // pred_check
        %p7221 = pneg %p7220
      $region58: #{tpu_custom_call.1} parent=5 // pred_check_branch
        %7223 = sbr.rel (%p7221) target = $region60
      $region59: #{tpu_custom_call.1} parent=5 // pred_region
        %s7224 = ssub.s32 %s18, 2
        // Predicated region
        $region61: #{tpu_custom_call.1} parent=59 // pred_check
          %p7225 = pneg %p157
        $region62: #{tpu_custom_call.1} parent=59 // pred_check_branch
          %7227 = sbr.rel (%p7225) target = $region64
        $region63: #{tpu_custom_call.1} parent=59 // pred_region
          %s7228 = sand.u32 %s142, 1
          %s7229 = scalar_lea.sflag [#allocation4], %s7228
          %s7230 = sand.u32 %s142, 1
          %s7231 = smul.addr %s7230, 128
          %s7232 = scalar_lea.vmem [#allocation8], %s7231
          %7233 = dma.done %s7229, 2048
        $region64: #{tpu_custom_call.1} parent=59 // pred_fallthru
          _
      $region60: #{tpu_custom_call.1} parent=5 // pred_fallthru
        _
    $region6: #{tpu_custom_call.1} parent=1 // loop_footer
      %s22 = sadd.s32 1, %s18
    $region7: #{tpu_custom_call.1} parent=1 // loop_footer_branch
      %17 = sbr.rel target = $region3
    $region8: #{tpu_custom_call.1} parent=1 // loop_exit
      _
    %7234 = vsyncpa [#allocation3], 1
    %s7235 = scalar_lea.sflag [#allocation3], 1
    %7236 = vsyncpa %s7235, 1
    %7237 = vsyncpa [#allocation6], 1
    %7238 = vsyncpa [#allocation4], 1
    %s7239 = scalar_lea.sflag [#allocation4], 1
    %7240 = vsyncpa %s7239, 1

</llo_original>
